<compile_context>
chip_gen: v6e
topology: v6e:2x2x1
jax: 0.10.0
libtpu: 0.0.40
codegen_flags: <defaults>
</compile_context>

<pallas_src>
import functools
import math

import jax
import jax.numpy as jnp
from jax.experimental import pallas as pl
from jax.experimental.pallas import tpu as pltpu


# ---------------------------------------------------------------------------
# Sizing helpers (generation-aware VMEM budget, row/graph tiling)
# ---------------------------------------------------------------------------

@functools.lru_cache(maxsize=None)
def _vmem_limit_bytes():
    cap = None
    try:
        info = pltpu.get_tpu_info()
        cap = getattr(info, "vmem_capacity_bytes", None)
    except Exception:
        cap = None
    if not cap:
        cap = 64 * 1024 * 1024  # conservative fallback (safe on v7x and older)
    return int(max(32 * 1024 * 1024, min(100 * 1024 * 1024, (cap * 3) // 4)))


def _row_tile(m, cap=1024):
    # Biggest row tile that keeps fp32 intermediates comfortably in VMEM.
    return m if m <= cap else 512


def _graphs_per_step(batch, seq, max_rows=1024):
    # Largest divisor of `batch` keeping G*seq rows per MHA grid step under max_rows.
    g = 1
    for cand in range(1, batch + 1):
        if batch % cand == 0 and cand * seq <= max_rows:
            g = cand
    return g


# ---------------------------------------------------------------------------
# Pallas kernels
# ---------------------------------------------------------------------------

def _embed_kernel(x_ref, w_ref, b_ref, o_ref):
    # y = x @ W + b ; W pre-transposed (F, E) bf16, fp32 accumulation, bf16 activation out.
    x = x_ref[...].astype(jnp.bfloat16)
    y = jnp.dot(x, w_ref[...], preferred_element_type=jnp.float32) + b_ref[...]
    o_ref[...] = y.astype(o_ref.dtype)


def embed_linear(x2d, w, b):
    """x2d: (M, F) f32, w: (F, E) bf16, b: (1, E) f32 -> (M, E) bf16."""
    M, F = x2d.shape
    E = w.shape[1]
    tm = _row_tile(M)
    return pl.pallas_call(
        _embed_kernel,
        out_shape=jax.ShapeDtypeStruct((M, E), jnp.bfloat16),
        grid=(pl.cdiv(M, tm),),
        in_specs=[
            pl.BlockSpec((tm, F), lambda i: (i, 0)),
            pl.BlockSpec((F, E), lambda i: (0, 0)),
            pl.BlockSpec((1, E), lambda i: (0, 0)),
        ],
        out_specs=pl.BlockSpec((tm, E), lambda i: (i, 0)),
        compiler_params=pltpu.CompilerParams(
            dimension_semantics=("parallel",),
            vmem_limit_bytes=_vmem_limit_bytes()),
    )(x2d, w, b)


def _mha_kernel(x_ref, nsc_ref, nsh_ref, wq_ref, wk_ref, wv_ref,
                bq_ref, bk_ref, bv_ref, wo_ref, bo_ref,
                y_ref, st_ref, *, num_heads):
    # One grid step = G graphs: fused [pre-norm -> q/k/v proj -> per-head softmax(QK^T)V
    # -> single out-proj -> residual add -> partial BN stats].
    G, L, E = x_ref.shape
    hd = E // num_heads
    GL = G * L

    # Fused pre-normalization (previous layer's bn2, or exact identity before layer 0).
    x2 = x_ref[...].reshape(GL, E).astype(jnp.float32)
    x2 = x2 * nsc_ref[...] + nsh_ref[...]                                  # (GL, E) fp32
    xb = x2.astype(jnp.bfloat16)

    # Full-K, lane-dense projection matmuls (q-scale folded into wq/bq on the host).
    q = jnp.dot(xb, wq_ref[...], preferred_element_type=jnp.float32) + bq_ref[...]
    k = jnp.dot(xb, wk_ref[...], preferred_element_type=jnp.float32) + bk_ref[...]
    v = jnp.dot(xb, wv_ref[...], preferred_element_type=jnp.float32) + bv_ref[...]
    q3 = q.reshape(G, L, E).astype(jnp.bfloat16)
    k3 = k.reshape(G, L, E).astype(jnp.bfloat16)
    v3 = v.reshape(G, L, E).astype(jnp.bfloat16)

    # Per-head attention, batched over the graph axis.
    # TODO(synk): for large L, stream K/V flash-style to bound the (G, L, L) fp32 scores
    # in VMEM (matters most on v7x's 64 MiB VMEM).
    ctx = []
    for h in range(num_heads):
        lo = h * hd
        qh = q3[:, :, lo:lo + hd]
        kh = k3[:, :, lo:lo + hd]
        vh = v3[:, :, lo:lo + hd]
        s = jax.lax.dot_general(qh, kh, (((2,), (2,)), ((0,), (0,))),
                                preferred_element_type=jnp.float32)        # (G, L, L)
        s = s - jnp.max(s, axis=-1, keepdims=True)
        p = jnp.exp(s)
        p = p * pl.reciprocal(jnp.sum(p, axis=-1, keepdims=True), approx=True)
        ctx.append(jax.lax.dot_general(p.astype(jnp.bfloat16), vh,
                                       (((2,), (1,)), ((0,), (0,))),
                                       preferred_element_type=jnp.float32))  # (G, L, hd)

    # Assemble heads once, then a single full-K out-projection.
    ctx2 = jnp.concatenate(ctx, axis=-1).reshape(GL, E)                    # (GL, E) fp32
    attn = jnp.dot(ctx2.astype(jnp.bfloat16), wo_ref[...],
                   preferred_element_type=jnp.float32) + bo_ref[...]
    y = x2 + attn                                                          # residual, fp32
    y_ref[...] = y.reshape(G, L, E).astype(y_ref.dtype)

    # Partial bn1 statistics of the residual sum (reduced in plain JAX afterwards).
    st_ref[0:1, 0:1, :] = jnp.sum(y, axis=0, keepdims=True).reshape(1, 1, E)
    st_ref[0:1, 1:2, :] = jnp.sum(y * y, axis=0, keepdims=True).reshape(1, 1, E)


def mha_block(x, nscale, nshift, p, num_heads):
    """x: (B, L, E) bf16 -> (y=(B,L,E) bf16, partial stats (B//G, 2, E) f32)."""
    B, L, E = x.shape
    G = _graphs_per_step(B, L)
    ng = B // G
    return pl.pallas_call(
        functools.partial(_mha_kernel, num_heads=num_heads),
        out_shape=(jax.ShapeDtypeStruct((B, L, E), jnp.bfloat16),
                   jax.ShapeDtypeStruct((ng, 2, E), jnp.float32)),
        grid=(ng,),
        in_specs=[
            pl.BlockSpec((G, L, E), lambda i: (i, 0, 0)),
            pl.BlockSpec((1, E), lambda i: (0, 0)),
            pl.BlockSpec((1, E), lambda i: (0, 0)),
            pl.BlockSpec((E, E), lambda i: (0, 0)),
            pl.BlockSpec((E, E), lambda i: (0, 0)),
            pl.BlockSpec((E, E), lambda i: (0, 0)),
            pl.BlockSpec((1, E), lambda i: (0, 0)),
            pl.BlockSpec((1, E), lambda i: (0, 0)),
            pl.BlockSpec((1, E), lambda i: (0, 0)),
            pl.BlockSpec((E, E), lambda i: (0, 0)),
            pl.BlockSpec((1, E), lambda i: (0, 0)),
        ],
        out_specs=(pl.BlockSpec((G, L, E), lambda i: (i, 0, 0)),
                   pl.BlockSpec((1, 2, E), lambda i: (i, 0, 0))),
        compiler_params=pltpu.CompilerParams(
            dimension_semantics=("parallel",),
            vmem_limit_bytes=_vmem_limit_bytes()),
    )(x, nscale, nshift, p["wq"], p["wk"], p["wv"],
      p["bq"], p["bk"], p["bv"], p["wo"], p["bo"])


def _ffn_kernel(y_ref, sc_ref, sh_ref, w1_ref, b1_ref, w2_ref, b2_ref,
                z_ref, st_ref, *, m_total):
    # Fused [bn1 apply -> Linear -> ReLU -> Linear -> residual -> partial bn2 stats].
    i = pl.program_id(0)
    tm, E = y_ref.shape
    h = y_ref[...].astype(jnp.float32) * sc_ref[...] + sh_ref[...]         # (tm, E) fp32
    t = jnp.dot(h.astype(jnp.bfloat16), w1_ref[...],
                preferred_element_type=jnp.float32) + b1_ref[...]
    t = jnp.maximum(t, 0.0)                                                # (tm, H) stays in VMEM
    ff = jnp.dot(t.astype(jnp.bfloat16), w2_ref[...],
                 preferred_element_type=jnp.float32) + b2_ref[...]
    z = h + ff                                                             # residual, fp32
    z_ref[...] = z.astype(z_ref.dtype)

    # Partial bn2 statistics; mask out-of-range rows of a partial last tile.
    row = i * tm + jax.lax.broadcasted_iota(jnp.int32, z.shape, 0)
    zm = jnp.where(row < m_total, z, 0.0)
    st_ref[0:1, 0:1, :] = jnp.sum(zm, axis=0, keepdims=True).reshape(1, 1, E)
    st_ref[0:1, 1:2, :] = jnp.sum(zm * zm, axis=0, keepdims=True).reshape(1, 1, E)


def ffn_block(y2d, scale1, shift1, p):
    """y2d: (M, E) bf16 -> (z=(M,E) bf16, partial stats (nt, 2, E) f32)."""
    M, E = y2d.shape
    H = p["ff1_w"].shape[1]
    tm = _row_tile(M)
    nt = pl.cdiv(M, tm)
    return pl.pallas_call(
        functools.partial(_ffn_kernel, m_total=M),
        out_shape=(jax.ShapeDtypeStruct((M, E), jnp.bfloat16),
                   jax.ShapeDtypeStruct((nt, 2, E), jnp.float32)),
        grid=(nt,),
        in_specs=[
            pl.BlockSpec((tm, E), lambda i: (i, 0)),
            pl.BlockSpec((1, E), lambda i: (0, 0)),
            pl.BlockSpec((1, E), lambda i: (0, 0)),
            pl.BlockSpec((E, H), lambda i: (0, 0)),
            pl.BlockSpec((1, H), lambda i: (0, 0)),
            pl.BlockSpec((H, E), lambda i: (0, 0)),
            pl.BlockSpec((1, E), lambda i: (0, 0)),
        ],
        out_specs=(pl.BlockSpec((tm, E), lambda i: (i, 0)),
                   pl.BlockSpec((1, 2, E), lambda i: (i, 0, 0))),
        compiler_params=pltpu.CompilerParams(
            dimension_semantics=("parallel",),
            vmem_limit_bytes=_vmem_limit_bytes()),
    )(y2d, scale1, shift1, p["ff1_w"], p["ff1_b"], p["ff2_w"], p["ff2_b"])


def _scale_shift_kernel(x_ref, sc_ref, sh_ref, o_ref):
    o_ref[...] = (x_ref[...].astype(jnp.float32) * sc_ref[...]
                  + sh_ref[...]).astype(o_ref.dtype)


def apply_scale_shift(x2d, scale, shift, out_dtype=jnp.float32):
    """Final BatchNorm apply (only runs once, after the last layer)."""
    M, E = x2d.shape
    tm = _row_tile(M)
    return pl.pallas_call(
        _scale_shift_kernel,
        out_shape=jax.ShapeDtypeStruct((M, E), out_dtype),
        grid=(pl.cdiv(M, tm),),
        in_specs=[
            pl.BlockSpec((tm, E), lambda i: (i, 0)),
            pl.BlockSpec((1, E), lambda i: (0, 0)),
            pl.BlockSpec((1, E), lambda i: (0, 0)),
        ],
        out_specs=pl.BlockSpec((tm, E), lambda i: (i, 0)),
        compiler_params=pltpu.CompilerParams(
            dimension_semantics=("parallel",),
            vmem_limit_bytes=_vmem_limit_bytes()),
    )(x2d, scale, shift)


# ---------------------------------------------------------------------------
# Model glue
# ---------------------------------------------------------------------------

def _bn_fold(partials, m_total, gamma, beta, eps=1e-5):
    """Reduce per-tile [sum; sumsq] partials into per-feature (scale, shift).
    Training-mode BatchNorm1d: batch stats, biased variance, var clamped >= 0."""
    s = jnp.sum(partials, axis=0)                       # (2, E)
    mean = s[0:1, :] / m_total
    var = jnp.maximum(s[1:2, :] / m_total - mean * mean, 0.0)
    scale = gamma * jax.lax.rsqrt(var + eps)
    shift = beta - mean * scale
    return scale, shift


def graph_encoder(x, params, num_heads):
    B, L, F = x.shape
    E = params["embed_w"].shape[1]
    M = B * L
    cur = embed_linear(x.reshape(M, F), params["embed_w"], params["embed_b"])
    cur = cur.reshape(B, L, E)
    # bn2-apply of the previous layer is fused into the next MHA prologue;
    # exact identity before the first layer.
    nscale = jnp.ones((1, E), jnp.float32)
    nshift = jnp.zeros((1, E), jnp.float32)
    for p in params["layers"]:
        y, y_parts = mha_block(cur, nscale, nshift, p, num_heads)      # y = xn + attn(xn)
        scale1, shift1 = _bn_fold(y_parts, M, p["bn1_gamma"], p["bn1_beta"])
        z, z_parts = ffn_block(y.reshape(M, E), scale1, shift1, p)     # z = h + ff(h), h=bn1(y)
        nscale, nshift = _bn_fold(z_parts, M, p["bn2_gamma"], p["bn2_beta"])
        cur = z.reshape(B, L, E)
    out = apply_scale_shift(cur.reshape(M, E), nscale, nshift)         # final bn2 apply
    return out.reshape(B, L, E)


# ---------------------------------------------------------------------------
# Deterministic parameter init (weights pre-transposed (in, out), bf16; q pre-scaled)
# ---------------------------------------------------------------------------

def init_params(key, node_input_dim, embedding_dim, hidden_dim, num_layers, num_heads):
    hd = embedding_dim // num_heads
    qscale = 1.0 / math.sqrt(hd)

    def w(k, shape, fan_in, scale=1.0):
        return ((scale / math.sqrt(fan_in))
                * jax.random.normal(k, shape, jnp.float32)).astype(jnp.bfloat16)

    def bias(k, n, scale=1.0):
        return scale * 0.01 * jax.random.normal(k, (1, n), jnp.float32)

    keys = jax.random.split(key, 1 + num_layers)
    ek = jax.random.split(keys[0], 2)
    params = {
        "embed_w": w(ek[0], (node_input_dim, embedding_dim), node_input_dim),
        "embed_b": bias(ek[1], embedding_dim),
        "layers": [],
    }
    E, H = embedding_dim, hidden_dim
    for li in range(num_layers):
        lk = jax.random.split(keys[1 + li], 12)
        p = {
            # q projection pre-scaled by 1/sqrt(head_dim) (PyTorch MHA scaling folded in).
            "wq": w(lk[0], (E, E), E, scale=qscale),
            "bq": bias(lk[1], E, scale=qscale),
            "wk": w(lk[2], (E, E), E),
            "bk": bias(lk[3], E),
            "wv": w(lk[4], (E, E), E),
            "bv": bias(lk[5], E),
            "wo": w(lk[6], (E, E), E),
            "bo": bias(lk[7], E),
            "ff1_w": w(lk[8], (E, H), E),
            "ff1_b": bias(lk[9], H),
            "ff2_w": w(lk[10], (H, E), H),
            "ff2_b": bias(lk[11], E),
            # BatchNorm1d defaults (training-mode batch stats; gamma=1, beta=0).
            "bn1_gamma": jnp.ones((1, E), jnp.float32),
            "bn1_beta": jnp.zeros((1, E), jnp.float32),
            "bn2_gamma": jnp.ones((1, E), jnp.float32),
            "bn2_beta": jnp.zeros((1, E), jnp.float32),
        }
        params["layers"].append(p)
    return params


if __name__ == "__main__":
    # x: (num_graphs, num_nodes, node_input_dim); module defaults for the rest so
    # features are lane-dense (E = 128, hidden = 512, 8 heads, 3 layers).
    B, L = 2, 16
    node_input_dim = 16
    embedding_dim = 128
    hidden_dim = 512
    num_heads = 8
    num_layers = 3

    key = jax.random.PRNGKey(0)
    k_x, k_p = jax.random.split(key)
    x = jax.random.normal(k_x, (B, L, node_input_dim), jnp.float32)
    params = init_params(k_p, node_input_dim, embedding_dim, hidden_dim,
                         num_layers, num_heads)

    fwd = jax.jit(functools.partial(graph_encoder, num_heads=num_heads))
    out = jax.block_until_ready(fwd(x, params))
    assert out.shape == (B, L, embedding_dim)
    assert bool(jnp.all(jnp.isfinite(out)))
    print("KERNEL_OK")
</pallas_src>

<mosaic_0001>
module attributes {stable_mosaic.version = 11 : i64} {
  func.func @_embed_kernel(%arg0: i32, %arg1: memref<32x16xf32, #tpu.memory_space<vmem>>, %arg2: memref<16x128xbf16, #tpu.memory_space<vmem>>, %arg3: memref<1x128xf32, #tpu.memory_space<vmem>>, %arg4: memref<32x128xbf16, #tpu.memory_space<vmem>>) attributes {dimension_semantics = [#tpu.dimension_semantics<parallel>], iteration_bounds = array<i64: 1>, scalar_prefetch = 0 : i64, scratch_operands = 0 : i64, tpu.core_type = #tpu.core_type<tc>, window_params = [{transform_indices = @transform_0, window_bounds = array<i64: 32, 16>}, {pipeline_mode = #tpu.pipeline_mode<synchronous>, transform_indices = @transform_1, window_bounds = array<i64: 16, 128>}, {pipeline_mode = #tpu.pipeline_mode<synchronous>, transform_indices = @transform_2, window_bounds = array<i64: 1, 128>}, {transform_indices = @transform_3, window_bounds = array<i64: 32, 128>}]} {
    %c0 = arith.constant 0 : index
    %c0_0 = arith.constant 0 : index
    %0 = vector.load %arg1[%c0, %c0_0] : memref<32x16xf32, #tpu.memory_space<vmem>>, vector<32x16xf32>
    %1 = arith.truncf %0 : vector<32x16xf32> to vector<32x16xbf16>
    %c0_1 = arith.constant 0 : index
    %c0_2 = arith.constant 0 : index
    %2 = vector.load %arg2[%c0_1, %c0_2] : memref<16x128xbf16, #tpu.memory_space<vmem>>, vector<16x128xbf16>
    %cst = arith.constant dense<0.000000e+00> : vector<32x128xf32>
    %3 = tpu.matmul %1, %2, %cst {dimension_numbers = #tpu.dot_dimension_numbers<[1], [0], [0], [1], [0, 0, 1, 1], [], []>} : vector<32x16xbf16>, vector<16x128xbf16>, vector<32x128xf32> -> vector<32x128xf32>
    %c0_3 = arith.constant 0 : index
    %c0_4 = arith.constant 0 : index
    %4 = vector.load %arg3[%c0_3, %c0_4] : memref<1x128xf32, #tpu.memory_space<vmem>>, vector<1x128xf32>
    %5 = vector.broadcast %4 : vector<1x128xf32> to vector<32x128xf32>
    %6 = arith.addf %3, %5 : vector<32x128xf32>
    %7 = arith.truncf %6 : vector<32x128xf32> to vector<32x128xbf16>
    %c0_5 = arith.constant 0 : index
    %c0_6 = arith.constant 0 : index
    %8 = vector.load %arg4[%c0_5, %c0_6] : memref<32x128xbf16, #tpu.memory_space<vmem>>, vector<32x128xbf16>
    tpu.vector_store %arg4[%c0_5, %c0_6], %7 {strides = array<i32>} : memref<32x128xbf16, #tpu.memory_space<vmem>>, vector<32x128xbf16>,
    return
  }
  func.func @transform_0(%arg0: i32) -> (i32, i32) {
    %c0_i32 = arith.constant 0 : i32
    %c0_i32_0 = arith.constant 0 : i32
    return %arg0, %c0_i32 : i32, i32
  }
  func.func @transform_1(%arg0: i32) -> (i32, i32) {
    %c0_i32 = arith.constant 0 : i32
    %c0_i32_0 = arith.constant 0 : i32
    %c0_i32_1 = arith.constant 0 : i32
    return %c0_i32, %c0_i32_0 : i32, i32
  }
  func.func @transform_2(%arg0: i32) -> (i32, i32) {
    %c0_i32 = arith.constant 0 : i32
    %c0_i32_0 = arith.constant 0 : i32
    %c0_i32_1 = arith.constant 0 : i32
    return %c0_i32, %c0_i32_0 : i32, i32
  }
  func.func @transform_3(%arg0: i32) -> (i32, i32) {
    %c0_i32 = arith.constant 0 : i32
    %c0_i32_0 = arith.constant 0 : i32
    return %arg0, %c0_i32 : i32, i32
  }
}

module attributes {stable_mosaic.version = 11 : i64} {
  func.func @_mha_kernel(%arg0: i32, %arg1: memref<2x16x128xbf16, #tpu.memory_space<vmem>>, %arg2: memref<1x128xf32, #tpu.memory_space<vmem>>, %arg3: memref<1x128xf32, #tpu.memory_space<vmem>>, %arg4: memref<128x128xbf16, #tpu.memory_space<vmem>>, %arg5: memref<128x128xbf16, #tpu.memory_space<vmem>>, %arg6: memref<128x128xbf16, #tpu.memory_space<vmem>>, %arg7: memref<1x128xf32, #tpu.memory_space<vmem>>, %arg8: memref<1x128xf32, #tpu.memory_space<vmem>>, %arg9: memref<1x128xf32, #tpu.memory_space<vmem>>, %arg10: memref<128x128xbf16, #tpu.memory_space<vmem>>, %arg11: memref<1x128xf32, #tpu.memory_space<vmem>>, %arg12: memref<2x16x128xbf16, #tpu.memory_space<vmem>>, %arg13: memref<1x2x128xf32, #tpu.memory_space<vmem>>) attributes {dimension_semantics = [#tpu.dimension_semantics<parallel>], iteration_bounds = array<i64: 1>, scalar_prefetch = 0 : i64, scratch_operands = 0 : i64, tpu.core_type = #tpu.core_type<tc>, window_params = [{transform_indices = @transform_0, window_bounds = array<i64: 2, 16, 128>}, {pipeline_mode = #tpu.pipeline_mode<synchronous>, transform_indices = @transform_1, window_bounds = array<i64: 1, 128>}, {pipeline_mode = #tpu.pipeline_mode<synchronous>, transform_indices = @transform_2, window_bounds = array<i64: 1, 128>}, {pipeline_mode = #tpu.pipeline_mode<synchronous>, transform_indices = @transform_3, window_bounds = array<i64: 128, 128>}, {pipeline_mode = #tpu.pipeline_mode<synchronous>, transform_indices = @transform_4, window_bounds = array<i64: 128, 128>}, {pipeline_mode = #tpu.pipeline_mode<synchronous>, transform_indices = @transform_5, window_bounds = array<i64: 128, 128>}, {pipeline_mode = #tpu.pipeline_mode<synchronous>, transform_indices = @transform_6, window_bounds = array<i64: 1, 128>}, {pipeline_mode = #tpu.pipeline_mode<synchronous>, transform_indices = @transform_7, window_bounds = array<i64: 1, 128>}, {pipeline_mode = #tpu.pipeline_mode<synchronous>, transform_indices = @transform_8, window_bounds = array<i64: 1, 128>}, {pipeline_mode = #tpu.pipeline_mode<synchronous>, transform_indices = @transform_9, window_bounds = array<i64: 128, 128>}, {pipeline_mode = #tpu.pipeline_mode<synchronous>, transform_indices = @transform_10, window_bounds = array<i64: 1, 128>}, {transform_indices = @transform_11, window_bounds = array<i64: 2, 16, 128>}, {transform_indices = @transform_12, window_bounds = array<i64: 1, 2, 128>}]} {
    %c0 = arith.constant 0 : index
    %c0_0 = arith.constant 0 : index
    %c0_1 = arith.constant 0 : index
    %0 = vector.load %arg1[%c0, %c0_0, %c0_1] : memref<2x16x128xbf16, #tpu.memory_space<vmem>>, vector<2x16x128xbf16>
    %1 = vector.shape_cast %0 : vector<2x16x128xbf16> to vector<32x128xbf16>
    %2 = arith.extf %1 : vector<32x128xbf16> to vector<32x128xf32>
    %c0_2 = arith.constant 0 : index
    %c0_3 = arith.constant 0 : index
    %3 = vector.load %arg2[%c0_2, %c0_3] : memref<1x128xf32, #tpu.memory_space<vmem>>, vector<1x128xf32>
    %4 = vector.broadcast %3 : vector<1x128xf32> to vector<32x128xf32>
    %5 = arith.mulf %2, %4 : vector<32x128xf32>
    %c0_4 = arith.constant 0 : index
    %c0_5 = arith.constant 0 : index
    %6 = vector.load %arg3[%c0_4, %c0_5] : memref<1x128xf32, #tpu.memory_space<vmem>>, vector<1x128xf32>
    %7 = vector.broadcast %6 : vector<1x128xf32> to vector<32x128xf32>
    %8 = arith.addf %5, %7 : vector<32x128xf32>
    %9 = arith.truncf %8 : vector<32x128xf32> to vector<32x128xbf16>
    %c0_6 = arith.constant 0 : index
    %c0_7 = arith.constant 0 : index
    %10 = vector.load %arg4[%c0_6, %c0_7] : memref<128x128xbf16, #tpu.memory_space<vmem>>, vector<128x128xbf16>
    %cst = arith.constant dense<0.000000e+00> : vector<32x128xf32>
    %11 = tpu.matmul %9, %10, %cst {dimension_numbers = #tpu.dot_dimension_numbers<[1], [0], [0], [1], [0, 0, 1, 1], [], []>} : vector<32x128xbf16>, vector<128x128xbf16>, vector<32x128xf32> -> vector<32x128xf32>
    %c0_8 = arith.constant 0 : index
    %c0_9 = arith.constant 0 : index
    %12 = vector.load %arg7[%c0_8, %c0_9] : memref<1x128xf32, #tpu.memory_space<vmem>>, vector<1x128xf32>
    %13 = vector.broadcast %12 : vector<1x128xf32> to vector<32x128xf32>
    %14 = arith.addf %11, %13 : vector<32x128xf32>
    %c0_10 = arith.constant 0 : index
    %c0_11 = arith.constant 0 : index
    %15 = vector.load %arg5[%c0_10, %c0_11] : memref<128x128xbf16, #tpu.memory_space<vmem>>, vector<128x128xbf16>
    %cst_12 = arith.constant dense<0.000000e+00> : vector<32x128xf32>
    %16 = tpu.matmul %9, %15, %cst_12 {dimension_numbers = #tpu.dot_dimension_numbers<[1], [0], [0], [1], [0, 0, 1, 1], [], []>} : vector<32x128xbf16>, vector<128x128xbf16>, vector<32x128xf32> -> vector<32x128xf32>
    %c0_13 = arith.constant 0 : index
    %c0_14 = arith.constant 0 : index
    %17 = vector.load %arg8[%c0_13, %c0_14] : memref<1x128xf32, #tpu.memory_space<vmem>>, vector<1x128xf32>
    %18 = vector.broadcast %17 : vector<1x128xf32> to vector<32x128xf32>
    %19 = arith.addf %16, %18 : vector<32x128xf32>
    %c0_15 = arith.constant 0 : index
    %c0_16 = arith.constant 0 : index
    %20 = vector.load %arg6[%c0_15, %c0_16] : memref<128x128xbf16, #tpu.memory_space<vmem>>, vector<128x128xbf16>
    %cst_17 = arith.constant dense<0.000000e+00> : vector<32x128xf32>
    %21 = tpu.matmul %9, %20, %cst_17 {dimension_numbers = #tpu.dot_dimension_numbers<[1], [0], [0], [1], [0, 0, 1, 1], [], []>} : vector<32x128xbf16>, vector<128x128xbf16>, vector<32x128xf32> -> vector<32x128xf32>
    %c0_18 = arith.constant 0 : index
    %c0_19 = arith.constant 0 : index
    %22 = vector.load %arg9[%c0_18, %c0_19] : memref<1x128xf32, #tpu.memory_space<vmem>>, vector<1x128xf32>
    %23 = vector.broadcast %22 : vector<1x128xf32> to vector<32x128xf32>
    %24 = arith.addf %21, %23 : vector<32x128xf32>
    %25 = vector.shape_cast %14 : vector<32x128xf32> to vector<2x16x128xf32>
    %26 = arith.truncf %25 : vector<2x16x128xf32> to vector<2x16x128xbf16>
    %27 = vector.shape_cast %19 : vector<32x128xf32> to vector<2x16x128xf32>
    %28 = arith.truncf %27 : vector<2x16x128xf32> to vector<2x16x128xbf16>
    %29 = vector.shape_cast %24 : vector<32x128xf32> to vector<2x16x128xf32>
    %30 = arith.truncf %29 : vector<2x16x128xf32> to vector<2x16x128xbf16>
    %31 = vector.extract_strided_slice %26 {offsets = [0, 0, 0], sizes = [2, 16, 16], strides = [1, 1, 1]} : vector<2x16x128xbf16> to vector<2x16x16xbf16>
    %32 = vector.extract_strided_slice %28 {offsets = [0, 0, 0], sizes = [2, 16, 16], strides = [1, 1, 1]} : vector<2x16x128xbf16> to vector<2x16x16xbf16>
    %33 = vector.extract_strided_slice %30 {offsets = [0, 0, 0], sizes = [2, 16, 16], strides = [1, 1, 1]} : vector<2x16x128xbf16> to vector<2x16x16xbf16>
    %cst_20 = arith.constant dense<0.000000e+00> : vector<2x16x16xf32>
    %34 = tpu.matmul %31, %32, %cst_20 {dimension_numbers = #tpu.dot_dimension_numbers<[2], [2], [1], [1], [0, 0, 0, 1, 1, 1], [0], [0]>} : vector<2x16x16xbf16>, vector<2x16x16xbf16>, vector<2x16x16xf32> -> vector<2x16x16xf32>
    %cst_21 = arith.constant dense<0xFF800000> : vector<2x16xf32>
    %35 = vector.multi_reduction <maximumf>, %34, %cst_21 [2] : vector<2x16x16xf32> to vector<2x16xf32>
    %36 = vector.shape_cast %35 : vector<2x16xf32> to vector<2x16x1xf32>
    %37 = vector.broadcast %36 : vector<2x16x1xf32> to vector<2x16x16xf32>
    %38 = arith.subf %34, %37 : vector<2x16x16xf32>
    %39 = math.exp %38 : vector<2x16x16xf32>
    %cst_22 = arith.constant dense<0.000000e+00> : vector<2x16xf32>
    %40 = vector.multi_reduction <add>, %39, %cst_22 [2] : vector<2x16x16xf32> to vector<2x16xf32>
    %41 = vector.shape_cast %40 : vector<2x16xf32> to vector<2x16x1xf32>
    %42 = tpu.reciprocal %41 {approx = true} : vector<2x16x1xf32> -> vector<2x16x1xf32>
    %43 = vector.broadcast %42 : vector<2x16x1xf32> to vector<2x16x16xf32>
    %44 = arith.mulf %39, %43 : vector<2x16x16xf32>
    %45 = arith.truncf %44 : vector<2x16x16xf32> to vector<2x16x16xbf16>
    %cst_23 = arith.constant dense<0.000000e+00> : vector<2x16x16xf32>
    %46 = tpu.matmul %45, %33, %cst_23 {dimension_numbers = #tpu.dot_dimension_numbers<[2], [1], [1], [2], [0, 0, 0, 1, 1, 2], [0], [0]>} : vector<2x16x16xbf16>, vector<2x16x16xbf16>, vector<2x16x16xf32> -> vector<2x16x16xf32>
    %47 = vector.extract_strided_slice %26 {offsets = [0, 0, 16], sizes = [2, 16, 16], strides = [1, 1, 1]} : vector<2x16x128xbf16> to vector<2x16x16xbf16>
    %48 = vector.extract_strided_slice %28 {offsets = [0, 0, 16], sizes = [2, 16, 16], strides = [1, 1, 1]} : vector<2x16x128xbf16> to vector<2x16x16xbf16>
    %49 = vector.extract_strided_slice %30 {offsets = [0, 0, 16], sizes = [2, 16, 16], strides = [1, 1, 1]} : vector<2x16x128xbf16> to vector<2x16x16xbf16>
    %cst_24 = arith.constant dense<0.000000e+00> : vector<2x16x16xf32>
    %50 = tpu.matmul %47, %48, %cst_24 {dimension_numbers = #tpu.dot_dimension_numbers<[2], [2], [1], [1], [0, 0, 0, 1, 1, 1], [0], [0]>} : vector<2x16x16xbf16>, vector<2x16x16xbf16>, vector<2x16x16xf32> -> vector<2x16x16xf32>
    %cst_25 = arith.constant dense<0xFF800000> : vector<2x16xf32>
    %51 = vector.multi_reduction <maximumf>, %50, %cst_25 [2] : vector<2x16x16xf32> to vector<2x16xf32>
    %52 = vector.shape_cast %51 : vector<2x16xf32> to vector<2x16x1xf32>
    %53 = vector.broadcast %52 : vector<2x16x1xf32> to vector<2x16x16xf32>
    %54 = arith.subf %50, %53 : vector<2x16x16xf32>
    %55 = math.exp %54 : vector<2x16x16xf32>
    %cst_26 = arith.constant dense<0.000000e+00> : vector<2x16xf32>
    %56 = vector.multi_reduction <add>, %55, %cst_26 [2] : vector<2x16x16xf32> to vector<2x16xf32>
    %57 = vector.shape_cast %56 : vector<2x16xf32> to vector<2x16x1xf32>
    %58 = tpu.reciprocal %57 {approx = true} : vector<2x16x1xf32> -> vector<2x16x1xf32>
    %59 = vector.broadcast %58 : vector<2x16x1xf32> to vector<2x16x16xf32>
    %60 = arith.mulf %55, %59 : vector<2x16x16xf32>
    %61 = arith.truncf %60 : vector<2x16x16xf32> to vector<2x16x16xbf16>
    %cst_27 = arith.constant dense<0.000000e+00> : vector<2x16x16xf32>
    %62 = tpu.matmul %61, %49, %cst_27 {dimension_numbers = #tpu.dot_dimension_numbers<[2], [1], [1], [2], [0, 0, 0, 1, 1, 2], [0], [0]>} : vector<2x16x16xbf16>, vector<2x16x16xbf16>, vector<2x16x16xf32> -> vector<2x16x16xf32>
    %63 = vector.extract_strided_slice %26 {offsets = [0, 0, 32], sizes = [2, 16, 16], strides = [1, 1, 1]} : vector<2x16x128xbf16> to vector<2x16x16xbf16>
    %64 = vector.extract_strided_slice %28 {offsets = [0, 0, 32], sizes = [2, 16, 16], strides = [1, 1, 1]} : vector<2x16x128xbf16> to vector<2x16x16xbf16>
    %65 = vector.extract_strided_slice %30 {offsets = [0, 0, 32], sizes = [2, 16, 16], strides = [1, 1, 1]} : vector<2x16x128xbf16> to vector<2x16x16xbf16>
    %cst_28 = arith.constant dense<0.000000e+00> : vector<2x16x16xf32>
    %66 = tpu.matmul %63, %64, %cst_28 {dimension_numbers = #tpu.dot_dimension_numbers<[2], [2], [1], [1], [0, 0, 0, 1, 1, 1], [0], [0]>} : vector<2x16x16xbf16>, vector<2x16x16xbf16>, vector<2x16x16xf32> -> vector<2x16x16xf32>
    %cst_29 = arith.constant dense<0xFF800000> : vector<2x16xf32>
    %67 = vector.multi_reduction <maximumf>, %66, %cst_29 [2] : vector<2x16x16xf32> to vector<2x16xf32>
    %68 = vector.shape_cast %67 : vector<2x16xf32> to vector<2x16x1xf32>
    %69 = vector.broadcast %68 : vector<2x16x1xf32> to vector<2x16x16xf32>
    %70 = arith.subf %66, %69 : vector<2x16x16xf32>
    %71 = math.exp %70 : vector<2x16x16xf32>
    %cst_30 = arith.constant dense<0.000000e+00> : vector<2x16xf32>
    %72 = vector.multi_reduction <add>, %71, %cst_30 [2] : vector<2x16x16xf32> to vector<2x16xf32>
    %73 = vector.shape_cast %72 : vector<2x16xf32> to vector<2x16x1xf32>
    %74 = tpu.reciprocal %73 {approx = true} : vector<2x16x1xf32> -> vector<2x16x1xf32>
    %75 = vector.broadcast %74 : vector<2x16x1xf32> to vector<2x16x16xf32>
    %76 = arith.mulf %71, %75 : vector<2x16x16xf32>
    %77 = arith.truncf %76 : vector<2x16x16xf32> to vector<2x16x16xbf16>
    %cst_31 = arith.constant dense<0.000000e+00> : vector<2x16x16xf32>
    %78 = tpu.matmul %77, %65, %cst_31 {dimension_numbers = #tpu.dot_dimension_numbers<[2], [1], [1], [2], [0, 0, 0, 1, 1, 2], [0], [0]>} : vector<2x16x16xbf16>, vector<2x16x16xbf16>, vector<2x16x16xf32> -> vector<2x16x16xf32>
    %79 = vector.extract_strided_slice %26 {offsets = [0, 0, 48], sizes = [2, 16, 16], strides = [1, 1, 1]} : vector<2x16x128xbf16> to vector<2x16x16xbf16>
    %80 = vector.extract_strided_slice %28 {offsets = [0, 0, 48], sizes = [2, 16, 16], strides = [1, 1, 1]} : vector<2x16x128xbf16> to vector<2x16x16xbf16>
    %81 = vector.extract_strided_slice %30 {offsets = [0, 0, 48], sizes = [2, 16, 16], strides = [1, 1, 1]} : vector<2x16x128xbf16> to vector<2x16x16xbf16>
    %cst_32 = arith.constant dense<0.000000e+00> : vector<2x16x16xf32>
    %82 = tpu.matmul %79, %80, %cst_32 {dimension_numbers = #tpu.dot_dimension_numbers<[2], [2], [1], [1], [0, 0, 0, 1, 1, 1], [0], [0]>} : vector<2x16x16xbf16>, vector<2x16x16xbf16>, vector<2x16x16xf32> -> vector<2x16x16xf32>
    %cst_33 = arith.constant dense<0xFF800000> : vector<2x16xf32>
    %83 = vector.multi_reduction <maximumf>, %82, %cst_33 [2] : vector<2x16x16xf32> to vector<2x16xf32>
    %84 = vector.shape_cast %83 : vector<2x16xf32> to vector<2x16x1xf32>
    %85 = vector.broadcast %84 : vector<2x16x1xf32> to vector<2x16x16xf32>
    %86 = arith.subf %82, %85 : vector<2x16x16xf32>
    %87 = math.exp %86 : vector<2x16x16xf32>
    %cst_34 = arith.constant dense<0.000000e+00> : vector<2x16xf32>
    %88 = vector.multi_reduction <add>, %87, %cst_34 [2] : vector<2x16x16xf32> to vector<2x16xf32>
    %89 = vector.shape_cast %88 : vector<2x16xf32> to vector<2x16x1xf32>
    %90 = tpu.reciprocal %89 {approx = true} : vector<2x16x1xf32> -> vector<2x16x1xf32>
    %91 = vector.broadcast %90 : vector<2x16x1xf32> to vector<2x16x16xf32>
    %92 = arith.mulf %87, %91 : vector<2x16x16xf32>
    %93 = arith.truncf %92 : vector<2x16x16xf32> to vector<2x16x16xbf16>
    %cst_35 = arith.constant dense<0.000000e+00> : vector<2x16x16xf32>
    %94 = tpu.matmul %93, %81, %cst_35 {dimension_numbers = #tpu.dot_dimension_numbers<[2], [1], [1], [2], [0, 0, 0, 1, 1, 2], [0], [0]>} : vector<2x16x16xbf16>, vector<2x16x16xbf16>, vector<2x16x16xf32> -> vector<2x16x16xf32>
    %95 = vector.extract_strided_slice %26 {offsets = [0, 0, 64], sizes = [2, 16, 16], strides = [1, 1, 1]} : vector<2x16x128xbf16> to vector<2x16x16xbf16>
    %96 = vector.extract_strided_slice %28 {offsets = [0, 0, 64], sizes = [2, 16, 16], strides = [1, 1, 1]} : vector<2x16x128xbf16> to vector<2x16x16xbf16>
    %97 = vector.extract_strided_slice %30 {offsets = [0, 0, 64], sizes = [2, 16, 16], strides = [1, 1, 1]} : vector<2x16x128xbf16> to vector<2x16x16xbf16>
    %cst_36 = arith.constant dense<0.000000e+00> : vector<2x16x16xf32>
    %98 = tpu.matmul %95, %96, %cst_36 {dimension_numbers = #tpu.dot_dimension_numbers<[2], [2], [1], [1], [0, 0, 0, 1, 1, 1], [0], [0]>} : vector<2x16x16xbf16>, vector<2x16x16xbf16>, vector<2x16x16xf32> -> vector<2x16x16xf32>
    %cst_37 = arith.constant dense<0xFF800000> : vector<2x16xf32>
    %99 = vector.multi_reduction <maximumf>, %98, %cst_37 [2] : vector<2x16x16xf32> to vector<2x16xf32>
    %100 = vector.shape_cast %99 : vector<2x16xf32> to vector<2x16x1xf32>
    %101 = vector.broadcast %100 : vector<2x16x1xf32> to vector<2x16x16xf32>
    %102 = arith.subf %98, %101 : vector<2x16x16xf32>
    %103 = math.exp %102 : vector<2x16x16xf32>
    %cst_38 = arith.constant dense<0.000000e+00> : vector<2x16xf32>
    %104 = vector.multi_reduction <add>, %103, %cst_38 [2] : vector<2x16x16xf32> to vector<2x16xf32>
    %105 = vector.shape_cast %104 : vector<2x16xf32> to vector<2x16x1xf32>
    %106 = tpu.reciprocal %105 {approx = true} : vector<2x16x1xf32> -> vector<2x16x1xf32>
    %107 = vector.broadcast %106 : vector<2x16x1xf32> to vector<2x16x16xf32>
    %108 = arith.mulf %103, %107 : vector<2x16x16xf32>
    %109 = arith.truncf %108 : vector<2x16x16xf32> to vector<2x16x16xbf16>
    %cst_39 = arith.constant dense<0.000000e+00> : vector<2x16x16xf32>
    %110 = tpu.matmul %109, %97, %cst_39 {dimension_numbers = #tpu.dot_dimension_numbers<[2], [1], [1], [2], [0, 0, 0, 1, 1, 2], [0], [0]>} : vector<2x16x16xbf16>, vector<2x16x16xbf16>, vector<2x16x16xf32> -> vector<2x16x16xf32>
    %111 = vector.extract_strided_slice %26 {offsets = [0, 0, 80], sizes = [2, 16, 16], strides = [1, 1, 1]} : vector<2x16x128xbf16> to vector<2x16x16xbf16>
    %112 = vector.extract_strided_slice %28 {offsets = [0, 0, 80], sizes = [2, 16, 16], strides = [1, 1, 1]} : vector<2x16x128xbf16> to vector<2x16x16xbf16>
    %113 = vector.extract_strided_slice %30 {offsets = [0, 0, 80], sizes = [2, 16, 16], strides = [1, 1, 1]} : vector<2x16x128xbf16> to vector<2x16x16xbf16>
    %cst_40 = arith.constant dense<0.000000e+00> : vector<2x16x16xf32>
    %114 = tpu.matmul %111, %112, %cst_40 {dimension_numbers = #tpu.dot_dimension_numbers<[2], [2], [1], [1], [0, 0, 0, 1, 1, 1], [0], [0]>} : vector<2x16x16xbf16>, vector<2x16x16xbf16>, vector<2x16x16xf32> -> vector<2x16x16xf32>
    %cst_41 = arith.constant dense<0xFF800000> : vector<2x16xf32>
    %115 = vector.multi_reduction <maximumf>, %114, %cst_41 [2] : vector<2x16x16xf32> to vector<2x16xf32>
    %116 = vector.shape_cast %115 : vector<2x16xf32> to vector<2x16x1xf32>
    %117 = vector.broadcast %116 : vector<2x16x1xf32> to vector<2x16x16xf32>
    %118 = arith.subf %114, %117 : vector<2x16x16xf32>
    %119 = math.exp %118 : vector<2x16x16xf32>
    %cst_42 = arith.constant dense<0.000000e+00> : vector<2x16xf32>
    %120 = vector.multi_reduction <add>, %119, %cst_42 [2] : vector<2x16x16xf32> to vector<2x16xf32>
    %121 = vector.shape_cast %120 : vector<2x16xf32> to vector<2x16x1xf32>
    %122 = tpu.reciprocal %121 {approx = true} : vector<2x16x1xf32> -> vector<2x16x1xf32>
    %123 = vector.broadcast %122 : vector<2x16x1xf32> to vector<2x16x16xf32>
    %124 = arith.mulf %119, %123 : vector<2x16x16xf32>
    %125 = arith.truncf %124 : vector<2x16x16xf32> to vector<2x16x16xbf16>
    %cst_43 = arith.constant dense<0.000000e+00> : vector<2x16x16xf32>
    %126 = tpu.matmul %125, %113, %cst_43 {dimension_numbers = #tpu.dot_dimension_numbers<[2], [1], [1], [2], [0, 0, 0, 1, 1, 2], [0], [0]>} : vector<2x16x16xbf16>, vector<2x16x16xbf16>, vector<2x16x16xf32> -> vector<2x16x16xf32>
    %127 = vector.extract_strided_slice %26 {offsets = [0, 0, 96], sizes = [2, 16, 16], strides = [1, 1, 1]} : vector<2x16x128xbf16> to vector<2x16x16xbf16>
    %128 = vector.extract_strided_slice %28 {offsets = [0, 0, 96], sizes = [2, 16, 16], strides = [1, 1, 1]} : vector<2x16x128xbf16> to vector<2x16x16xbf16>
    %129 = vector.extract_strided_slice %30 {offsets = [0, 0, 96], sizes = [2, 16, 16], strides = [1, 1, 1]} : vector<2x16x128xbf16> to vector<2x16x16xbf16>
    %cst_44 = arith.constant dense<0.000000e+00> : vector<2x16x16xf32>
    %130 = tpu.matmul %127, %128, %cst_44 {dimension_numbers = #tpu.dot_dimension_numbers<[2], [2], [1], [1], [0, 0, 0, 1, 1, 1], [0], [0]>} : vector<2x16x16xbf16>, vector<2x16x16xbf16>, vector<2x16x16xf32> -> vector<2x16x16xf32>
    %cst_45 = arith.constant dense<0xFF800000> : vector<2x16xf32>
    %131 = vector.multi_reduction <maximumf>, %130, %cst_45 [2] : vector<2x16x16xf32> to vector<2x16xf32>
    %132 = vector.shape_cast %131 : vector<2x16xf32> to vector<2x16x1xf32>
    %133 = vector.broadcast %132 : vector<2x16x1xf32> to vector<2x16x16xf32>
    %134 = arith.subf %130, %133 : vector<2x16x16xf32>
    %135 = math.exp %134 : vector<2x16x16xf32>
    %cst_46 = arith.constant dense<0.000000e+00> : vector<2x16xf32>
    %136 = vector.multi_reduction <add>, %135, %cst_46 [2] : vector<2x16x16xf32> to vector<2x16xf32>
    %137 = vector.shape_cast %136 : vector<2x16xf32> to vector<2x16x1xf32>
    %138 = tpu.reciprocal %137 {approx = true} : vector<2x16x1xf32> -> vector<2x16x1xf32>
    %139 = vector.broadcast %138 : vector<2x16x1xf32> to vector<2x16x16xf32>
    %140 = arith.mulf %135, %139 : vector<2x16x16xf32>
    %141 = arith.truncf %140 : vector<2x16x16xf32> to vector<2x16x16xbf16>
    %cst_47 = arith.constant dense<0.000000e+00> : vector<2x16x16xf32>
    %142 = tpu.matmul %141, %129, %cst_47 {dimension_numbers = #tpu.dot_dimension_numbers<[2], [1], [1], [2], [0, 0, 0, 1, 1, 2], [0], [0]>} : vector<2x16x16xbf16>, vector<2x16x16xbf16>, vector<2x16x16xf32> -> vector<2x16x16xf32>
    %143 = vector.extract_strided_slice %26 {offsets = [0, 0, 112], sizes = [2, 16, 16], strides = [1, 1, 1]} : vector<2x16x128xbf16> to vector<2x16x16xbf16>
    %144 = vector.extract_strided_slice %28 {offsets = [0, 0, 112], sizes = [2, 16, 16], strides = [1, 1, 1]} : vector<2x16x128xbf16> to vector<2x16x16xbf16>
    %145 = vector.extract_strided_slice %30 {offsets = [0, 0, 112], sizes = [2, 16, 16], strides = [1, 1, 1]} : vector<2x16x128xbf16> to vector<2x16x16xbf16>
    %cst_48 = arith.constant dense<0.000000e+00> : vector<2x16x16xf32>
    %146 = tpu.matmul %143, %144, %cst_48 {dimension_numbers = #tpu.dot_dimension_numbers<[2], [2], [1], [1], [0, 0, 0, 1, 1, 1], [0], [0]>} : vector<2x16x16xbf16>, vector<2x16x16xbf16>, vector<2x16x16xf32> -> vector<2x16x16xf32>
    %cst_49 = arith.constant dense<0xFF800000> : vector<2x16xf32>
    %147 = vector.multi_reduction <maximumf>, %146, %cst_49 [2] : vector<2x16x16xf32> to vector<2x16xf32>
    %148 = vector.shape_cast %147 : vector<2x16xf32> to vector<2x16x1xf32>
    %149 = vector.broadcast %148 : vector<2x16x1xf32> to vector<2x16x16xf32>
    %150 = arith.subf %146, %149 : vector<2x16x16xf32>
    %151 = math.exp %150 : vector<2x16x16xf32>
    %cst_50 = arith.constant dense<0.000000e+00> : vector<2x16xf32>
    %152 = vector.multi_reduction <add>, %151, %cst_50 [2] : vector<2x16x16xf32> to vector<2x16xf32>
    %153 = vector.shape_cast %152 : vector<2x16xf32> to vector<2x16x1xf32>
    %154 = tpu.reciprocal %153 {approx = true} : vector<2x16x1xf32> -> vector<2x16x1xf32>
    %155 = vector.broadcast %154 : vector<2x16x1xf32> to vector<2x16x16xf32>
    %156 = arith.mulf %151, %155 : vector<2x16x16xf32>
    %157 = arith.truncf %156 : vector<2x16x16xf32> to vector<2x16x16xbf16>
    %cst_51 = arith.constant dense<0.000000e+00> : vector<2x16x16xf32>
    %158 = tpu.matmul %157, %145, %cst_51 {dimension_numbers = #tpu.dot_dimension_numbers<[2], [1], [1], [2], [0, 0, 0, 1, 1, 2], [0], [0]>} : vector<2x16x16xbf16>, vector<2x16x16xbf16>, vector<2x16x16xf32> -> vector<2x16x16xf32>
    %159 = tpu.concatenate %46, %62, %78, %94, %110, %126, %142, %158 in 2 : vector<2x16x16xf32>, vector<2x16x16xf32>, vector<2x16x16xf32>, vector<2x16x16xf32>, vector<2x16x16xf32>, vector<2x16x16xf32>, vector<2x16x16xf32>, vector<2x16x16xf32> -> vector<2x16x128xf32>
    %160 = vector.shape_cast %159 : vector<2x16x128xf32> to vector<32x128xf32>
    %161 = arith.truncf %160 : vector<32x128xf32> to vector<32x128xbf16>
    %c0_52 = arith.constant 0 : index
    %c0_53 = arith.constant 0 : index
    %162 = vector.load %arg10[%c0_52, %c0_53] : memref<128x128xbf16, #tpu.memory_space<vmem>>, vector<128x128xbf16>
    %cst_54 = arith.constant dense<0.000000e+00> : vector<32x128xf32>
    %163 = tpu.matmul %161, %162, %cst_54 {dimension_numbers = #tpu.dot_dimension_numbers<[1], [0], [0], [1], [0, 0, 1, 1], [], []>} : vector<32x128xbf16>, vector<128x128xbf16>, vector<32x128xf32> -> vector<32x128xf32>
    %c0_55 = arith.constant 0 : index
    %c0_56 = arith.constant 0 : index
    %164 = vector.load %arg11[%c0_55, %c0_56] : memref<1x128xf32, #tpu.memory_space<vmem>>, vector<1x128xf32>
    %165 = vector.broadcast %164 : vector<1x128xf32> to vector<32x128xf32>
    %166 = arith.addf %163, %165 : vector<32x128xf32>
    %167 = arith.addf %8, %166 : vector<32x128xf32>
    %168 = vector.shape_cast %167 : vector<32x128xf32> to vector<2x16x128xf32>
    %169 = arith.truncf %168 : vector<2x16x128xf32> to vector<2x16x128xbf16>
    %c0_57 = arith.constant 0 : index
    %c0_58 = arith.constant 0 : index
    %c0_59 = arith.constant 0 : index
    %170 = vector.load %arg12[%c0_57, %c0_58, %c0_59] : memref<2x16x128xbf16, #tpu.memory_space<vmem>>, vector<2x16x128xbf16>
    tpu.vector_store %arg12[%c0_57, %c0_58, %c0_59], %169 {strides = array<i32>} : memref<2x16x128xbf16, #tpu.memory_space<vmem>>, vector<2x16x128xbf16>,
    %cst_60 = arith.constant dense<0.000000e+00> : vector<128xf32>
    %171 = vector.multi_reduction <add>, %167, %cst_60 [0] : vector<32x128xf32> to vector<128xf32>
    %172 = vector.shape_cast %171 : vector<128xf32> to vector<1x128xf32>
    %173 = vector.shape_cast %172 : vector<1x128xf32> to vector<1x1x128xf32>
    %c0_61 = arith.constant 0 : index
    %c0_62 = arith.constant 0 : index
    %c0_63 = arith.constant 0 : index
    %174 = vector.load %arg13[%c0_61, %c0_62, %c0_63] : memref<1x2x128xf32, #tpu.memory_space<vmem>>, vector<1x1x128xf32>
    tpu.vector_store %arg13[%c0_61, %c0_62, %c0_63], %173 {strides = array<i32>} : memref<1x2x128xf32, #tpu.memory_space<vmem>>, vector<1x1x128xf32>,
    %175 = arith.mulf %167, %167 : vector<32x128xf32>
    %cst_64 = arith.constant dense<0.000000e+00> : vector<128xf32>
    %176 = vector.multi_reduction <add>, %175, %cst_64 [0] : vector<32x128xf32> to vector<128xf32>
    %177 = vector.shape_cast %176 : vector<128xf32> to vector<1x128xf32>
    %178 = vector.shape_cast %177 : vector<1x128xf32> to vector<1x1x128xf32>
    %c0_65 = arith.constant 0 : index
    %c1 = arith.constant 1 : index
    %c0_66 = arith.constant 0 : index
    %179 = vector.load %arg13[%c0_65, %c1, %c0_66] : memref<1x2x128xf32, #tpu.memory_space<vmem>>, vector<1x1x128xf32>
    tpu.vector_store %arg13[%c0_65, %c1, %c0_66], %178 {strides = array<i32>} : memref<1x2x128xf32, #tpu.memory_space<vmem>>, vector<1x1x128xf32>,
    return
  }
  func.func @transform_0(%arg0: i32) -> (i32, i32, i32) {
    %c0_i32 = arith.constant 0 : i32
    %c0_i32_0 = arith.constant 0 : i32
    %c0_i32_1 = arith.constant 0 : i32
    return %arg0, %c0_i32, %c0_i32_0 : i32, i32, i32
  }
  func.func @transform_1(%arg0: i32) -> (i32, i32) {
    %c0_i32 = arith.constant 0 : i32
    %c0_i32_0 = arith.constant 0 : i32
    %c0_i32_1 = arith.constant 0 : i32
    return %c0_i32, %c0_i32_0 : i32, i32
  }
  func.func @transform_2(%arg0: i32) -> (i32, i32) {
    %c0_i32 = arith.constant 0 : i32
    %c0_i32_0 = arith.constant 0 : i32
    %c0_i32_1 = arith.constant 0 : i32
    return %c0_i32, %c0_i32_0 : i32, i32
  }
  func.func @transform_3(%arg0: i32) -> (i32, i32) {
    %c0_i32 = arith.constant 0 : i32
    %c0_i32_0 = arith.constant 0 : i32
    %c0_i32_1 = arith.constant 0 : i32
    return %c0_i32, %c0_i32_0 : i32, i32
  }
  func.func @transform_4(%arg0: i32) -> (i32, i32) {
    %c0_i32 = arith.constant 0 : i32
    %c0_i32_0 = arith.constant 0 : i32
    %c0_i32_1 = arith.constant 0 : i32
    return %c0_i32, %c0_i32_0 : i32, i32
  }
  func.func @transform_5(%arg0: i32) -> (i32, i32) {
    %c0_i32 = arith.constant 0 : i32
    %c0_i32_0 = arith.constant 0 : i32
    %c0_i32_1 = arith.constant 0 : i32
    return %c0_i32, %c0_i32_0 : i32, i32
  }
  func.func @transform_6(%arg0: i32) -> (i32, i32) {
    %c0_i32 = arith.constant 0 : i32
    %c0_i32_0 = arith.constant 0 : i32
    %c0_i32_1 = arith.constant 0 : i32
    return %c0_i32, %c0_i32_0 : i32, i32
  }
  func.func @transform_7(%arg0: i32) -> (i32, i32) {
    %c0_i32 = arith.constant 0 : i32
    %c0_i32_0 = arith.constant 0 : i32
    %c0_i32_1 = arith.constant 0 : i32
    return %c0_i32, %c0_i32_0 : i32, i32
  }
  func.func @transform_8(%arg0: i32) -> (i32, i32) {
    %c0_i32 = arith.constant 0 : i32
    %c0_i32_0 = arith.constant 0 : i32
    %c0_i32_1 = arith.constant 0 : i32
    return %c0_i32, %c0_i32_0 : i32, i32
  }
  func.func @transform_9(%arg0: i32) -> (i32, i32) {
    %c0_i32 = arith.constant 0 : i32
    %c0_i32_0 = arith.constant 0 : i32
    %c0_i32_1 = arith.constant 0 : i32
    return %c0_i32, %c0_i32_0 : i32, i32
  }
  func.func @transform_10(%arg0: i32) -> (i32, i32) {
    %c0_i32 = arith.constant 0 : i32
    %c0_i32_0 = arith.constant 0 : i32
    %c0_i32_1 = arith.constant 0 : i32
    return %c0_i32, %c0_i32_0 : i32, i32
  }
  func.func @transform_11(%arg0: i32) -> (i32, i32, i32) {
    %c0_i32 = arith.constant 0 : i32
    %c0_i32_0 = arith.constant 0 : i32
    %c0_i32_1 = arith.constant 0 : i32
    return %arg0, %c0_i32, %c0_i32_0 : i32, i32, i32
  }
  func.func @transform_12(%arg0: i32) -> (i32, i32, i32) {
    %c0_i32 = arith.constant 0 : i32
    %c0_i32_0 = arith.constant 0 : i32
    %c0_i32_1 = arith.constant 0 : i32
    return %arg0, %c0_i32, %c0_i32_0 : i32, i32, i32
  }
}

module attributes {stable_mosaic.version = 11 : i64} {
  func.func @_ffn_kernel(%arg0: i32, %arg1: memref<32x128xbf16, #tpu.memory_space<vmem>>, %arg2: memref<1x128xf32, #tpu.memory_space<vmem>>, %arg3: memref<1x128xf32, #tpu.memory_space<vmem>>, %arg4: memref<128x512xbf16, #tpu.memory_space<vmem>>, %arg5: memref<1x512xf32, #tpu.memory_space<vmem>>, %arg6: memref<512x128xbf16, #tpu.memory_space<vmem>>, %arg7: memref<1x128xf32, #tpu.memory_space<vmem>>, %arg8: memref<32x128xbf16, #tpu.memory_space<vmem>>, %arg9: memref<1x2x128xf32, #tpu.memory_space<vmem>>) attributes {dimension_semantics = [#tpu.dimension_semantics<parallel>], iteration_bounds = array<i64: 1>, scalar_prefetch = 0 : i64, scratch_operands = 0 : i64, tpu.core_type = #tpu.core_type<tc>, window_params = [{transform_indices = @transform_0, window_bounds = array<i64: 32, 128>}, {pipeline_mode = #tpu.pipeline_mode<synchronous>, transform_indices = @transform_1, window_bounds = array<i64: 1, 128>}, {pipeline_mode = #tpu.pipeline_mode<synchronous>, transform_indices = @transform_2, window_bounds = array<i64: 1, 128>}, {pipeline_mode = #tpu.pipeline_mode<synchronous>, transform_indices = @transform_3, window_bounds = array<i64: 128, 512>}, {pipeline_mode = #tpu.pipeline_mode<synchronous>, transform_indices = @transform_4, window_bounds = array<i64: 1, 512>}, {pipeline_mode = #tpu.pipeline_mode<synchronous>, transform_indices = @transform_5, window_bounds = array<i64: 512, 128>}, {pipeline_mode = #tpu.pipeline_mode<synchronous>, transform_indices = @transform_6, window_bounds = array<i64: 1, 128>}, {transform_indices = @transform_7, window_bounds = array<i64: 32, 128>}, {transform_indices = @transform_8, window_bounds = array<i64: 1, 2, 128>}]} {
    %c0 = arith.constant 0 : index
    %c0_0 = arith.constant 0 : index
    %0 = vector.load %arg1[%c0, %c0_0] : memref<32x128xbf16, #tpu.memory_space<vmem>>, vector<32x128xbf16>
    %1 = arith.extf %0 : vector<32x128xbf16> to vector<32x128xf32>
    %c0_1 = arith.constant 0 : index
    %c0_2 = arith.constant 0 : index
    %2 = vector.load %arg2[%c0_1, %c0_2] : memref<1x128xf32, #tpu.memory_space<vmem>>, vector<1x128xf32>
    %3 = vector.broadcast %2 : vector<1x128xf32> to vector<32x128xf32>
    %4 = arith.mulf %1, %3 : vector<32x128xf32>
    %c0_3 = arith.constant 0 : index
    %c0_4 = arith.constant 0 : index
    %5 = vector.load %arg3[%c0_3, %c0_4] : memref<1x128xf32, #tpu.memory_space<vmem>>, vector<1x128xf32>
    %6 = vector.broadcast %5 : vector<1x128xf32> to vector<32x128xf32>
    %7 = arith.addf %4, %6 : vector<32x128xf32>
    %8 = arith.truncf %7 : vector<32x128xf32> to vector<32x128xbf16>
    %c0_5 = arith.constant 0 : index
    %c0_6 = arith.constant 0 : index
    %9 = vector.load %arg4[%c0_5, %c0_6] : memref<128x512xbf16, #tpu.memory_space<vmem>>, vector<128x512xbf16>
    %cst = arith.constant dense<0.000000e+00> : vector<32x512xf32>
    %10 = tpu.matmul %8, %9, %cst {dimension_numbers = #tpu.dot_dimension_numbers<[1], [0], [0], [1], [0, 0, 1, 1], [], []>} : vector<32x128xbf16>, vector<128x512xbf16>, vector<32x512xf32> -> vector<32x512xf32>
    %c0_7 = arith.constant 0 : index
    %c0_8 = arith.constant 0 : index
    %11 = vector.load %arg5[%c0_7, %c0_8] : memref<1x512xf32, #tpu.memory_space<vmem>>, vector<1x512xf32>
    %12 = vector.broadcast %11 : vector<1x512xf32> to vector<32x512xf32>
    %13 = arith.addf %10, %12 : vector<32x512xf32>
    %cst_9 = arith.constant 0.000000e+00 : f32
    %14 = vector.broadcast %cst_9 : f32 to vector<32x512xf32>
    %15 = arith.maximumf %13, %14 : vector<32x512xf32>
    %16 = arith.truncf %15 : vector<32x512xf32> to vector<32x512xbf16>
    %c0_10 = arith.constant 0 : index
    %c0_11 = arith.constant 0 : index
    %17 = vector.load %arg6[%c0_10, %c0_11] : memref<512x128xbf16, #tpu.memory_space<vmem>>, vector<512x128xbf16>
    %cst_12 = arith.constant dense<0.000000e+00> : vector<32x128xf32>
    %18 = tpu.matmul %16, %17, %cst_12 {dimension_numbers = #tpu.dot_dimension_numbers<[1], [0], [0], [1], [0, 0, 1, 1], [], []>} : vector<32x512xbf16>, vector<512x128xbf16>, vector<32x128xf32> -> vector<32x128xf32>
    %c0_13 = arith.constant 0 : index
    %c0_14 = arith.constant 0 : index
    %19 = vector.load %arg7[%c0_13, %c0_14] : memref<1x128xf32, #tpu.memory_space<vmem>>, vector<1x128xf32>
    %20 = vector.broadcast %19 : vector<1x128xf32> to vector<32x128xf32>
    %21 = arith.addf %18, %20 : vector<32x128xf32>
    %22 = arith.addf %7, %21 : vector<32x128xf32>
    %23 = arith.truncf %22 : vector<32x128xf32> to vector<32x128xbf16>
    %c0_15 = arith.constant 0 : index
    %c0_16 = arith.constant 0 : index
    %24 = vector.load %arg8[%c0_15, %c0_16] : memref<32x128xbf16, #tpu.memory_space<vmem>>, vector<32x128xbf16>
    tpu.vector_store %arg8[%c0_15, %c0_16], %23 {strides = array<i32>} : memref<32x128xbf16, #tpu.memory_space<vmem>>, vector<32x128xbf16>,
    %c32_i32 = arith.constant 32 : i32
    %25 = arith.muli %arg0, %c32_i32 : i32
    %26 = tpu.iota {dimensions = array<i32: 0>} : vector<32x128xi32>
    %27 = vector.broadcast %25 : i32 to vector<32x128xi32>
    %28 = arith.addi %27, %26 : vector<32x128xi32>
    %c32_i32_17 = arith.constant 32 : i32
    %29 = vector.broadcast %c32_i32_17 : i32 to vector<32x128xi32>
    %30 = arith.cmpi slt, %28, %29 : vector<32x128xi32>
    %cst_18 = arith.constant 0.000000e+00 : f32
    %31 = vector.broadcast %cst_18 : f32 to vector<32x128xf32>
    %32 = arith.select %30, %22, %31 : vector<32x128xi1>, vector<32x128xf32>
    %cst_19 = arith.constant dense<0.000000e+00> : vector<128xf32>
    %33 = vector.multi_reduction <add>, %32, %cst_19 [0] : vector<32x128xf32> to vector<128xf32>
    %34 = vector.shape_cast %33 : vector<128xf32> to vector<1x128xf32>
    %35 = vector.shape_cast %34 : vector<1x128xf32> to vector<1x1x128xf32>
    %c0_20 = arith.constant 0 : index
    %c0_21 = arith.constant 0 : index
    %c0_22 = arith.constant 0 : index
    %36 = vector.load %arg9[%c0_20, %c0_21, %c0_22] : memref<1x2x128xf32, #tpu.memory_space<vmem>>, vector<1x1x128xf32>
    tpu.vector_store %arg9[%c0_20, %c0_21, %c0_22], %35 {strides = array<i32>} : memref<1x2x128xf32, #tpu.memory_space<vmem>>, vector<1x1x128xf32>,
    %37 = arith.mulf %32, %32 : vector<32x128xf32>
    %cst_23 = arith.constant dense<0.000000e+00> : vector<128xf32>
    %38 = vector.multi_reduction <add>, %37, %cst_23 [0] : vector<32x128xf32> to vector<128xf32>
    %39 = vector.shape_cast %38 : vector<128xf32> to vector<1x128xf32>
    %40 = vector.shape_cast %39 : vector<1x128xf32> to vector<1x1x128xf32>
    %c0_24 = arith.constant 0 : index
    %c1 = arith.constant 1 : index
    %c0_25 = arith.constant 0 : index
    %41 = vector.load %arg9[%c0_24, %c1, %c0_25] : memref<1x2x128xf32, #tpu.memory_space<vmem>>, vector<1x1x128xf32>
    tpu.vector_store %arg9[%c0_24, %c1, %c0_25], %40 {strides = array<i32>} : memref<1x2x128xf32, #tpu.memory_space<vmem>>, vector<1x1x128xf32>,
    return
  }
  func.func @transform_0(%arg0: i32) -> (i32, i32) {
    %c0_i32 = arith.constant 0 : i32
    %c0_i32_0 = arith.constant 0 : i32
    return %arg0, %c0_i32 : i32, i32
  }
  func.func @transform_1(%arg0: i32) -> (i32, i32) {
    %c0_i32 = arith.constant 0 : i32
    %c0_i32_0 = arith.constant 0 : i32
    %c0_i32_1 = arith.constant 0 : i32
    return %c0_i32, %c0_i32_0 : i32, i32
  }
  func.func @transform_2(%arg0: i32) -> (i32, i32) {
    %c0_i32 = arith.constant 0 : i32
    %c0_i32_0 = arith.constant 0 : i32
    %c0_i32_1 = arith.constant 0 : i32
    return %c0_i32, %c0_i32_0 : i32, i32
  }
  func.func @transform_3(%arg0: i32) -> (i32, i32) {
    %c0_i32 = arith.constant 0 : i32
    %c0_i32_0 = arith.constant 0 : i32
    %c0_i32_1 = arith.constant 0 : i32
    return %c0_i32, %c0_i32_0 : i32, i32
  }
  func.func @transform_4(%arg0: i32) -> (i32, i32) {
    %c0_i32 = arith.constant 0 : i32
    %c0_i32_0 = arith.constant 0 : i32
    %c0_i32_1 = arith.constant 0 : i32
    return %c0_i32, %c0_i32_0 : i32, i32
  }
  func.func @transform_5(%arg0: i32) -> (i32, i32) {
    %c0_i32 = arith.constant 0 : i32
    %c0_i32_0 = arith.constant 0 : i32
    %c0_i32_1 = arith.constant 0 : i32
    return %c0_i32, %c0_i32_0 : i32, i32
  }
  func.func @transform_6(%arg0: i32) -> (i32, i32) {
    %c0_i32 = arith.constant 0 : i32
    %c0_i32_0 = arith.constant 0 : i32
    %c0_i32_1 = arith.constant 0 : i32
    return %c0_i32, %c0_i32_0 : i32, i32
  }
  func.func @transform_7(%arg0: i32) -> (i32, i32) {
    %c0_i32 = arith.constant 0 : i32
    %c0_i32_0 = arith.constant 0 : i32
    return %arg0, %c0_i32 : i32, i32
  }
  func.func @transform_8(%arg0: i32) -> (i32, i32, i32) {
    %c0_i32 = arith.constant 0 : i32
    %c0_i32_0 = arith.constant 0 : i32
    %c0_i32_1 = arith.constant 0 : i32
    return %arg0, %c0_i32, %c0_i32_0 : i32, i32, i32
  }
}

module attributes {stable_mosaic.version = 11 : i64} {
  func.func @_mha_kernel(%arg0: i32, %arg1: memref<2x16x128xbf16, #tpu.memory_space<vmem>>, %arg2: memref<1x128xf32, #tpu.memory_space<vmem>>, %arg3: memref<1x128xf32, #tpu.memory_space<vmem>>, %arg4: memref<128x128xbf16, #tpu.memory_space<vmem>>, %arg5: memref<128x128xbf16, #tpu.memory_space<vmem>>, %arg6: memref<128x128xbf16, #tpu.memory_space<vmem>>, %arg7: memref<1x128xf32, #tpu.memory_space<vmem>>, %arg8: memref<1x128xf32, #tpu.memory_space<vmem>>, %arg9: memref<1x128xf32, #tpu.memory_space<vmem>>, %arg10: memref<128x128xbf16, #tpu.memory_space<vmem>>, %arg11: memref<1x128xf32, #tpu.memory_space<vmem>>, %arg12: memref<2x16x128xbf16, #tpu.memory_space<vmem>>, %arg13: memref<1x2x128xf32, #tpu.memory_space<vmem>>) attributes {dimension_semantics = [#tpu.dimension_semantics<parallel>], iteration_bounds = array<i64: 1>, scalar_prefetch = 0 : i64, scratch_operands = 0 : i64, tpu.core_type = #tpu.core_type<tc>, window_params = [{transform_indices = @transform_0, window_bounds = array<i64: 2, 16, 128>}, {pipeline_mode = #tpu.pipeline_mode<synchronous>, transform_indices = @transform_1, window_bounds = array<i64: 1, 128>}, {pipeline_mode = #tpu.pipeline_mode<synchronous>, transform_indices = @transform_2, window_bounds = array<i64: 1, 128>}, {pipeline_mode = #tpu.pipeline_mode<synchronous>, transform_indices = @transform_3, window_bounds = array<i64: 128, 128>}, {pipeline_mode = #tpu.pipeline_mode<synchronous>, transform_indices = @transform_4, window_bounds = array<i64: 128, 128>}, {pipeline_mode = #tpu.pipeline_mode<synchronous>, transform_indices = @transform_5, window_bounds = array<i64: 128, 128>}, {pipeline_mode = #tpu.pipeline_mode<synchronous>, transform_indices = @transform_6, window_bounds = array<i64: 1, 128>}, {pipeline_mode = #tpu.pipeline_mode<synchronous>, transform_indices = @transform_7, window_bounds = array<i64: 1, 128>}, {pipeline_mode = #tpu.pipeline_mode<synchronous>, transform_indices = @transform_8, window_bounds = array<i64: 1, 128>}, {pipeline_mode = #tpu.pipeline_mode<synchronous>, transform_indices = @transform_9, window_bounds = array<i64: 128, 128>}, {pipeline_mode = #tpu.pipeline_mode<synchronous>, transform_indices = @transform_10, window_bounds = array<i64: 1, 128>}, {transform_indices = @transform_11, window_bounds = array<i64: 2, 16, 128>}, {transform_indices = @transform_12, window_bounds = array<i64: 1, 2, 128>}]} {
    %c0 = arith.constant 0 : index
    %c0_0 = arith.constant 0 : index
    %c0_1 = arith.constant 0 : index
    %0 = vector.load %arg1[%c0, %c0_0, %c0_1] : memref<2x16x128xbf16, #tpu.memory_space<vmem>>, vector<2x16x128xbf16>
    %1 = vector.shape_cast %0 : vector<2x16x128xbf16> to vector<32x128xbf16>
    %2 = arith.extf %1 : vector<32x128xbf16> to vector<32x128xf32>
    %c0_2 = arith.constant 0 : index
    %c0_3 = arith.constant 0 : index
    %3 = vector.load %arg2[%c0_2, %c0_3] : memref<1x128xf32, #tpu.memory_space<vmem>>, vector<1x128xf32>
    %4 = vector.broadcast %3 : vector<1x128xf32> to vector<32x128xf32>
    %5 = arith.mulf %2, %4 : vector<32x128xf32>
    %c0_4 = arith.constant 0 : index
    %c0_5 = arith.constant 0 : index
    %6 = vector.load %arg3[%c0_4, %c0_5] : memref<1x128xf32, #tpu.memory_space<vmem>>, vector<1x128xf32>
    %7 = vector.broadcast %6 : vector<1x128xf32> to vector<32x128xf32>
    %8 = arith.addf %5, %7 : vector<32x128xf32>
    %9 = arith.truncf %8 : vector<32x128xf32> to vector<32x128xbf16>
    %c0_6 = arith.constant 0 : index
    %c0_7 = arith.constant 0 : index
    %10 = vector.load %arg4[%c0_6, %c0_7] : memref<128x128xbf16, #tpu.memory_space<vmem>>, vector<128x128xbf16>
    %cst = arith.constant dense<0.000000e+00> : vector<32x128xf32>
    %11 = tpu.matmul %9, %10, %cst {dimension_numbers = #tpu.dot_dimension_numbers<[1], [0], [0], [1], [0, 0, 1, 1], [], []>} : vector<32x128xbf16>, vector<128x128xbf16>, vector<32x128xf32> -> vector<32x128xf32>
    %c0_8 = arith.constant 0 : index
    %c0_9 = arith.constant 0 : index
    %12 = vector.load %arg7[%c0_8, %c0_9] : memref<1x128xf32, #tpu.memory_space<vmem>>, vector<1x128xf32>
    %13 = vector.broadcast %12 : vector<1x128xf32> to vector<32x128xf32>
    %14 = arith.addf %11, %13 : vector<32x128xf32>
    %c0_10 = arith.constant 0 : index
    %c0_11 = arith.constant 0 : index
    %15 = vector.load %arg5[%c0_10, %c0_11] : memref<128x128xbf16, #tpu.memory_space<vmem>>, vector<128x128xbf16>
    %cst_12 = arith.constant dense<0.000000e+00> : vector<32x128xf32>
    %16 = tpu.matmul %9, %15, %cst_12 {dimension_numbers = #tpu.dot_dimension_numbers<[1], [0], [0], [1], [0, 0, 1, 1], [], []>} : vector<32x128xbf16>, vector<128x128xbf16>, vector<32x128xf32> -> vector<32x128xf32>
    %c0_13 = arith.constant 0 : index
    %c0_14 = arith.constant 0 : index
    %17 = vector.load %arg8[%c0_13, %c0_14] : memref<1x128xf32, #tpu.memory_space<vmem>>, vector<1x128xf32>
    %18 = vector.broadcast %17 : vector<1x128xf32> to vector<32x128xf32>
    %19 = arith.addf %16, %18 : vector<32x128xf32>
    %c0_15 = arith.constant 0 : index
    %c0_16 = arith.constant 0 : index
    %20 = vector.load %arg6[%c0_15, %c0_16] : memref<128x128xbf16, #tpu.memory_space<vmem>>, vector<128x128xbf16>
    %cst_17 = arith.constant dense<0.000000e+00> : vector<32x128xf32>
    %21 = tpu.matmul %9, %20, %cst_17 {dimension_numbers = #tpu.dot_dimension_numbers<[1], [0], [0], [1], [0, 0, 1, 1], [], []>} : vector<32x128xbf16>, vector<128x128xbf16>, vector<32x128xf32> -> vector<32x128xf32>
    %c0_18 = arith.constant 0 : index
    %c0_19 = arith.constant 0 : index
    %22 = vector.load %arg9[%c0_18, %c0_19] : memref<1x128xf32, #tpu.memory_space<vmem>>, vector<1x128xf32>
    %23 = vector.broadcast %22 : vector<1x128xf32> to vector<32x128xf32>
    %24 = arith.addf %21, %23 : vector<32x128xf32>
    %25 = vector.shape_cast %14 : vector<32x128xf32> to vector<2x16x128xf32>
    %26 = arith.truncf %25 : vector<2x16x128xf32> to vector<2x16x128xbf16>
    %27 = vector.shape_cast %19 : vector<32x128xf32> to vector<2x16x128xf32>
    %28 = arith.truncf %27 : vector<2x16x128xf32> to vector<2x16x128xbf16>
    %29 = vector.shape_cast %24 : vector<32x128xf32> to vector<2x16x128xf32>
    %30 = arith.truncf %29 : vector<2x16x128xf32> to vector<2x16x128xbf16>
    %31 = vector.extract_strided_slice %26 {offsets = [0, 0, 0], sizes = [2, 16, 16], strides = [1, 1, 1]} : vector<2x16x128xbf16> to vector<2x16x16xbf16>
    %32 = vector.extract_strided_slice %28 {offsets = [0, 0, 0], sizes = [2, 16, 16], strides = [1, 1, 1]} : vector<2x16x128xbf16> to vector<2x16x16xbf16>
    %33 = vector.extract_strided_slice %30 {offsets = [0, 0, 0], sizes = [2, 16, 16], strides = [1, 1, 1]} : vector<2x16x128xbf16> to vector<2x16x16xbf16>
    %cst_20 = arith.constant dense<0.000000e+00> : vector<2x16x16xf32>
    %34 = tpu.matmul %31, %32, %cst_20 {dimension_numbers = #tpu.dot_dimension_numbers<[2], [2], [1], [1], [0, 0, 0, 1, 1, 1], [0], [0]>} : vector<2x16x16xbf16>, vector<2x16x16xbf16>, vector<2x16x16xf32> -> vector<2x16x16xf32>
    %cst_21 = arith.constant dense<0xFF800000> : vector<2x16xf32>
    %35 = vector.multi_reduction <maximumf>, %34, %cst_21 [2] : vector<2x16x16xf32> to vector<2x16xf32>
    %36 = vector.shape_cast %35 : vector<2x16xf32> to vector<2x16x1xf32>
    %37 = vector.broadcast %36 : vector<2x16x1xf32> to vector<2x16x16xf32>
    %38 = arith.subf %34, %37 : vector<2x16x16xf32>
    %39 = math.exp %38 : vector<2x16x16xf32>
    %cst_22 = arith.constant dense<0.000000e+00> : vector<2x16xf32>
    %40 = vector.multi_reduction <add>, %39, %cst_22 [2] : vector<2x16x16xf32> to vector<2x16xf32>
    %41 = vector.shape_cast %40 : vector<2x16xf32> to vector<2x16x1xf32>
    %42 = tpu.reciprocal %41 {approx = true} : vector<2x16x1xf32> -> vector<2x16x1xf32>
    %43 = vector.broadcast %42 : vector<2x16x1xf32> to vector<2x16x16xf32>
    %44 = arith.mulf %39, %43 : vector<2x16x16xf32>
    %45 = arith.truncf %44 : vector<2x16x16xf32> to vector<2x16x16xbf16>
    %cst_23 = arith.constant dense<0.000000e+00> : vector<2x16x16xf32>
    %46 = tpu.matmul %45, %33, %cst_23 {dimension_numbers = #tpu.dot_dimension_numbers<[2], [1], [1], [2], [0, 0, 0, 1, 1, 2], [0], [0]>} : vector<2x16x16xbf16>, vector<2x16x16xbf16>, vector<2x16x16xf32> -> vector<2x16x16xf32>
    %47 = vector.extract_strided_slice %26 {offsets = [0, 0, 16], sizes = [2, 16, 16], strides = [1, 1, 1]} : vector<2x16x128xbf16> to vector<2x16x16xbf16>
    %48 = vector.extract_strided_slice %28 {offsets = [0, 0, 16], sizes = [2, 16, 16], strides = [1, 1, 1]} : vector<2x16x128xbf16> to vector<2x16x16xbf16>
    %49 = vector.extract_strided_slice %30 {offsets = [0, 0, 16], sizes = [2, 16, 16], strides = [1, 1, 1]} : vector<2x16x128xbf16> to vector<2x16x16xbf16>
    %cst_24 = arith.constant dense<0.000000e+00> : vector<2x16x16xf32>
    %50 = tpu.matmul %47, %48, %cst_24 {dimension_numbers = #tpu.dot_dimension_numbers<[2], [2], [1], [1], [0, 0, 0, 1, 1, 1], [0], [0]>} : vector<2x16x16xbf16>, vector<2x16x16xbf16>, vector<2x16x16xf32> -> vector<2x16x16xf32>
    %cst_25 = arith.constant dense<0xFF800000> : vector<2x16xf32>
    %51 = vector.multi_reduction <maximumf>, %50, %cst_25 [2] : vector<2x16x16xf32> to vector<2x16xf32>
    %52 = vector.shape_cast %51 : vector<2x16xf32> to vector<2x16x1xf32>
    %53 = vector.broadcast %52 : vector<2x16x1xf32> to vector<2x16x16xf32>
    %54 = arith.subf %50, %53 : vector<2x16x16xf32>
    %55 = math.exp %54 : vector<2x16x16xf32>
    %cst_26 = arith.constant dense<0.000000e+00> : vector<2x16xf32>
    %56 = vector.multi_reduction <add>, %55, %cst_26 [2] : vector<2x16x16xf32> to vector<2x16xf32>
    %57 = vector.shape_cast %56 : vector<2x16xf32> to vector<2x16x1xf32>
    %58 = tpu.reciprocal %57 {approx = true} : vector<2x16x1xf32> -> vector<2x16x1xf32>
    %59 = vector.broadcast %58 : vector<2x16x1xf32> to vector<2x16x16xf32>
    %60 = arith.mulf %55, %59 : vector<2x16x16xf32>
    %61 = arith.truncf %60 : vector<2x16x16xf32> to vector<2x16x16xbf16>
    %cst_27 = arith.constant dense<0.000000e+00> : vector<2x16x16xf32>
    %62 = tpu.matmul %61, %49, %cst_27 {dimension_numbers = #tpu.dot_dimension_numbers<[2], [1], [1], [2], [0, 0, 0, 1, 1, 2], [0], [0]>} : vector<2x16x16xbf16>, vector<2x16x16xbf16>, vector<2x16x16xf32> -> vector<2x16x16xf32>
    %63 = vector.extract_strided_slice %26 {offsets = [0, 0, 32], sizes = [2, 16, 16], strides = [1, 1, 1]} : vector<2x16x128xbf16> to vector<2x16x16xbf16>
    %64 = vector.extract_strided_slice %28 {offsets = [0, 0, 32], sizes = [2, 16, 16], strides = [1, 1, 1]} : vector<2x16x128xbf16> to vector<2x16x16xbf16>
    %65 = vector.extract_strided_slice %30 {offsets = [0, 0, 32], sizes = [2, 16, 16], strides = [1, 1, 1]} : vector<2x16x128xbf16> to vector<2x16x16xbf16>
    %cst_28 = arith.constant dense<0.000000e+00> : vector<2x16x16xf32>
    %66 = tpu.matmul %63, %64, %cst_28 {dimension_numbers = #tpu.dot_dimension_numbers<[2], [2], [1], [1], [0, 0, 0, 1, 1, 1], [0], [0]>} : vector<2x16x16xbf16>, vector<2x16x16xbf16>, vector<2x16x16xf32> -> vector<2x16x16xf32>
    %cst_29 = arith.constant dense<0xFF800000> : vector<2x16xf32>
    %67 = vector.multi_reduction <maximumf>, %66, %cst_29 [2] : vector<2x16x16xf32> to vector<2x16xf32>
    %68 = vector.shape_cast %67 : vector<2x16xf32> to vector<2x16x1xf32>
    %69 = vector.broadcast %68 : vector<2x16x1xf32> to vector<2x16x16xf32>
    %70 = arith.subf %66, %69 : vector<2x16x16xf32>
    %71 = math.exp %70 : vector<2x16x16xf32>
    %cst_30 = arith.constant dense<0.000000e+00> : vector<2x16xf32>
    %72 = vector.multi_reduction <add>, %71, %cst_30 [2] : vector<2x16x16xf32> to vector<2x16xf32>
    %73 = vector.shape_cast %72 : vector<2x16xf32> to vector<2x16x1xf32>
    %74 = tpu.reciprocal %73 {approx = true} : vector<2x16x1xf32> -> vector<2x16x1xf32>
    %75 = vector.broadcast %74 : vector<2x16x1xf32> to vector<2x16x16xf32>
    %76 = arith.mulf %71, %75 : vector<2x16x16xf32>
    %77 = arith.truncf %76 : vector<2x16x16xf32> to vector<2x16x16xbf16>
    %cst_31 = arith.constant dense<0.000000e+00> : vector<2x16x16xf32>
    %78 = tpu.matmul %77, %65, %cst_31 {dimension_numbers = #tpu.dot_dimension_numbers<[2], [1], [1], [2], [0, 0, 0, 1, 1, 2], [0], [0]>} : vector<2x16x16xbf16>, vector<2x16x16xbf16>, vector<2x16x16xf32> -> vector<2x16x16xf32>
    %79 = vector.extract_strided_slice %26 {offsets = [0, 0, 48], sizes = [2, 16, 16], strides = [1, 1, 1]} : vector<2x16x128xbf16> to vector<2x16x16xbf16>
    %80 = vector.extract_strided_slice %28 {offsets = [0, 0, 48], sizes = [2, 16, 16], strides = [1, 1, 1]} : vector<2x16x128xbf16> to vector<2x16x16xbf16>
    %81 = vector.extract_strided_slice %30 {offsets = [0, 0, 48], sizes = [2, 16, 16], strides = [1, 1, 1]} : vector<2x16x128xbf16> to vector<2x16x16xbf16>
    %cst_32 = arith.constant dense<0.000000e+00> : vector<2x16x16xf32>
    %82 = tpu.matmul %79, %80, %cst_32 {dimension_numbers = #tpu.dot_dimension_numbers<[2], [2], [1], [1], [0, 0, 0, 1, 1, 1], [0], [0]>} : vector<2x16x16xbf16>, vector<2x16x16xbf16>, vector<2x16x16xf32> -> vector<2x16x16xf32>
    %cst_33 = arith.constant dense<0xFF800000> : vector<2x16xf32>
    %83 = vector.multi_reduction <maximumf>, %82, %cst_33 [2] : vector<2x16x16xf32> to vector<2x16xf32>
    %84 = vector.shape_cast %83 : vector<2x16xf32> to vector<2x16x1xf32>
    %85 = vector.broadcast %84 : vector<2x16x1xf32> to vector<2x16x16xf32>
    %86 = arith.subf %82, %85 : vector<2x16x16xf32>
    %87 = math.exp %86 : vector<2x16x16xf32>
    %cst_34 = arith.constant dense<0.000000e+00> : vector<2x16xf32>
    %88 = vector.multi_reduction <add>, %87, %cst_34 [2] : vector<2x16x16xf32> to vector<2x16xf32>
    %89 = vector.shape_cast %88 : vector<2x16xf32> to vector<2x16x1xf32>
    %90 = tpu.reciprocal %89 {approx = true} : vector<2x16x1xf32> -> vector<2x16x1xf32>
    %91 = vector.broadcast %90 : vector<2x16x1xf32> to vector<2x16x16xf32>
    %92 = arith.mulf %87, %91 : vector<2x16x16xf32>
    %93 = arith.truncf %92 : vector<2x16x16xf32> to vector<2x16x16xbf16>
    %cst_35 = arith.constant dense<0.000000e+00> : vector<2x16x16xf32>
    %94 = tpu.matmul %93, %81, %cst_35 {dimension_numbers = #tpu.dot_dimension_numbers<[2], [1], [1], [2], [0, 0, 0, 1, 1, 2], [0], [0]>} : vector<2x16x16xbf16>, vector<2x16x16xbf16>, vector<2x16x16xf32> -> vector<2x16x16xf32>
    %95 = vector.extract_strided_slice %26 {offsets = [0, 0, 64], sizes = [2, 16, 16], strides = [1, 1, 1]} : vector<2x16x128xbf16> to vector<2x16x16xbf16>
    %96 = vector.extract_strided_slice %28 {offsets = [0, 0, 64], sizes = [2, 16, 16], strides = [1, 1, 1]} : vector<2x16x128xbf16> to vector<2x16x16xbf16>
    %97 = vector.extract_strided_slice %30 {offsets = [0, 0, 64], sizes = [2, 16, 16], strides = [1, 1, 1]} : vector<2x16x128xbf16> to vector<2x16x16xbf16>
    %cst_36 = arith.constant dense<0.000000e+00> : vector<2x16x16xf32>
    %98 = tpu.matmul %95, %96, %cst_36 {dimension_numbers = #tpu.dot_dimension_numbers<[2], [2], [1], [1], [0, 0, 0, 1, 1, 1], [0], [0]>} : vector<2x16x16xbf16>, vector<2x16x16xbf16>, vector<2x16x16xf32> -> vector<2x16x16xf32>
    %cst_37 = arith.constant dense<0xFF800000> : vector<2x16xf32>
    %99 = vector.multi_reduction <maximumf>, %98, %cst_37 [2] : vector<2x16x16xf32> to vector<2x16xf32>
    %100 = vector.shape_cast %99 : vector<2x16xf32> to vector<2x16x1xf32>
    %101 = vector.broadcast %100 : vector<2x16x1xf32> to vector<2x16x16xf32>
    %102 = arith.subf %98, %101 : vector<2x16x16xf32>
    %103 = math.exp %102 : vector<2x16x16xf32>
    %cst_38 = arith.constant dense<0.000000e+00> : vector<2x16xf32>
    %104 = vector.multi_reduction <add>, %103, %cst_38 [2] : vector<2x16x16xf32> to vector<2x16xf32>
    %105 = vector.shape_cast %104 : vector<2x16xf32> to vector<2x16x1xf32>
    %106 = tpu.reciprocal %105 {approx = true} : vector<2x16x1xf32> -> vector<2x16x1xf32>
    %107 = vector.broadcast %106 : vector<2x16x1xf32> to vector<2x16x16xf32>
    %108 = arith.mulf %103, %107 : vector<2x16x16xf32>
    %109 = arith.truncf %108 : vector<2x16x16xf32> to vector<2x16x16xbf16>
    %cst_39 = arith.constant dense<0.000000e+00> : vector<2x16x16xf32>
    %110 = tpu.matmul %109, %97, %cst_39 {dimension_numbers = #tpu.dot_dimension_numbers<[2], [1], [1], [2], [0, 0, 0, 1, 1, 2], [0], [0]>} : vector<2x16x16xbf16>, vector<2x16x16xbf16>, vector<2x16x16xf32> -> vector<2x16x16xf32>
    %111 = vector.extract_strided_slice %26 {offsets = [0, 0, 80], sizes = [2, 16, 16], strides = [1, 1, 1]} : vector<2x16x128xbf16> to vector<2x16x16xbf16>
    %112 = vector.extract_strided_slice %28 {offsets = [0, 0, 80], sizes = [2, 16, 16], strides = [1, 1, 1]} : vector<2x16x128xbf16> to vector<2x16x16xbf16>
    %113 = vector.extract_strided_slice %30 {offsets = [0, 0, 80], sizes = [2, 16, 16], strides = [1, 1, 1]} : vector<2x16x128xbf16> to vector<2x16x16xbf16>
    %cst_40 = arith.constant dense<0.000000e+00> : vector<2x16x16xf32>
    %114 = tpu.matmul %111, %112, %cst_40 {dimension_numbers = #tpu.dot_dimension_numbers<[2], [2], [1], [1], [0, 0, 0, 1, 1, 1], [0], [0]>} : vector<2x16x16xbf16>, vector<2x16x16xbf16>, vector<2x16x16xf32> -> vector<2x16x16xf32>
    %cst_41 = arith.constant dense<0xFF800000> : vector<2x16xf32>
    %115 = vector.multi_reduction <maximumf>, %114, %cst_41 [2] : vector<2x16x16xf32> to vector<2x16xf32>
    %116 = vector.shape_cast %115 : vector<2x16xf32> to vector<2x16x1xf32>
    %117 = vector.broadcast %116 : vector<2x16x1xf32> to vector<2x16x16xf32>
    %118 = arith.subf %114, %117 : vector<2x16x16xf32>
    %119 = math.exp %118 : vector<2x16x16xf32>
    %cst_42 = arith.constant dense<0.000000e+00> : vector<2x16xf32>
    %120 = vector.multi_reduction <add>, %119, %cst_42 [2] : vector<2x16x16xf32> to vector<2x16xf32>
    %121 = vector.shape_cast %120 : vector<2x16xf32> to vector<2x16x1xf32>
    %122 = tpu.reciprocal %121 {approx = true} : vector<2x16x1xf32> -> vector<2x16x1xf32>
    %123 = vector.broadcast %122 : vector<2x16x1xf32> to vector<2x16x16xf32>
    %124 = arith.mulf %119, %123 : vector<2x16x16xf32>
    %125 = arith.truncf %124 : vector<2x16x16xf32> to vector<2x16x16xbf16>
    %cst_43 = arith.constant dense<0.000000e+00> : vector<2x16x16xf32>
    %126 = tpu.matmul %125, %113, %cst_43 {dimension_numbers = #tpu.dot_dimension_numbers<[2], [1], [1], [2], [0, 0, 0, 1, 1, 2], [0], [0]>} : vector<2x16x16xbf16>, vector<2x16x16xbf16>, vector<2x16x16xf32> -> vector<2x16x16xf32>
    %127 = vector.extract_strided_slice %26 {offsets = [0, 0, 96], sizes = [2, 16, 16], strides = [1, 1, 1]} : vector<2x16x128xbf16> to vector<2x16x16xbf16>
    %128 = vector.extract_strided_slice %28 {offsets = [0, 0, 96], sizes = [2, 16, 16], strides = [1, 1, 1]} : vector<2x16x128xbf16> to vector<2x16x16xbf16>
    %129 = vector.extract_strided_slice %30 {offsets = [0, 0, 96], sizes = [2, 16, 16], strides = [1, 1, 1]} : vector<2x16x128xbf16> to vector<2x16x16xbf16>
    %cst_44 = arith.constant dense<0.000000e+00> : vector<2x16x16xf32>
    %130 = tpu.matmul %127, %128, %cst_44 {dimension_numbers = #tpu.dot_dimension_numbers<[2], [2], [1], [1], [0, 0, 0, 1, 1, 1], [0], [0]>} : vector<2x16x16xbf16>, vector<2x16x16xbf16>, vector<2x16x16xf32> -> vector<2x16x16xf32>
    %cst_45 = arith.constant dense<0xFF800000> : vector<2x16xf32>
    %131 = vector.multi_reduction <maximumf>, %130, %cst_45 [2] : vector<2x16x16xf32> to vector<2x16xf32>
    %132 = vector.shape_cast %131 : vector<2x16xf32> to vector<2x16x1xf32>
    %133 = vector.broadcast %132 : vector<2x16x1xf32> to vector<2x16x16xf32>
    %134 = arith.subf %130, %133 : vector<2x16x16xf32>
    %135 = math.exp %134 : vector<2x16x16xf32>
    %cst_46 = arith.constant dense<0.000000e+00> : vector<2x16xf32>
    %136 = vector.multi_reduction <add>, %135, %cst_46 [2] : vector<2x16x16xf32> to vector<2x16xf32>
    %137 = vector.shape_cast %136 : vector<2x16xf32> to vector<2x16x1xf32>
    %138 = tpu.reciprocal %137 {approx = true} : vector<2x16x1xf32> -> vector<2x16x1xf32>
    %139 = vector.broadcast %138 : vector<2x16x1xf32> to vector<2x16x16xf32>
    %140 = arith.mulf %135, %139 : vector<2x16x16xf32>
    %141 = arith.truncf %140 : vector<2x16x16xf32> to vector<2x16x16xbf16>
    %cst_47 = arith.constant dense<0.000000e+00> : vector<2x16x16xf32>
    %142 = tpu.matmul %141, %129, %cst_47 {dimension_numbers = #tpu.dot_dimension_numbers<[2], [1], [1], [2], [0, 0, 0, 1, 1, 2], [0], [0]>} : vector<2x16x16xbf16>, vector<2x16x16xbf16>, vector<2x16x16xf32> -> vector<2x16x16xf32>
    %143 = vector.extract_strided_slice %26 {offsets = [0, 0, 112], sizes = [2, 16, 16], strides = [1, 1, 1]} : vector<2x16x128xbf16> to vector<2x16x16xbf16>
    %144 = vector.extract_strided_slice %28 {offsets = [0, 0, 112], sizes = [2, 16, 16], strides = [1, 1, 1]} : vector<2x16x128xbf16> to vector<2x16x16xbf16>
    %145 = vector.extract_strided_slice %30 {offsets = [0, 0, 112], sizes = [2, 16, 16], strides = [1, 1, 1]} : vector<2x16x128xbf16> to vector<2x16x16xbf16>
    %cst_48 = arith.constant dense<0.000000e+00> : vector<2x16x16xf32>
    %146 = tpu.matmul %143, %144, %cst_48 {dimension_numbers = #tpu.dot_dimension_numbers<[2], [2], [1], [1], [0, 0, 0, 1, 1, 1], [0], [0]>} : vector<2x16x16xbf16>, vector<2x16x16xbf16>, vector<2x16x16xf32> -> vector<2x16x16xf32>
    %cst_49 = arith.constant dense<0xFF800000> : vector<2x16xf32>
    %147 = vector.multi_reduction <maximumf>, %146, %cst_49 [2] : vector<2x16x16xf32> to vector<2x16xf32>
    %148 = vector.shape_cast %147 : vector<2x16xf32> to vector<2x16x1xf32>
    %149 = vector.broadcast %148 : vector<2x16x1xf32> to vector<2x16x16xf32>
    %150 = arith.subf %146, %149 : vector<2x16x16xf32>
    %151 = math.exp %150 : vector<2x16x16xf32>
    %cst_50 = arith.constant dense<0.000000e+00> : vector<2x16xf32>
    %152 = vector.multi_reduction <add>, %151, %cst_50 [2] : vector<2x16x16xf32> to vector<2x16xf32>
    %153 = vector.shape_cast %152 : vector<2x16xf32> to vector<2x16x1xf32>
    %154 = tpu.reciprocal %153 {approx = true} : vector<2x16x1xf32> -> vector<2x16x1xf32>
    %155 = vector.broadcast %154 : vector<2x16x1xf32> to vector<2x16x16xf32>
    %156 = arith.mulf %151, %155 : vector<2x16x16xf32>
    %157 = arith.truncf %156 : vector<2x16x16xf32> to vector<2x16x16xbf16>
    %cst_51 = arith.constant dense<0.000000e+00> : vector<2x16x16xf32>
    %158 = tpu.matmul %157, %145, %cst_51 {dimension_numbers = #tpu.dot_dimension_numbers<[2], [1], [1], [2], [0, 0, 0, 1, 1, 2], [0], [0]>} : vector<2x16x16xbf16>, vector<2x16x16xbf16>, vector<2x16x16xf32> -> vector<2x16x16xf32>
    %159 = tpu.concatenate %46, %62, %78, %94, %110, %126, %142, %158 in 2 : vector<2x16x16xf32>, vector<2x16x16xf32>, vector<2x16x16xf32>, vector<2x16x16xf32>, vector<2x16x16xf32>, vector<2x16x16xf32>, vector<2x16x16xf32>, vector<2x16x16xf32> -> vector<2x16x128xf32>
    %160 = vector.shape_cast %159 : vector<2x16x128xf32> to vector<32x128xf32>
    %161 = arith.truncf %160 : vector<32x128xf32> to vector<32x128xbf16>
    %c0_52 = arith.constant 0 : index
    %c0_53 = arith.constant 0 : index
    %162 = vector.load %arg10[%c0_52, %c0_53] : memref<128x128xbf16, #tpu.memory_space<vmem>>, vector<128x128xbf16>
    %cst_54 = arith.constant dense<0.000000e+00> : vector<32x128xf32>
    %163 = tpu.matmul %161, %162, %cst_54 {dimension_numbers = #tpu.dot_dimension_numbers<[1], [0], [0], [1], [0, 0, 1, 1], [], []>} : vector<32x128xbf16>, vector<128x128xbf16>, vector<32x128xf32> -> vector<32x128xf32>
    %c0_55 = arith.constant 0 : index
    %c0_56 = arith.constant 0 : index
    %164 = vector.load %arg11[%c0_55, %c0_56] : memref<1x128xf32, #tpu.memory_space<vmem>>, vector<1x128xf32>
    %165 = vector.broadcast %164 : vector<1x128xf32> to vector<32x128xf32>
    %166 = arith.addf %163, %165 : vector<32x128xf32>
    %167 = arith.addf %8, %166 : vector<32x128xf32>
    %168 = vector.shape_cast %167 : vector<32x128xf32> to vector<2x16x128xf32>
    %169 = arith.truncf %168 : vector<2x16x128xf32> to vector<2x16x128xbf16>
    %c0_57 = arith.constant 0 : index
    %c0_58 = arith.constant 0 : index
    %c0_59 = arith.constant 0 : index
    %170 = vector.load %arg12[%c0_57, %c0_58, %c0_59] : memref<2x16x128xbf16, #tpu.memory_space<vmem>>, vector<2x16x128xbf16>
    tpu.vector_store %arg12[%c0_57, %c0_58, %c0_59], %169 {strides = array<i32>} : memref<2x16x128xbf16, #tpu.memory_space<vmem>>, vector<2x16x128xbf16>,
    %cst_60 = arith.constant dense<0.000000e+00> : vector<128xf32>
    %171 = vector.multi_reduction <add>, %167, %cst_60 [0] : vector<32x128xf32> to vector<128xf32>
    %172 = vector.shape_cast %171 : vector<128xf32> to vector<1x128xf32>
    %173 = vector.shape_cast %172 : vector<1x128xf32> to vector<1x1x128xf32>
    %c0_61 = arith.constant 0 : index
    %c0_62 = arith.constant 0 : index
    %c0_63 = arith.constant 0 : index
    %174 = vector.load %arg13[%c0_61, %c0_62, %c0_63] : memref<1x2x128xf32, #tpu.memory_space<vmem>>, vector<1x1x128xf32>
    tpu.vector_store %arg13[%c0_61, %c0_62, %c0_63], %173 {strides = array<i32>} : memref<1x2x128xf32, #tpu.memory_space<vmem>>, vector<1x1x128xf32>,
    %175 = arith.mulf %167, %167 : vector<32x128xf32>
    %cst_64 = arith.constant dense<0.000000e+00> : vector<128xf32>
    %176 = vector.multi_reduction <add>, %175, %cst_64 [0] : vector<32x128xf32> to vector<128xf32>
    %177 = vector.shape_cast %176 : vector<128xf32> to vector<1x128xf32>
    %178 = vector.shape_cast %177 : vector<1x128xf32> to vector<1x1x128xf32>
    %c0_65 = arith.constant 0 : index
    %c1 = arith.constant 1 : index
    %c0_66 = arith.constant 0 : index
    %179 = vector.load %arg13[%c0_65, %c1, %c0_66] : memref<1x2x128xf32, #tpu.memory_space<vmem>>, vector<1x1x128xf32>
    tpu.vector_store %arg13[%c0_65, %c1, %c0_66], %178 {strides = array<i32>} : memref<1x2x128xf32, #tpu.memory_space<vmem>>, vector<1x1x128xf32>,
    return
  }
  func.func @transform_0(%arg0: i32) -> (i32, i32, i32) {
    %c0_i32 = arith.constant 0 : i32
    %c0_i32_0 = arith.constant 0 : i32
    %c0_i32_1 = arith.constant 0 : i32
    return %arg0, %c0_i32, %c0_i32_0 : i32, i32, i32
  }
  func.func @transform_1(%arg0: i32) -> (i32, i32) {
    %c0_i32 = arith.constant 0 : i32
    %c0_i32_0 = arith.constant 0 : i32
    %c0_i32_1 = arith.constant 0 : i32
    return %c0_i32, %c0_i32_0 : i32, i32
  }
  func.func @transform_2(%arg0: i32) -> (i32, i32) {
    %c0_i32 = arith.constant 0 : i32
    %c0_i32_0 = arith.constant 0 : i32
    %c0_i32_1 = arith.constant 0 : i32
    return %c0_i32, %c0_i32_0 : i32, i32
  }
  func.func @transform_3(%arg0: i32) -> (i32, i32) {
    %c0_i32 = arith.constant 0 : i32
    %c0_i32_0 = arith.constant 0 : i32
    %c0_i32_1 = arith.constant 0 : i32
    return %c0_i32, %c0_i32_0 : i32, i32
  }
  func.func @transform_4(%arg0: i32) -> (i32, i32) {
    %c0_i32 = arith.constant 0 : i32
    %c0_i32_0 = arith.constant 0 : i32
    %c0_i32_1 = arith.constant 0 : i32
    return %c0_i32, %c0_i32_0 : i32, i32
  }
  func.func @transform_5(%arg0: i32) -> (i32, i32) {
    %c0_i32 = arith.constant 0 : i32
    %c0_i32_0 = arith.constant 0 : i32
    %c0_i32_1 = arith.constant 0 : i32
    return %c0_i32, %c0_i32_0 : i32, i32
  }
  func.func @transform_6(%arg0: i32) -> (i32, i32) {
    %c0_i32 = arith.constant 0 : i32
    %c0_i32_0 = arith.constant 0 : i32
    %c0_i32_1 = arith.constant 0 : i32
    return %c0_i32, %c0_i32_0 : i32, i32
  }
  func.func @transform_7(%arg0: i32) -> (i32, i32) {
    %c0_i32 = arith.constant 0 : i32
    %c0_i32_0 = arith.constant 0 : i32
    %c0_i32_1 = arith.constant 0 : i32
    return %c0_i32, %c0_i32_0 : i32, i32
  }
  func.func @transform_8(%arg0: i32) -> (i32, i32) {
    %c0_i32 = arith.constant 0 : i32
    %c0_i32_0 = arith.constant 0 : i32
    %c0_i32_1 = arith.constant 0 : i32
    return %c0_i32, %c0_i32_0 : i32, i32
  }
  func.func @transform_9(%arg0: i32) -> (i32, i32) {
    %c0_i32 = arith.constant 0 : i32
    %c0_i32_0 = arith.constant 0 : i32
    %c0_i32_1 = arith.constant 0 : i32
    return %c0_i32, %c0_i32_0 : i32, i32
  }
  func.func @transform_10(%arg0: i32) -> (i32, i32) {
    %c0_i32 = arith.constant 0 : i32
    %c0_i32_0 = arith.constant 0 : i32
    %c0_i32_1 = arith.constant 0 : i32
    return %c0_i32, %c0_i32_0 : i32, i32
  }
  func.func @transform_11(%arg0: i32) -> (i32, i32, i32) {
    %c0_i32 = arith.constant 0 : i32
    %c0_i32_0 = arith.constant 0 : i32
    %c0_i32_1 = arith.constant 0 : i32
    return %arg0, %c0_i32, %c0_i32_0 : i32, i32, i32
  }
  func.func @transform_12(%arg0: i32) -> (i32, i32, i32) {
    %c0_i32 = arith.constant 0 : i32
    %c0_i32_0 = arith.constant 0 : i32
    %c0_i32_1 = arith.constant 0 : i32
    return %arg0, %c0_i32, %c0_i32_0 : i32, i32, i32
  }
}

module attributes {stable_mosaic.version = 11 : i64} {
  func.func @_ffn_kernel(%arg0: i32, %arg1: memref<32x128xbf16, #tpu.memory_space<vmem>>, %arg2: memref<1x128xf32, #tpu.memory_space<vmem>>, %arg3: memref<1x128xf32, #tpu.memory_space<vmem>>, %arg4: memref<128x512xbf16, #tpu.memory_space<vmem>>, %arg5: memref<1x512xf32, #tpu.memory_space<vmem>>, %arg6: memref<512x128xbf16, #tpu.memory_space<vmem>>, %arg7: memref<1x128xf32, #tpu.memory_space<vmem>>, %arg8: memref<32x128xbf16, #tpu.memory_space<vmem>>, %arg9: memref<1x2x128xf32, #tpu.memory_space<vmem>>) attributes {dimension_semantics = [#tpu.dimension_semantics<parallel>], iteration_bounds = array<i64: 1>, scalar_prefetch = 0 : i64, scratch_operands = 0 : i64, tpu.core_type = #tpu.core_type<tc>, window_params = [{transform_indices = @transform_0, window_bounds = array<i64: 32, 128>}, {pipeline_mode = #tpu.pipeline_mode<synchronous>, transform_indices = @transform_1, window_bounds = array<i64: 1, 128>}, {pipeline_mode = #tpu.pipeline_mode<synchronous>, transform_indices = @transform_2, window_bounds = array<i64: 1, 128>}, {pipeline_mode = #tpu.pipeline_mode<synchronous>, transform_indices = @transform_3, window_bounds = array<i64: 128, 512>}, {pipeline_mode = #tpu.pipeline_mode<synchronous>, transform_indices = @transform_4, window_bounds = array<i64: 1, 512>}, {pipeline_mode = #tpu.pipeline_mode<synchronous>, transform_indices = @transform_5, window_bounds = array<i64: 512, 128>}, {pipeline_mode = #tpu.pipeline_mode<synchronous>, transform_indices = @transform_6, window_bounds = array<i64: 1, 128>}, {transform_indices = @transform_7, window_bounds = array<i64: 32, 128>}, {transform_indices = @transform_8, window_bounds = array<i64: 1, 2, 128>}]} {
    %c0 = arith.constant 0 : index
    %c0_0 = arith.constant 0 : index
    %0 = vector.load %arg1[%c0, %c0_0] : memref<32x128xbf16, #tpu.memory_space<vmem>>, vector<32x128xbf16>
    %1 = arith.extf %0 : vector<32x128xbf16> to vector<32x128xf32>
    %c0_1 = arith.constant 0 : index
    %c0_2 = arith.constant 0 : index
    %2 = vector.load %arg2[%c0_1, %c0_2] : memref<1x128xf32, #tpu.memory_space<vmem>>, vector<1x128xf32>
    %3 = vector.broadcast %2 : vector<1x128xf32> to vector<32x128xf32>
    %4 = arith.mulf %1, %3 : vector<32x128xf32>
    %c0_3 = arith.constant 0 : index
    %c0_4 = arith.constant 0 : index
    %5 = vector.load %arg3[%c0_3, %c0_4] : memref<1x128xf32, #tpu.memory_space<vmem>>, vector<1x128xf32>
    %6 = vector.broadcast %5 : vector<1x128xf32> to vector<32x128xf32>
    %7 = arith.addf %4, %6 : vector<32x128xf32>
    %8 = arith.truncf %7 : vector<32x128xf32> to vector<32x128xbf16>
    %c0_5 = arith.constant 0 : index
    %c0_6 = arith.constant 0 : index
    %9 = vector.load %arg4[%c0_5, %c0_6] : memref<128x512xbf16, #tpu.memory_space<vmem>>, vector<128x512xbf16>
    %cst = arith.constant dense<0.000000e+00> : vector<32x512xf32>
    %10 = tpu.matmul %8, %9, %cst {dimension_numbers = #tpu.dot_dimension_numbers<[1], [0], [0], [1], [0, 0, 1, 1], [], []>} : vector<32x128xbf16>, vector<128x512xbf16>, vector<32x512xf32> -> vector<32x512xf32>
    %c0_7 = arith.constant 0 : index
    %c0_8 = arith.constant 0 : index
    %11 = vector.load %arg5[%c0_7, %c0_8] : memref<1x512xf32, #tpu.memory_space<vmem>>, vector<1x512xf32>
    %12 = vector.broadcast %11 : vector<1x512xf32> to vector<32x512xf32>
    %13 = arith.addf %10, %12 : vector<32x512xf32>
    %cst_9 = arith.constant 0.000000e+00 : f32
    %14 = vector.broadcast %cst_9 : f32 to vector<32x512xf32>
    %15 = arith.maximumf %13, %14 : vector<32x512xf32>
    %16 = arith.truncf %15 : vector<32x512xf32> to vector<32x512xbf16>
    %c0_10 = arith.constant 0 : index
    %c0_11 = arith.constant 0 : index
    %17 = vector.load %arg6[%c0_10, %c0_11] : memref<512x128xbf16, #tpu.memory_space<vmem>>, vector<512x128xbf16>
    %cst_12 = arith.constant dense<0.000000e+00> : vector<32x128xf32>
    %18 = tpu.matmul %16, %17, %cst_12 {dimension_numbers = #tpu.dot_dimension_numbers<[1], [0], [0], [1], [0, 0, 1, 1], [], []>} : vector<32x512xbf16>, vector<512x128xbf16>, vector<32x128xf32> -> vector<32x128xf32>
    %c0_13 = arith.constant 0 : index
    %c0_14 = arith.constant 0 : index
    %19 = vector.load %arg7[%c0_13, %c0_14] : memref<1x128xf32, #tpu.memory_space<vmem>>, vector<1x128xf32>
    %20 = vector.broadcast %19 : vector<1x128xf32> to vector<32x128xf32>
    %21 = arith.addf %18, %20 : vector<32x128xf32>
    %22 = arith.addf %7, %21 : vector<32x128xf32>
    %23 = arith.truncf %22 : vector<32x128xf32> to vector<32x128xbf16>
    %c0_15 = arith.constant 0 : index
    %c0_16 = arith.constant 0 : index
    %24 = vector.load %arg8[%c0_15, %c0_16] : memref<32x128xbf16, #tpu.memory_space<vmem>>, vector<32x128xbf16>
    tpu.vector_store %arg8[%c0_15, %c0_16], %23 {strides = array<i32>} : memref<32x128xbf16, #tpu.memory_space<vmem>>, vector<32x128xbf16>,
    %c32_i32 = arith.constant 32 : i32
    %25 = arith.muli %arg0, %c32_i32 : i32
    %26 = tpu.iota {dimensions = array<i32: 0>} : vector<32x128xi32>
    %27 = vector.broadcast %25 : i32 to vector<32x128xi32>
    %28 = arith.addi %27, %26 : vector<32x128xi32>
    %c32_i32_17 = arith.constant 32 : i32
    %29 = vector.broadcast %c32_i32_17 : i32 to vector<32x128xi32>
    %30 = arith.cmpi slt, %28, %29 : vector<32x128xi32>
    %cst_18 = arith.constant 0.000000e+00 : f32
    %31 = vector.broadcast %cst_18 : f32 to vector<32x128xf32>
    %32 = arith.select %30, %22, %31 : vector<32x128xi1>, vector<32x128xf32>
    %cst_19 = arith.constant dense<0.000000e+00> : vector<128xf32>
    %33 = vector.multi_reduction <add>, %32, %cst_19 [0] : vector<32x128xf32> to vector<128xf32>
    %34 = vector.shape_cast %33 : vector<128xf32> to vector<1x128xf32>
    %35 = vector.shape_cast %34 : vector<1x128xf32> to vector<1x1x128xf32>
    %c0_20 = arith.constant 0 : index
    %c0_21 = arith.constant 0 : index
    %c0_22 = arith.constant 0 : index
    %36 = vector.load %arg9[%c0_20, %c0_21, %c0_22] : memref<1x2x128xf32, #tpu.memory_space<vmem>>, vector<1x1x128xf32>
    tpu.vector_store %arg9[%c0_20, %c0_21, %c0_22], %35 {strides = array<i32>} : memref<1x2x128xf32, #tpu.memory_space<vmem>>, vector<1x1x128xf32>,
    %37 = arith.mulf %32, %32 : vector<32x128xf32>
    %cst_23 = arith.constant dense<0.000000e+00> : vector<128xf32>
    %38 = vector.multi_reduction <add>, %37, %cst_23 [0] : vector<32x128xf32> to vector<128xf32>
    %39 = vector.shape_cast %38 : vector<128xf32> to vector<1x128xf32>
    %40 = vector.shape_cast %39 : vector<1x128xf32> to vector<1x1x128xf32>
    %c0_24 = arith.constant 0 : index
    %c1 = arith.constant 1 : index
    %c0_25 = arith.constant 0 : index
    %41 = vector.load %arg9[%c0_24, %c1, %c0_25] : memref<1x2x128xf32, #tpu.memory_space<vmem>>, vector<1x1x128xf32>
    tpu.vector_store %arg9[%c0_24, %c1, %c0_25], %40 {strides = array<i32>} : memref<1x2x128xf32, #tpu.memory_space<vmem>>, vector<1x1x128xf32>,
    return
  }
  func.func @transform_0(%arg0: i32) -> (i32, i32) {
    %c0_i32 = arith.constant 0 : i32
    %c0_i32_0 = arith.constant 0 : i32
    return %arg0, %c0_i32 : i32, i32
  }
  func.func @transform_1(%arg0: i32) -> (i32, i32) {
    %c0_i32 = arith.constant 0 : i32
    %c0_i32_0 = arith.constant 0 : i32
    %c0_i32_1 = arith.constant 0 : i32
    return %c0_i32, %c0_i32_0 : i32, i32
  }
  func.func @transform_2(%arg0: i32) -> (i32, i32) {
    %c0_i32 = arith.constant 0 : i32
    %c0_i32_0 = arith.constant 0 : i32
    %c0_i32_1 = arith.constant 0 : i32
    return %c0_i32, %c0_i32_0 : i32, i32
  }
  func.func @transform_3(%arg0: i32) -> (i32, i32) {
    %c0_i32 = arith.constant 0 : i32
    %c0_i32_0 = arith.constant 0 : i32
    %c0_i32_1 = arith.constant 0 : i32
    return %c0_i32, %c0_i32_0 : i32, i32
  }
  func.func @transform_4(%arg0: i32) -> (i32, i32) {
    %c0_i32 = arith.constant 0 : i32
    %c0_i32_0 = arith.constant 0 : i32
    %c0_i32_1 = arith.constant 0 : i32
    return %c0_i32, %c0_i32_0 : i32, i32
  }
  func.func @transform_5(%arg0: i32) -> (i32, i32) {
    %c0_i32 = arith.constant 0 : i32
    %c0_i32_0 = arith.constant 0 : i32
    %c0_i32_1 = arith.constant 0 : i32
    return %c0_i32, %c0_i32_0 : i32, i32
  }
  func.func @transform_6(%arg0: i32) -> (i32, i32) {
    %c0_i32 = arith.constant 0 : i32
    %c0_i32_0 = arith.constant 0 : i32
    %c0_i32_1 = arith.constant 0 : i32
    return %c0_i32, %c0_i32_0 : i32, i32
  }
  func.func @transform_7(%arg0: i32) -> (i32, i32) {
    %c0_i32 = arith.constant 0 : i32
    %c0_i32_0 = arith.constant 0 : i32
    return %arg0, %c0_i32 : i32, i32
  }
  func.func @transform_8(%arg0: i32) -> (i32, i32, i32) {
    %c0_i32 = arith.constant 0 : i32
    %c0_i32_0 = arith.constant 0 : i32
    %c0_i32_1 = arith.constant 0 : i32
    return %arg0, %c0_i32, %c0_i32_0 : i32, i32, i32
  }
}

module attributes {stable_mosaic.version = 11 : i64} {
  func.func @_scale_shift_kernel(%arg0: i32, %arg1: memref<32x128xbf16, #tpu.memory_space<vmem>>, %arg2: memref<1x128xf32, #tpu.memory_space<vmem>>, %arg3: memref<1x128xf32, #tpu.memory_space<vmem>>, %arg4: memref<32x128xf32, #tpu.memory_space<vmem>>) attributes {dimension_semantics = [#tpu.dimension_semantics<parallel>], iteration_bounds = array<i64: 1>, scalar_prefetch = 0 : i64, scratch_operands = 0 : i64, tpu.core_type = #tpu.core_type<tc>, window_params = [{transform_indices = @transform_0, window_bounds = array<i64: 32, 128>}, {pipeline_mode = #tpu.pipeline_mode<synchronous>, transform_indices = @transform_1, window_bounds = array<i64: 1, 128>}, {pipeline_mode = #tpu.pipeline_mode<synchronous>, transform_indices = @transform_2, window_bounds = array<i64: 1, 128>}, {transform_indices = @transform_3, window_bounds = array<i64: 32, 128>}]} {
    %c0 = arith.constant 0 : index
    %c0_0 = arith.constant 0 : index
    %0 = vector.load %arg1[%c0, %c0_0] : memref<32x128xbf16, #tpu.memory_space<vmem>>, vector<32x128xbf16>
    %1 = arith.extf %0 : vector<32x128xbf16> to vector<32x128xf32>
    %c0_1 = arith.constant 0 : index
    %c0_2 = arith.constant 0 : index
    %2 = vector.load %arg2[%c0_1, %c0_2] : memref<1x128xf32, #tpu.memory_space<vmem>>, vector<1x128xf32>
    %3 = vector.broadcast %2 : vector<1x128xf32> to vector<32x128xf32>
    %4 = arith.mulf %1, %3 : vector<32x128xf32>
    %c0_3 = arith.constant 0 : index
    %c0_4 = arith.constant 0 : index
    %5 = vector.load %arg3[%c0_3, %c0_4] : memref<1x128xf32, #tpu.memory_space<vmem>>, vector<1x128xf32>
    %6 = vector.broadcast %5 : vector<1x128xf32> to vector<32x128xf32>
    %7 = arith.addf %4, %6 : vector<32x128xf32>
    %c0_5 = arith.constant 0 : index
    %c0_6 = arith.constant 0 : index
    %8 = vector.load %arg4[%c0_5, %c0_6] : memref<32x128xf32, #tpu.memory_space<vmem>>, vector<32x128xf32>
    tpu.vector_store %arg4[%c0_5, %c0_6], %7 {strides = array<i32>} : memref<32x128xf32, #tpu.memory_space<vmem>>, vector<32x128xf32>,
    return
  }
  func.func @transform_0(%arg0: i32) -> (i32, i32) {
    %c0_i32 = arith.constant 0 : i32
    %c0_i32_0 = arith.constant 0 : i32
    return %arg0, %c0_i32 : i32, i32
  }
  func.func @transform_1(%arg0: i32) -> (i32, i32) {
    %c0_i32 = arith.constant 0 : i32
    %c0_i32_0 = arith.constant 0 : i32
    %c0_i32_1 = arith.constant 0 : i32
    return %c0_i32, %c0_i32_0 : i32, i32
  }
  func.func @transform_2(%arg0: i32) -> (i32, i32) {
    %c0_i32 = arith.constant 0 : i32
    %c0_i32_0 = arith.constant 0 : i32
    %c0_i32_1 = arith.constant 0 : i32
    return %c0_i32, %c0_i32_0 : i32, i32
  }
  func.func @transform_3(%arg0: i32) -> (i32, i32) {
    %c0_i32 = arith.constant 0 : i32
    %c0_i32_0 = arith.constant 0 : i32
    return %arg0, %c0_i32 : i32, i32
  }
}

</mosaic_0001>

<llo_original>
// kernel: graph_encoder.8
$region0: #{graph_encoder.8}
  #allocation0 [shape = 'u32[]', space=smem, size = 0x4, offset = 0x4, fixed_abs, tag = 'smem constant byte address 0x4 - core index']
  #allocation1 [shape = 'u32[144,128]{1,0:T(1,128)}', space=vmem, size = 0x12000, scoped, tag = 'internal scratch']
  %s0 = inlined_call_operand.hbm [shape: f32[32,16], index: 0, kind: input, shape index: {}]
  %s1 = inlined_call_operand.hbm [shape: bf16[16,128], index: 1, kind: input, shape index: {}]
  %s2 = inlined_call_operand.hbm [shape: f32[1,128], index: 2, kind: input, shape index: {}]
  %s3 = inlined_call_operand.vmem [shape: bf16[32,128], index: 3, kind: output, shape index: {}]
  %s4 = sld [smem:[#allocation0]]
  $region34: #{graph_encoder.8} parent=0
    _
  %s6 = ssub.s32 1, %s4
  %s7 = scalar_select 0, %s6, %s4
  $region1: #{graph_encoder.8} parent=0
    #allocation2 [shape = 'u8[16384]{0}', space=vmem, size = 0x4000, scoped, tag = 'input window, operand 0, single buffered']
    #allocation3 [shape = 's32[1]{0}', space=sflag, size = 0x4, scoped, tag = 'scoped memory for graph_encoder.8']
    #allocation4 [shape = 'u8[4096]{0}', space=vmem, size = 0x1000, scoped, tag = 'input window, operand 1, single buffered']
    #allocation5 [shape = 's32[1]{0}', space=sflag, size = 0x4, scoped, tag = 'scoped memory for graph_encoder.8']
    #allocation6 [shape = 'u8[512]{0}', space=vmem, size = 0x400, scoped, tag = 'input window, operand 2, single buffered']
    %8 = vsyncpa [#allocation3], 0
    %9 = vsyncpa [#allocation5], 0
    // Predicated region
    $region2: #{graph_encoder.8} parent=1 // pred_check
      _
    $region3: #{graph_encoder.8} parent=1 // pred_check_branch
      %11 = sbr.rel (0) target = $region5
    $region4: #{graph_encoder.8} parent=1 // pred_region
      %s13 = ssub.s32 512, 512
      %14 = vsyncadd [#allocation3], %s13
      %s15 = sshll.u32 [#allocation2], 4
      %s16 = int_to_ptr.vmem [resolvable:$true] %s15
      %21 = dma.hbm_to_vmem [thread:$0]  %s0, 512, %s16, [#allocation3], 128, 128, 8
    $region5: #{graph_encoder.8} parent=1 // pred_fallthru
      _
    // Predicated region
    $region6: #{graph_encoder.8} parent=1 // pred_check
      _
    $region7: #{graph_encoder.8} parent=1 // pred_check_branch
      %23 = sbr.rel (0) target = $region9
    $region8: #{graph_encoder.8} parent=1 // pred_region
      %s25 = ssub.s32 128, 128
      %26 = vsyncadd [#allocation5], %s25
      %s27 = sshll.u32 [#allocation4], 4
      %s28 = int_to_ptr.vmem [resolvable:$true] %s27
      %33 = dma.hbm_to_vmem [thread:$0]  %s1, 128, %s28, [#allocation5], 64, 64, 4
    $region9: #{graph_encoder.8} parent=1 // pred_fallthru
      _
    // Predicated region
    $region10: #{graph_encoder.8} parent=1 // pred_check
      _
    $region11: #{graph_encoder.8} parent=1 // pred_check_branch
      %35 = sbr.rel (0) target = $region13
    $region12: #{graph_encoder.8} parent=1 // pred_region
      %s37 = ssub.s32 16, 16
      %38 = vsyncadd [#allocation5], %s37
      %s40 = sshll.u32 [#allocation6], 4
      %s41 = int_to_ptr.vmem [resolvable:$true] %s40
      %43 = dma.hbm_to_vmem [thread:$0]  %s2, 16, %s41, [#allocation5]
    $region13: #{graph_encoder.8} parent=1 // pred_fallthru
      _
    // Predicated region
    $region14: #{graph_encoder.8} parent=1 // pred_check
      _
    $region15: #{graph_encoder.8} parent=1 // pred_check_branch
      %45 = sbr.rel (0) target = $region17
    $region16: #{graph_encoder.8} parent=1 // pred_region
      %46 = dma.done [#allocation3], 512
    $region17: #{graph_encoder.8} parent=1 // pred_fallthru
      _
    // Predicated region
    $region18: #{graph_encoder.8} parent=1 // pred_check
      _
    $region19: #{graph_encoder.8} parent=1 // pred_check_branch
      %48 = sbr.rel (0) target = $region21
    $region20: #{graph_encoder.8} parent=1 // pred_region
      %49 = dma.done [#allocation5], 128
    $region21: #{graph_encoder.8} parent=1 // pred_fallthru
      _
    // Predicated region
    $region22: #{graph_encoder.8} parent=1 // pred_check
      _
    $region23: #{graph_encoder.8} parent=1 // pred_check_branch
      %51 = sbr.rel (0) target = $region25
    $region24: #{graph_encoder.8} parent=1 // pred_region
      %52 = dma.done [#allocation5], 16
    $region25: #{graph_encoder.8} parent=1 // pred_fallthru
      _
    %v54 = vld [vmem:[#allocation2] sm:$0xff]
    %v55 = vld [vmem:[#allocation2 + $0x8] sm:$0xff]
    %v56 = vld [vmem:[#allocation2 + $0x10] sm:$0xff]
    %v57 = vld [vmem:[#allocation2 + $0x18] sm:$0xff]
    %v58 = vpack.c.bf16 %v55, %v54
    %v59 = vpack.c.bf16 %v57, %v56
    %v60 = vld [vmem:[#allocation4] sm:$0xf]
    %v61 = vld [vmem:[#allocation4 + $0x4] sm:$0xf]
    %v62 = vld [vmem:[#allocation6] sm:$0x1]
    %v64 = vlaneseq
    %v65 = vshrl.u32 %v64, 7
    %v66 = vsub.s32 0, %v65
    %v67 = vrot.slane %v62, %v66
    %v71 = vunpack.c.l.b16 %v60
    %v72 = vunpack.c.l.b16 %v61
    %v73 = vpack.c.b16 %v72, %v71
    %vm75 = vcmask 130048
    %v77 = vsel %vm75, %v58, 0
    %v80 = vsel %vm75, %v59, 0
    %82 = vmatprep.subr.bf16.mxu0 0
    %83 = vmatpush1.bf16.msra.mxu0 0
    %84 = vmatprep.subr.bf16.mxu0 0
    %85 = vmatpush1.bf16.msra.mxu0 0
    %86 = vmatprep.subr.bf16.mxu0 0
    %87 = vmatpush1.bf16.msra.mxu0 0
    %88 = vmatprep.subr.bf16.mxu0 0
    %89 = vmatpush1.bf16.msra.mxu0 0
    %90 = vmatprep.subr.bf16.mxu0 0
    %91 = vmatpush1.bf16.msra.mxu0 0
    %92 = vmatprep.subr.bf16.mxu0 0
    %93 = vmatpush1.bf16.msra.mxu0 0
    %94 = vmatprep.subr.bf16.mxu0 0
    %95 = vmatpush1.bf16.msra.mxu0 0
    %96 = vmatprep.subr.bf16.mxu0 0
    %97 = vmatpush1.bf16.msra.mxu0 %v73
    %98 = vmatprep.subr.bf16.mxu0 0
    %99 = vmatpush2.bf16.msra.mxu0 0
    %100 = vmatprep.subr.bf16.mxu0 0
    %101 = vmatpush2.bf16.msra.mxu0 0
    %102 = vmatprep.subr.bf16.mxu0 0
    %103 = vmatpush2.bf16.msra.mxu0 0
    %104 = vmatprep.subr.bf16.mxu0 0
    %105 = vmatpush2.bf16.msra.mxu0 0
    %106 = vmatprep.subr.bf16.mxu0 0
    %107 = vmatpush2.bf16.msra.mxu0 0
    %108 = vmatprep.subr.bf16.mxu0 0
    %109 = vmatpush2.bf16.msra.mxu0 0
    %110 = vmatprep.subr.bf16.mxu0 0
    %111 = vmatpush2.bf16.msra.mxu0 0
    %112 = vmatprep.subr.bf16.mxu0 0
    %113 = vmatpush2.bf16.msra.mxu0 0
    %114 = vmatprep.mubr.bf16.mxu0 0
    %115 = vmatmul.mubr.bf16.gmra.mxu0 %v77
    %v116 = vpop.f32.mrf.mxu0
    %v117 = vadd.f32 %v67, %v116
    %v118 = vpop.f32.mrf.mxu0
    %v119 = vpop.f32.mrf.mxu0
    %v120 = vadd.f32 %v67, %v119
    %v121 = vpop.f32.mrf.mxu0
    %122 = vmatprep.mubr.bf16.mxu0 0
    %123 = vmatmul.mubr.bf16.gmra.mxu0 %v80
    %v124 = vpop.f32.mrf.mxu0
    %v125 = vadd.f32 %v67, %v124
    %v126 = vpop.f32.mrf.mxu0
    %v127 = vpop.f32.mrf.mxu0
    %v128 = vadd.f32 %v67, %v127
    %v129 = vpop.f32.mrf.mxu0
    %130 = vdwg.mxu0
    %v131 = vpack.c.bf16 %v120, %v117
    %v132 = vpack.c.bf16 %v128, %v125
    %v135 = vunpack.c.l.b16 %v131
    %v136 = vunpack.c.h.b16 %v131
    %v137 = vunpack.c.l.b16 %v132
    %v138 = vunpack.c.h.b16 %v132
    %v139 = vpack.c.b16 %v135, %v135
    %v140 = vpack.c.b16 %v136, %v136
    %v141 = vpack.c.b16 %v137, %v137
    %v142 = vpack.c.b16 %v138, %v138
    %147 = vst [vmem:[%s3] sm:$0xf] %v139
    %148 = vst [vmem:[%s3 + $0x4] sm:$0xf] %v140
    %149 = vst [vmem:[%s3 + $0x8] sm:$0xf] %v141
    %150 = vst [vmem:[%s3 + $0xc] sm:$0xf] %v142
    // Predicated region
    $region26: #{graph_encoder.8} parent=1 // pred_check
      _
    $region27: #{graph_encoder.8} parent=1 // pred_check_branch
      %152 = sbr.rel (0) target = $region29
    $region28: #{graph_encoder.8} parent=1 // pred_region
      _
    $region29: #{graph_encoder.8} parent=1 // pred_fallthru
      _
    // Predicated region
    $region30: #{graph_encoder.8} parent=1 // pred_check
      _
    $region31: #{graph_encoder.8} parent=1 // pred_check_branch
      %154 = sbr.rel (0) target = $region33
    $region32: #{graph_encoder.8} parent=1 // pred_region
      _
    $region33: #{graph_encoder.8} parent=1 // pred_fallthru
      _
    %155 = vsyncpa [#allocation3], 1
    %156 = vsyncpa [#allocation5], 1

// kernel: graph_encoder.10
$region0: #{graph_encoder.10}
  #allocation0 [shape = 'u32[]', space=smem, size = 0x4, offset = 0x4, fixed_abs, tag = 'smem constant byte address 0x4 - core index']
  #allocation1 [shape = 'u32[144,128]{1,0:T(1,128)}', space=vmem, size = 0x12000, scoped, tag = 'internal scratch']
  %s0 = inlined_call_operand.vmem [shape: bf16[32,128], index: 0, kind: input, shape index: {}]
  %s1 = inlined_call_operand.vmem [shape: f32[1,128], index: 1, kind: input, shape index: {}]
  %s2 = inlined_call_operand.vmem [shape: f32[1,128], index: 2, kind: input, shape index: {}]
  %s3 = inlined_call_operand.vmem [shape: bf16[128,512], index: 3, kind: input, shape index: {}]
  %s4 = inlined_call_operand.vmem [shape: f32[1,512], index: 4, kind: input, shape index: {}]
  %s5 = inlined_call_operand.hbm [shape: bf16[512,128], index: 5, kind: input, shape index: {}]
  %s6 = inlined_call_operand.vmem [shape: f32[1,128], index: 6, kind: input, shape index: {}]
  %s7 = inlined_call_operand.vmem [shape: bf16[32,128], index: 7, kind: output, shape index: {0}]
  %s8 = inlined_call_operand.vmem [shape: f32[1,2,128], index: 8, kind: output, shape index: {1}]
  %9 = xla_tuple %s7, %s8
  %s10 = sld [smem:[#allocation0]]
  $region50: #{graph_encoder.10} parent=0
    _
  %s12 = ssub.s32 1, %s10
  %s13 = scalar_select 0, %s12, %s10
  $region1: #{graph_encoder.10} parent=0
    #allocation2 [shape = 'u8[131072]{0}', space=vmem, size = 0x20000, scoped, tag = 'input window, operand 5, single buffered']
    #allocation3 [shape = 's32[1]{0}', space=sflag, size = 0x4, scoped, tag = 'scoped memory for graph_encoder.10']
    %14 = vsyncpa [#allocation3], 0
    // Predicated region
    $region2: #{graph_encoder.10} parent=1 // pred_check
      _
    $region3: #{graph_encoder.10} parent=1 // pred_check_branch
      %16 = sbr.rel (0) target = $region5
    $region4: #{graph_encoder.10} parent=1 // pred_region
      _
    $region5: #{graph_encoder.10} parent=1 // pred_fallthru
      _
    // Predicated region
    $region6: #{graph_encoder.10} parent=1 // pred_check
      _
    $region7: #{graph_encoder.10} parent=1 // pred_check_branch
      %18 = sbr.rel (0) target = $region9
    $region8: #{graph_encoder.10} parent=1 // pred_region
      _
    $region9: #{graph_encoder.10} parent=1 // pred_fallthru
      _
    // Predicated region
    $region10: #{graph_encoder.10} parent=1 // pred_check
      _
    $region11: #{graph_encoder.10} parent=1 // pred_check_branch
      %20 = sbr.rel (0) target = $region13
    $region12: #{graph_encoder.10} parent=1 // pred_region
      _
    $region13: #{graph_encoder.10} parent=1 // pred_fallthru
      _
    // Predicated region
    $region14: #{graph_encoder.10} parent=1 // pred_check
      _
    $region15: #{graph_encoder.10} parent=1 // pred_check_branch
      %22 = sbr.rel (0) target = $region17
    $region16: #{graph_encoder.10} parent=1 // pred_region
      _
    $region17: #{graph_encoder.10} parent=1 // pred_fallthru
      _
    // Predicated region
    $region18: #{graph_encoder.10} parent=1 // pred_check
      _
    $region19: #{graph_encoder.10} parent=1 // pred_check_branch
      %24 = sbr.rel (0) target = $region21
    $region20: #{graph_encoder.10} parent=1 // pred_region
      _
    $region21: #{graph_encoder.10} parent=1 // pred_fallthru
      _
    // Predicated region
    $region22: #{graph_encoder.10} parent=1 // pred_check
      _
    $region23: #{graph_encoder.10} parent=1 // pred_check_branch
      %26 = sbr.rel (0) target = $region25
    $region24: #{graph_encoder.10} parent=1 // pred_region
      %s28 = ssub.s32 4096, 4096
      %29 = vsyncadd [#allocation3], %s28
      %s30 = sshll.u32 [#allocation2], 4
      %s31 = int_to_ptr.vmem [resolvable:$true] %s30
      %36 = dma.hbm_to_vmem [thread:$0]  %s5, 4096, %s31, [#allocation3], 64, 64, 4
    $region25: #{graph_encoder.10} parent=1 // pred_fallthru
      _
    // Predicated region
    $region26: #{graph_encoder.10} parent=1 // pred_check
      _
    $region27: #{graph_encoder.10} parent=1 // pred_check_branch
      %38 = sbr.rel (0) target = $region29
    $region28: #{graph_encoder.10} parent=1 // pred_region
      _
    $region29: #{graph_encoder.10} parent=1 // pred_fallthru
      _
    // Predicated region
    $region30: #{graph_encoder.10} parent=1 // pred_check
      _
    $region31: #{graph_encoder.10} parent=1 // pred_check_branch
      %40 = sbr.rel (0) target = $region33
    $region32: #{graph_encoder.10} parent=1 // pred_region
      %41 = dma.done [#allocation3], 4096
    $region33: #{graph_encoder.10} parent=1 // pred_fallthru
      _
    %v43 = vld [vmem:[%s0] sm:$0xf]
    %v44 = vld [vmem:[%s0 + $0x4] sm:$0xf]
    %v45 = vld [vmem:[%s0 + $0x8] sm:$0xf]
    %v46 = vld [vmem:[%s0 + $0xc] sm:$0xf]
    %v47 = vunpack.c.l.bf16 %v43
    %v48 = vunpack.c.l.bf16 %v44
    %v49 = vunpack.c.l.bf16 %v45
    %v50 = vunpack.c.l.bf16 %v46
    %v51 = vld [vmem:[%s1] sm:$0x1]
    %v53 = vlaneseq
    %v54 = vshrl.u32 %v53, 7
    %v55 = vsub.s32 0, %v54
    %v56 = vrot.slane %v51, %v55
    %v58 = vmul.f32 %v47, %v56
    %v59 = vmul.f32 %v48, %v56
    %v60 = vmul.f32 %v49, %v56
    %v61 = vmul.f32 %v50, %v56
    %v62 = vld [vmem:[%s2] sm:$0x1]
    %v64 = vlaneseq
    %v65 = vshrl.u32 %v64, 7
    %v66 = vsub.s32 0, %v65
    %v67 = vrot.slane %v62, %v66
    %v69 = vadd.f32 %v58, %v67
    %v70 = vadd.f32 %v59, %v67
    %v71 = vadd.f32 %v60, %v67
    %v72 = vadd.f32 %v61, %v67
    %v73 = vpack.c.bf16 %v70, %v69
    %v74 = vpack.c.bf16 %v72, %v71
    %v75 = vld [vmem:[%s3] sm:$0xff]
    %v76 = vld [vmem:[%s3 + $0x8] sm:$0xff]
    %v77 = vld [vmem:[%s3 + $0x10] sm:$0xff]
    %v78 = vld [vmem:[%s3 + $0x18] sm:$0xff]
    %v79 = vld [vmem:[%s3 + $0x20] sm:$0xff]
    %v80 = vld [vmem:[%s3 + $0x28] sm:$0xff]
    %v81 = vld [vmem:[%s3 + $0x30] sm:$0xff]
    %v82 = vld [vmem:[%s3 + $0x38] sm:$0xff]
    %v83 = vld [vmem:[%s3 + $0x40] sm:$0xff]
    %v84 = vld [vmem:[%s3 + $0x48] sm:$0xff]
    %v85 = vld [vmem:[%s3 + $0x50] sm:$0xff]
    %v86 = vld [vmem:[%s3 + $0x58] sm:$0xff]
    %v87 = vld [vmem:[%s3 + $0x60] sm:$0xff]
    %v88 = vld [vmem:[%s3 + $0x68] sm:$0xff]
    %v89 = vld [vmem:[%s3 + $0x70] sm:$0xff]
    %v90 = vld [vmem:[%s3 + $0x78] sm:$0xff]
    %v91 = vld [vmem:[%s3 + $0x80] sm:$0xff]
    %v92 = vld [vmem:[%s3 + $0x88] sm:$0xff]
    %v93 = vld [vmem:[%s3 + $0x90] sm:$0xff]
    %v94 = vld [vmem:[%s3 + $0x98] sm:$0xff]
    %v95 = vld [vmem:[%s3 + $0xa0] sm:$0xff]
    %v96 = vld [vmem:[%s3 + $0xa8] sm:$0xff]
    %v97 = vld [vmem:[%s3 + $0xb0] sm:$0xff]
    %v98 = vld [vmem:[%s3 + $0xb8] sm:$0xff]
    %v99 = vld [vmem:[%s3 + $0xc0] sm:$0xff]
    %v100 = vld [vmem:[%s3 + $0xc8] sm:$0xff]
    %v101 = vld [vmem:[%s3 + $0xd0] sm:$0xff]
    %v102 = vld [vmem:[%s3 + $0xd8] sm:$0xff]
    %v103 = vld [vmem:[%s3 + $0xe0] sm:$0xff]
    %v104 = vld [vmem:[%s3 + $0xe8] sm:$0xff]
    %v105 = vld [vmem:[%s3 + $0xf0] sm:$0xff]
    %v106 = vld [vmem:[%s3 + $0xf8] sm:$0xff]
    %v107 = vld [vmem:[%s4] sm:$0xf]
    %v109 = vlaneseq
    %v110 = vshrl.u32 %v109, 7
    %v111 = vsub.s32 0, %v110
    %v112 = vrot.slane %v107, %v111
    %v113 = vlaneseq
    %v114 = vshrl.u32 %v113, 7
    %v115 = vsub.s32 1, %v114
    %v116 = vrot.slane %v107, %v115
    %v117 = vlaneseq
    %v118 = vshrl.u32 %v117, 7
    %v119 = vsub.s32 2, %v118
    %v120 = vrot.slane %v107, %v119
    %v121 = vlaneseq
    %v122 = vshrl.u32 %v121, 7
    %v123 = vsub.s32 3, %v122
    %v124 = vrot.slane %v107, %v123
    %v161 = vunpack.c.l.b16 %v75
    %v162 = vunpack.c.h.b16 %v75
    %v163 = vunpack.c.l.b16 %v76
    %v164 = vunpack.c.h.b16 %v76
    %v165 = vunpack.c.l.b16 %v77
    %v166 = vunpack.c.h.b16 %v77
    %v167 = vunpack.c.l.b16 %v78
    %v168 = vunpack.c.h.b16 %v78
    %v169 = vunpack.c.l.b16 %v79
    %v170 = vunpack.c.h.b16 %v79
    %v171 = vunpack.c.l.b16 %v80
    %v172 = vunpack.c.h.b16 %v80
    %v173 = vunpack.c.l.b16 %v81
    %v174 = vunpack.c.h.b16 %v81
    %v175 = vunpack.c.l.b16 %v82
    %v176 = vunpack.c.h.b16 %v82
    %v177 = vunpack.c.l.b16 %v83
    %v178 = vunpack.c.h.b16 %v83
    %v179 = vunpack.c.l.b16 %v84
    %v180 = vunpack.c.h.b16 %v84
    %v181 = vunpack.c.l.b16 %v85
    %v182 = vunpack.c.h.b16 %v85
    %v183 = vunpack.c.l.b16 %v86
    %v184 = vunpack.c.h.b16 %v86
    %v185 = vunpack.c.l.b16 %v87
    %v186 = vunpack.c.h.b16 %v87
    %v187 = vunpack.c.l.b16 %v88
    %v188 = vunpack.c.h.b16 %v88
    %v189 = vunpack.c.l.b16 %v89
    %v190 = vunpack.c.h.b16 %v89
    %v191 = vunpack.c.l.b16 %v90
    %v192 = vunpack.c.h.b16 %v90
    %v193 = vunpack.c.l.b16 %v91
    %v194 = vunpack.c.h.b16 %v91
    %v195 = vunpack.c.l.b16 %v92
    %v196 = vunpack.c.h.b16 %v92
    %v197 = vunpack.c.l.b16 %v93
    %v198 = vunpack.c.h.b16 %v93
    %v199 = vunpack.c.l.b16 %v94
    %v200 = vunpack.c.h.b16 %v94
    %v201 = vunpack.c.l.b16 %v95
    %v202 = vunpack.c.h.b16 %v95
    %v203 = vunpack.c.l.b16 %v96
    %v204 = vunpack.c.h.b16 %v96
    %v205 = vunpack.c.l.b16 %v97
    %v206 = vunpack.c.h.b16 %v97
    %v207 = vunpack.c.l.b16 %v98
    %v208 = vunpack.c.h.b16 %v98
    %v209 = vunpack.c.l.b16 %v99
    %v210 = vunpack.c.h.b16 %v99
    %v211 = vunpack.c.l.b16 %v100
    %v212 = vunpack.c.h.b16 %v100
    %v213 = vunpack.c.l.b16 %v101
    %v214 = vunpack.c.h.b16 %v101
    %v215 = vunpack.c.l.b16 %v102
    %v216 = vunpack.c.h.b16 %v102
    %v217 = vunpack.c.l.b16 %v103
    %v218 = vunpack.c.h.b16 %v103
    %v219 = vunpack.c.l.b16 %v104
    %v220 = vunpack.c.h.b16 %v104
    %v221 = vunpack.c.l.b16 %v105
    %v222 = vunpack.c.h.b16 %v105
    %v223 = vunpack.c.l.b16 %v106
    %v224 = vunpack.c.h.b16 %v106
    %v225 = vpack.c.b16 %v165, %v161
    %v226 = vpack.c.b16 %v166, %v162
    %v227 = vpack.c.b16 %v167, %v163
    %v228 = vpack.c.b16 %v168, %v164
    %v229 = vpack.c.b16 %v173, %v169
    %v230 = vpack.c.b16 %v174, %v170
    %v231 = vpack.c.b16 %v175, %v171
    %v232 = vpack.c.b16 %v176, %v172
    %v233 = vpack.c.b16 %v181, %v177
    %v234 = vpack.c.b16 %v182, %v178
    %v235 = vpack.c.b16 %v183, %v179
    %v236 = vpack.c.b16 %v184, %v180
    %v237 = vpack.c.b16 %v189, %v185
    %v238 = vpack.c.b16 %v190, %v186
    %v239 = vpack.c.b16 %v191, %v187
    %v240 = vpack.c.b16 %v192, %v188
    %v241 = vpack.c.b16 %v197, %v193
    %v242 = vpack.c.b16 %v198, %v194
    %v243 = vpack.c.b16 %v199, %v195
    %v244 = vpack.c.b16 %v200, %v196
    %v245 = vpack.c.b16 %v205, %v201
    %v246 = vpack.c.b16 %v206, %v202
    %v247 = vpack.c.b16 %v207, %v203
    %v248 = vpack.c.b16 %v208, %v204
    %v249 = vpack.c.b16 %v213, %v209
    %v250 = vpack.c.b16 %v214, %v210
    %v251 = vpack.c.b16 %v215, %v211
    %v252 = vpack.c.b16 %v216, %v212
    %v253 = vpack.c.b16 %v221, %v217
    %v254 = vpack.c.b16 %v222, %v218
    %v255 = vpack.c.b16 %v223, %v219
    %v256 = vpack.c.b16 %v224, %v220
    %289 = vmatprep.subr.bf16.mxu0 %v254
    %290 = vmatpush1.bf16.msra.mxu0 %v253
    %291 = vmatprep.subr.bf16.mxu0 %v250
    %292 = vmatpush1.bf16.msra.mxu0 %v249
    %293 = vmatprep.subr.bf16.mxu0 %v246
    %294 = vmatpush1.bf16.msra.mxu0 %v245
    %295 = vmatprep.subr.bf16.mxu0 %v242
    %296 = vmatpush1.bf16.msra.mxu0 %v241
    %297 = vmatprep.subr.bf16.mxu0 %v238
    %298 = vmatpush1.bf16.msra.mxu0 %v237
    %299 = vmatprep.subr.bf16.mxu0 %v234
    %300 = vmatpush1.bf16.msra.mxu0 %v233
    %301 = vmatprep.subr.bf16.mxu0 %v230
    %302 = vmatpush1.bf16.msra.mxu0 %v229
    %303 = vmatprep.subr.bf16.mxu0 %v226
    %304 = vmatpush1.bf16.msra.mxu0 %v225
    %305 = vmatprep.subr.bf16.mxu0 0
    %306 = vmatpush2.bf16.msra.mxu0 0
    %307 = vmatprep.subr.bf16.mxu0 0
    %308 = vmatpush2.bf16.msra.mxu0 0
    %309 = vmatprep.subr.bf16.mxu0 0
    %310 = vmatpush2.bf16.msra.mxu0 0
    %311 = vmatprep.subr.bf16.mxu0 0
    %312 = vmatpush2.bf16.msra.mxu0 0
    %313 = vmatprep.subr.bf16.mxu0 0
    %314 = vmatpush2.bf16.msra.mxu0 0
    %315 = vmatprep.subr.bf16.mxu0 0
    %316 = vmatpush2.bf16.msra.mxu0 0
    %317 = vmatprep.subr.bf16.mxu0 0
    %318 = vmatpush2.bf16.msra.mxu0 0
    %319 = vmatprep.subr.bf16.mxu0 0
    %320 = vmatpush2.bf16.msra.mxu0 0
    %321 = vmatprep.mubr.bf16.mxu0 0
    %322 = vmatmul.mubr.bf16.gmra.mxu0 %v73
    %v323 = vpop.f32.mrf.mxu0
    %v324 = vadd.f32 %v112, %v323
    %v325 = vpop.f32.mrf.mxu0
    %v326 = vadd.f32 %v116, %v325
    %v327 = vpop.f32.mrf.mxu0
    %v328 = vadd.f32 %v112, %v327
    %v329 = vpop.f32.mrf.mxu0
    %v330 = vadd.f32 %v116, %v329
    %331 = vmatprep.mubr.bf16.mxu0 0
    %332 = vmatmul.mubr.bf16.gmra.mxu0 %v74
    %v333 = vpop.f32.mrf.mxu0
    %v334 = vadd.f32 %v112, %v333
    %v335 = vpop.f32.mrf.mxu0
    %v336 = vadd.f32 %v116, %v335
    %v337 = vpop.f32.mrf.mxu0
    %v338 = vadd.f32 %v112, %v337
    %v339 = vpop.f32.mrf.mxu0
    %v340 = vadd.f32 %v116, %v339
    %341 = vdwg.mxu0
    %342 = vmatprep.subr.bf16.mxu0 %v256
    %343 = vmatpush1.bf16.msra.mxu0 %v255
    %344 = vmatprep.subr.bf16.mxu0 %v252
    %345 = vmatpush1.bf16.msra.mxu0 %v251
    %346 = vmatprep.subr.bf16.mxu0 %v248
    %347 = vmatpush1.bf16.msra.mxu0 %v247
    %348 = vmatprep.subr.bf16.mxu0 %v244
    %349 = vmatpush1.bf16.msra.mxu0 %v243
    %350 = vmatprep.subr.bf16.mxu0 %v240
    %351 = vmatpush1.bf16.msra.mxu0 %v239
    %352 = vmatprep.subr.bf16.mxu0 %v236
    %353 = vmatpush1.bf16.msra.mxu0 %v235
    %354 = vmatprep.subr.bf16.mxu0 %v232
    %355 = vmatpush1.bf16.msra.mxu0 %v231
    %356 = vmatprep.subr.bf16.mxu0 %v228
    %357 = vmatpush1.bf16.msra.mxu0 %v227
    %358 = vmatprep.subr.bf16.mxu0 0
    %359 = vmatpush2.bf16.msra.mxu0 0
    %360 = vmatprep.subr.bf16.mxu0 0
    %361 = vmatpush2.bf16.msra.mxu0 0
    %362 = vmatprep.subr.bf16.mxu0 0
    %363 = vmatpush2.bf16.msra.mxu0 0
    %364 = vmatprep.subr.bf16.mxu0 0
    %365 = vmatpush2.bf16.msra.mxu0 0
    %366 = vmatprep.subr.bf16.mxu0 0
    %367 = vmatpush2.bf16.msra.mxu0 0
    %368 = vmatprep.subr.bf16.mxu0 0
    %369 = vmatpush2.bf16.msra.mxu0 0
    %370 = vmatprep.subr.bf16.mxu0 0
    %371 = vmatpush2.bf16.msra.mxu0 0
    %372 = vmatprep.subr.bf16.mxu0 0
    %373 = vmatpush2.bf16.msra.mxu0 0
    %374 = vmatprep.mubr.bf16.mxu0 0
    %375 = vmatmul.mubr.bf16.gmra.mxu0 %v73
    %v376 = vpop.f32.mrf.mxu0
    %v377 = vadd.f32 %v120, %v376
    %v378 = vpop.f32.mrf.mxu0
    %v379 = vadd.f32 %v124, %v378
    %v380 = vpop.f32.mrf.mxu0
    %v381 = vadd.f32 %v120, %v380
    %v382 = vpop.f32.mrf.mxu0
    %v383 = vadd.f32 %v124, %v382
    %384 = vmatprep.mubr.bf16.mxu0 0
    %385 = vmatmul.mubr.bf16.gmra.mxu0 %v74
    %v386 = vpop.f32.mrf.mxu0
    %v387 = vadd.f32 %v120, %v386
    %v388 = vpop.f32.mrf.mxu0
    %v389 = vadd.f32 %v124, %v388
    %v390 = vpop.f32.mrf.mxu0
    %v391 = vadd.f32 %v120, %v390
    %v392 = vpop.f32.mrf.mxu0
    %v393 = vadd.f32 %v124, %v392
    %394 = vdwg.mxu0
    %v395 = vmax.f32 %v324, 0.0
    %v396 = vmax.f32 %v326, 0.0
    %v397 = vmax.f32 %v377, 0.0
    %v398 = vmax.f32 %v379, 0.0
    %v399 = vmax.f32 %v328, 0.0
    %v400 = vmax.f32 %v330, 0.0
    %v401 = vmax.f32 %v381, 0.0
    %v402 = vmax.f32 %v383, 0.0
    %v403 = vmax.f32 %v334, 0.0
    %v404 = vmax.f32 %v336, 0.0
    %v405 = vmax.f32 %v387, 0.0
    %v406 = vmax.f32 %v389, 0.0
    %v407 = vmax.f32 %v338, 0.0
    %v408 = vmax.f32 %v340, 0.0
    %v409 = vmax.f32 %v391, 0.0
    %v410 = vmax.f32 %v393, 0.0
    %v411 = vpack.c.bf16 %v399, %v395
    %v412 = vpack.c.bf16 %v400, %v396
    %v413 = vpack.c.bf16 %v401, %v397
    %v414 = vpack.c.bf16 %v402, %v398
    %v415 = vpack.c.bf16 %v407, %v403
    %v416 = vpack.c.bf16 %v408, %v404
    %v417 = vpack.c.bf16 %v409, %v405
    %v418 = vpack.c.bf16 %v410, %v406
    %v419 = vld [vmem:[#allocation2] sm:$0xf]
    %v420 = vld [vmem:[#allocation2 + $0x4] sm:$0xf]
    %v421 = vld [vmem:[#allocation2 + $0x8] sm:$0xf]
    %v422 = vld [vmem:[#allocation2 + $0xc] sm:$0xf]
    %v423 = vld [vmem:[#allocation2 + $0x10] sm:$0xf]
    %v424 = vld [vmem:[#allocation2 + $0x14] sm:$0xf]
    %v425 = vld [vmem:[#allocation2 + $0x18] sm:$0xf]
    %v426 = vld [vmem:[#allocation2 + $0x1c] sm:$0xf]
    %v427 = vld [vmem:[#allocation2 + $0x20] sm:$0xf]
    %v428 = vld [vmem:[#allocation2 + $0x24] sm:$0xf]
    %v429 = vld [vmem:[#allocation2 + $0x28] sm:$0xf]
    %v430 = vld [vmem:[#allocation2 + $0x2c] sm:$0xf]
    %v431 = vld [vmem:[#allocation2 + $0x30] sm:$0xf]
    %v432 = vld [vmem:[#allocation2 + $0x34] sm:$0xf]
    %v433 = vld [vmem:[#allocation2 + $0x38] sm:$0xf]
    %v434 = vld [vmem:[#allocation2 + $0x3c] sm:$0xf]
    %v435 = vld [vmem:[#allocation2 + $0x40] sm:$0xf]
    %v436 = vld [vmem:[#allocation2 + $0x44] sm:$0xf]
    %v437 = vld [vmem:[#allocation2 + $0x48] sm:$0xf]
    %v438 = vld [vmem:[#allocation2 + $0x4c] sm:$0xf]
    %v439 = vld [vmem:[#allocation2 + $0x50] sm:$0xf]
    %v440 = vld [vmem:[#allocation2 + $0x54] sm:$0xf]
    %v441 = vld [vmem:[#allocation2 + $0x58] sm:$0xf]
    %v442 = vld [vmem:[#allocation2 + $0x5c] sm:$0xf]
    %v443 = vld [vmem:[#allocation2 + $0x60] sm:$0xf]
    %v444 = vld [vmem:[#allocation2 + $0x64] sm:$0xf]
    %v445 = vld [vmem:[#allocation2 + $0x68] sm:$0xf]
    %v446 = vld [vmem:[#allocation2 + $0x6c] sm:$0xf]
    %v447 = vld [vmem:[#allocation2 + $0x70] sm:$0xf]
    %v448 = vld [vmem:[#allocation2 + $0x74] sm:$0xf]
    %v449 = vld [vmem:[#allocation2 + $0x78] sm:$0xf]
    %v450 = vld [vmem:[#allocation2 + $0x7c] sm:$0xf]
    %v451 = vld [vmem:[#allocation2 + $0x80] sm:$0xf]
    %v452 = vld [vmem:[#allocation2 + $0x84] sm:$0xf]
    %v453 = vld [vmem:[#allocation2 + $0x88] sm:$0xf]
    %v454 = vld [vmem:[#allocation2 + $0x8c] sm:$0xf]
    %v455 = vld [vmem:[#allocation2 + $0x90] sm:$0xf]
    %v456 = vld [vmem:[#allocation2 + $0x94] sm:$0xf]
    %v457 = vld [vmem:[#allocation2 + $0x98] sm:$0xf]
    %v458 = vld [vmem:[#allocation2 + $0x9c] sm:$0xf]
    %v459 = vld [vmem:[#allocation2 + $0xa0] sm:$0xf]
    %v460 = vld [vmem:[#allocation2 + $0xa4] sm:$0xf]
    %v461 = vld [vmem:[#allocation2 + $0xa8] sm:$0xf]
    %v462 = vld [vmem:[#allocation2 + $0xac] sm:$0xf]
    %v463 = vld [vmem:[#allocation2 + $0xb0] sm:$0xf]
    %v464 = vld [vmem:[#allocation2 + $0xb4] sm:$0xf]
    %v465 = vld [vmem:[#allocation2 + $0xb8] sm:$0xf]
    %v466 = vld [vmem:[#allocation2 + $0xbc] sm:$0xf]
    %v467 = vld [vmem:[#allocation2 + $0xc0] sm:$0xf]
    %v468 = vld [vmem:[#allocation2 + $0xc4] sm:$0xf]
    %v469 = vld [vmem:[#allocation2 + $0xc8] sm:$0xf]
    %v470 = vld [vmem:[#allocation2 + $0xcc] sm:$0xf]
    %v471 = vld [vmem:[#allocation2 + $0xd0] sm:$0xf]
    %v472 = vld [vmem:[#allocation2 + $0xd4] sm:$0xf]
    %v473 = vld [vmem:[#allocation2 + $0xd8] sm:$0xf]
    %v474 = vld [vmem:[#allocation2 + $0xdc] sm:$0xf]
    %v475 = vld [vmem:[#allocation2 + $0xe0] sm:$0xf]
    %v476 = vld [vmem:[#allocation2 + $0xe4] sm:$0xf]
    %v477 = vld [vmem:[#allocation2 + $0xe8] sm:$0xf]
    %v478 = vld [vmem:[#allocation2 + $0xec] sm:$0xf]
    %v479 = vld [vmem:[#allocation2 + $0xf0] sm:$0xf]
    %v480 = vld [vmem:[#allocation2 + $0xf4] sm:$0xf]
    %v481 = vld [vmem:[#allocation2 + $0xf8] sm:$0xf]
    %v482 = vld [vmem:[#allocation2 + $0xfc] sm:$0xf]
    %v483 = vld [vmem:[%s6] sm:$0x1]
    %v485 = vlaneseq
    %v486 = vshrl.u32 %v485, 7
    %v487 = vsub.s32 0, %v486
    %v488 = vrot.slane %v483, %v487
    %v554 = vunpack.c.l.b16 %v419
    %v555 = vunpack.c.l.b16 %v420
    %v556 = vunpack.c.l.b16 %v421
    %v557 = vunpack.c.l.b16 %v422
    %v558 = vunpack.c.l.b16 %v423
    %v559 = vunpack.c.l.b16 %v424
    %v560 = vunpack.c.l.b16 %v425
    %v561 = vunpack.c.l.b16 %v426
    %v562 = vunpack.c.l.b16 %v427
    %v563 = vunpack.c.l.b16 %v428
    %v564 = vunpack.c.l.b16 %v429
    %v565 = vunpack.c.l.b16 %v430
    %v566 = vunpack.c.l.b16 %v431
    %v567 = vunpack.c.l.b16 %v432
    %v568 = vunpack.c.l.b16 %v433
    %v569 = vunpack.c.l.b16 %v434
    %v570 = vunpack.c.l.b16 %v435
    %v571 = vunpack.c.l.b16 %v436
    %v572 = vunpack.c.l.b16 %v437
    %v573 = vunpack.c.l.b16 %v438
    %v574 = vunpack.c.l.b16 %v439
    %v575 = vunpack.c.l.b16 %v440
    %v576 = vunpack.c.l.b16 %v441
    %v577 = vunpack.c.l.b16 %v442
    %v578 = vunpack.c.l.b16 %v443
    %v579 = vunpack.c.l.b16 %v444
    %v580 = vunpack.c.l.b16 %v445
    %v581 = vunpack.c.l.b16 %v446
    %v582 = vunpack.c.l.b16 %v447
    %v583 = vunpack.c.l.b16 %v448
    %v584 = vunpack.c.l.b16 %v449
    %v585 = vunpack.c.l.b16 %v450
    %v586 = vunpack.c.l.b16 %v451
    %v587 = vunpack.c.l.b16 %v452
    %v588 = vunpack.c.l.b16 %v453
    %v589 = vunpack.c.l.b16 %v454
    %v590 = vunpack.c.l.b16 %v455
    %v591 = vunpack.c.l.b16 %v456
    %v592 = vunpack.c.l.b16 %v457
    %v593 = vunpack.c.l.b16 %v458
    %v594 = vunpack.c.l.b16 %v459
    %v595 = vunpack.c.l.b16 %v460
    %v596 = vunpack.c.l.b16 %v461
    %v597 = vunpack.c.l.b16 %v462
    %v598 = vunpack.c.l.b16 %v463
    %v599 = vunpack.c.l.b16 %v464
    %v600 = vunpack.c.l.b16 %v465
    %v601 = vunpack.c.l.b16 %v466
    %v602 = vunpack.c.l.b16 %v467
    %v603 = vunpack.c.l.b16 %v468
    %v604 = vunpack.c.l.b16 %v469
    %v605 = vunpack.c.l.b16 %v470
    %v606 = vunpack.c.l.b16 %v471
    %v607 = vunpack.c.l.b16 %v472
    %v608 = vunpack.c.l.b16 %v473
    %v609 = vunpack.c.l.b16 %v474
    %v610 = vunpack.c.l.b16 %v475
    %v611 = vunpack.c.l.b16 %v476
    %v612 = vunpack.c.l.b16 %v477
    %v613 = vunpack.c.l.b16 %v478
    %v614 = vunpack.c.l.b16 %v479
    %v615 = vunpack.c.l.b16 %v480
    %v616 = vunpack.c.l.b16 %v481
    %v617 = vunpack.c.l.b16 %v482
    %v618 = vpack.c.b16 %v555, %v554
    %v619 = vpack.c.b16 %v557, %v556
    %v620 = vpack.c.b16 %v559, %v558
    %v621 = vpack.c.b16 %v561, %v560
    %v622 = vpack.c.b16 %v563, %v562
    %v623 = vpack.c.b16 %v565, %v564
    %v624 = vpack.c.b16 %v567, %v566
    %v625 = vpack.c.b16 %v569, %v568
    %v626 = vpack.c.b16 %v571, %v570
    %v627 = vpack.c.b16 %v573, %v572
    %v628 = vpack.c.b16 %v575, %v574
    %v629 = vpack.c.b16 %v577, %v576
    %v630 = vpack.c.b16 %v579, %v578
    %v631 = vpack.c.b16 %v581, %v580
    %v632 = vpack.c.b16 %v583, %v582
    %v633 = vpack.c.b16 %v585, %v584
    %v634 = vpack.c.b16 %v587, %v586
    %v635 = vpack.c.b16 %v589, %v588
    %v636 = vpack.c.b16 %v591, %v590
    %v637 = vpack.c.b16 %v593, %v592
    %v638 = vpack.c.b16 %v595, %v594
    %v639 = vpack.c.b16 %v597, %v596
    %v640 = vpack.c.b16 %v599, %v598
    %v641 = vpack.c.b16 %v601, %v600
    %v642 = vpack.c.b16 %v603, %v602
    %v643 = vpack.c.b16 %v605, %v604
    %v644 = vpack.c.b16 %v607, %v606
    %v645 = vpack.c.b16 %v609, %v608
    %v646 = vpack.c.b16 %v611, %v610
    %v647 = vpack.c.b16 %v613, %v612
    %v648 = vpack.c.b16 %v615, %v614
    %v649 = vpack.c.b16 %v617, %v616
    %682 = vmatprep.subr.bf16.mxu0 0
    %683 = vmatpush1.bf16.msra.mxu0 %v625
    %684 = vmatprep.subr.bf16.mxu0 0
    %685 = vmatpush1.bf16.msra.mxu0 %v624
    %686 = vmatprep.subr.bf16.mxu0 0
    %687 = vmatpush1.bf16.msra.mxu0 %v623
    %688 = vmatprep.subr.bf16.mxu0 0
    %689 = vmatpush1.bf16.msra.mxu0 %v622
    %690 = vmatprep.subr.bf16.mxu0 0
    %691 = vmatpush1.bf16.msra.mxu0 %v621
    %692 = vmatprep.subr.bf16.mxu0 0
    %693 = vmatpush1.bf16.msra.mxu0 %v620
    %694 = vmatprep.subr.bf16.mxu0 0
    %695 = vmatpush1.bf16.msra.mxu0 %v619
    %696 = vmatprep.subr.bf16.mxu0 0
    %697 = vmatpush1.bf16.msra.mxu0 %v618
    %698 = vmatprep.subr.bf16.mxu0 0
    %699 = vmatpush2.bf16.msra.mxu0 %v633
    %700 = vmatprep.subr.bf16.mxu0 0
    %701 = vmatpush2.bf16.msra.mxu0 %v632
    %702 = vmatprep.subr.bf16.mxu0 0
    %703 = vmatpush2.bf16.msra.mxu0 %v631
    %704 = vmatprep.subr.bf16.mxu0 0
    %705 = vmatpush2.bf16.msra.mxu0 %v630
    %706 = vmatprep.subr.bf16.mxu0 0
    %707 = vmatpush2.bf16.msra.mxu0 %v629
    %708 = vmatprep.subr.bf16.mxu0 0
    %709 = vmatpush2.bf16.msra.mxu0 %v628
    %710 = vmatprep.subr.bf16.mxu0 0
    %711 = vmatpush2.bf16.msra.mxu0 %v627
    %712 = vmatprep.subr.bf16.mxu0 0
    %713 = vmatpush2.bf16.msra.mxu0 %v626
    %714 = vmatprep.mubr.bf16.mxu0 %v412
    %715 = vmatmul.mubr.bf16.gmra.mxu0 %v411
    %v716 = vpop.f32.mrf.mxu0
    %v717 = vadd.f32 %v488, %v716
    %v718 = vpop.f32.mrf.mxu0
    %v719 = vpop.f32.mrf.mxu0
    %v720 = vadd.f32 %v488, %v719
    %v721 = vpop.f32.mrf.mxu0
    %722 = vmatprep.mubr.bf16.mxu0 %v416
    %723 = vmatmul.mubr.bf16.gmra.mxu0 %v415
    %v724 = vpop.f32.mrf.mxu0
    %v725 = vadd.f32 %v488, %v724
    %v726 = vpop.f32.mrf.mxu0
    %v727 = vpop.f32.mrf.mxu0
    %v728 = vadd.f32 %v488, %v727
    %v729 = vpop.f32.mrf.mxu0
    %730 = vdwg.mxu0
    %731 = vmatprep.subr.bf16.mxu0 0
    %732 = vmatpush1.bf16.msra.mxu0 %v641
    %733 = vmatprep.subr.bf16.mxu0 0
    %734 = vmatpush1.bf16.msra.mxu0 %v640
    %735 = vmatprep.subr.bf16.mxu0 0
    %736 = vmatpush1.bf16.msra.mxu0 %v639
    %737 = vmatprep.subr.bf16.mxu0 0
    %738 = vmatpush1.bf16.msra.mxu0 %v638
    %739 = vmatprep.subr.bf16.mxu0 0
    %740 = vmatpush1.bf16.msra.mxu0 %v637
    %741 = vmatprep.subr.bf16.mxu0 0
    %742 = vmatpush1.bf16.msra.mxu0 %v636
    %743 = vmatprep.subr.bf16.mxu0 0
    %744 = vmatpush1.bf16.msra.mxu0 %v635
    %745 = vmatprep.subr.bf16.mxu0 0
    %746 = vmatpush1.bf16.msra.mxu0 %v634
    %747 = vmatprep.subr.bf16.mxu0 0
    %748 = vmatpush2.bf16.msra.mxu0 %v649
    %749 = vmatprep.subr.bf16.mxu0 0
    %750 = vmatpush2.bf16.msra.mxu0 %v648
    %751 = vmatprep.subr.bf16.mxu0 0
    %752 = vmatpush2.bf16.msra.mxu0 %v647
    %753 = vmatprep.subr.bf16.mxu0 0
    %754 = vmatpush2.bf16.msra.mxu0 %v646
    %755 = vmatprep.subr.bf16.mxu0 0
    %756 = vmatpush2.bf16.msra.mxu0 %v645
    %757 = vmatprep.subr.bf16.mxu0 0
    %758 = vmatpush2.bf16.msra.mxu0 %v644
    %759 = vmatprep.subr.bf16.mxu0 0
    %760 = vmatpush2.bf16.msra.mxu0 %v643
    %761 = vmatprep.subr.bf16.mxu0 0
    %762 = vmatpush2.bf16.msra.mxu0 %v642
    %763 = vmatprep.mubr.bf16.mxu0 %v414
    %764 = vmatmul.mubr.bf16.gmra.mxu0 %v413
    %v765 = vpop.f32.mrf.mxu0
    %v766 = vadd.f32 %v717, %v765
    %v767 = vpop.f32.mrf.mxu0
    %v768 = vpop.f32.mrf.mxu0
    %v769 = vadd.f32 %v720, %v768
    %v770 = vpop.f32.mrf.mxu0
    %771 = vmatprep.mubr.bf16.mxu0 %v418
    %772 = vmatmul.mubr.bf16.gmra.mxu0 %v417
    %v773 = vpop.f32.mrf.mxu0
    %v774 = vadd.f32 %v725, %v773
    %v775 = vpop.f32.mrf.mxu0
    %v776 = vpop.f32.mrf.mxu0
    %v777 = vadd.f32 %v728, %v776
    %v778 = vpop.f32.mrf.mxu0
    %779 = vdwg.mxu0
    %v780 = vadd.f32 %v69, %v766
    %v781 = vadd.f32 %v70, %v769
    %v782 = vadd.f32 %v71, %v774
    %v783 = vadd.f32 %v72, %v777
    %v784 = vpack.c.bf16 %v781, %v780
    %v785 = vpack.c.bf16 %v783, %v782
    %v788 = vunpack.c.l.b16 %v784
    %v789 = vunpack.c.h.b16 %v784
    %v790 = vunpack.c.l.b16 %v785
    %v791 = vunpack.c.h.b16 %v785
    %v792 = vpack.c.b16 %v788, %v788
    %v793 = vpack.c.b16 %v789, %v789
    %v794 = vpack.c.b16 %v790, %v790
    %v795 = vpack.c.b16 %v791, %v791
    %800 = vst [vmem:[%s7] sm:$0xf] %v792
    %801 = vst [vmem:[%s7 + $0x4] sm:$0xf] %v793
    %802 = vst [vmem:[%s7 + $0x8] sm:$0xf] %v794
    %803 = vst [vmem:[%s7 + $0xc] sm:$0xf] %v795
    %s804 = smul.u32 0, 32
    %v805 = vlaneseq
    %v806 = vshrl.u32 %v805, 7
    %v807 = vadd.s32 %v806, 8
    %v808 = vadd.s32 %v806, 16
    %v809 = vadd.s32 %v806, 24
    %v810 = vstv %s804
    %v811 = vadd.s32 %v810, %v806
    %v812 = vadd.s32 %v810, %v807
    %v813 = vadd.s32 %v810, %v808
    %v814 = vadd.s32 %v810, %v809
    %vm815 = vcmp.lt.s32.totalorder %v811, 32
    %vm816 = vcmp.lt.s32.totalorder %v812, 32
    %vm817 = vcmp.lt.s32.totalorder %v813, 32
    %vm818 = vcmp.lt.s32.totalorder %v814, 32
    %v819 = vsel %vm815, %v780, 0.0
    %v820 = vsel %vm816, %v781, 0.0
    %v821 = vsel %vm817, %v782, 0.0
    %v822 = vsel %vm818, %v783, 0.0
    %v823 = vadd.f32 %v819, %v820
    %v824 = vadd.f32 %v823, %v821
    %v825 = vadd.f32 %v824, %v822
    %v826 = vrot.slane %v825, 4
    %v827 = vadd.f32 %v825, %v826
    %v828 = vrot.slane %v827, 2
    %v829 = vadd.f32 %v827, %v828
    %v830 = vrot.slane %v829, 1
    %v831 = vadd.f32 %v829, %v830
    %832 = vst [vmem:[%s8] sm:$0x1] %v831
    %v833 = vmul.f32 %v819, %v819
    %v834 = vmul.f32 %v820, %v820
    %v835 = vmul.f32 %v821, %v821
    %v836 = vmul.f32 %v822, %v822
    %v837 = vadd.f32 %v833, %v834
    %v838 = vadd.f32 %v837, %v835
    %v839 = vadd.f32 %v838, %v836
    %v840 = vrot.slane %v839, 4
    %v841 = vadd.f32 %v839, %v840
    %v842 = vrot.slane %v841, 2
    %v843 = vadd.f32 %v841, %v842
    %v844 = vrot.slane %v843, 1
    %v845 = vadd.f32 %v843, %v844
    %846 = vst [vmem:[%s8 + $0x1] sm:$0x1] %v845
    // Predicated region
    $region34: #{graph_encoder.10} parent=1 // pred_check
      _
    $region35: #{graph_encoder.10} parent=1 // pred_check_branch
      %848 = sbr.rel (0) target = $region37
    $region36: #{graph_encoder.10} parent=1 // pred_region
      _
    $region37: #{graph_encoder.10} parent=1 // pred_fallthru
      _
    // Predicated region
    $region38: #{graph_encoder.10} parent=1 // pred_check
      _
    $region39: #{graph_encoder.10} parent=1 // pred_check_branch
      %850 = sbr.rel (0) target = $region41
    $region40: #{graph_encoder.10} parent=1 // pred_region
      _
    $region41: #{graph_encoder.10} parent=1 // pred_fallthru
      _
    // Predicated region
    $region42: #{graph_encoder.10} parent=1 // pred_check
      _
    $region43: #{graph_encoder.10} parent=1 // pred_check_branch
      %852 = sbr.rel (0) target = $region45
    $region44: #{graph_encoder.10} parent=1 // pred_region
      _
    $region45: #{graph_encoder.10} parent=1 // pred_fallthru
      _
    // Predicated region
    $region46: #{graph_encoder.10} parent=1 // pred_check
      _
    $region47: #{graph_encoder.10} parent=1 // pred_check_branch
      %854 = sbr.rel (0) target = $region49
    $region48: #{graph_encoder.10} parent=1 // pred_region
      _
    $region49: #{graph_encoder.10} parent=1 // pred_fallthru
      _
    %855 = vsyncpa [#allocation3], 1

// kernel: graph_encoder.9
$region0: #{graph_encoder.9}
  #allocation0 [shape = 'u32[]', space=smem, size = 0x4, offset = 0x4, fixed_abs, tag = 'smem constant byte address 0x4 - core index']
  #allocation1 [shape = 'u32[144,128]{1,0:T(1,128)}', space=vmem, size = 0x12000, scoped, tag = 'internal scratch']
  %s0 = inlined_call_operand.vmem [shape: bf16[2,16,128], index: 0, kind: input, shape index: {}]
  %s1 = inlined_call_operand.vmem [shape: f32[1,128], index: 1, kind: input, shape index: {}]
  %s2 = inlined_call_operand.vmem [shape: f32[1,128], index: 2, kind: input, shape index: {}]
  %s3 = inlined_call_operand.vmem [shape: bf16[128,128], index: 3, kind: input, shape index: {}]
  %s4 = inlined_call_operand.hbm [shape: bf16[128,128], index: 4, kind: input, shape index: {}]
  %s5 = inlined_call_operand.hbm [shape: bf16[128,128], index: 5, kind: input, shape index: {}]
  %s6 = inlined_call_operand.hbm [shape: f32[1,128], index: 6, kind: input, shape index: {}]
  %s7 = inlined_call_operand.hbm [shape: f32[1,128], index: 7, kind: input, shape index: {}]
  %s8 = inlined_call_operand.hbm [shape: f32[1,128], index: 8, kind: input, shape index: {}]
  %s9 = inlined_call_operand.hbm [shape: bf16[128,128], index: 9, kind: input, shape index: {}]
  %s10 = inlined_call_operand.hbm [shape: f32[1,128], index: 10, kind: input, shape index: {}]
  %s11 = inlined_call_operand.vmem [shape: bf16[2,16,128], index: 11, kind: output, shape index: {0}]
  %s12 = inlined_call_operand.vmem [shape: f32[1,2,128], index: 12, kind: output, shape index: {1}]
  %13 = xla_tuple %s11, %s12
  %s14 = sld [smem:[#allocation0]]
  $region90: #{graph_encoder.9} parent=0
    _
  %s16 = ssub.s32 1, %s14
  %s17 = scalar_select 0, %s16, %s14
  $region1: #{graph_encoder.9} parent=0
    #allocation2 [shape = 'u8[32768]{0}', space=vmem, size = 0x8000, scoped, tag = 'input window, operand 4, single buffered']
    #allocation3 [shape = 's32[1]{0}', space=sflag, size = 0x4, scoped, tag = 'scoped memory for graph_encoder.9']
    #allocation4 [shape = 'u8[32768]{0}', space=vmem, size = 0x8000, scoped, tag = 'input window, operand 5, single buffered']
    #allocation5 [shape = 's32[1]{0}', space=sflag, size = 0x4, scoped, tag = 'scoped memory for graph_encoder.9']
    #allocation6 [shape = 'u8[512]{0}', space=vmem, size = 0x400, scoped, tag = 'input window, operand 6, single buffered']
    #allocation7 [shape = 'u8[512]{0}', space=vmem, size = 0x400, scoped, tag = 'input window, operand 7, single buffered']
    #allocation8 [shape = 's32[1]{0}', space=sflag, size = 0x4, scoped, tag = 'scoped memory for graph_encoder.9']
    #allocation9 [shape = 'u8[512]{0}', space=vmem, size = 0x400, scoped, tag = 'input window, operand 8, single buffered']
    #allocation10 [shape = 'u8[32768]{0}', space=vmem, size = 0x8000, scoped, tag = 'input window, operand 9, single buffered']
    #allocation11 [shape = 's32[1]{0}', space=sflag, size = 0x4, scoped, tag = 'scoped memory for graph_encoder.9']
    #allocation12 [shape = 'u8[512]{0}', space=vmem, size = 0x400, scoped, tag = 'input window, operand 10, single buffered']
    %18 = vsyncpa [#allocation3], 0
    %19 = vsyncpa [#allocation5], 0
    %20 = vsyncpa [#allocation8], 0
    %21 = vsyncpa [#allocation11], 0
    // Predicated region
    $region2: #{graph_encoder.9} parent=1 // pred_check
      _
    $region3: #{graph_encoder.9} parent=1 // pred_check_branch
      %23 = sbr.rel (0) target = $region5
    $region4: #{graph_encoder.9} parent=1 // pred_region
      _
    $region5: #{graph_encoder.9} parent=1 // pred_fallthru
      _
    // Predicated region
    $region6: #{graph_encoder.9} parent=1 // pred_check
      _
    $region7: #{graph_encoder.9} parent=1 // pred_check_branch
      %25 = sbr.rel (0) target = $region9
    $region8: #{graph_encoder.9} parent=1 // pred_region
      _
    $region9: #{graph_encoder.9} parent=1 // pred_fallthru
      _
    // Predicated region
    $region10: #{graph_encoder.9} parent=1 // pred_check
      _
    $region11: #{graph_encoder.9} parent=1 // pred_check_branch
      %27 = sbr.rel (0) target = $region13
    $region12: #{graph_encoder.9} parent=1 // pred_region
      _
    $region13: #{graph_encoder.9} parent=1 // pred_fallthru
      _
    // Predicated region
    $region14: #{graph_encoder.9} parent=1 // pred_check
      _
    $region15: #{graph_encoder.9} parent=1 // pred_check_branch
      %29 = sbr.rel (0) target = $region17
    $region16: #{graph_encoder.9} parent=1 // pred_region
      _
    $region17: #{graph_encoder.9} parent=1 // pred_fallthru
      _
    // Predicated region
    $region18: #{graph_encoder.9} parent=1 // pred_check
      _
    $region19: #{graph_encoder.9} parent=1 // pred_check_branch
      %31 = sbr.rel (0) target = $region21
    $region20: #{graph_encoder.9} parent=1 // pred_region
      %s33 = ssub.s32 1024, 1024
      %34 = vsyncadd [#allocation3], %s33
      %s35 = sshll.u32 [#allocation2], 4
      %s36 = int_to_ptr.vmem [resolvable:$true] %s35
      %41 = dma.hbm_to_vmem [thread:$0]  %s4, 1024, %s36, [#allocation3], 64, 64, 4
    $region21: #{graph_encoder.9} parent=1 // pred_fallthru
      _
    // Predicated region
    $region22: #{graph_encoder.9} parent=1 // pred_check
      _
    $region23: #{graph_encoder.9} parent=1 // pred_check_branch
      %43 = sbr.rel (0) target = $region25
    $region24: #{graph_encoder.9} parent=1 // pred_region
      %s45 = ssub.s32 1024, 1024
      %46 = vsyncadd [#allocation5], %s45
      %s47 = sshll.u32 [#allocation4], 4
      %s48 = int_to_ptr.vmem [resolvable:$true] %s47
      %53 = dma.hbm_to_vmem [thread:$0]  %s5, 1024, %s48, [#allocation5], 64, 64, 4
    $region25: #{graph_encoder.9} parent=1 // pred_fallthru
      _
    // Predicated region
    $region26: #{graph_encoder.9} parent=1 // pred_check
      _
    $region27: #{graph_encoder.9} parent=1 // pred_check_branch
      %55 = sbr.rel (0) target = $region29
    $region28: #{graph_encoder.9} parent=1 // pred_region
      %s57 = ssub.s32 16, 16
      %58 = vsyncadd [#allocation5], %s57
      %s60 = sshll.u32 [#allocation6], 4
      %s61 = int_to_ptr.vmem [resolvable:$true] %s60
      %63 = dma.hbm_to_vmem [thread:$0]  %s6, 16, %s61, [#allocation5]
    $region29: #{graph_encoder.9} parent=1 // pred_fallthru
      _
    // Predicated region
    $region30: #{graph_encoder.9} parent=1 // pred_check
      _
    $region31: #{graph_encoder.9} parent=1 // pred_check_branch
      %65 = sbr.rel (0) target = $region33
    $region32: #{graph_encoder.9} parent=1 // pred_region
      %s67 = ssub.s32 16, 16
      %68 = vsyncadd [#allocation8], %s67
      %s70 = sshll.u32 [#allocation7], 4
      %s71 = int_to_ptr.vmem [resolvable:$true] %s70
      %73 = dma.hbm_to_vmem [thread:$0]  %s7, 16, %s71, [#allocation8]
    $region33: #{graph_encoder.9} parent=1 // pred_fallthru
      _
    // Predicated region
    $region34: #{graph_encoder.9} parent=1 // pred_check
      _
    $region35: #{graph_encoder.9} parent=1 // pred_check_branch
      %75 = sbr.rel (0) target = $region37
    $region36: #{graph_encoder.9} parent=1 // pred_region
      %s77 = ssub.s32 16, 16
      %78 = vsyncadd [#allocation8], %s77
      %s80 = sshll.u32 [#allocation9], 4
      %s81 = int_to_ptr.vmem [resolvable:$true] %s80
      %83 = dma.hbm_to_vmem [thread:$0]  %s8, 16, %s81, [#allocation8]
    $region37: #{graph_encoder.9} parent=1 // pred_fallthru
      _
    // Predicated region
    $region38: #{graph_encoder.9} parent=1 // pred_check
      _
    $region39: #{graph_encoder.9} parent=1 // pred_check_branch
      %85 = sbr.rel (0) target = $region41
    $region40: #{graph_encoder.9} parent=1 // pred_region
      %s87 = ssub.s32 1024, 1024
      %88 = vsyncadd [#allocation11], %s87
      %s89 = sshll.u32 [#allocation10], 4
      %s90 = int_to_ptr.vmem [resolvable:$true] %s89
      %95 = dma.hbm_to_vmem [thread:$0]  %s9, 1024, %s90, [#allocation11], 64, 64, 4
    $region41: #{graph_encoder.9} parent=1 // pred_fallthru
      _
    // Predicated region
    $region42: #{graph_encoder.9} parent=1 // pred_check
      _
    $region43: #{graph_encoder.9} parent=1 // pred_check_branch
      %97 = sbr.rel (0) target = $region45
    $region44: #{graph_encoder.9} parent=1 // pred_region
      %s99 = ssub.s32 16, 16
      %100 = vsyncadd [#allocation11], %s99
      %s102 = sshll.u32 [#allocation12], 4
      %s103 = int_to_ptr.vmem [resolvable:$true] %s102
      %105 = dma.hbm_to_vmem [thread:$0]  %s10, 16, %s103, [#allocation11]
    $region45: #{graph_encoder.9} parent=1 // pred_fallthru
      _
    // Predicated region
    $region46: #{graph_encoder.9} parent=1 // pred_check
      _
    $region47: #{graph_encoder.9} parent=1 // pred_check_branch
      %107 = sbr.rel (0) target = $region49
    $region48: #{graph_encoder.9} parent=1 // pred_region
      %108 = dma.done [#allocation3], 1024
    $region49: #{graph_encoder.9} parent=1 // pred_fallthru
      _
    // Predicated region
    $region50: #{graph_encoder.9} parent=1 // pred_check
      _
    $region51: #{graph_encoder.9} parent=1 // pred_check_branch
      %110 = sbr.rel (0) target = $region53
    $region52: #{graph_encoder.9} parent=1 // pred_region
      %111 = dma.done [#allocation5], 1024
    $region53: #{graph_encoder.9} parent=1 // pred_fallthru
      _
    // Predicated region
    $region54: #{graph_encoder.9} parent=1 // pred_check
      _
    $region55: #{graph_encoder.9} parent=1 // pred_check_branch
      %113 = sbr.rel (0) target = $region57
    $region56: #{graph_encoder.9} parent=1 // pred_region
      %114 = dma.done [#allocation5], 16
    $region57: #{graph_encoder.9} parent=1 // pred_fallthru
      _
    // Predicated region
    $region58: #{graph_encoder.9} parent=1 // pred_check
      _
    $region59: #{graph_encoder.9} parent=1 // pred_check_branch
      %116 = sbr.rel (0) target = $region61
    $region60: #{graph_encoder.9} parent=1 // pred_region
      %117 = dma.done [#allocation8], 16
    $region61: #{graph_encoder.9} parent=1 // pred_fallthru
      _
    // Predicated region
    $region62: #{graph_encoder.9} parent=1 // pred_check
      _
    $region63: #{graph_encoder.9} parent=1 // pred_check_branch
      %119 = sbr.rel (0) target = $region65
    $region64: #{graph_encoder.9} parent=1 // pred_region
      %120 = dma.done [#allocation8], 16
    $region65: #{graph_encoder.9} parent=1 // pred_fallthru
      _
    // Predicated region
    $region66: #{graph_encoder.9} parent=1 // pred_check
      _
    $region67: #{graph_encoder.9} parent=1 // pred_check_branch
      %122 = sbr.rel (0) target = $region69
    $region68: #{graph_encoder.9} parent=1 // pred_region
      %123 = dma.done [#allocation11], 1024
    $region69: #{graph_encoder.9} parent=1 // pred_fallthru
      _
    // Predicated region
    $region70: #{graph_encoder.9} parent=1 // pred_check
      _
    $region71: #{graph_encoder.9} parent=1 // pred_check_branch
      %125 = sbr.rel (0) target = $region73
    $region72: #{graph_encoder.9} parent=1 // pred_region
      %126 = dma.done [#allocation11], 16
    $region73: #{graph_encoder.9} parent=1 // pred_fallthru
      _
    %v128 = vld [vmem:[%s0] sm:$0xf]
    %v129 = vld [vmem:[%s0 + $0x4] sm:$0xf]
    %v130 = vld [vmem:[%s0 + $0x8] sm:$0xf]
    %v131 = vld [vmem:[%s0 + $0xc] sm:$0xf]
    %v132 = vunpack.c.l.bf16 %v128
    %v133 = vunpack.c.l.bf16 %v129
    %v134 = vunpack.c.l.bf16 %v130
    %v135 = vunpack.c.l.bf16 %v131
    %v136 = vld [vmem:[%s1] sm:$0x1]
    %v138 = vlaneseq
    %v139 = vshrl.u32 %v138, 7
    %v140 = vsub.s32 0, %v139
    %v141 = vrot.slane %v136, %v140
    %v143 = vmul.f32 %v132, %v141
    %v144 = vmul.f32 %v133, %v141
    %v145 = vmul.f32 %v134, %v141
    %v146 = vmul.f32 %v135, %v141
    %v147 = vld [vmem:[%s2] sm:$0x1]
    %v149 = vlaneseq
    %v150 = vshrl.u32 %v149, 7
    %v151 = vsub.s32 0, %v150
    %v152 = vrot.slane %v147, %v151
    %v154 = vadd.f32 %v143, %v152
    %v155 = vadd.f32 %v144, %v152
    %v156 = vadd.f32 %v145, %v152
    %v157 = vadd.f32 %v146, %v152
    %v158 = vpack.c.bf16 %v155, %v154
    %v159 = vpack.c.bf16 %v157, %v156
    %v160 = vld [vmem:[%s3] sm:$0xf]
    %v161 = vld [vmem:[%s3 + $0x4] sm:$0xf]
    %v162 = vld [vmem:[%s3 + $0x8] sm:$0xf]
    %v163 = vld [vmem:[%s3 + $0xc] sm:$0xf]
    %v164 = vld [vmem:[%s3 + $0x10] sm:$0xf]
    %v165 = vld [vmem:[%s3 + $0x14] sm:$0xf]
    %v166 = vld [vmem:[%s3 + $0x18] sm:$0xf]
    %v167 = vld [vmem:[%s3 + $0x1c] sm:$0xf]
    %v168 = vld [vmem:[%s3 + $0x20] sm:$0xf]
    %v169 = vld [vmem:[%s3 + $0x24] sm:$0xf]
    %v170 = vld [vmem:[%s3 + $0x28] sm:$0xf]
    %v171 = vld [vmem:[%s3 + $0x2c] sm:$0xf]
    %v172 = vld [vmem:[%s3 + $0x30] sm:$0xf]
    %v173 = vld [vmem:[%s3 + $0x34] sm:$0xf]
    %v174 = vld [vmem:[%s3 + $0x38] sm:$0xf]
    %v175 = vld [vmem:[%s3 + $0x3c] sm:$0xf]
    %v176 = vld [vmem:[#allocation6] sm:$0x1]
    %v178 = vlaneseq
    %v179 = vshrl.u32 %v178, 7
    %v180 = vsub.s32 0, %v179
    %v181 = vrot.slane %v176, %v180
    %v199 = vunpack.c.l.b16 %v160
    %v200 = vunpack.c.l.b16 %v161
    %v201 = vunpack.c.l.b16 %v162
    %v202 = vunpack.c.l.b16 %v163
    %v203 = vunpack.c.l.b16 %v164
    %v204 = vunpack.c.l.b16 %v165
    %v205 = vunpack.c.l.b16 %v166
    %v206 = vunpack.c.l.b16 %v167
    %v207 = vunpack.c.l.b16 %v168
    %v208 = vunpack.c.l.b16 %v169
    %v209 = vunpack.c.l.b16 %v170
    %v210 = vunpack.c.l.b16 %v171
    %v211 = vunpack.c.l.b16 %v172
    %v212 = vunpack.c.l.b16 %v173
    %v213 = vunpack.c.l.b16 %v174
    %v214 = vunpack.c.l.b16 %v175
    %v215 = vpack.c.b16 %v200, %v199
    %v216 = vpack.c.b16 %v202, %v201
    %v217 = vpack.c.b16 %v204, %v203
    %v218 = vpack.c.b16 %v206, %v205
    %v219 = vpack.c.b16 %v208, %v207
    %v220 = vpack.c.b16 %v210, %v209
    %v221 = vpack.c.b16 %v212, %v211
    %v222 = vpack.c.b16 %v214, %v213
    %231 = vmatprep.subr.bf16.mxu0 0
    %232 = vmatpush1.bf16.msra.mxu0 %v222
    %233 = vmatprep.subr.bf16.mxu0 0
    %234 = vmatpush1.bf16.msra.mxu0 %v221
    %235 = vmatprep.subr.bf16.mxu0 0
    %236 = vmatpush1.bf16.msra.mxu0 %v220
    %237 = vmatprep.subr.bf16.mxu0 0
    %238 = vmatpush1.bf16.msra.mxu0 %v219
    %239 = vmatprep.subr.bf16.mxu0 0
    %240 = vmatpush1.bf16.msra.mxu0 %v218
    %241 = vmatprep.subr.bf16.mxu0 0
    %242 = vmatpush1.bf16.msra.mxu0 %v217
    %243 = vmatprep.subr.bf16.mxu0 0
    %244 = vmatpush1.bf16.msra.mxu0 %v216
    %245 = vmatprep.subr.bf16.mxu0 0
    %246 = vmatpush1.bf16.msra.mxu0 %v215
    %247 = vmatprep.subr.bf16.mxu0 0
    %248 = vmatpush2.bf16.msra.mxu0 0
    %249 = vmatprep.subr.bf16.mxu0 0
    %250 = vmatpush2.bf16.msra.mxu0 0
    %251 = vmatprep.subr.bf16.mxu0 0
    %252 = vmatpush2.bf16.msra.mxu0 0
    %253 = vmatprep.subr.bf16.mxu0 0
    %254 = vmatpush2.bf16.msra.mxu0 0
    %255 = vmatprep.subr.bf16.mxu0 0
    %256 = vmatpush2.bf16.msra.mxu0 0
    %257 = vmatprep.subr.bf16.mxu0 0
    %258 = vmatpush2.bf16.msra.mxu0 0
    %259 = vmatprep.subr.bf16.mxu0 0
    %260 = vmatpush2.bf16.msra.mxu0 0
    %261 = vmatprep.subr.bf16.mxu0 0
    %262 = vmatpush2.bf16.msra.mxu0 0
    %263 = vmatprep.mubr.bf16.mxu0 0
    %264 = vmatmul.mubr.bf16.gmra.mxu0 %v158
    %v265 = vpop.f32.mrf.mxu0
    %v266 = vadd.f32 %v181, %v265
    %v267 = vpop.f32.mrf.mxu0
    %v268 = vpop.f32.mrf.mxu0
    %v269 = vadd.f32 %v181, %v268
    %v270 = vpop.f32.mrf.mxu0
    %271 = vmatprep.mubr.bf16.mxu0 0
    %272 = vmatmul.mubr.bf16.gmra.mxu0 %v159
    %v273 = vpop.f32.mrf.mxu0
    %v274 = vadd.f32 %v181, %v273
    %v275 = vpop.f32.mrf.mxu0
    %v276 = vpop.f32.mrf.mxu0
    %v277 = vadd.f32 %v181, %v276
    %v278 = vpop.f32.mrf.mxu0
    %279 = vdwg.mxu0
    %v280 = vld [vmem:[#allocation2] sm:$0xf]
    %v281 = vld [vmem:[#allocation2 + $0x4] sm:$0xf]
    %v282 = vld [vmem:[#allocation2 + $0x8] sm:$0xf]
    %v283 = vld [vmem:[#allocation2 + $0xc] sm:$0xf]
    %v284 = vld [vmem:[#allocation2 + $0x10] sm:$0xf]
    %v285 = vld [vmem:[#allocation2 + $0x14] sm:$0xf]
    %v286 = vld [vmem:[#allocation2 + $0x18] sm:$0xf]
    %v287 = vld [vmem:[#allocation2 + $0x1c] sm:$0xf]
    %v288 = vld [vmem:[#allocation2 + $0x20] sm:$0xf]
    %v289 = vld [vmem:[#allocation2 + $0x24] sm:$0xf]
    %v290 = vld [vmem:[#allocation2 + $0x28] sm:$0xf]
    %v291 = vld [vmem:[#allocation2 + $0x2c] sm:$0xf]
    %v292 = vld [vmem:[#allocation2 + $0x30] sm:$0xf]
    %v293 = vld [vmem:[#allocation2 + $0x34] sm:$0xf]
    %v294 = vld [vmem:[#allocation2 + $0x38] sm:$0xf]
    %v295 = vld [vmem:[#allocation2 + $0x3c] sm:$0xf]
    %v296 = vld [vmem:[#allocation7] sm:$0x1]
    %v298 = vlaneseq
    %v299 = vshrl.u32 %v298, 7
    %v300 = vsub.s32 0, %v299
    %v301 = vrot.slane %v296, %v300
    %v319 = vunpack.c.l.b16 %v280
    %v320 = vunpack.c.l.b16 %v281
    %v321 = vunpack.c.l.b16 %v282
    %v322 = vunpack.c.l.b16 %v283
    %v323 = vunpack.c.l.b16 %v284
    %v324 = vunpack.c.l.b16 %v285
    %v325 = vunpack.c.l.b16 %v286
    %v326 = vunpack.c.l.b16 %v287
    %v327 = vunpack.c.l.b16 %v288
    %v328 = vunpack.c.l.b16 %v289
    %v329 = vunpack.c.l.b16 %v290
    %v330 = vunpack.c.l.b16 %v291
    %v331 = vunpack.c.l.b16 %v292
    %v332 = vunpack.c.l.b16 %v293
    %v333 = vunpack.c.l.b16 %v294
    %v334 = vunpack.c.l.b16 %v295
    %v335 = vpack.c.b16 %v320, %v319
    %v336 = vpack.c.b16 %v322, %v321
    %v337 = vpack.c.b16 %v324, %v323
    %v338 = vpack.c.b16 %v326, %v325
    %v339 = vpack.c.b16 %v328, %v327
    %v340 = vpack.c.b16 %v330, %v329
    %v341 = vpack.c.b16 %v332, %v331
    %v342 = vpack.c.b16 %v334, %v333
    %351 = vmatprep.subr.bf16.mxu0 0
    %352 = vmatpush1.bf16.msra.mxu0 %v342
    %353 = vmatprep.subr.bf16.mxu0 0
    %354 = vmatpush1.bf16.msra.mxu0 %v341
    %355 = vmatprep.subr.bf16.mxu0 0
    %356 = vmatpush1.bf16.msra.mxu0 %v340
    %357 = vmatprep.subr.bf16.mxu0 0
    %358 = vmatpush1.bf16.msra.mxu0 %v339
    %359 = vmatprep.subr.bf16.mxu0 0
    %360 = vmatpush1.bf16.msra.mxu0 %v338
    %361 = vmatprep.subr.bf16.mxu0 0
    %362 = vmatpush1.bf16.msra.mxu0 %v337
    %363 = vmatprep.subr.bf16.mxu0 0
    %364 = vmatpush1.bf16.msra.mxu0 %v336
    %365 = vmatprep.subr.bf16.mxu0 0
    %366 = vmatpush1.bf16.msra.mxu0 %v335
    %367 = vmatprep.subr.bf16.mxu0 0
    %368 = vmatpush2.bf16.msra.mxu0 0
    %369 = vmatprep.subr.bf16.mxu0 0
    %370 = vmatpush2.bf16.msra.mxu0 0
    %371 = vmatprep.subr.bf16.mxu0 0
    %372 = vmatpush2.bf16.msra.mxu0 0
    %373 = vmatprep.subr.bf16.mxu0 0
    %374 = vmatpush2.bf16.msra.mxu0 0
    %375 = vmatprep.subr.bf16.mxu0 0
    %376 = vmatpush2.bf16.msra.mxu0 0
    %377 = vmatprep.subr.bf16.mxu0 0
    %378 = vmatpush2.bf16.msra.mxu0 0
    %379 = vmatprep.subr.bf16.mxu0 0
    %380 = vmatpush2.bf16.msra.mxu0 0
    %381 = vmatprep.subr.bf16.mxu0 0
    %382 = vmatpush2.bf16.msra.mxu0 0
    %383 = vmatprep.mubr.bf16.mxu0 0
    %384 = vmatmul.mubr.bf16.gmra.mxu0 %v158
    %v385 = vpop.f32.mrf.mxu0
    %v386 = vadd.f32 %v301, %v385
    %v387 = vpop.f32.mrf.mxu0
    %v388 = vpop.f32.mrf.mxu0
    %v389 = vadd.f32 %v301, %v388
    %v390 = vpop.f32.mrf.mxu0
    %391 = vmatprep.mubr.bf16.mxu0 0
    %392 = vmatmul.mubr.bf16.gmra.mxu0 %v159
    %v393 = vpop.f32.mrf.mxu0
    %v394 = vadd.f32 %v301, %v393
    %v395 = vpop.f32.mrf.mxu0
    %v396 = vpop.f32.mrf.mxu0
    %v397 = vadd.f32 %v301, %v396
    %v398 = vpop.f32.mrf.mxu0
    %399 = vdwg.mxu0
    %v400 = vld [vmem:[#allocation4] sm:$0xf]
    %v401 = vld [vmem:[#allocation4 + $0x4] sm:$0xf]
    %v402 = vld [vmem:[#allocation4 + $0x8] sm:$0xf]
    %v403 = vld [vmem:[#allocation4 + $0xc] sm:$0xf]
    %v404 = vld [vmem:[#allocation4 + $0x10] sm:$0xf]
    %v405 = vld [vmem:[#allocation4 + $0x14] sm:$0xf]
    %v406 = vld [vmem:[#allocation4 + $0x18] sm:$0xf]
    %v407 = vld [vmem:[#allocation4 + $0x1c] sm:$0xf]
    %v408 = vld [vmem:[#allocation4 + $0x20] sm:$0xf]
    %v409 = vld [vmem:[#allocation4 + $0x24] sm:$0xf]
    %v410 = vld [vmem:[#allocation4 + $0x28] sm:$0xf]
    %v411 = vld [vmem:[#allocation4 + $0x2c] sm:$0xf]
    %v412 = vld [vmem:[#allocation4 + $0x30] sm:$0xf]
    %v413 = vld [vmem:[#allocation4 + $0x34] sm:$0xf]
    %v414 = vld [vmem:[#allocation4 + $0x38] sm:$0xf]
    %v415 = vld [vmem:[#allocation4 + $0x3c] sm:$0xf]
    %v416 = vld [vmem:[#allocation9] sm:$0x1]
    %v418 = vlaneseq
    %v419 = vshrl.u32 %v418, 7
    %v420 = vsub.s32 0, %v419
    %v421 = vrot.slane %v416, %v420
    %v439 = vunpack.c.l.b16 %v400
    %v440 = vunpack.c.l.b16 %v401
    %v441 = vunpack.c.l.b16 %v402
    %v442 = vunpack.c.l.b16 %v403
    %v443 = vunpack.c.l.b16 %v404
    %v444 = vunpack.c.l.b16 %v405
    %v445 = vunpack.c.l.b16 %v406
    %v446 = vunpack.c.l.b16 %v407
    %v447 = vunpack.c.l.b16 %v408
    %v448 = vunpack.c.l.b16 %v409
    %v449 = vunpack.c.l.b16 %v410
    %v450 = vunpack.c.l.b16 %v411
    %v451 = vunpack.c.l.b16 %v412
    %v452 = vunpack.c.l.b16 %v413
    %v453 = vunpack.c.l.b16 %v414
    %v454 = vunpack.c.l.b16 %v415
    %v455 = vpack.c.b16 %v440, %v439
    %v456 = vpack.c.b16 %v442, %v441
    %v457 = vpack.c.b16 %v444, %v443
    %v458 = vpack.c.b16 %v446, %v445
    %v459 = vpack.c.b16 %v448, %v447
    %v460 = vpack.c.b16 %v450, %v449
    %v461 = vpack.c.b16 %v452, %v451
    %v462 = vpack.c.b16 %v454, %v453
    %471 = vmatprep.subr.bf16.mxu0 0
    %472 = vmatpush1.bf16.msra.mxu0 %v462
    %473 = vmatprep.subr.bf16.mxu0 0
    %474 = vmatpush1.bf16.msra.mxu0 %v461
    %475 = vmatprep.subr.bf16.mxu0 0
    %476 = vmatpush1.bf16.msra.mxu0 %v460
    %477 = vmatprep.subr.bf16.mxu0 0
    %478 = vmatpush1.bf16.msra.mxu0 %v459
    %479 = vmatprep.subr.bf16.mxu0 0
    %480 = vmatpush1.bf16.msra.mxu0 %v458
    %481 = vmatprep.subr.bf16.mxu0 0
    %482 = vmatpush1.bf16.msra.mxu0 %v457
    %483 = vmatprep.subr.bf16.mxu0 0
    %484 = vmatpush1.bf16.msra.mxu0 %v456
    %485 = vmatprep.subr.bf16.mxu0 0
    %486 = vmatpush1.bf16.msra.mxu0 %v455
    %487 = vmatprep.subr.bf16.mxu0 0
    %488 = vmatpush2.bf16.msra.mxu0 0
    %489 = vmatprep.subr.bf16.mxu0 0
    %490 = vmatpush2.bf16.msra.mxu0 0
    %491 = vmatprep.subr.bf16.mxu0 0
    %492 = vmatpush2.bf16.msra.mxu0 0
    %493 = vmatprep.subr.bf16.mxu0 0
    %494 = vmatpush2.bf16.msra.mxu0 0
    %495 = vmatprep.subr.bf16.mxu0 0
    %496 = vmatpush2.bf16.msra.mxu0 0
    %497 = vmatprep.subr.bf16.mxu0 0
    %498 = vmatpush2.bf16.msra.mxu0 0
    %499 = vmatprep.subr.bf16.mxu0 0
    %500 = vmatpush2.bf16.msra.mxu0 0
    %501 = vmatprep.subr.bf16.mxu0 0
    %502 = vmatpush2.bf16.msra.mxu0 0
    %503 = vmatprep.mubr.bf16.mxu0 0
    %504 = vmatmul.mubr.bf16.gmra.mxu0 %v158
    %v505 = vpop.f32.mrf.mxu0
    %v506 = vadd.f32 %v421, %v505
    %v507 = vpop.f32.mrf.mxu0
    %v508 = vpop.f32.mrf.mxu0
    %v509 = vadd.f32 %v421, %v508
    %v510 = vpop.f32.mrf.mxu0
    %511 = vmatprep.mubr.bf16.mxu0 0
    %512 = vmatmul.mubr.bf16.gmra.mxu0 %v159
    %v513 = vpop.f32.mrf.mxu0
    %v514 = vadd.f32 %v421, %v513
    %v515 = vpop.f32.mrf.mxu0
    %v516 = vpop.f32.mrf.mxu0
    %v517 = vadd.f32 %v421, %v516
    %v518 = vpop.f32.mrf.mxu0
    %519 = vdwg.mxu0
    %v520 = vpack.c.bf16 %v269, %v266
    %v521 = vpack.c.bf16 %v277, %v274
    %v522 = vpack.c.bf16 %v389, %v386
    %v523 = vpack.c.bf16 %v397, %v394
    %v524 = vpack.c.bf16 %v509, %v506
    %v525 = vpack.c.bf16 %v517, %v514
    %vm526 = vcmask 130048
    %v528 = vsel %vm526, %v520, 0
    %v531 = vsel %vm526, %v522, 0
    %533 = vmatprep.subr.bf16.mxu0 0
    %534 = vmatpush1.bf16.xpose.msra.mxu0 0
    %535 = vmatprep.subr.bf16.mxu0 0
    %536 = vmatpush1.bf16.xpose.msra.mxu0 0
    %537 = vmatprep.subr.bf16.mxu0 0
    %538 = vmatpush1.bf16.xpose.msra.mxu0 0
    %539 = vmatprep.subr.bf16.mxu0 0
    %540 = vmatpush1.bf16.xpose.msra.mxu0 0
    %541 = vmatprep.subr.bf16.mxu0 0
    %542 = vmatpush1.bf16.xpose.msra.mxu0 0
    %543 = vmatprep.subr.bf16.mxu0 0
    %544 = vmatpush1.bf16.xpose.msra.mxu0 0
    %545 = vmatprep.subr.bf16.mxu0 0
    %546 = vmatpush1.bf16.xpose.msra.mxu0 0
    %547 = vmatprep.subr.bf16.mxu0 0
    %548 = vmatpush1.bf16.xpose.msra.mxu0 %v531
    %549 = vmatprep.subr.bf16.mxu0 0
    %550 = vmatpush2.bf16.xpose.msra.mxu0 0
    %551 = vmatprep.subr.bf16.mxu0 0
    %552 = vmatpush2.bf16.xpose.msra.mxu0 0
    %553 = vmatprep.subr.bf16.mxu0 0
    %554 = vmatpush2.bf16.xpose.msra.mxu0 0
    %555 = vmatprep.subr.bf16.mxu0 0
    %556 = vmatpush2.bf16.xpose.msra.mxu0 0
    %557 = vmatprep.subr.bf16.mxu0 0
    %558 = vmatpush2.bf16.xpose.msra.mxu0 0
    %559 = vmatprep.subr.bf16.mxu0 0
    %560 = vmatpush2.bf16.xpose.msra.mxu0 0
    %561 = vmatprep.subr.bf16.mxu0 0
    %562 = vmatpush2.bf16.xpose.msra.mxu0 0
    %563 = vmatprep.subr.bf16.mxu0 0
    %564 = vmatpush2.bf16.xpose.msra.mxu0 0
    %565 = vmatprep.mubr.bf16.mxu0 0
    %566 = vmatmul.mubr.bf16.gmra.mxu0 %v528
    %v567 = vpop.f32.mrf.mxu0
    %v568 = vadd.f32 0.0, %v567
    %v569 = vpop.f32.mrf.mxu0
    %v570 = vpop.f32.mrf.mxu0
    %v571 = vadd.f32 0.0, %v570
    %v572 = vpop.f32.mrf.mxu0
    %573 = vdwg.mxu0
    %v575 = vsel %vm526, %v521, 0
    %v578 = vsel %vm526, %v523, 0
    %580 = vmatprep.subr.bf16.mxu0 0
    %581 = vmatpush1.bf16.xpose.msra.mxu0 0
    %582 = vmatprep.subr.bf16.mxu0 0
    %583 = vmatpush1.bf16.xpose.msra.mxu0 0
    %584 = vmatprep.subr.bf16.mxu0 0
    %585 = vmatpush1.bf16.xpose.msra.mxu0 0
    %586 = vmatprep.subr.bf16.mxu0 0
    %587 = vmatpush1.bf16.xpose.msra.mxu0 0
    %588 = vmatprep.subr.bf16.mxu0 0
    %589 = vmatpush1.bf16.xpose.msra.mxu0 0
    %590 = vmatprep.subr.bf16.mxu0 0
    %591 = vmatpush1.bf16.xpose.msra.mxu0 0
    %592 = vmatprep.subr.bf16.mxu0 0
    %593 = vmatpush1.bf16.xpose.msra.mxu0 0
    %594 = vmatprep.subr.bf16.mxu0 0
    %595 = vmatpush1.bf16.xpose.msra.mxu0 %v578
    %596 = vmatprep.subr.bf16.mxu0 0
    %597 = vmatpush2.bf16.xpose.msra.mxu0 0
    %598 = vmatprep.subr.bf16.mxu0 0
    %599 = vmatpush2.bf16.xpose.msra.mxu0 0
    %600 = vmatprep.subr.bf16.mxu0 0
    %601 = vmatpush2.bf16.xpose.msra.mxu0 0
    %602 = vmatprep.subr.bf16.mxu0 0
    %603 = vmatpush2.bf16.xpose.msra.mxu0 0
    %604 = vmatprep.subr.bf16.mxu0 0
    %605 = vmatpush2.bf16.xpose.msra.mxu0 0
    %606 = vmatprep.subr.bf16.mxu0 0
    %607 = vmatpush2.bf16.xpose.msra.mxu0 0
    %608 = vmatprep.subr.bf16.mxu0 0
    %609 = vmatpush2.bf16.xpose.msra.mxu0 0
    %610 = vmatprep.subr.bf16.mxu0 0
    %611 = vmatpush2.bf16.xpose.msra.mxu0 0
    %612 = vmatprep.mubr.bf16.mxu0 0
    %613 = vmatmul.mubr.bf16.gmra.mxu0 %v575
    %v614 = vpop.f32.mrf.mxu0
    %v615 = vadd.f32 0.0, %v614
    %v616 = vpop.f32.mrf.mxu0
    %v617 = vpop.f32.mrf.mxu0
    %v618 = vadd.f32 0.0, %v617
    %v619 = vpop.f32.mrf.mxu0
    %620 = vdwg.mxu0
    %v621 = vsel %vm526, %v568, -inf
    %622 = vmax.xlane.f32.xlu0 %v621
    %v623 = vpop.xlane.xlu0 %622
    %v624 = vsel %vm526, %v571, -inf
    %625 = vmax.xlane.f32.xlu0 %v624
    %v626 = vpop.xlane.xlu0 %625
    %v627 = vsel %vm526, %v615, -inf
    %628 = vmax.xlane.f32.xlu0 %v627
    %v629 = vpop.xlane.xlu0 %628
    %v630 = vsel %vm526, %v618, -inf
    %631 = vmax.xlane.f32.xlu0 %v630
    %v632 = vpop.xlane.xlu0 %631
    %v633 = vsub.f32 %v568, %v623
    %v634 = vsub.f32 %v571, %v626
    %v635 = vsub.f32 %v615, %v629
    %v636 = vsub.f32 %v618, %v632
    %v637 = vmul.f32 %v633, 1.442695
    %v638 = vpow.pop %v637
    %v639 = vmul.f32 %v634, 1.442695
    %v640 = vpow.pop %v639
    %v641 = vmul.f32 %v635, 1.442695
    %v642 = vpow.pop %v641
    %v643 = vmul.f32 %v636, 1.442695
    %v644 = vpow.pop %v643
    %v645 = vsel %vm526, %v638, 0.0
    %646 = vadd.xlane.f32.xlu0 %v645
    %v647 = vpop.xlane.xlu0 %646
    %v648 = vsel %vm526, %v640, 0.0
    %649 = vadd.xlane.f32.xlu0 %v648
    %v650 = vpop.xlane.xlu0 %649
    %v651 = vsel %vm526, %v642, 0.0
    %652 = vadd.xlane.f32.xlu0 %v651
    %v653 = vpop.xlane.xlu0 %652
    %v654 = vsel %vm526, %v644, 0.0
    %655 = vadd.xlane.f32.xlu0 %v654
    %v656 = vpop.xlane.xlu0 %655
    %v657 = vrcp.pop %v647
    %v658 = vrcp.pop %v650
    %v659 = vrcp.pop %v653
    %v660 = vrcp.pop %v656
    %v661 = vmul.f32 %v638, %v657
    %v662 = vmul.f32 %v640, %v658
    %v663 = vmul.f32 %v642, %v659
    %v664 = vmul.f32 %v644, %v660
    %v665 = vpack.c.bf16 %v662, %v661
    %v666 = vpack.c.bf16 %v664, %v663
    %v668 = vsel %vm526, %v665, 0
    %670 = vmatprep.subr.bf16.mxu0 0
    %671 = vmatpush1.bf16.msra.mxu0 0
    %672 = vmatprep.subr.bf16.mxu0 0
    %673 = vmatpush1.bf16.msra.mxu0 0
    %674 = vmatprep.subr.bf16.mxu0 0
    %675 = vmatpush1.bf16.msra.mxu0 0
    %676 = vmatprep.subr.bf16.mxu0 0
    %677 = vmatpush1.bf16.msra.mxu0 0
    %678 = vmatprep.subr.bf16.mxu0 0
    %679 = vmatpush1.bf16.msra.mxu0 0
    %680 = vmatprep.subr.bf16.mxu0 0
    %681 = vmatpush1.bf16.msra.mxu0 0
    %682 = vmatprep.subr.bf16.mxu0 0
    %683 = vmatpush1.bf16.msra.mxu0 0
    %684 = vmatprep.subr.bf16.mxu0 0
    %685 = vmatpush1.bf16.msra.mxu0 %v524
    %686 = vmatprep.subr.bf16.mxu0 0
    %687 = vmatpush2.bf16.msra.mxu0 0
    %688 = vmatprep.subr.bf16.mxu0 0
    %689 = vmatpush2.bf16.msra.mxu0 0
    %690 = vmatprep.subr.bf16.mxu0 0
    %691 = vmatpush2.bf16.msra.mxu0 0
    %692 = vmatprep.subr.bf16.mxu0 0
    %693 = vmatpush2.bf16.msra.mxu0 0
    %694 = vmatprep.subr.bf16.mxu0 0
    %695 = vmatpush2.bf16.msra.mxu0 0
    %696 = vmatprep.subr.bf16.mxu0 0
    %697 = vmatpush2.bf16.msra.mxu0 0
    %698 = vmatprep.subr.bf16.mxu0 0
    %699 = vmatpush2.bf16.msra.mxu0 0
    %700 = vmatprep.subr.bf16.mxu0 0
    %701 = vmatpush2.bf16.msra.mxu0 0
    %702 = vmatprep.mubr.bf16.mxu0 0
    %703 = vmatmul.mubr.bf16.gmra.mxu0 %v668
    %v704 = vpop.f32.mrf.mxu0
    %v705 = vadd.f32 0.0, %v704
    %v706 = vpop.f32.mrf.mxu0
    %v707 = vpop.f32.mrf.mxu0
    %v708 = vadd.f32 0.0, %v707
    %v709 = vpop.f32.mrf.mxu0
    %710 = vdwg.mxu0
    %v712 = vsel %vm526, %v666, 0
    %714 = vmatprep.subr.bf16.mxu0 0
    %715 = vmatpush1.bf16.msra.mxu0 0
    %716 = vmatprep.subr.bf16.mxu0 0
    %717 = vmatpush1.bf16.msra.mxu0 0
    %718 = vmatprep.subr.bf16.mxu0 0
    %719 = vmatpush1.bf16.msra.mxu0 0
    %720 = vmatprep.subr.bf16.mxu0 0
    %721 = vmatpush1.bf16.msra.mxu0 0
    %722 = vmatprep.subr.bf16.mxu0 0
    %723 = vmatpush1.bf16.msra.mxu0 0
    %724 = vmatprep.subr.bf16.mxu0 0
    %725 = vmatpush1.bf16.msra.mxu0 0
    %726 = vmatprep.subr.bf16.mxu0 0
    %727 = vmatpush1.bf16.msra.mxu0 0
    %728 = vmatprep.subr.bf16.mxu0 0
    %729 = vmatpush1.bf16.msra.mxu0 %v525
    %730 = vmatprep.subr.bf16.mxu0 0
    %731 = vmatpush2.bf16.msra.mxu0 0
    %732 = vmatprep.subr.bf16.mxu0 0
    %733 = vmatpush2.bf16.msra.mxu0 0
    %734 = vmatprep.subr.bf16.mxu0 0
    %735 = vmatpush2.bf16.msra.mxu0 0
    %736 = vmatprep.subr.bf16.mxu0 0
    %737 = vmatpush2.bf16.msra.mxu0 0
    %738 = vmatprep.subr.bf16.mxu0 0
    %739 = vmatpush2.bf16.msra.mxu0 0
    %740 = vmatprep.subr.bf16.mxu0 0
    %741 = vmatpush2.bf16.msra.mxu0 0
    %742 = vmatprep.subr.bf16.mxu0 0
    %743 = vmatpush2.bf16.msra.mxu0 0
    %744 = vmatprep.subr.bf16.mxu0 0
    %745 = vmatpush2.bf16.msra.mxu0 0
    %746 = vmatprep.mubr.bf16.mxu0 0
    %747 = vmatmul.mubr.bf16.gmra.mxu0 %v712
    %v748 = vpop.f32.mrf.mxu0
    %v749 = vadd.f32 0.0, %v748
    %v750 = vpop.f32.mrf.mxu0
    %v751 = vpop.f32.mrf.mxu0
    %v752 = vadd.f32 0.0, %v751
    %v753 = vpop.f32.mrf.mxu0
    %754 = vdwg.mxu0
    %756 = vrot.lane.b32.xlu0 %v520, 112
    %v757 = vpop.permute.xlu0 %756
    %759 = vrot.lane.b32.xlu0 %v522, 112
    %v760 = vpop.permute.xlu0 %759
    %v762 = vsel %vm526, %v757, 0
    %v765 = vsel %vm526, %v760, 0
    %767 = vmatprep.subr.bf16.mxu0 0
    %768 = vmatpush1.bf16.xpose.msra.mxu0 0
    %769 = vmatprep.subr.bf16.mxu0 0
    %770 = vmatpush1.bf16.xpose.msra.mxu0 0
    %771 = vmatprep.subr.bf16.mxu0 0
    %772 = vmatpush1.bf16.xpose.msra.mxu0 0
    %773 = vmatprep.subr.bf16.mxu0 0
    %774 = vmatpush1.bf16.xpose.msra.mxu0 0
    %775 = vmatprep.subr.bf16.mxu0 0
    %776 = vmatpush1.bf16.xpose.msra.mxu0 0
    %777 = vmatprep.subr.bf16.mxu0 0
    %778 = vmatpush1.bf16.xpose.msra.mxu0 0
    %779 = vmatprep.subr.bf16.mxu0 0
    %780 = vmatpush1.bf16.xpose.msra.mxu0 0
    %781 = vmatprep.subr.bf16.mxu0 0
    %782 = vmatpush1.bf16.xpose.msra.mxu0 %v765
    %783 = vmatprep.subr.bf16.mxu0 0
    %784 = vmatpush2.bf16.xpose.msra.mxu0 0
    %785 = vmatprep.subr.bf16.mxu0 0
    %786 = vmatpush2.bf16.xpose.msra.mxu0 0
    %787 = vmatprep.subr.bf16.mxu0 0
    %788 = vmatpush2.bf16.xpose.msra.mxu0 0
    %789 = vmatprep.subr.bf16.mxu0 0
    %790 = vmatpush2.bf16.xpose.msra.mxu0 0
    %791 = vmatprep.subr.bf16.mxu0 0
    %792 = vmatpush2.bf16.xpose.msra.mxu0 0
    %793 = vmatprep.subr.bf16.mxu0 0
    %794 = vmatpush2.bf16.xpose.msra.mxu0 0
    %795 = vmatprep.subr.bf16.mxu0 0
    %796 = vmatpush2.bf16.xpose.msra.mxu0 0
    %797 = vmatprep.subr.bf16.mxu0 0
    %798 = vmatpush2.bf16.xpose.msra.mxu0 0
    %799 = vmatprep.mubr.bf16.mxu0 0
    %800 = vmatmul.mubr.bf16.gmra.mxu0 %v762
    %v801 = vpop.f32.mrf.mxu0
    %v802 = vadd.f32 0.0, %v801
    %v803 = vpop.f32.mrf.mxu0
    %v804 = vpop.f32.mrf.mxu0
    %v805 = vadd.f32 0.0, %v804
    %v806 = vpop.f32.mrf.mxu0
    %807 = vdwg.mxu0
    %809 = vrot.lane.b32.xlu0 %v521, 112
    %v810 = vpop.permute.xlu0 %809
    %812 = vrot.lane.b32.xlu0 %v523, 112
    %v813 = vpop.permute.xlu0 %812
    %v815 = vsel %vm526, %v810, 0
    %v818 = vsel %vm526, %v813, 0
    %820 = vmatprep.subr.bf16.mxu0 0
    %821 = vmatpush1.bf16.xpose.msra.mxu0 0
    %822 = vmatprep.subr.bf16.mxu0 0
    %823 = vmatpush1.bf16.xpose.msra.mxu0 0
    %824 = vmatprep.subr.bf16.mxu0 0
    %825 = vmatpush1.bf16.xpose.msra.mxu0 0
    %826 = vmatprep.subr.bf16.mxu0 0
    %827 = vmatpush1.bf16.xpose.msra.mxu0 0
    %828 = vmatprep.subr.bf16.mxu0 0
    %829 = vmatpush1.bf16.xpose.msra.mxu0 0
    %830 = vmatprep.subr.bf16.mxu0 0
    %831 = vmatpush1.bf16.xpose.msra.mxu0 0
    %832 = vmatprep.subr.bf16.mxu0 0
    %833 = vmatpush1.bf16.xpose.msra.mxu0 0
    %834 = vmatprep.subr.bf16.mxu0 0
    %835 = vmatpush1.bf16.xpose.msra.mxu0 %v818
    %836 = vmatprep.subr.bf16.mxu0 0
    %837 = vmatpush2.bf16.xpose.msra.mxu0 0
    %838 = vmatprep.subr.bf16.mxu0 0
    %839 = vmatpush2.bf16.xpose.msra.mxu0 0
    %840 = vmatprep.subr.bf16.mxu0 0
    %841 = vmatpush2.bf16.xpose.msra.mxu0 0
    %842 = vmatprep.subr.bf16.mxu0 0
    %843 = vmatpush2.bf16.xpose.msra.mxu0 0
    %844 = vmatprep.subr.bf16.mxu0 0
    %845 = vmatpush2.bf16.xpose.msra.mxu0 0
    %846 = vmatprep.subr.bf16.mxu0 0
    %847 = vmatpush2.bf16.xpose.msra.mxu0 0
    %848 = vmatprep.subr.bf16.mxu0 0
    %849 = vmatpush2.bf16.xpose.msra.mxu0 0
    %850 = vmatprep.subr.bf16.mxu0 0
    %851 = vmatpush2.bf16.xpose.msra.mxu0 0
    %852 = vmatprep.mubr.bf16.mxu0 0
    %853 = vmatmul.mubr.bf16.gmra.mxu0 %v815
    %v854 = vpop.f32.mrf.mxu0
    %v855 = vadd.f32 0.0, %v854
    %v856 = vpop.f32.mrf.mxu0
    %v857 = vpop.f32.mrf.mxu0
    %v858 = vadd.f32 0.0, %v857
    %v859 = vpop.f32.mrf.mxu0
    %860 = vdwg.mxu0
    %v861 = vsel %vm526, %v802, -inf
    %862 = vmax.xlane.f32.xlu0 %v861
    %v863 = vpop.xlane.xlu0 %862
    %v864 = vsel %vm526, %v805, -inf
    %865 = vmax.xlane.f32.xlu0 %v864
    %v866 = vpop.xlane.xlu0 %865
    %v867 = vsel %vm526, %v855, -inf
    %868 = vmax.xlane.f32.xlu0 %v867
    %v869 = vpop.xlane.xlu0 %868
    %v870 = vsel %vm526, %v858, -inf
    %871 = vmax.xlane.f32.xlu0 %v870
    %v872 = vpop.xlane.xlu0 %871
    %v873 = vsub.f32 %v802, %v863
    %v874 = vsub.f32 %v805, %v866
    %v875 = vsub.f32 %v855, %v869
    %v876 = vsub.f32 %v858, %v872
    %v877 = vmul.f32 %v873, 1.442695
    %v878 = vpow.pop %v877
    %v879 = vmul.f32 %v874, 1.442695
    %v880 = vpow.pop %v879
    %v881 = vmul.f32 %v875, 1.442695
    %v882 = vpow.pop %v881
    %v883 = vmul.f32 %v876, 1.442695
    %v884 = vpow.pop %v883
    %v885 = vsel %vm526, %v878, 0.0
    %886 = vadd.xlane.f32.xlu0 %v885
    %v887 = vpop.xlane.xlu0 %886
    %v888 = vsel %vm526, %v880, 0.0
    %889 = vadd.xlane.f32.xlu0 %v888
    %v890 = vpop.xlane.xlu0 %889
    %v891 = vsel %vm526, %v882, 0.0
    %892 = vadd.xlane.f32.xlu0 %v891
    %v893 = vpop.xlane.xlu0 %892
    %v894 = vsel %vm526, %v884, 0.0
    %895 = vadd.xlane.f32.xlu0 %v894
    %v896 = vpop.xlane.xlu0 %895
    %v897 = vrcp.pop %v887
    %v898 = vrcp.pop %v890
    %v899 = vrcp.pop %v893
    %v900 = vrcp.pop %v896
    %v901 = vmul.f32 %v878, %v897
    %v902 = vmul.f32 %v880, %v898
    %v903 = vmul.f32 %v882, %v899
    %v904 = vmul.f32 %v884, %v900
    %v905 = vpack.c.bf16 %v902, %v901
    %v906 = vpack.c.bf16 %v904, %v903
    %908 = vrot.lane.b32.xlu0 %v524, 112
    %v909 = vpop.permute.xlu0 %908
    %v912 = vsel %vm526, %v905, 0
    %914 = vmatprep.subr.bf16.mxu0 0
    %915 = vmatpush1.bf16.msra.mxu0 0
    %916 = vmatprep.subr.bf16.mxu0 0
    %917 = vmatpush1.bf16.msra.mxu0 0
    %918 = vmatprep.subr.bf16.mxu0 0
    %919 = vmatpush1.bf16.msra.mxu0 0
    %920 = vmatprep.subr.bf16.mxu0 0
    %921 = vmatpush1.bf16.msra.mxu0 0
    %922 = vmatprep.subr.bf16.mxu0 0
    %923 = vmatpush1.bf16.msra.mxu0 0
    %924 = vmatprep.subr.bf16.mxu0 0
    %925 = vmatpush1.bf16.msra.mxu0 0
    %926 = vmatprep.subr.bf16.mxu0 0
    %927 = vmatpush1.bf16.msra.mxu0 0
    %928 = vmatprep.subr.bf16.mxu0 0
    %929 = vmatpush1.bf16.msra.mxu0 %v909
    %930 = vmatprep.subr.bf16.mxu0 0
    %931 = vmatpush2.bf16.msra.mxu0 0
    %932 = vmatprep.subr.bf16.mxu0 0
    %933 = vmatpush2.bf16.msra.mxu0 0
    %934 = vmatprep.subr.bf16.mxu0 0
    %935 = vmatpush2.bf16.msra.mxu0 0
    %936 = vmatprep.subr.bf16.mxu0 0
    %937 = vmatpush2.bf16.msra.mxu0 0
    %938 = vmatprep.subr.bf16.mxu0 0
    %939 = vmatpush2.bf16.msra.mxu0 0
    %940 = vmatprep.subr.bf16.mxu0 0
    %941 = vmatpush2.bf16.msra.mxu0 0
    %942 = vmatprep.subr.bf16.mxu0 0
    %943 = vmatpush2.bf16.msra.mxu0 0
    %944 = vmatprep.subr.bf16.mxu0 0
    %945 = vmatpush2.bf16.msra.mxu0 0
    %946 = vmatprep.mubr.bf16.mxu0 0
    %947 = vmatmul.mubr.bf16.gmra.mxu0 %v912
    %v948 = vpop.f32.mrf.mxu0
    %v949 = vadd.f32 0.0, %v948
    %v950 = vpop.f32.mrf.mxu0
    %v951 = vpop.f32.mrf.mxu0
    %v952 = vadd.f32 0.0, %v951
    %v953 = vpop.f32.mrf.mxu0
    %954 = vdwg.mxu0
    %956 = vrot.lane.b32.xlu0 %v525, 112
    %v957 = vpop.permute.xlu0 %956
    %v960 = vsel %vm526, %v906, 0
    %962 = vmatprep.subr.bf16.mxu0 0
    %963 = vmatpush1.bf16.msra.mxu0 0
    %964 = vmatprep.subr.bf16.mxu0 0
    %965 = vmatpush1.bf16.msra.mxu0 0
    %966 = vmatprep.subr.bf16.mxu0 0
    %967 = vmatpush1.bf16.msra.mxu0 0
    %968 = vmatprep.subr.bf16.mxu0 0
    %969 = vmatpush1.bf16.msra.mxu0 0
    %970 = vmatprep.subr.bf16.mxu0 0
    %971 = vmatpush1.bf16.msra.mxu0 0
    %972 = vmatprep.subr.bf16.mxu0 0
    %973 = vmatpush1.bf16.msra.mxu0 0
    %974 = vmatprep.subr.bf16.mxu0 0
    %975 = vmatpush1.bf16.msra.mxu0 0
    %976 = vmatprep.subr.bf16.mxu0 0
    %977 = vmatpush1.bf16.msra.mxu0 %v957
    %978 = vmatprep.subr.bf16.mxu0 0
    %979 = vmatpush2.bf16.msra.mxu0 0
    %980 = vmatprep.subr.bf16.mxu0 0
    %981 = vmatpush2.bf16.msra.mxu0 0
    %982 = vmatprep.subr.bf16.mxu0 0
    %983 = vmatpush2.bf16.msra.mxu0 0
    %984 = vmatprep.subr.bf16.mxu0 0
    %985 = vmatpush2.bf16.msra.mxu0 0
    %986 = vmatprep.subr.bf16.mxu0 0
    %987 = vmatpush2.bf16.msra.mxu0 0
    %988 = vmatprep.subr.bf16.mxu0 0
    %989 = vmatpush2.bf16.msra.mxu0 0
    %990 = vmatprep.subr.bf16.mxu0 0
    %991 = vmatpush2.bf16.msra.mxu0 0
    %992 = vmatprep.subr.bf16.mxu0 0
    %993 = vmatpush2.bf16.msra.mxu0 0
    %994 = vmatprep.mubr.bf16.mxu0 0
    %995 = vmatmul.mubr.bf16.gmra.mxu0 %v960
    %v996 = vpop.f32.mrf.mxu0
    %v997 = vadd.f32 0.0, %v996
    %v998 = vpop.f32.mrf.mxu0
    %v999 = vpop.f32.mrf.mxu0
    %v1000 = vadd.f32 0.0, %v999
    %v1001 = vpop.f32.mrf.mxu0
    %1002 = vdwg.mxu0
    %1003 = vrot.lane.b32.xlu0 %v520, 96
    %v1004 = vpop.permute.xlu0 %1003
    %1005 = vrot.lane.b32.xlu0 %v522, 96
    %v1006 = vpop.permute.xlu0 %1005
    %v1008 = vsel %vm526, %v1004, 0
    %v1011 = vsel %vm526, %v1006, 0
    %1013 = vmatprep.subr.bf16.mxu0 0
    %1014 = vmatpush1.bf16.xpose.msra.mxu0 0
    %1015 = vmatprep.subr.bf16.mxu0 0
    %1016 = vmatpush1.bf16.xpose.msra.mxu0 0
    %1017 = vmatprep.subr.bf16.mxu0 0
    %1018 = vmatpush1.bf16.xpose.msra.mxu0 0
    %1019 = vmatprep.subr.bf16.mxu0 0
    %1020 = vmatpush1.bf16.xpose.msra.mxu0 0
    %1021 = vmatprep.subr.bf16.mxu0 0
    %1022 = vmatpush1.bf16.xpose.msra.mxu0 0
    %1023 = vmatprep.subr.bf16.mxu0 0
    %1024 = vmatpush1.bf16.xpose.msra.mxu0 0
    %1025 = vmatprep.subr.bf16.mxu0 0
    %1026 = vmatpush1.bf16.xpose.msra.mxu0 0
    %1027 = vmatprep.subr.bf16.mxu0 0
    %1028 = vmatpush1.bf16.xpose.msra.mxu0 %v1011
    %1029 = vmatprep.subr.bf16.mxu0 0
    %1030 = vmatpush2.bf16.xpose.msra.mxu0 0
    %1031 = vmatprep.subr.bf16.mxu0 0
    %1032 = vmatpush2.bf16.xpose.msra.mxu0 0
    %1033 = vmatprep.subr.bf16.mxu0 0
    %1034 = vmatpush2.bf16.xpose.msra.mxu0 0
    %1035 = vmatprep.subr.bf16.mxu0 0
    %1036 = vmatpush2.bf16.xpose.msra.mxu0 0
    %1037 = vmatprep.subr.bf16.mxu0 0
    %1038 = vmatpush2.bf16.xpose.msra.mxu0 0
    %1039 = vmatprep.subr.bf16.mxu0 0
    %1040 = vmatpush2.bf16.xpose.msra.mxu0 0
    %1041 = vmatprep.subr.bf16.mxu0 0
    %1042 = vmatpush2.bf16.xpose.msra.mxu0 0
    %1043 = vmatprep.subr.bf16.mxu0 0
    %1044 = vmatpush2.bf16.xpose.msra.mxu0 0
    %1045 = vmatprep.mubr.bf16.mxu0 0
    %1046 = vmatmul.mubr.bf16.gmra.mxu0 %v1008
    %v1047 = vpop.f32.mrf.mxu0
    %v1048 = vadd.f32 0.0, %v1047
    %v1049 = vpop.f32.mrf.mxu0
    %v1050 = vpop.f32.mrf.mxu0
    %v1051 = vadd.f32 0.0, %v1050
    %v1052 = vpop.f32.mrf.mxu0
    %1053 = vdwg.mxu0
    %1054 = vrot.lane.b32.xlu0 %v521, 96
    %v1055 = vpop.permute.xlu0 %1054
    %1056 = vrot.lane.b32.xlu0 %v523, 96
    %v1057 = vpop.permute.xlu0 %1056
    %v1059 = vsel %vm526, %v1055, 0
    %v1062 = vsel %vm526, %v1057, 0
    %1064 = vmatprep.subr.bf16.mxu0 0
    %1065 = vmatpush1.bf16.xpose.msra.mxu0 0
    %1066 = vmatprep.subr.bf16.mxu0 0
    %1067 = vmatpush1.bf16.xpose.msra.mxu0 0
    %1068 = vmatprep.subr.bf16.mxu0 0
    %1069 = vmatpush1.bf16.xpose.msra.mxu0 0
    %1070 = vmatprep.subr.bf16.mxu0 0
    %1071 = vmatpush1.bf16.xpose.msra.mxu0 0
    %1072 = vmatprep.subr.bf16.mxu0 0
    %1073 = vmatpush1.bf16.xpose.msra.mxu0 0
    %1074 = vmatprep.subr.bf16.mxu0 0
    %1075 = vmatpush1.bf16.xpose.msra.mxu0 0
    %1076 = vmatprep.subr.bf16.mxu0 0
    %1077 = vmatpush1.bf16.xpose.msra.mxu0 0
    %1078 = vmatprep.subr.bf16.mxu0 0
    %1079 = vmatpush1.bf16.xpose.msra.mxu0 %v1062
    %1080 = vmatprep.subr.bf16.mxu0 0
    %1081 = vmatpush2.bf16.xpose.msra.mxu0 0
    %1082 = vmatprep.subr.bf16.mxu0 0
    %1083 = vmatpush2.bf16.xpose.msra.mxu0 0
    %1084 = vmatprep.subr.bf16.mxu0 0
    %1085 = vmatpush2.bf16.xpose.msra.mxu0 0
    %1086 = vmatprep.subr.bf16.mxu0 0
    %1087 = vmatpush2.bf16.xpose.msra.mxu0 0
    %1088 = vmatprep.subr.bf16.mxu0 0
    %1089 = vmatpush2.bf16.xpose.msra.mxu0 0
    %1090 = vmatprep.subr.bf16.mxu0 0
    %1091 = vmatpush2.bf16.xpose.msra.mxu0 0
    %1092 = vmatprep.subr.bf16.mxu0 0
    %1093 = vmatpush2.bf16.xpose.msra.mxu0 0
    %1094 = vmatprep.subr.bf16.mxu0 0
    %1095 = vmatpush2.bf16.xpose.msra.mxu0 0
    %1096 = vmatprep.mubr.bf16.mxu0 0
    %1097 = vmatmul.mubr.bf16.gmra.mxu0 %v1059
    %v1098 = vpop.f32.mrf.mxu0
    %v1099 = vadd.f32 0.0, %v1098
    %v1100 = vpop.f32.mrf.mxu0
    %v1101 = vpop.f32.mrf.mxu0
    %v1102 = vadd.f32 0.0, %v1101
    %v1103 = vpop.f32.mrf.mxu0
    %1104 = vdwg.mxu0
    %v1105 = vsel %vm526, %v1048, -inf
    %1106 = vmax.xlane.f32.xlu0 %v1105
    %v1107 = vpop.xlane.xlu0 %1106
    %v1108 = vsel %vm526, %v1051, -inf
    %1109 = vmax.xlane.f32.xlu0 %v1108
    %v1110 = vpop.xlane.xlu0 %1109
    %v1111 = vsel %vm526, %v1099, -inf
    %1112 = vmax.xlane.f32.xlu0 %v1111
    %v1113 = vpop.xlane.xlu0 %1112
    %v1114 = vsel %vm526, %v1102, -inf
    %1115 = vmax.xlane.f32.xlu0 %v1114
    %v1116 = vpop.xlane.xlu0 %1115
    %v1117 = vsub.f32 %v1048, %v1107
    %v1118 = vsub.f32 %v1051, %v1110
    %v1119 = vsub.f32 %v1099, %v1113
    %v1120 = vsub.f32 %v1102, %v1116
    %v1121 = vmul.f32 %v1117, 1.442695
    %v1122 = vpow.pop %v1121
    %v1123 = vmul.f32 %v1118, 1.442695
    %v1124 = vpow.pop %v1123
    %v1125 = vmul.f32 %v1119, 1.442695
    %v1126 = vpow.pop %v1125
    %v1127 = vmul.f32 %v1120, 1.442695
    %v1128 = vpow.pop %v1127
    %v1129 = vsel %vm526, %v1122, 0.0
    %1130 = vadd.xlane.f32.xlu0 %v1129
    %v1131 = vpop.xlane.xlu0 %1130
    %v1132 = vsel %vm526, %v1124, 0.0
    %1133 = vadd.xlane.f32.xlu0 %v1132
    %v1134 = vpop.xlane.xlu0 %1133
    %v1135 = vsel %vm526, %v1126, 0.0
    %1136 = vadd.xlane.f32.xlu0 %v1135
    %v1137 = vpop.xlane.xlu0 %1136
    %v1138 = vsel %vm526, %v1128, 0.0
    %1139 = vadd.xlane.f32.xlu0 %v1138
    %v1140 = vpop.xlane.xlu0 %1139
    %v1141 = vrcp.pop %v1131
    %v1142 = vrcp.pop %v1134
    %v1143 = vrcp.pop %v1137
    %v1144 = vrcp.pop %v1140
    %v1145 = vmul.f32 %v1122, %v1141
    %v1146 = vmul.f32 %v1124, %v1142
    %v1147 = vmul.f32 %v1126, %v1143
    %v1148 = vmul.f32 %v1128, %v1144
    %v1149 = vpack.c.bf16 %v1146, %v1145
    %v1150 = vpack.c.bf16 %v1148, %v1147
    %1151 = vrot.lane.b32.xlu0 %v524, 96
    %v1152 = vpop.permute.xlu0 %1151
    %v1155 = vsel %vm526, %v1149, 0
    %1157 = vmatprep.subr.bf16.mxu0 0
    %1158 = vmatpush1.bf16.msra.mxu0 0
    %1159 = vmatprep.subr.bf16.mxu0 0
    %1160 = vmatpush1.bf16.msra.mxu0 0
    %1161 = vmatprep.subr.bf16.mxu0 0
    %1162 = vmatpush1.bf16.msra.mxu0 0
    %1163 = vmatprep.subr.bf16.mxu0 0
    %1164 = vmatpush1.bf16.msra.mxu0 0
    %1165 = vmatprep.subr.bf16.mxu0 0
    %1166 = vmatpush1.bf16.msra.mxu0 0
    %1167 = vmatprep.subr.bf16.mxu0 0
    %1168 = vmatpush1.bf16.msra.mxu0 0
    %1169 = vmatprep.subr.bf16.mxu0 0
    %1170 = vmatpush1.bf16.msra.mxu0 0
    %1171 = vmatprep.subr.bf16.mxu0 0
    %1172 = vmatpush1.bf16.msra.mxu0 %v1152
    %1173 = vmatprep.subr.bf16.mxu0 0
    %1174 = vmatpush2.bf16.msra.mxu0 0
    %1175 = vmatprep.subr.bf16.mxu0 0
    %1176 = vmatpush2.bf16.msra.mxu0 0
    %1177 = vmatprep.subr.bf16.mxu0 0
    %1178 = vmatpush2.bf16.msra.mxu0 0
    %1179 = vmatprep.subr.bf16.mxu0 0
    %1180 = vmatpush2.bf16.msra.mxu0 0
    %1181 = vmatprep.subr.bf16.mxu0 0
    %1182 = vmatpush2.bf16.msra.mxu0 0
    %1183 = vmatprep.subr.bf16.mxu0 0
    %1184 = vmatpush2.bf16.msra.mxu0 0
    %1185 = vmatprep.subr.bf16.mxu0 0
    %1186 = vmatpush2.bf16.msra.mxu0 0
    %1187 = vmatprep.subr.bf16.mxu0 0
    %1188 = vmatpush2.bf16.msra.mxu0 0
    %1189 = vmatprep.mubr.bf16.mxu0 0
    %1190 = vmatmul.mubr.bf16.gmra.mxu0 %v1155
    %v1191 = vpop.f32.mrf.mxu0
    %v1192 = vadd.f32 0.0, %v1191
    %v1193 = vpop.f32.mrf.mxu0
    %v1194 = vpop.f32.mrf.mxu0
    %v1195 = vadd.f32 0.0, %v1194
    %v1196 = vpop.f32.mrf.mxu0
    %1197 = vdwg.mxu0
    %1198 = vrot.lane.b32.xlu0 %v525, 96
    %v1199 = vpop.permute.xlu0 %1198
    %v1202 = vsel %vm526, %v1150, 0
    %1204 = vmatprep.subr.bf16.mxu0 0
    %1205 = vmatpush1.bf16.msra.mxu0 0
    %1206 = vmatprep.subr.bf16.mxu0 0
    %1207 = vmatpush1.bf16.msra.mxu0 0
    %1208 = vmatprep.subr.bf16.mxu0 0
    %1209 = vmatpush1.bf16.msra.mxu0 0
    %1210 = vmatprep.subr.bf16.mxu0 0
    %1211 = vmatpush1.bf16.msra.mxu0 0
    %1212 = vmatprep.subr.bf16.mxu0 0
    %1213 = vmatpush1.bf16.msra.mxu0 0
    %1214 = vmatprep.subr.bf16.mxu0 0
    %1215 = vmatpush1.bf16.msra.mxu0 0
    %1216 = vmatprep.subr.bf16.mxu0 0
    %1217 = vmatpush1.bf16.msra.mxu0 0
    %1218 = vmatprep.subr.bf16.mxu0 0
    %1219 = vmatpush1.bf16.msra.mxu0 %v1199
    %1220 = vmatprep.subr.bf16.mxu0 0
    %1221 = vmatpush2.bf16.msra.mxu0 0
    %1222 = vmatprep.subr.bf16.mxu0 0
    %1223 = vmatpush2.bf16.msra.mxu0 0
    %1224 = vmatprep.subr.bf16.mxu0 0
    %1225 = vmatpush2.bf16.msra.mxu0 0
    %1226 = vmatprep.subr.bf16.mxu0 0
    %1227 = vmatpush2.bf16.msra.mxu0 0
    %1228 = vmatprep.subr.bf16.mxu0 0
    %1229 = vmatpush2.bf16.msra.mxu0 0
    %1230 = vmatprep.subr.bf16.mxu0 0
    %1231 = vmatpush2.bf16.msra.mxu0 0
    %1232 = vmatprep.subr.bf16.mxu0 0
    %1233 = vmatpush2.bf16.msra.mxu0 0
    %1234 = vmatprep.subr.bf16.mxu0 0
    %1235 = vmatpush2.bf16.msra.mxu0 0
    %1236 = vmatprep.mubr.bf16.mxu0 0
    %1237 = vmatmul.mubr.bf16.gmra.mxu0 %v1202
    %v1238 = vpop.f32.mrf.mxu0
    %v1239 = vadd.f32 0.0, %v1238
    %v1240 = vpop.f32.mrf.mxu0
    %v1241 = vpop.f32.mrf.mxu0
    %v1242 = vadd.f32 0.0, %v1241
    %v1243 = vpop.f32.mrf.mxu0
    %1244 = vdwg.mxu0
    %1245 = vrot.lane.b32.xlu0 %v520, 80
    %v1246 = vpop.permute.xlu0 %1245
    %1247 = vrot.lane.b32.xlu0 %v522, 80
    %v1248 = vpop.permute.xlu0 %1247
    %v1250 = vsel %vm526, %v1246, 0
    %v1253 = vsel %vm526, %v1248, 0
    %1255 = vmatprep.subr.bf16.mxu0 0
    %1256 = vmatpush1.bf16.xpose.msra.mxu0 0
    %1257 = vmatprep.subr.bf16.mxu0 0
    %1258 = vmatpush1.bf16.xpose.msra.mxu0 0
    %1259 = vmatprep.subr.bf16.mxu0 0
    %1260 = vmatpush1.bf16.xpose.msra.mxu0 0
    %1261 = vmatprep.subr.bf16.mxu0 0
    %1262 = vmatpush1.bf16.xpose.msra.mxu0 0
    %1263 = vmatprep.subr.bf16.mxu0 0
    %1264 = vmatpush1.bf16.xpose.msra.mxu0 0
    %1265 = vmatprep.subr.bf16.mxu0 0
    %1266 = vmatpush1.bf16.xpose.msra.mxu0 0
    %1267 = vmatprep.subr.bf16.mxu0 0
    %1268 = vmatpush1.bf16.xpose.msra.mxu0 0
    %1269 = vmatprep.subr.bf16.mxu0 0
    %1270 = vmatpush1.bf16.xpose.msra.mxu0 %v1253
    %1271 = vmatprep.subr.bf16.mxu0 0
    %1272 = vmatpush2.bf16.xpose.msra.mxu0 0
    %1273 = vmatprep.subr.bf16.mxu0 0
    %1274 = vmatpush2.bf16.xpose.msra.mxu0 0
    %1275 = vmatprep.subr.bf16.mxu0 0
    %1276 = vmatpush2.bf16.xpose.msra.mxu0 0
    %1277 = vmatprep.subr.bf16.mxu0 0
    %1278 = vmatpush2.bf16.xpose.msra.mxu0 0
    %1279 = vmatprep.subr.bf16.mxu0 0
    %1280 = vmatpush2.bf16.xpose.msra.mxu0 0
    %1281 = vmatprep.subr.bf16.mxu0 0
    %1282 = vmatpush2.bf16.xpose.msra.mxu0 0
    %1283 = vmatprep.subr.bf16.mxu0 0
    %1284 = vmatpush2.bf16.xpose.msra.mxu0 0
    %1285 = vmatprep.subr.bf16.mxu0 0
    %1286 = vmatpush2.bf16.xpose.msra.mxu0 0
    %1287 = vmatprep.mubr.bf16.mxu0 0
    %1288 = vmatmul.mubr.bf16.gmra.mxu0 %v1250
    %v1289 = vpop.f32.mrf.mxu0
    %v1290 = vadd.f32 0.0, %v1289
    %v1291 = vpop.f32.mrf.mxu0
    %v1292 = vpop.f32.mrf.mxu0
    %v1293 = vadd.f32 0.0, %v1292
    %v1294 = vpop.f32.mrf.mxu0
    %1295 = vdwg.mxu0
    %1296 = vrot.lane.b32.xlu0 %v521, 80
    %v1297 = vpop.permute.xlu0 %1296
    %1298 = vrot.lane.b32.xlu0 %v523, 80
    %v1299 = vpop.permute.xlu0 %1298
    %v1301 = vsel %vm526, %v1297, 0
    %v1304 = vsel %vm526, %v1299, 0
    %1306 = vmatprep.subr.bf16.mxu0 0
    %1307 = vmatpush1.bf16.xpose.msra.mxu0 0
    %1308 = vmatprep.subr.bf16.mxu0 0
    %1309 = vmatpush1.bf16.xpose.msra.mxu0 0
    %1310 = vmatprep.subr.bf16.mxu0 0
    %1311 = vmatpush1.bf16.xpose.msra.mxu0 0
    %1312 = vmatprep.subr.bf16.mxu0 0
    %1313 = vmatpush1.bf16.xpose.msra.mxu0 0
    %1314 = vmatprep.subr.bf16.mxu0 0
    %1315 = vmatpush1.bf16.xpose.msra.mxu0 0
    %1316 = vmatprep.subr.bf16.mxu0 0
    %1317 = vmatpush1.bf16.xpose.msra.mxu0 0
    %1318 = vmatprep.subr.bf16.mxu0 0
    %1319 = vmatpush1.bf16.xpose.msra.mxu0 0
    %1320 = vmatprep.subr.bf16.mxu0 0
    %1321 = vmatpush1.bf16.xpose.msra.mxu0 %v1304
    %1322 = vmatprep.subr.bf16.mxu0 0
    %1323 = vmatpush2.bf16.xpose.msra.mxu0 0
    %1324 = vmatprep.subr.bf16.mxu0 0
    %1325 = vmatpush2.bf16.xpose.msra.mxu0 0
    %1326 = vmatprep.subr.bf16.mxu0 0
    %1327 = vmatpush2.bf16.xpose.msra.mxu0 0
    %1328 = vmatprep.subr.bf16.mxu0 0
    %1329 = vmatpush2.bf16.xpose.msra.mxu0 0
    %1330 = vmatprep.subr.bf16.mxu0 0
    %1331 = vmatpush2.bf16.xpose.msra.mxu0 0
    %1332 = vmatprep.subr.bf16.mxu0 0
    %1333 = vmatpush2.bf16.xpose.msra.mxu0 0
    %1334 = vmatprep.subr.bf16.mxu0 0
    %1335 = vmatpush2.bf16.xpose.msra.mxu0 0
    %1336 = vmatprep.subr.bf16.mxu0 0
    %1337 = vmatpush2.bf16.xpose.msra.mxu0 0
    %1338 = vmatprep.mubr.bf16.mxu0 0
    %1339 = vmatmul.mubr.bf16.gmra.mxu0 %v1301
    %v1340 = vpop.f32.mrf.mxu0
    %v1341 = vadd.f32 0.0, %v1340
    %v1342 = vpop.f32.mrf.mxu0
    %v1343 = vpop.f32.mrf.mxu0
    %v1344 = vadd.f32 0.0, %v1343
    %v1345 = vpop.f32.mrf.mxu0
    %1346 = vdwg.mxu0
    %v1347 = vsel %vm526, %v1290, -inf
    %1348 = vmax.xlane.f32.xlu0 %v1347
    %v1349 = vpop.xlane.xlu0 %1348
    %v1350 = vsel %vm526, %v1293, -inf
    %1351 = vmax.xlane.f32.xlu0 %v1350
    %v1352 = vpop.xlane.xlu0 %1351
    %v1353 = vsel %vm526, %v1341, -inf
    %1354 = vmax.xlane.f32.xlu0 %v1353
    %v1355 = vpop.xlane.xlu0 %1354
    %v1356 = vsel %vm526, %v1344, -inf
    %1357 = vmax.xlane.f32.xlu0 %v1356
    %v1358 = vpop.xlane.xlu0 %1357
    %v1359 = vsub.f32 %v1290, %v1349
    %v1360 = vsub.f32 %v1293, %v1352
    %v1361 = vsub.f32 %v1341, %v1355
    %v1362 = vsub.f32 %v1344, %v1358
    %v1363 = vmul.f32 %v1359, 1.442695
    %v1364 = vpow.pop %v1363
    %v1365 = vmul.f32 %v1360, 1.442695
    %v1366 = vpow.pop %v1365
    %v1367 = vmul.f32 %v1361, 1.442695
    %v1368 = vpow.pop %v1367
    %v1369 = vmul.f32 %v1362, 1.442695
    %v1370 = vpow.pop %v1369
    %v1371 = vsel %vm526, %v1364, 0.0
    %1372 = vadd.xlane.f32.xlu0 %v1371
    %v1373 = vpop.xlane.xlu0 %1372
    %v1374 = vsel %vm526, %v1366, 0.0
    %1375 = vadd.xlane.f32.xlu0 %v1374
    %v1376 = vpop.xlane.xlu0 %1375
    %v1377 = vsel %vm526, %v1368, 0.0
    %1378 = vadd.xlane.f32.xlu0 %v1377
    %v1379 = vpop.xlane.xlu0 %1378
    %v1380 = vsel %vm526, %v1370, 0.0
    %1381 = vadd.xlane.f32.xlu0 %v1380
    %v1382 = vpop.xlane.xlu0 %1381
    %v1383 = vrcp.pop %v1373
    %v1384 = vrcp.pop %v1376
    %v1385 = vrcp.pop %v1379
    %v1386 = vrcp.pop %v1382
    %v1387 = vmul.f32 %v1364, %v1383
    %v1388 = vmul.f32 %v1366, %v1384
    %v1389 = vmul.f32 %v1368, %v1385
    %v1390 = vmul.f32 %v1370, %v1386
    %v1391 = vpack.c.bf16 %v1388, %v1387
    %v1392 = vpack.c.bf16 %v1390, %v1389
    %1393 = vrot.lane.b32.xlu0 %v524, 80
    %v1394 = vpop.permute.xlu0 %1393
    %v1397 = vsel %vm526, %v1391, 0
    %1399 = vmatprep.subr.bf16.mxu0 0
    %1400 = vmatpush1.bf16.msra.mxu0 0
    %1401 = vmatprep.subr.bf16.mxu0 0
    %1402 = vmatpush1.bf16.msra.mxu0 0
    %1403 = vmatprep.subr.bf16.mxu0 0
    %1404 = vmatpush1.bf16.msra.mxu0 0
    %1405 = vmatprep.subr.bf16.mxu0 0
    %1406 = vmatpush1.bf16.msra.mxu0 0
    %1407 = vmatprep.subr.bf16.mxu0 0
    %1408 = vmatpush1.bf16.msra.mxu0 0
    %1409 = vmatprep.subr.bf16.mxu0 0
    %1410 = vmatpush1.bf16.msra.mxu0 0
    %1411 = vmatprep.subr.bf16.mxu0 0
    %1412 = vmatpush1.bf16.msra.mxu0 0
    %1413 = vmatprep.subr.bf16.mxu0 0
    %1414 = vmatpush1.bf16.msra.mxu0 %v1394
    %1415 = vmatprep.subr.bf16.mxu0 0
    %1416 = vmatpush2.bf16.msra.mxu0 0
    %1417 = vmatprep.subr.bf16.mxu0 0
    %1418 = vmatpush2.bf16.msra.mxu0 0
    %1419 = vmatprep.subr.bf16.mxu0 0
    %1420 = vmatpush2.bf16.msra.mxu0 0
    %1421 = vmatprep.subr.bf16.mxu0 0
    %1422 = vmatpush2.bf16.msra.mxu0 0
    %1423 = vmatprep.subr.bf16.mxu0 0
    %1424 = vmatpush2.bf16.msra.mxu0 0
    %1425 = vmatprep.subr.bf16.mxu0 0
    %1426 = vmatpush2.bf16.msra.mxu0 0
    %1427 = vmatprep.subr.bf16.mxu0 0
    %1428 = vmatpush2.bf16.msra.mxu0 0
    %1429 = vmatprep.subr.bf16.mxu0 0
    %1430 = vmatpush2.bf16.msra.mxu0 0
    %1431 = vmatprep.mubr.bf16.mxu0 0
    %1432 = vmatmul.mubr.bf16.gmra.mxu0 %v1397
    %v1433 = vpop.f32.mrf.mxu0
    %v1434 = vadd.f32 0.0, %v1433
    %v1435 = vpop.f32.mrf.mxu0
    %v1436 = vpop.f32.mrf.mxu0
    %v1437 = vadd.f32 0.0, %v1436
    %v1438 = vpop.f32.mrf.mxu0
    %1439 = vdwg.mxu0
    %1440 = vrot.lane.b32.xlu0 %v525, 80
    %v1441 = vpop.permute.xlu0 %1440
    %v1444 = vsel %vm526, %v1392, 0
    %1446 = vmatprep.subr.bf16.mxu0 0
    %1447 = vmatpush1.bf16.msra.mxu0 0
    %1448 = vmatprep.subr.bf16.mxu0 0
    %1449 = vmatpush1.bf16.msra.mxu0 0
    %1450 = vmatprep.subr.bf16.mxu0 0
    %1451 = vmatpush1.bf16.msra.mxu0 0
    %1452 = vmatprep.subr.bf16.mxu0 0
    %1453 = vmatpush1.bf16.msra.mxu0 0
    %1454 = vmatprep.subr.bf16.mxu0 0
    %1455 = vmatpush1.bf16.msra.mxu0 0
    %1456 = vmatprep.subr.bf16.mxu0 0
    %1457 = vmatpush1.bf16.msra.mxu0 0
    %1458 = vmatprep.subr.bf16.mxu0 0
    %1459 = vmatpush1.bf16.msra.mxu0 0
    %1460 = vmatprep.subr.bf16.mxu0 0
    %1461 = vmatpush1.bf16.msra.mxu0 %v1441
    %1462 = vmatprep.subr.bf16.mxu0 0
    %1463 = vmatpush2.bf16.msra.mxu0 0
    %1464 = vmatprep.subr.bf16.mxu0 0
    %1465 = vmatpush2.bf16.msra.mxu0 0
    %1466 = vmatprep.subr.bf16.mxu0 0
    %1467 = vmatpush2.bf16.msra.mxu0 0
    %1468 = vmatprep.subr.bf16.mxu0 0
    %1469 = vmatpush2.bf16.msra.mxu0 0
    %1470 = vmatprep.subr.bf16.mxu0 0
    %1471 = vmatpush2.bf16.msra.mxu0 0
    %1472 = vmatprep.subr.bf16.mxu0 0
    %1473 = vmatpush2.bf16.msra.mxu0 0
    %1474 = vmatprep.subr.bf16.mxu0 0
    %1475 = vmatpush2.bf16.msra.mxu0 0
    %1476 = vmatprep.subr.bf16.mxu0 0
    %1477 = vmatpush2.bf16.msra.mxu0 0
    %1478 = vmatprep.mubr.bf16.mxu0 0
    %1479 = vmatmul.mubr.bf16.gmra.mxu0 %v1444
    %v1480 = vpop.f32.mrf.mxu0
    %v1481 = vadd.f32 0.0, %v1480
    %v1482 = vpop.f32.mrf.mxu0
    %v1483 = vpop.f32.mrf.mxu0
    %v1484 = vadd.f32 0.0, %v1483
    %v1485 = vpop.f32.mrf.mxu0
    %1486 = vdwg.mxu0
    %1487 = vrot.lane.b32.xlu0 %v520, 64
    %v1488 = vpop.permute.xlu0 %1487
    %1489 = vrot.lane.b32.xlu0 %v522, 64
    %v1490 = vpop.permute.xlu0 %1489
    %v1492 = vsel %vm526, %v1488, 0
    %v1495 = vsel %vm526, %v1490, 0
    %1497 = vmatprep.subr.bf16.mxu0 0
    %1498 = vmatpush1.bf16.xpose.msra.mxu0 0
    %1499 = vmatprep.subr.bf16.mxu0 0
    %1500 = vmatpush1.bf16.xpose.msra.mxu0 0
    %1501 = vmatprep.subr.bf16.mxu0 0
    %1502 = vmatpush1.bf16.xpose.msra.mxu0 0
    %1503 = vmatprep.subr.bf16.mxu0 0
    %1504 = vmatpush1.bf16.xpose.msra.mxu0 0
    %1505 = vmatprep.subr.bf16.mxu0 0
    %1506 = vmatpush1.bf16.xpose.msra.mxu0 0
    %1507 = vmatprep.subr.bf16.mxu0 0
    %1508 = vmatpush1.bf16.xpose.msra.mxu0 0
    %1509 = vmatprep.subr.bf16.mxu0 0
    %1510 = vmatpush1.bf16.xpose.msra.mxu0 0
    %1511 = vmatprep.subr.bf16.mxu0 0
    %1512 = vmatpush1.bf16.xpose.msra.mxu0 %v1495
    %1513 = vmatprep.subr.bf16.mxu0 0
    %1514 = vmatpush2.bf16.xpose.msra.mxu0 0
    %1515 = vmatprep.subr.bf16.mxu0 0
    %1516 = vmatpush2.bf16.xpose.msra.mxu0 0
    %1517 = vmatprep.subr.bf16.mxu0 0
    %1518 = vmatpush2.bf16.xpose.msra.mxu0 0
    %1519 = vmatprep.subr.bf16.mxu0 0
    %1520 = vmatpush2.bf16.xpose.msra.mxu0 0
    %1521 = vmatprep.subr.bf16.mxu0 0
    %1522 = vmatpush2.bf16.xpose.msra.mxu0 0
    %1523 = vmatprep.subr.bf16.mxu0 0
    %1524 = vmatpush2.bf16.xpose.msra.mxu0 0
    %1525 = vmatprep.subr.bf16.mxu0 0
    %1526 = vmatpush2.bf16.xpose.msra.mxu0 0
    %1527 = vmatprep.subr.bf16.mxu0 0
    %1528 = vmatpush2.bf16.xpose.msra.mxu0 0
    %1529 = vmatprep.mubr.bf16.mxu0 0
    %1530 = vmatmul.mubr.bf16.gmra.mxu0 %v1492
    %v1531 = vpop.f32.mrf.mxu0
    %v1532 = vadd.f32 0.0, %v1531
    %v1533 = vpop.f32.mrf.mxu0
    %v1534 = vpop.f32.mrf.mxu0
    %v1535 = vadd.f32 0.0, %v1534
    %v1536 = vpop.f32.mrf.mxu0
    %1537 = vdwg.mxu0
    %1538 = vrot.lane.b32.xlu0 %v521, 64
    %v1539 = vpop.permute.xlu0 %1538
    %1540 = vrot.lane.b32.xlu0 %v523, 64
    %v1541 = vpop.permute.xlu0 %1540
    %v1543 = vsel %vm526, %v1539, 0
    %v1546 = vsel %vm526, %v1541, 0
    %1548 = vmatprep.subr.bf16.mxu0 0
    %1549 = vmatpush1.bf16.xpose.msra.mxu0 0
    %1550 = vmatprep.subr.bf16.mxu0 0
    %1551 = vmatpush1.bf16.xpose.msra.mxu0 0
    %1552 = vmatprep.subr.bf16.mxu0 0
    %1553 = vmatpush1.bf16.xpose.msra.mxu0 0
    %1554 = vmatprep.subr.bf16.mxu0 0
    %1555 = vmatpush1.bf16.xpose.msra.mxu0 0
    %1556 = vmatprep.subr.bf16.mxu0 0
    %1557 = vmatpush1.bf16.xpose.msra.mxu0 0
    %1558 = vmatprep.subr.bf16.mxu0 0
    %1559 = vmatpush1.bf16.xpose.msra.mxu0 0
    %1560 = vmatprep.subr.bf16.mxu0 0
    %1561 = vmatpush1.bf16.xpose.msra.mxu0 0
    %1562 = vmatprep.subr.bf16.mxu0 0
    %1563 = vmatpush1.bf16.xpose.msra.mxu0 %v1546
    %1564 = vmatprep.subr.bf16.mxu0 0
    %1565 = vmatpush2.bf16.xpose.msra.mxu0 0
    %1566 = vmatprep.subr.bf16.mxu0 0
    %1567 = vmatpush2.bf16.xpose.msra.mxu0 0
    %1568 = vmatprep.subr.bf16.mxu0 0
    %1569 = vmatpush2.bf16.xpose.msra.mxu0 0
    %1570 = vmatprep.subr.bf16.mxu0 0
    %1571 = vmatpush2.bf16.xpose.msra.mxu0 0
    %1572 = vmatprep.subr.bf16.mxu0 0
    %1573 = vmatpush2.bf16.xpose.msra.mxu0 0
    %1574 = vmatprep.subr.bf16.mxu0 0
    %1575 = vmatpush2.bf16.xpose.msra.mxu0 0
    %1576 = vmatprep.subr.bf16.mxu0 0
    %1577 = vmatpush2.bf16.xpose.msra.mxu0 0
    %1578 = vmatprep.subr.bf16.mxu0 0
    %1579 = vmatpush2.bf16.xpose.msra.mxu0 0
    %1580 = vmatprep.mubr.bf16.mxu0 0
    %1581 = vmatmul.mubr.bf16.gmra.mxu0 %v1543
    %v1582 = vpop.f32.mrf.mxu0
    %v1583 = vadd.f32 0.0, %v1582
    %v1584 = vpop.f32.mrf.mxu0
    %v1585 = vpop.f32.mrf.mxu0
    %v1586 = vadd.f32 0.0, %v1585
    %v1587 = vpop.f32.mrf.mxu0
    %1588 = vdwg.mxu0
    %v1589 = vsel %vm526, %v1532, -inf
    %1590 = vmax.xlane.f32.xlu0 %v1589
    %v1591 = vpop.xlane.xlu0 %1590
    %v1592 = vsel %vm526, %v1535, -inf
    %1593 = vmax.xlane.f32.xlu0 %v1592
    %v1594 = vpop.xlane.xlu0 %1593
    %v1595 = vsel %vm526, %v1583, -inf
    %1596 = vmax.xlane.f32.xlu0 %v1595
    %v1597 = vpop.xlane.xlu0 %1596
    %v1598 = vsel %vm526, %v1586, -inf
    %1599 = vmax.xlane.f32.xlu0 %v1598
    %v1600 = vpop.xlane.xlu0 %1599
    %v1601 = vsub.f32 %v1532, %v1591
    %v1602 = vsub.f32 %v1535, %v1594
    %v1603 = vsub.f32 %v1583, %v1597
    %v1604 = vsub.f32 %v1586, %v1600
    %v1605 = vmul.f32 %v1601, 1.442695
    %v1606 = vpow.pop %v1605
    %v1607 = vmul.f32 %v1602, 1.442695
    %v1608 = vpow.pop %v1607
    %v1609 = vmul.f32 %v1603, 1.442695
    %v1610 = vpow.pop %v1609
    %v1611 = vmul.f32 %v1604, 1.442695
    %v1612 = vpow.pop %v1611
    %v1613 = vsel %vm526, %v1606, 0.0
    %1614 = vadd.xlane.f32.xlu0 %v1613
    %v1615 = vpop.xlane.xlu0 %1614
    %v1616 = vsel %vm526, %v1608, 0.0
    %1617 = vadd.xlane.f32.xlu0 %v1616
    %v1618 = vpop.xlane.xlu0 %1617
    %v1619 = vsel %vm526, %v1610, 0.0
    %1620 = vadd.xlane.f32.xlu0 %v1619
    %v1621 = vpop.xlane.xlu0 %1620
    %v1622 = vsel %vm526, %v1612, 0.0
    %1623 = vadd.xlane.f32.xlu0 %v1622
    %v1624 = vpop.xlane.xlu0 %1623
    %v1625 = vrcp.pop %v1615
    %v1626 = vrcp.pop %v1618
    %v1627 = vrcp.pop %v1621
    %v1628 = vrcp.pop %v1624
    %v1629 = vmul.f32 %v1606, %v1625
    %v1630 = vmul.f32 %v1608, %v1626
    %v1631 = vmul.f32 %v1610, %v1627
    %v1632 = vmul.f32 %v1612, %v1628
    %v1633 = vpack.c.bf16 %v1630, %v1629
    %v1634 = vpack.c.bf16 %v1632, %v1631
    %1635 = vrot.lane.b32.xlu0 %v524, 64
    %v1636 = vpop.permute.xlu0 %1635
    %v1639 = vsel %vm526, %v1633, 0
    %1641 = vmatprep.subr.bf16.mxu0 0
    %1642 = vmatpush1.bf16.msra.mxu0 0
    %1643 = vmatprep.subr.bf16.mxu0 0
    %1644 = vmatpush1.bf16.msra.mxu0 0
    %1645 = vmatprep.subr.bf16.mxu0 0
    %1646 = vmatpush1.bf16.msra.mxu0 0
    %1647 = vmatprep.subr.bf16.mxu0 0
    %1648 = vmatpush1.bf16.msra.mxu0 0
    %1649 = vmatprep.subr.bf16.mxu0 0
    %1650 = vmatpush1.bf16.msra.mxu0 0
    %1651 = vmatprep.subr.bf16.mxu0 0
    %1652 = vmatpush1.bf16.msra.mxu0 0
    %1653 = vmatprep.subr.bf16.mxu0 0
    %1654 = vmatpush1.bf16.msra.mxu0 0
    %1655 = vmatprep.subr.bf16.mxu0 0
    %1656 = vmatpush1.bf16.msra.mxu0 %v1636
    %1657 = vmatprep.subr.bf16.mxu0 0
    %1658 = vmatpush2.bf16.msra.mxu0 0
    %1659 = vmatprep.subr.bf16.mxu0 0
    %1660 = vmatpush2.bf16.msra.mxu0 0
    %1661 = vmatprep.subr.bf16.mxu0 0
    %1662 = vmatpush2.bf16.msra.mxu0 0
    %1663 = vmatprep.subr.bf16.mxu0 0
    %1664 = vmatpush2.bf16.msra.mxu0 0
    %1665 = vmatprep.subr.bf16.mxu0 0
    %1666 = vmatpush2.bf16.msra.mxu0 0
    %1667 = vmatprep.subr.bf16.mxu0 0
    %1668 = vmatpush2.bf16.msra.mxu0 0
    %1669 = vmatprep.subr.bf16.mxu0 0
    %1670 = vmatpush2.bf16.msra.mxu0 0
    %1671 = vmatprep.subr.bf16.mxu0 0
    %1672 = vmatpush2.bf16.msra.mxu0 0
    %1673 = vmatprep.mubr.bf16.mxu0 0
    %1674 = vmatmul.mubr.bf16.gmra.mxu0 %v1639
    %v1675 = vpop.f32.mrf.mxu0
    %v1676 = vadd.f32 0.0, %v1675
    %v1677 = vpop.f32.mrf.mxu0
    %v1678 = vpop.f32.mrf.mxu0
    %v1679 = vadd.f32 0.0, %v1678
    %v1680 = vpop.f32.mrf.mxu0
    %1681 = vdwg.mxu0
    %1682 = vrot.lane.b32.xlu0 %v525, 64
    %v1683 = vpop.permute.xlu0 %1682
    %v1686 = vsel %vm526, %v1634, 0
    %1688 = vmatprep.subr.bf16.mxu0 0
    %1689 = vmatpush1.bf16.msra.mxu0 0
    %1690 = vmatprep.subr.bf16.mxu0 0
    %1691 = vmatpush1.bf16.msra.mxu0 0
    %1692 = vmatprep.subr.bf16.mxu0 0
    %1693 = vmatpush1.bf16.msra.mxu0 0
    %1694 = vmatprep.subr.bf16.mxu0 0
    %1695 = vmatpush1.bf16.msra.mxu0 0
    %1696 = vmatprep.subr.bf16.mxu0 0
    %1697 = vmatpush1.bf16.msra.mxu0 0
    %1698 = vmatprep.subr.bf16.mxu0 0
    %1699 = vmatpush1.bf16.msra.mxu0 0
    %1700 = vmatprep.subr.bf16.mxu0 0
    %1701 = vmatpush1.bf16.msra.mxu0 0
    %1702 = vmatprep.subr.bf16.mxu0 0
    %1703 = vmatpush1.bf16.msra.mxu0 %v1683
    %1704 = vmatprep.subr.bf16.mxu0 0
    %1705 = vmatpush2.bf16.msra.mxu0 0
    %1706 = vmatprep.subr.bf16.mxu0 0
    %1707 = vmatpush2.bf16.msra.mxu0 0
    %1708 = vmatprep.subr.bf16.mxu0 0
    %1709 = vmatpush2.bf16.msra.mxu0 0
    %1710 = vmatprep.subr.bf16.mxu0 0
    %1711 = vmatpush2.bf16.msra.mxu0 0
    %1712 = vmatprep.subr.bf16.mxu0 0
    %1713 = vmatpush2.bf16.msra.mxu0 0
    %1714 = vmatprep.subr.bf16.mxu0 0
    %1715 = vmatpush2.bf16.msra.mxu0 0
    %1716 = vmatprep.subr.bf16.mxu0 0
    %1717 = vmatpush2.bf16.msra.mxu0 0
    %1718 = vmatprep.subr.bf16.mxu0 0
    %1719 = vmatpush2.bf16.msra.mxu0 0
    %1720 = vmatprep.mubr.bf16.mxu0 0
    %1721 = vmatmul.mubr.bf16.gmra.mxu0 %v1686
    %v1722 = vpop.f32.mrf.mxu0
    %v1723 = vadd.f32 0.0, %v1722
    %v1724 = vpop.f32.mrf.mxu0
    %v1725 = vpop.f32.mrf.mxu0
    %v1726 = vadd.f32 0.0, %v1725
    %v1727 = vpop.f32.mrf.mxu0
    %1728 = vdwg.mxu0
    %1729 = vrot.lane.b32.xlu0 %v520, 48
    %v1730 = vpop.permute.xlu0 %1729
    %1731 = vrot.lane.b32.xlu0 %v522, 48
    %v1732 = vpop.permute.xlu0 %1731
    %v1734 = vsel %vm526, %v1730, 0
    %v1737 = vsel %vm526, %v1732, 0
    %1739 = vmatprep.subr.bf16.mxu0 0
    %1740 = vmatpush1.bf16.xpose.msra.mxu0 0
    %1741 = vmatprep.subr.bf16.mxu0 0
    %1742 = vmatpush1.bf16.xpose.msra.mxu0 0
    %1743 = vmatprep.subr.bf16.mxu0 0
    %1744 = vmatpush1.bf16.xpose.msra.mxu0 0
    %1745 = vmatprep.subr.bf16.mxu0 0
    %1746 = vmatpush1.bf16.xpose.msra.mxu0 0
    %1747 = vmatprep.subr.bf16.mxu0 0
    %1748 = vmatpush1.bf16.xpose.msra.mxu0 0
    %1749 = vmatprep.subr.bf16.mxu0 0
    %1750 = vmatpush1.bf16.xpose.msra.mxu0 0
    %1751 = vmatprep.subr.bf16.mxu0 0
    %1752 = vmatpush1.bf16.xpose.msra.mxu0 0
    %1753 = vmatprep.subr.bf16.mxu0 0
    %1754 = vmatpush1.bf16.xpose.msra.mxu0 %v1737
    %1755 = vmatprep.subr.bf16.mxu0 0
    %1756 = vmatpush2.bf16.xpose.msra.mxu0 0
    %1757 = vmatprep.subr.bf16.mxu0 0
    %1758 = vmatpush2.bf16.xpose.msra.mxu0 0
    %1759 = vmatprep.subr.bf16.mxu0 0
    %1760 = vmatpush2.bf16.xpose.msra.mxu0 0
    %1761 = vmatprep.subr.bf16.mxu0 0
    %1762 = vmatpush2.bf16.xpose.msra.mxu0 0
    %1763 = vmatprep.subr.bf16.mxu0 0
    %1764 = vmatpush2.bf16.xpose.msra.mxu0 0
    %1765 = vmatprep.subr.bf16.mxu0 0
    %1766 = vmatpush2.bf16.xpose.msra.mxu0 0
    %1767 = vmatprep.subr.bf16.mxu0 0
    %1768 = vmatpush2.bf16.xpose.msra.mxu0 0
    %1769 = vmatprep.subr.bf16.mxu0 0
    %1770 = vmatpush2.bf16.xpose.msra.mxu0 0
    %1771 = vmatprep.mubr.bf16.mxu0 0
    %1772 = vmatmul.mubr.bf16.gmra.mxu0 %v1734
    %v1773 = vpop.f32.mrf.mxu0
    %v1774 = vadd.f32 0.0, %v1773
    %v1775 = vpop.f32.mrf.mxu0
    %v1776 = vpop.f32.mrf.mxu0
    %v1777 = vadd.f32 0.0, %v1776
    %v1778 = vpop.f32.mrf.mxu0
    %1779 = vdwg.mxu0
    %1780 = vrot.lane.b32.xlu0 %v521, 48
    %v1781 = vpop.permute.xlu0 %1780
    %1782 = vrot.lane.b32.xlu0 %v523, 48
    %v1783 = vpop.permute.xlu0 %1782
    %v1785 = vsel %vm526, %v1781, 0
    %v1788 = vsel %vm526, %v1783, 0
    %1790 = vmatprep.subr.bf16.mxu0 0
    %1791 = vmatpush1.bf16.xpose.msra.mxu0 0
    %1792 = vmatprep.subr.bf16.mxu0 0
    %1793 = vmatpush1.bf16.xpose.msra.mxu0 0
    %1794 = vmatprep.subr.bf16.mxu0 0
    %1795 = vmatpush1.bf16.xpose.msra.mxu0 0
    %1796 = vmatprep.subr.bf16.mxu0 0
    %1797 = vmatpush1.bf16.xpose.msra.mxu0 0
    %1798 = vmatprep.subr.bf16.mxu0 0
    %1799 = vmatpush1.bf16.xpose.msra.mxu0 0
    %1800 = vmatprep.subr.bf16.mxu0 0
    %1801 = vmatpush1.bf16.xpose.msra.mxu0 0
    %1802 = vmatprep.subr.bf16.mxu0 0
    %1803 = vmatpush1.bf16.xpose.msra.mxu0 0
    %1804 = vmatprep.subr.bf16.mxu0 0
    %1805 = vmatpush1.bf16.xpose.msra.mxu0 %v1788
    %1806 = vmatprep.subr.bf16.mxu0 0
    %1807 = vmatpush2.bf16.xpose.msra.mxu0 0
    %1808 = vmatprep.subr.bf16.mxu0 0
    %1809 = vmatpush2.bf16.xpose.msra.mxu0 0
    %1810 = vmatprep.subr.bf16.mxu0 0
    %1811 = vmatpush2.bf16.xpose.msra.mxu0 0
    %1812 = vmatprep.subr.bf16.mxu0 0
    %1813 = vmatpush2.bf16.xpose.msra.mxu0 0
    %1814 = vmatprep.subr.bf16.mxu0 0
    %1815 = vmatpush2.bf16.xpose.msra.mxu0 0
    %1816 = vmatprep.subr.bf16.mxu0 0
    %1817 = vmatpush2.bf16.xpose.msra.mxu0 0
    %1818 = vmatprep.subr.bf16.mxu0 0
    %1819 = vmatpush2.bf16.xpose.msra.mxu0 0
    %1820 = vmatprep.subr.bf16.mxu0 0
    %1821 = vmatpush2.bf16.xpose.msra.mxu0 0
    %1822 = vmatprep.mubr.bf16.mxu0 0
    %1823 = vmatmul.mubr.bf16.gmra.mxu0 %v1785
    %v1824 = vpop.f32.mrf.mxu0
    %v1825 = vadd.f32 0.0, %v1824
    %v1826 = vpop.f32.mrf.mxu0
    %v1827 = vpop.f32.mrf.mxu0
    %v1828 = vadd.f32 0.0, %v1827
    %v1829 = vpop.f32.mrf.mxu0
    %1830 = vdwg.mxu0
    %v1831 = vsel %vm526, %v1774, -inf
    %1832 = vmax.xlane.f32.xlu0 %v1831
    %v1833 = vpop.xlane.xlu0 %1832
    %v1834 = vsel %vm526, %v1777, -inf
    %1835 = vmax.xlane.f32.xlu0 %v1834
    %v1836 = vpop.xlane.xlu0 %1835
    %v1837 = vsel %vm526, %v1825, -inf
    %1838 = vmax.xlane.f32.xlu0 %v1837
    %v1839 = vpop.xlane.xlu0 %1838
    %v1840 = vsel %vm526, %v1828, -inf
    %1841 = vmax.xlane.f32.xlu0 %v1840
    %v1842 = vpop.xlane.xlu0 %1841
    %v1843 = vsub.f32 %v1774, %v1833
    %v1844 = vsub.f32 %v1777, %v1836
    %v1845 = vsub.f32 %v1825, %v1839
    %v1846 = vsub.f32 %v1828, %v1842
    %v1847 = vmul.f32 %v1843, 1.442695
    %v1848 = vpow.pop %v1847
    %v1849 = vmul.f32 %v1844, 1.442695
    %v1850 = vpow.pop %v1849
    %v1851 = vmul.f32 %v1845, 1.442695
    %v1852 = vpow.pop %v1851
    %v1853 = vmul.f32 %v1846, 1.442695
    %v1854 = vpow.pop %v1853
    %v1855 = vsel %vm526, %v1848, 0.0
    %1856 = vadd.xlane.f32.xlu0 %v1855
    %v1857 = vpop.xlane.xlu0 %1856
    %v1858 = vsel %vm526, %v1850, 0.0
    %1859 = vadd.xlane.f32.xlu0 %v1858
    %v1860 = vpop.xlane.xlu0 %1859
    %v1861 = vsel %vm526, %v1852, 0.0
    %1862 = vadd.xlane.f32.xlu0 %v1861
    %v1863 = vpop.xlane.xlu0 %1862
    %v1864 = vsel %vm526, %v1854, 0.0
    %1865 = vadd.xlane.f32.xlu0 %v1864
    %v1866 = vpop.xlane.xlu0 %1865
    %v1867 = vrcp.pop %v1857
    %v1868 = vrcp.pop %v1860
    %v1869 = vrcp.pop %v1863
    %v1870 = vrcp.pop %v1866
    %v1871 = vmul.f32 %v1848, %v1867
    %v1872 = vmul.f32 %v1850, %v1868
    %v1873 = vmul.f32 %v1852, %v1869
    %v1874 = vmul.f32 %v1854, %v1870
    %v1875 = vpack.c.bf16 %v1872, %v1871
    %v1876 = vpack.c.bf16 %v1874, %v1873
    %1877 = vrot.lane.b32.xlu0 %v524, 48
    %v1878 = vpop.permute.xlu0 %1877
    %v1881 = vsel %vm526, %v1875, 0
    %1883 = vmatprep.subr.bf16.mxu0 0
    %1884 = vmatpush1.bf16.msra.mxu0 0
    %1885 = vmatprep.subr.bf16.mxu0 0
    %1886 = vmatpush1.bf16.msra.mxu0 0
    %1887 = vmatprep.subr.bf16.mxu0 0
    %1888 = vmatpush1.bf16.msra.mxu0 0
    %1889 = vmatprep.subr.bf16.mxu0 0
    %1890 = vmatpush1.bf16.msra.mxu0 0
    %1891 = vmatprep.subr.bf16.mxu0 0
    %1892 = vmatpush1.bf16.msra.mxu0 0
    %1893 = vmatprep.subr.bf16.mxu0 0
    %1894 = vmatpush1.bf16.msra.mxu0 0
    %1895 = vmatprep.subr.bf16.mxu0 0
    %1896 = vmatpush1.bf16.msra.mxu0 0
    %1897 = vmatprep.subr.bf16.mxu0 0
    %1898 = vmatpush1.bf16.msra.mxu0 %v1878
    %1899 = vmatprep.subr.bf16.mxu0 0
    %1900 = vmatpush2.bf16.msra.mxu0 0
    %1901 = vmatprep.subr.bf16.mxu0 0
    %1902 = vmatpush2.bf16.msra.mxu0 0
    %1903 = vmatprep.subr.bf16.mxu0 0
    %1904 = vmatpush2.bf16.msra.mxu0 0
    %1905 = vmatprep.subr.bf16.mxu0 0
    %1906 = vmatpush2.bf16.msra.mxu0 0
    %1907 = vmatprep.subr.bf16.mxu0 0
    %1908 = vmatpush2.bf16.msra.mxu0 0
    %1909 = vmatprep.subr.bf16.mxu0 0
    %1910 = vmatpush2.bf16.msra.mxu0 0
    %1911 = vmatprep.subr.bf16.mxu0 0
    %1912 = vmatpush2.bf16.msra.mxu0 0
    %1913 = vmatprep.subr.bf16.mxu0 0
    %1914 = vmatpush2.bf16.msra.mxu0 0
    %1915 = vmatprep.mubr.bf16.mxu0 0
    %1916 = vmatmul.mubr.bf16.gmra.mxu0 %v1881
    %v1917 = vpop.f32.mrf.mxu0
    %v1918 = vadd.f32 0.0, %v1917
    %v1919 = vpop.f32.mrf.mxu0
    %v1920 = vpop.f32.mrf.mxu0
    %v1921 = vadd.f32 0.0, %v1920
    %v1922 = vpop.f32.mrf.mxu0
    %1923 = vdwg.mxu0
    %1924 = vrot.lane.b32.xlu0 %v525, 48
    %v1925 = vpop.permute.xlu0 %1924
    %v1928 = vsel %vm526, %v1876, 0
    %1930 = vmatprep.subr.bf16.mxu0 0
    %1931 = vmatpush1.bf16.msra.mxu0 0
    %1932 = vmatprep.subr.bf16.mxu0 0
    %1933 = vmatpush1.bf16.msra.mxu0 0
    %1934 = vmatprep.subr.bf16.mxu0 0
    %1935 = vmatpush1.bf16.msra.mxu0 0
    %1936 = vmatprep.subr.bf16.mxu0 0
    %1937 = vmatpush1.bf16.msra.mxu0 0
    %1938 = vmatprep.subr.bf16.mxu0 0
    %1939 = vmatpush1.bf16.msra.mxu0 0
    %1940 = vmatprep.subr.bf16.mxu0 0
    %1941 = vmatpush1.bf16.msra.mxu0 0
    %1942 = vmatprep.subr.bf16.mxu0 0
    %1943 = vmatpush1.bf16.msra.mxu0 0
    %1944 = vmatprep.subr.bf16.mxu0 0
    %1945 = vmatpush1.bf16.msra.mxu0 %v1925
    %1946 = vmatprep.subr.bf16.mxu0 0
    %1947 = vmatpush2.bf16.msra.mxu0 0
    %1948 = vmatprep.subr.bf16.mxu0 0
    %1949 = vmatpush2.bf16.msra.mxu0 0
    %1950 = vmatprep.subr.bf16.mxu0 0
    %1951 = vmatpush2.bf16.msra.mxu0 0
    %1952 = vmatprep.subr.bf16.mxu0 0
    %1953 = vmatpush2.bf16.msra.mxu0 0
    %1954 = vmatprep.subr.bf16.mxu0 0
    %1955 = vmatpush2.bf16.msra.mxu0 0
    %1956 = vmatprep.subr.bf16.mxu0 0
    %1957 = vmatpush2.bf16.msra.mxu0 0
    %1958 = vmatprep.subr.bf16.mxu0 0
    %1959 = vmatpush2.bf16.msra.mxu0 0
    %1960 = vmatprep.subr.bf16.mxu0 0
    %1961 = vmatpush2.bf16.msra.mxu0 0
    %1962 = vmatprep.mubr.bf16.mxu0 0
    %1963 = vmatmul.mubr.bf16.gmra.mxu0 %v1928
    %v1964 = vpop.f32.mrf.mxu0
    %v1965 = vadd.f32 0.0, %v1964
    %v1966 = vpop.f32.mrf.mxu0
    %v1967 = vpop.f32.mrf.mxu0
    %v1968 = vadd.f32 0.0, %v1967
    %v1969 = vpop.f32.mrf.mxu0
    %1970 = vdwg.mxu0
    %1971 = vrot.lane.b32.xlu0 %v520, 32
    %v1972 = vpop.permute.xlu0 %1971
    %1973 = vrot.lane.b32.xlu0 %v522, 32
    %v1974 = vpop.permute.xlu0 %1973
    %v1976 = vsel %vm526, %v1972, 0
    %v1979 = vsel %vm526, %v1974, 0
    %1981 = vmatprep.subr.bf16.mxu0 0
    %1982 = vmatpush1.bf16.xpose.msra.mxu0 0
    %1983 = vmatprep.subr.bf16.mxu0 0
    %1984 = vmatpush1.bf16.xpose.msra.mxu0 0
    %1985 = vmatprep.subr.bf16.mxu0 0
    %1986 = vmatpush1.bf16.xpose.msra.mxu0 0
    %1987 = vmatprep.subr.bf16.mxu0 0
    %1988 = vmatpush1.bf16.xpose.msra.mxu0 0
    %1989 = vmatprep.subr.bf16.mxu0 0
    %1990 = vmatpush1.bf16.xpose.msra.mxu0 0
    %1991 = vmatprep.subr.bf16.mxu0 0
    %1992 = vmatpush1.bf16.xpose.msra.mxu0 0
    %1993 = vmatprep.subr.bf16.mxu0 0
    %1994 = vmatpush1.bf16.xpose.msra.mxu0 0
    %1995 = vmatprep.subr.bf16.mxu0 0
    %1996 = vmatpush1.bf16.xpose.msra.mxu0 %v1979
    %1997 = vmatprep.subr.bf16.mxu0 0
    %1998 = vmatpush2.bf16.xpose.msra.mxu0 0
    %1999 = vmatprep.subr.bf16.mxu0 0
    %2000 = vmatpush2.bf16.xpose.msra.mxu0 0
    %2001 = vmatprep.subr.bf16.mxu0 0
    %2002 = vmatpush2.bf16.xpose.msra.mxu0 0
    %2003 = vmatprep.subr.bf16.mxu0 0
    %2004 = vmatpush2.bf16.xpose.msra.mxu0 0
    %2005 = vmatprep.subr.bf16.mxu0 0
    %2006 = vmatpush2.bf16.xpose.msra.mxu0 0
    %2007 = vmatprep.subr.bf16.mxu0 0
    %2008 = vmatpush2.bf16.xpose.msra.mxu0 0
    %2009 = vmatprep.subr.bf16.mxu0 0
    %2010 = vmatpush2.bf16.xpose.msra.mxu0 0
    %2011 = vmatprep.subr.bf16.mxu0 0
    %2012 = vmatpush2.bf16.xpose.msra.mxu0 0
    %2013 = vmatprep.mubr.bf16.mxu0 0
    %2014 = vmatmul.mubr.bf16.gmra.mxu0 %v1976
    %v2015 = vpop.f32.mrf.mxu0
    %v2016 = vadd.f32 0.0, %v2015
    %v2017 = vpop.f32.mrf.mxu0
    %v2018 = vpop.f32.mrf.mxu0
    %v2019 = vadd.f32 0.0, %v2018
    %v2020 = vpop.f32.mrf.mxu0
    %2021 = vdwg.mxu0
    %2022 = vrot.lane.b32.xlu0 %v521, 32
    %v2023 = vpop.permute.xlu0 %2022
    %2024 = vrot.lane.b32.xlu0 %v523, 32
    %v2025 = vpop.permute.xlu0 %2024
    %v2027 = vsel %vm526, %v2023, 0
    %v2030 = vsel %vm526, %v2025, 0
    %2032 = vmatprep.subr.bf16.mxu0 0
    %2033 = vmatpush1.bf16.xpose.msra.mxu0 0
    %2034 = vmatprep.subr.bf16.mxu0 0
    %2035 = vmatpush1.bf16.xpose.msra.mxu0 0
    %2036 = vmatprep.subr.bf16.mxu0 0
    %2037 = vmatpush1.bf16.xpose.msra.mxu0 0
    %2038 = vmatprep.subr.bf16.mxu0 0
    %2039 = vmatpush1.bf16.xpose.msra.mxu0 0
    %2040 = vmatprep.subr.bf16.mxu0 0
    %2041 = vmatpush1.bf16.xpose.msra.mxu0 0
    %2042 = vmatprep.subr.bf16.mxu0 0
    %2043 = vmatpush1.bf16.xpose.msra.mxu0 0
    %2044 = vmatprep.subr.bf16.mxu0 0
    %2045 = vmatpush1.bf16.xpose.msra.mxu0 0
    %2046 = vmatprep.subr.bf16.mxu0 0
    %2047 = vmatpush1.bf16.xpose.msra.mxu0 %v2030
    %2048 = vmatprep.subr.bf16.mxu0 0
    %2049 = vmatpush2.bf16.xpose.msra.mxu0 0
    %2050 = vmatprep.subr.bf16.mxu0 0
    %2051 = vmatpush2.bf16.xpose.msra.mxu0 0
    %2052 = vmatprep.subr.bf16.mxu0 0
    %2053 = vmatpush2.bf16.xpose.msra.mxu0 0
    %2054 = vmatprep.subr.bf16.mxu0 0
    %2055 = vmatpush2.bf16.xpose.msra.mxu0 0
    %2056 = vmatprep.subr.bf16.mxu0 0
    %2057 = vmatpush2.bf16.xpose.msra.mxu0 0
    %2058 = vmatprep.subr.bf16.mxu0 0
    %2059 = vmatpush2.bf16.xpose.msra.mxu0 0
    %2060 = vmatprep.subr.bf16.mxu0 0
    %2061 = vmatpush2.bf16.xpose.msra.mxu0 0
    %2062 = vmatprep.subr.bf16.mxu0 0
    %2063 = vmatpush2.bf16.xpose.msra.mxu0 0
    %2064 = vmatprep.mubr.bf16.mxu0 0
    %2065 = vmatmul.mubr.bf16.gmra.mxu0 %v2027
    %v2066 = vpop.f32.mrf.mxu0
    %v2067 = vadd.f32 0.0, %v2066
    %v2068 = vpop.f32.mrf.mxu0
    %v2069 = vpop.f32.mrf.mxu0
    %v2070 = vadd.f32 0.0, %v2069
    %v2071 = vpop.f32.mrf.mxu0
    %2072 = vdwg.mxu0
    %v2073 = vsel %vm526, %v2016, -inf
    %2074 = vmax.xlane.f32.xlu0 %v2073
    %v2075 = vpop.xlane.xlu0 %2074
    %v2076 = vsel %vm526, %v2019, -inf
    %2077 = vmax.xlane.f32.xlu0 %v2076
    %v2078 = vpop.xlane.xlu0 %2077
    %v2079 = vsel %vm526, %v2067, -inf
    %2080 = vmax.xlane.f32.xlu0 %v2079
    %v2081 = vpop.xlane.xlu0 %2080
    %v2082 = vsel %vm526, %v2070, -inf
    %2083 = vmax.xlane.f32.xlu0 %v2082
    %v2084 = vpop.xlane.xlu0 %2083
    %v2085 = vsub.f32 %v2016, %v2075
    %v2086 = vsub.f32 %v2019, %v2078
    %v2087 = vsub.f32 %v2067, %v2081
    %v2088 = vsub.f32 %v2070, %v2084
    %v2089 = vmul.f32 %v2085, 1.442695
    %v2090 = vpow.pop %v2089
    %v2091 = vmul.f32 %v2086, 1.442695
    %v2092 = vpow.pop %v2091
    %v2093 = vmul.f32 %v2087, 1.442695
    %v2094 = vpow.pop %v2093
    %v2095 = vmul.f32 %v2088, 1.442695
    %v2096 = vpow.pop %v2095
    %v2097 = vsel %vm526, %v2090, 0.0
    %2098 = vadd.xlane.f32.xlu0 %v2097
    %v2099 = vpop.xlane.xlu0 %2098
    %v2100 = vsel %vm526, %v2092, 0.0
    %2101 = vadd.xlane.f32.xlu0 %v2100
    %v2102 = vpop.xlane.xlu0 %2101
    %v2103 = vsel %vm526, %v2094, 0.0
    %2104 = vadd.xlane.f32.xlu0 %v2103
    %v2105 = vpop.xlane.xlu0 %2104
    %v2106 = vsel %vm526, %v2096, 0.0
    %2107 = vadd.xlane.f32.xlu0 %v2106
    %v2108 = vpop.xlane.xlu0 %2107
    %v2109 = vrcp.pop %v2099
    %v2110 = vrcp.pop %v2102
    %v2111 = vrcp.pop %v2105
    %v2112 = vrcp.pop %v2108
    %v2113 = vmul.f32 %v2090, %v2109
    %v2114 = vmul.f32 %v2092, %v2110
    %v2115 = vmul.f32 %v2094, %v2111
    %v2116 = vmul.f32 %v2096, %v2112
    %v2117 = vpack.c.bf16 %v2114, %v2113
    %v2118 = vpack.c.bf16 %v2116, %v2115
    %2119 = vrot.lane.b32.xlu0 %v524, 32
    %v2120 = vpop.permute.xlu0 %2119
    %v2123 = vsel %vm526, %v2117, 0
    %2125 = vmatprep.subr.bf16.mxu0 0
    %2126 = vmatpush1.bf16.msra.mxu0 0
    %2127 = vmatprep.subr.bf16.mxu0 0
    %2128 = vmatpush1.bf16.msra.mxu0 0
    %2129 = vmatprep.subr.bf16.mxu0 0
    %2130 = vmatpush1.bf16.msra.mxu0 0
    %2131 = vmatprep.subr.bf16.mxu0 0
    %2132 = vmatpush1.bf16.msra.mxu0 0
    %2133 = vmatprep.subr.bf16.mxu0 0
    %2134 = vmatpush1.bf16.msra.mxu0 0
    %2135 = vmatprep.subr.bf16.mxu0 0
    %2136 = vmatpush1.bf16.msra.mxu0 0
    %2137 = vmatprep.subr.bf16.mxu0 0
    %2138 = vmatpush1.bf16.msra.mxu0 0
    %2139 = vmatprep.subr.bf16.mxu0 0
    %2140 = vmatpush1.bf16.msra.mxu0 %v2120
    %2141 = vmatprep.subr.bf16.mxu0 0
    %2142 = vmatpush2.bf16.msra.mxu0 0
    %2143 = vmatprep.subr.bf16.mxu0 0
    %2144 = vmatpush2.bf16.msra.mxu0 0
    %2145 = vmatprep.subr.bf16.mxu0 0
    %2146 = vmatpush2.bf16.msra.mxu0 0
    %2147 = vmatprep.subr.bf16.mxu0 0
    %2148 = vmatpush2.bf16.msra.mxu0 0
    %2149 = vmatprep.subr.bf16.mxu0 0
    %2150 = vmatpush2.bf16.msra.mxu0 0
    %2151 = vmatprep.subr.bf16.mxu0 0
    %2152 = vmatpush2.bf16.msra.mxu0 0
    %2153 = vmatprep.subr.bf16.mxu0 0
    %2154 = vmatpush2.bf16.msra.mxu0 0
    %2155 = vmatprep.subr.bf16.mxu0 0
    %2156 = vmatpush2.bf16.msra.mxu0 0
    %2157 = vmatprep.mubr.bf16.mxu0 0
    %2158 = vmatmul.mubr.bf16.gmra.mxu0 %v2123
    %v2159 = vpop.f32.mrf.mxu0
    %v2160 = vadd.f32 0.0, %v2159
    %v2161 = vpop.f32.mrf.mxu0
    %v2162 = vpop.f32.mrf.mxu0
    %v2163 = vadd.f32 0.0, %v2162
    %v2164 = vpop.f32.mrf.mxu0
    %2165 = vdwg.mxu0
    %2166 = vrot.lane.b32.xlu0 %v525, 32
    %v2167 = vpop.permute.xlu0 %2166
    %v2170 = vsel %vm526, %v2118, 0
    %2172 = vmatprep.subr.bf16.mxu0 0
    %2173 = vmatpush1.bf16.msra.mxu0 0
    %2174 = vmatprep.subr.bf16.mxu0 0
    %2175 = vmatpush1.bf16.msra.mxu0 0
    %2176 = vmatprep.subr.bf16.mxu0 0
    %2177 = vmatpush1.bf16.msra.mxu0 0
    %2178 = vmatprep.subr.bf16.mxu0 0
    %2179 = vmatpush1.bf16.msra.mxu0 0
    %2180 = vmatprep.subr.bf16.mxu0 0
    %2181 = vmatpush1.bf16.msra.mxu0 0
    %2182 = vmatprep.subr.bf16.mxu0 0
    %2183 = vmatpush1.bf16.msra.mxu0 0
    %2184 = vmatprep.subr.bf16.mxu0 0
    %2185 = vmatpush1.bf16.msra.mxu0 0
    %2186 = vmatprep.subr.bf16.mxu0 0
    %2187 = vmatpush1.bf16.msra.mxu0 %v2167
    %2188 = vmatprep.subr.bf16.mxu0 0
    %2189 = vmatpush2.bf16.msra.mxu0 0
    %2190 = vmatprep.subr.bf16.mxu0 0
    %2191 = vmatpush2.bf16.msra.mxu0 0
    %2192 = vmatprep.subr.bf16.mxu0 0
    %2193 = vmatpush2.bf16.msra.mxu0 0
    %2194 = vmatprep.subr.bf16.mxu0 0
    %2195 = vmatpush2.bf16.msra.mxu0 0
    %2196 = vmatprep.subr.bf16.mxu0 0
    %2197 = vmatpush2.bf16.msra.mxu0 0
    %2198 = vmatprep.subr.bf16.mxu0 0
    %2199 = vmatpush2.bf16.msra.mxu0 0
    %2200 = vmatprep.subr.bf16.mxu0 0
    %2201 = vmatpush2.bf16.msra.mxu0 0
    %2202 = vmatprep.subr.bf16.mxu0 0
    %2203 = vmatpush2.bf16.msra.mxu0 0
    %2204 = vmatprep.mubr.bf16.mxu0 0
    %2205 = vmatmul.mubr.bf16.gmra.mxu0 %v2170
    %v2206 = vpop.f32.mrf.mxu0
    %v2207 = vadd.f32 0.0, %v2206
    %v2208 = vpop.f32.mrf.mxu0
    %v2209 = vpop.f32.mrf.mxu0
    %v2210 = vadd.f32 0.0, %v2209
    %v2211 = vpop.f32.mrf.mxu0
    %2212 = vdwg.mxu0
    %2213 = vrot.lane.b32.xlu0 %v520, 16
    %v2214 = vpop.permute.xlu0 %2213
    %2215 = vrot.lane.b32.xlu0 %v522, 16
    %v2216 = vpop.permute.xlu0 %2215
    %v2218 = vsel %vm526, %v2214, 0
    %v2221 = vsel %vm526, %v2216, 0
    %2223 = vmatprep.subr.bf16.mxu0 0
    %2224 = vmatpush1.bf16.xpose.msra.mxu0 0
    %2225 = vmatprep.subr.bf16.mxu0 0
    %2226 = vmatpush1.bf16.xpose.msra.mxu0 0
    %2227 = vmatprep.subr.bf16.mxu0 0
    %2228 = vmatpush1.bf16.xpose.msra.mxu0 0
    %2229 = vmatprep.subr.bf16.mxu0 0
    %2230 = vmatpush1.bf16.xpose.msra.mxu0 0
    %2231 = vmatprep.subr.bf16.mxu0 0
    %2232 = vmatpush1.bf16.xpose.msra.mxu0 0
    %2233 = vmatprep.subr.bf16.mxu0 0
    %2234 = vmatpush1.bf16.xpose.msra.mxu0 0
    %2235 = vmatprep.subr.bf16.mxu0 0
    %2236 = vmatpush1.bf16.xpose.msra.mxu0 0
    %2237 = vmatprep.subr.bf16.mxu0 0
    %2238 = vmatpush1.bf16.xpose.msra.mxu0 %v2221
    %2239 = vmatprep.subr.bf16.mxu0 0
    %2240 = vmatpush2.bf16.xpose.msra.mxu0 0
    %2241 = vmatprep.subr.bf16.mxu0 0
    %2242 = vmatpush2.bf16.xpose.msra.mxu0 0
    %2243 = vmatprep.subr.bf16.mxu0 0
    %2244 = vmatpush2.bf16.xpose.msra.mxu0 0
    %2245 = vmatprep.subr.bf16.mxu0 0
    %2246 = vmatpush2.bf16.xpose.msra.mxu0 0
    %2247 = vmatprep.subr.bf16.mxu0 0
    %2248 = vmatpush2.bf16.xpose.msra.mxu0 0
    %2249 = vmatprep.subr.bf16.mxu0 0
    %2250 = vmatpush2.bf16.xpose.msra.mxu0 0
    %2251 = vmatprep.subr.bf16.mxu0 0
    %2252 = vmatpush2.bf16.xpose.msra.mxu0 0
    %2253 = vmatprep.subr.bf16.mxu0 0
    %2254 = vmatpush2.bf16.xpose.msra.mxu0 0
    %2255 = vmatprep.mubr.bf16.mxu0 0
    %2256 = vmatmul.mubr.bf16.gmra.mxu0 %v2218
    %v2257 = vpop.f32.mrf.mxu0
    %v2258 = vadd.f32 0.0, %v2257
    %v2259 = vpop.f32.mrf.mxu0
    %v2260 = vpop.f32.mrf.mxu0
    %v2261 = vadd.f32 0.0, %v2260
    %v2262 = vpop.f32.mrf.mxu0
    %2263 = vdwg.mxu0
    %2264 = vrot.lane.b32.xlu0 %v521, 16
    %v2265 = vpop.permute.xlu0 %2264
    %2266 = vrot.lane.b32.xlu0 %v523, 16
    %v2267 = vpop.permute.xlu0 %2266
    %v2269 = vsel %vm526, %v2265, 0
    %v2272 = vsel %vm526, %v2267, 0
    %2274 = vmatprep.subr.bf16.mxu0 0
    %2275 = vmatpush1.bf16.xpose.msra.mxu0 0
    %2276 = vmatprep.subr.bf16.mxu0 0
    %2277 = vmatpush1.bf16.xpose.msra.mxu0 0
    %2278 = vmatprep.subr.bf16.mxu0 0
    %2279 = vmatpush1.bf16.xpose.msra.mxu0 0
    %2280 = vmatprep.subr.bf16.mxu0 0
    %2281 = vmatpush1.bf16.xpose.msra.mxu0 0
    %2282 = vmatprep.subr.bf16.mxu0 0
    %2283 = vmatpush1.bf16.xpose.msra.mxu0 0
    %2284 = vmatprep.subr.bf16.mxu0 0
    %2285 = vmatpush1.bf16.xpose.msra.mxu0 0
    %2286 = vmatprep.subr.bf16.mxu0 0
    %2287 = vmatpush1.bf16.xpose.msra.mxu0 0
    %2288 = vmatprep.subr.bf16.mxu0 0
    %2289 = vmatpush1.bf16.xpose.msra.mxu0 %v2272
    %2290 = vmatprep.subr.bf16.mxu0 0
    %2291 = vmatpush2.bf16.xpose.msra.mxu0 0
    %2292 = vmatprep.subr.bf16.mxu0 0
    %2293 = vmatpush2.bf16.xpose.msra.mxu0 0
    %2294 = vmatprep.subr.bf16.mxu0 0
    %2295 = vmatpush2.bf16.xpose.msra.mxu0 0
    %2296 = vmatprep.subr.bf16.mxu0 0
    %2297 = vmatpush2.bf16.xpose.msra.mxu0 0
    %2298 = vmatprep.subr.bf16.mxu0 0
    %2299 = vmatpush2.bf16.xpose.msra.mxu0 0
    %2300 = vmatprep.subr.bf16.mxu0 0
    %2301 = vmatpush2.bf16.xpose.msra.mxu0 0
    %2302 = vmatprep.subr.bf16.mxu0 0
    %2303 = vmatpush2.bf16.xpose.msra.mxu0 0
    %2304 = vmatprep.subr.bf16.mxu0 0
    %2305 = vmatpush2.bf16.xpose.msra.mxu0 0
    %2306 = vmatprep.mubr.bf16.mxu0 0
    %2307 = vmatmul.mubr.bf16.gmra.mxu0 %v2269
    %v2308 = vpop.f32.mrf.mxu0
    %v2309 = vadd.f32 0.0, %v2308
    %v2310 = vpop.f32.mrf.mxu0
    %v2311 = vpop.f32.mrf.mxu0
    %v2312 = vadd.f32 0.0, %v2311
    %v2313 = vpop.f32.mrf.mxu0
    %2314 = vdwg.mxu0
    %v2315 = vsel %vm526, %v2258, -inf
    %2316 = vmax.xlane.f32.xlu0 %v2315
    %v2317 = vpop.xlane.xlu0 %2316
    %v2318 = vsel %vm526, %v2261, -inf
    %2319 = vmax.xlane.f32.xlu0 %v2318
    %v2320 = vpop.xlane.xlu0 %2319
    %v2321 = vsel %vm526, %v2309, -inf
    %2322 = vmax.xlane.f32.xlu0 %v2321
    %v2323 = vpop.xlane.xlu0 %2322
    %v2324 = vsel %vm526, %v2312, -inf
    %2325 = vmax.xlane.f32.xlu0 %v2324
    %v2326 = vpop.xlane.xlu0 %2325
    %v2327 = vsub.f32 %v2258, %v2317
    %v2328 = vsub.f32 %v2261, %v2320
    %v2329 = vsub.f32 %v2309, %v2323
    %v2330 = vsub.f32 %v2312, %v2326
    %v2331 = vmul.f32 %v2327, 1.442695
    %v2332 = vpow.pop %v2331
    %v2333 = vmul.f32 %v2328, 1.442695
    %v2334 = vpow.pop %v2333
    %v2335 = vmul.f32 %v2329, 1.442695
    %v2336 = vpow.pop %v2335
    %v2337 = vmul.f32 %v2330, 1.442695
    %v2338 = vpow.pop %v2337
    %v2339 = vsel %vm526, %v2332, 0.0
    %2340 = vadd.xlane.f32.xlu0 %v2339
    %v2341 = vpop.xlane.xlu0 %2340
    %v2342 = vsel %vm526, %v2334, 0.0
    %2343 = vadd.xlane.f32.xlu0 %v2342
    %v2344 = vpop.xlane.xlu0 %2343
    %v2345 = vsel %vm526, %v2336, 0.0
    %2346 = vadd.xlane.f32.xlu0 %v2345
    %v2347 = vpop.xlane.xlu0 %2346
    %v2348 = vsel %vm526, %v2338, 0.0
    %2349 = vadd.xlane.f32.xlu0 %v2348
    %v2350 = vpop.xlane.xlu0 %2349
    %v2351 = vrcp.pop %v2341
    %v2352 = vrcp.pop %v2344
    %v2353 = vrcp.pop %v2347
    %v2354 = vrcp.pop %v2350
    %v2355 = vmul.f32 %v2332, %v2351
    %v2356 = vmul.f32 %v2334, %v2352
    %v2357 = vmul.f32 %v2336, %v2353
    %v2358 = vmul.f32 %v2338, %v2354
    %v2359 = vpack.c.bf16 %v2356, %v2355
    %v2360 = vpack.c.bf16 %v2358, %v2357
    %2361 = vrot.lane.b32.xlu0 %v524, 16
    %v2362 = vpop.permute.xlu0 %2361
    %v2365 = vsel %vm526, %v2359, 0
    %2367 = vmatprep.subr.bf16.mxu0 0
    %2368 = vmatpush1.bf16.msra.mxu0 0
    %2369 = vmatprep.subr.bf16.mxu0 0
    %2370 = vmatpush1.bf16.msra.mxu0 0
    %2371 = vmatprep.subr.bf16.mxu0 0
    %2372 = vmatpush1.bf16.msra.mxu0 0
    %2373 = vmatprep.subr.bf16.mxu0 0
    %2374 = vmatpush1.bf16.msra.mxu0 0
    %2375 = vmatprep.subr.bf16.mxu0 0
    %2376 = vmatpush1.bf16.msra.mxu0 0
    %2377 = vmatprep.subr.bf16.mxu0 0
    %2378 = vmatpush1.bf16.msra.mxu0 0
    %2379 = vmatprep.subr.bf16.mxu0 0
    %2380 = vmatpush1.bf16.msra.mxu0 0
    %2381 = vmatprep.subr.bf16.mxu0 0
    %2382 = vmatpush1.bf16.msra.mxu0 %v2362
    %2383 = vmatprep.subr.bf16.mxu0 0
    %2384 = vmatpush2.bf16.msra.mxu0 0
    %2385 = vmatprep.subr.bf16.mxu0 0
    %2386 = vmatpush2.bf16.msra.mxu0 0
    %2387 = vmatprep.subr.bf16.mxu0 0
    %2388 = vmatpush2.bf16.msra.mxu0 0
    %2389 = vmatprep.subr.bf16.mxu0 0
    %2390 = vmatpush2.bf16.msra.mxu0 0
    %2391 = vmatprep.subr.bf16.mxu0 0
    %2392 = vmatpush2.bf16.msra.mxu0 0
    %2393 = vmatprep.subr.bf16.mxu0 0
    %2394 = vmatpush2.bf16.msra.mxu0 0
    %2395 = vmatprep.subr.bf16.mxu0 0
    %2396 = vmatpush2.bf16.msra.mxu0 0
    %2397 = vmatprep.subr.bf16.mxu0 0
    %2398 = vmatpush2.bf16.msra.mxu0 0
    %2399 = vmatprep.mubr.bf16.mxu0 0
    %2400 = vmatmul.mubr.bf16.gmra.mxu0 %v2365
    %v2401 = vpop.f32.mrf.mxu0
    %v2402 = vadd.f32 0.0, %v2401
    %v2403 = vpop.f32.mrf.mxu0
    %v2404 = vpop.f32.mrf.mxu0
    %v2405 = vadd.f32 0.0, %v2404
    %v2406 = vpop.f32.mrf.mxu0
    %2407 = vdwg.mxu0
    %2408 = vrot.lane.b32.xlu0 %v525, 16
    %v2409 = vpop.permute.xlu0 %2408
    %v2412 = vsel %vm526, %v2360, 0
    %2414 = vmatprep.subr.bf16.mxu0 0
    %2415 = vmatpush1.bf16.msra.mxu0 0
    %2416 = vmatprep.subr.bf16.mxu0 0
    %2417 = vmatpush1.bf16.msra.mxu0 0
    %2418 = vmatprep.subr.bf16.mxu0 0
    %2419 = vmatpush1.bf16.msra.mxu0 0
    %2420 = vmatprep.subr.bf16.mxu0 0
    %2421 = vmatpush1.bf16.msra.mxu0 0
    %2422 = vmatprep.subr.bf16.mxu0 0
    %2423 = vmatpush1.bf16.msra.mxu0 0
    %2424 = vmatprep.subr.bf16.mxu0 0
    %2425 = vmatpush1.bf16.msra.mxu0 0
    %2426 = vmatprep.subr.bf16.mxu0 0
    %2427 = vmatpush1.bf16.msra.mxu0 0
    %2428 = vmatprep.subr.bf16.mxu0 0
    %2429 = vmatpush1.bf16.msra.mxu0 %v2409
    %2430 = vmatprep.subr.bf16.mxu0 0
    %2431 = vmatpush2.bf16.msra.mxu0 0
    %2432 = vmatprep.subr.bf16.mxu0 0
    %2433 = vmatpush2.bf16.msra.mxu0 0
    %2434 = vmatprep.subr.bf16.mxu0 0
    %2435 = vmatpush2.bf16.msra.mxu0 0
    %2436 = vmatprep.subr.bf16.mxu0 0
    %2437 = vmatpush2.bf16.msra.mxu0 0
    %2438 = vmatprep.subr.bf16.mxu0 0
    %2439 = vmatpush2.bf16.msra.mxu0 0
    %2440 = vmatprep.subr.bf16.mxu0 0
    %2441 = vmatpush2.bf16.msra.mxu0 0
    %2442 = vmatprep.subr.bf16.mxu0 0
    %2443 = vmatpush2.bf16.msra.mxu0 0
    %2444 = vmatprep.subr.bf16.mxu0 0
    %2445 = vmatpush2.bf16.msra.mxu0 0
    %2446 = vmatprep.mubr.bf16.mxu0 0
    %2447 = vmatmul.mubr.bf16.gmra.mxu0 %v2412
    %v2448 = vpop.f32.mrf.mxu0
    %v2449 = vadd.f32 0.0, %v2448
    %v2450 = vpop.f32.mrf.mxu0
    %v2451 = vpop.f32.mrf.mxu0
    %v2452 = vadd.f32 0.0, %v2451
    %v2453 = vpop.f32.mrf.mxu0
    %2454 = vdwg.mxu0
    %2459 = vrot.lane.b32.xlu0 %v949, 16
    %v2460 = vpop.permute.xlu0 %2459
    %2461 = vrot.lane.b32.xlu0 %v952, 16
    %v2462 = vpop.permute.xlu0 %2461
    %2463 = vrot.lane.b32.xlu0 %v997, 16
    %v2464 = vpop.permute.xlu0 %2463
    %2465 = vrot.lane.b32.xlu0 %v1000, 16
    %v2466 = vpop.permute.xlu0 %2465
    %2475 = vrot.lane.b32.xlu0 %v1192, 32
    %v2476 = vpop.permute.xlu0 %2475
    %2477 = vrot.lane.b32.xlu0 %v1195, 32
    %v2478 = vpop.permute.xlu0 %2477
    %2479 = vrot.lane.b32.xlu0 %v1239, 32
    %v2480 = vpop.permute.xlu0 %2479
    %2481 = vrot.lane.b32.xlu0 %v1242, 32
    %v2482 = vpop.permute.xlu0 %2481
    %2491 = vrot.lane.b32.xlu0 %v1434, 48
    %v2492 = vpop.permute.xlu0 %2491
    %2493 = vrot.lane.b32.xlu0 %v1437, 48
    %v2494 = vpop.permute.xlu0 %2493
    %2495 = vrot.lane.b32.xlu0 %v1481, 48
    %v2496 = vpop.permute.xlu0 %2495
    %2497 = vrot.lane.b32.xlu0 %v1484, 48
    %v2498 = vpop.permute.xlu0 %2497
    %2507 = vrot.lane.b32.xlu0 %v1676, 64
    %v2508 = vpop.permute.xlu0 %2507
    %2509 = vrot.lane.b32.xlu0 %v1679, 64
    %v2510 = vpop.permute.xlu0 %2509
    %2511 = vrot.lane.b32.xlu0 %v1723, 64
    %v2512 = vpop.permute.xlu0 %2511
    %2513 = vrot.lane.b32.xlu0 %v1726, 64
    %v2514 = vpop.permute.xlu0 %2513
    %2523 = vrot.lane.b32.xlu0 %v1918, 80
    %v2524 = vpop.permute.xlu0 %2523
    %2525 = vrot.lane.b32.xlu0 %v1921, 80
    %v2526 = vpop.permute.xlu0 %2525
    %2527 = vrot.lane.b32.xlu0 %v1965, 80
    %v2528 = vpop.permute.xlu0 %2527
    %2529 = vrot.lane.b32.xlu0 %v1968, 80
    %v2530 = vpop.permute.xlu0 %2529
    %2539 = vrot.lane.b32.xlu0 %v2160, 96
    %v2540 = vpop.permute.xlu0 %2539
    %2541 = vrot.lane.b32.xlu0 %v2163, 96
    %v2542 = vpop.permute.xlu0 %2541
    %2543 = vrot.lane.b32.xlu0 %v2207, 96
    %v2544 = vpop.permute.xlu0 %2543
    %2545 = vrot.lane.b32.xlu0 %v2210, 96
    %v2546 = vpop.permute.xlu0 %2545
    %2555 = vrot.lane.b32.xlu0 %v2402, 112
    %v2556 = vpop.permute.xlu0 %2555
    %2557 = vrot.lane.b32.xlu0 %v2405, 112
    %v2558 = vpop.permute.xlu0 %2557
    %2559 = vrot.lane.b32.xlu0 %v2449, 112
    %v2560 = vpop.permute.xlu0 %2559
    %2561 = vrot.lane.b32.xlu0 %v2452, 112
    %v2562 = vpop.permute.xlu0 %2561
    %v2567 = vsel %vm526, %v705, %v2460
    %v2568 = vsel %vm526, %v708, %v2462
    %v2569 = vsel %vm526, %v749, %v2464
    %v2570 = vsel %vm526, %v752, %v2466
    %vm2571 = vcmask 261120
    %v2572 = vsel %vm2571, %v2567, %v2476
    %v2573 = vsel %vm2571, %v2568, %v2478
    %v2574 = vsel %vm2571, %v2569, %v2480
    %v2575 = vsel %vm2571, %v2570, %v2482
    %vm2576 = vcmask 392192
    %v2577 = vsel %vm2576, %v2572, %v2492
    %v2578 = vsel %vm2576, %v2573, %v2494
    %v2579 = vsel %vm2576, %v2574, %v2496
    %v2580 = vsel %vm2576, %v2575, %v2498
    %vm2581 = vcmask 523264
    %v2582 = vsel %vm2581, %v2577, %v2508
    %v2583 = vsel %vm2581, %v2578, %v2510
    %v2584 = vsel %vm2581, %v2579, %v2512
    %v2585 = vsel %vm2581, %v2580, %v2514
    %vm2586 = vcmask 654336
    %v2587 = vsel %vm2586, %v2582, %v2524
    %v2588 = vsel %vm2586, %v2583, %v2526
    %v2589 = vsel %vm2586, %v2584, %v2528
    %v2590 = vsel %vm2586, %v2585, %v2530
    %vm2591 = vcmask 785408
    %v2592 = vsel %vm2591, %v2587, %v2540
    %v2593 = vsel %vm2591, %v2588, %v2542
    %v2594 = vsel %vm2591, %v2589, %v2544
    %v2595 = vsel %vm2591, %v2590, %v2546
    %vm2596 = vcmask 916480
    %v2597 = vsel %vm2596, %v2592, %v2556
    %v2598 = vsel %vm2596, %v2593, %v2558
    %v2599 = vsel %vm2596, %v2594, %v2560
    %v2600 = vsel %vm2596, %v2595, %v2562
    %v2601 = vpack.c.bf16 %v2598, %v2597
    %v2602 = vpack.c.bf16 %v2600, %v2599
    %v2603 = vld [vmem:[#allocation10] sm:$0xf]
    %v2604 = vld [vmem:[#allocation10 + $0x4] sm:$0xf]
    %v2605 = vld [vmem:[#allocation10 + $0x8] sm:$0xf]
    %v2606 = vld [vmem:[#allocation10 + $0xc] sm:$0xf]
    %v2607 = vld [vmem:[#allocation10 + $0x10] sm:$0xf]
    %v2608 = vld [vmem:[#allocation10 + $0x14] sm:$0xf]
    %v2609 = vld [vmem:[#allocation10 + $0x18] sm:$0xf]
    %v2610 = vld [vmem:[#allocation10 + $0x1c] sm:$0xf]
    %v2611 = vld [vmem:[#allocation10 + $0x20] sm:$0xf]
    %v2612 = vld [vmem:[#allocation10 + $0x24] sm:$0xf]
    %v2613 = vld [vmem:[#allocation10 + $0x28] sm:$0xf]
    %v2614 = vld [vmem:[#allocation10 + $0x2c] sm:$0xf]
    %v2615 = vld [vmem:[#allocation10 + $0x30] sm:$0xf]
    %v2616 = vld [vmem:[#allocation10 + $0x34] sm:$0xf]
    %v2617 = vld [vmem:[#allocation10 + $0x38] sm:$0xf]
    %v2618 = vld [vmem:[#allocation10 + $0x3c] sm:$0xf]
    %v2619 = vld [vmem:[#allocation12] sm:$0x1]
    %v2621 = vlaneseq
    %v2622 = vshrl.u32 %v2621, 7
    %v2623 = vsub.s32 0, %v2622
    %v2624 = vrot.slane %v2619, %v2623
    %v2642 = vunpack.c.l.b16 %v2603
    %v2643 = vunpack.c.l.b16 %v2604
    %v2644 = vunpack.c.l.b16 %v2605
    %v2645 = vunpack.c.l.b16 %v2606
    %v2646 = vunpack.c.l.b16 %v2607
    %v2647 = vunpack.c.l.b16 %v2608
    %v2648 = vunpack.c.l.b16 %v2609
    %v2649 = vunpack.c.l.b16 %v2610
    %v2650 = vunpack.c.l.b16 %v2611
    %v2651 = vunpack.c.l.b16 %v2612
    %v2652 = vunpack.c.l.b16 %v2613
    %v2653 = vunpack.c.l.b16 %v2614
    %v2654 = vunpack.c.l.b16 %v2615
    %v2655 = vunpack.c.l.b16 %v2616
    %v2656 = vunpack.c.l.b16 %v2617
    %v2657 = vunpack.c.l.b16 %v2618
    %v2658 = vpack.c.b16 %v2643, %v2642
    %v2659 = vpack.c.b16 %v2645, %v2644
    %v2660 = vpack.c.b16 %v2647, %v2646
    %v2661 = vpack.c.b16 %v2649, %v2648
    %v2662 = vpack.c.b16 %v2651, %v2650
    %v2663 = vpack.c.b16 %v2653, %v2652
    %v2664 = vpack.c.b16 %v2655, %v2654
    %v2665 = vpack.c.b16 %v2657, %v2656
    %2674 = vmatprep.subr.bf16.mxu0 0
    %2675 = vmatpush1.bf16.msra.mxu0 %v2665
    %2676 = vmatprep.subr.bf16.mxu0 0
    %2677 = vmatpush1.bf16.msra.mxu0 %v2664
    %2678 = vmatprep.subr.bf16.mxu0 0
    %2679 = vmatpush1.bf16.msra.mxu0 %v2663
    %2680 = vmatprep.subr.bf16.mxu0 0
    %2681 = vmatpush1.bf16.msra.mxu0 %v2662
    %2682 = vmatprep.subr.bf16.mxu0 0
    %2683 = vmatpush1.bf16.msra.mxu0 %v2661
    %2684 = vmatprep.subr.bf16.mxu0 0
    %2685 = vmatpush1.bf16.msra.mxu0 %v2660
    %2686 = vmatprep.subr.bf16.mxu0 0
    %2687 = vmatpush1.bf16.msra.mxu0 %v2659
    %2688 = vmatprep.subr.bf16.mxu0 0
    %2689 = vmatpush1.bf16.msra.mxu0 %v2658
    %2690 = vmatprep.subr.bf16.mxu0 0
    %2691 = vmatpush2.bf16.msra.mxu0 0
    %2692 = vmatprep.subr.bf16.mxu0 0
    %2693 = vmatpush2.bf16.msra.mxu0 0
    %2694 = vmatprep.subr.bf16.mxu0 0
    %2695 = vmatpush2.bf16.msra.mxu0 0
    %2696 = vmatprep.subr.bf16.mxu0 0
    %2697 = vmatpush2.bf16.msra.mxu0 0
    %2698 = vmatprep.subr.bf16.mxu0 0
    %2699 = vmatpush2.bf16.msra.mxu0 0
    %2700 = vmatprep.subr.bf16.mxu0 0
    %2701 = vmatpush2.bf16.msra.mxu0 0
    %2702 = vmatprep.subr.bf16.mxu0 0
    %2703 = vmatpush2.bf16.msra.mxu0 0
    %2704 = vmatprep.subr.bf16.mxu0 0
    %2705 = vmatpush2.bf16.msra.mxu0 0
    %2706 = vmatprep.mubr.bf16.mxu0 0
    %2707 = vmatmul.mubr.bf16.gmra.mxu0 %v2601
    %v2708 = vpop.f32.mrf.mxu0
    %v2709 = vadd.f32 %v2624, %v2708
    %v2710 = vpop.f32.mrf.mxu0
    %v2711 = vpop.f32.mrf.mxu0
    %v2712 = vadd.f32 %v2624, %v2711
    %v2713 = vpop.f32.mrf.mxu0
    %2714 = vmatprep.mubr.bf16.mxu0 0
    %2715 = vmatmul.mubr.bf16.gmra.mxu0 %v2602
    %v2716 = vpop.f32.mrf.mxu0
    %v2717 = vadd.f32 %v2624, %v2716
    %v2718 = vpop.f32.mrf.mxu0
    %v2719 = vpop.f32.mrf.mxu0
    %v2720 = vadd.f32 %v2624, %v2719
    %v2721 = vpop.f32.mrf.mxu0
    %2722 = vdwg.mxu0
    %v2723 = vadd.f32 %v154, %v2709
    %v2724 = vadd.f32 %v155, %v2712
    %v2725 = vadd.f32 %v156, %v2717
    %v2726 = vadd.f32 %v157, %v2720
    %v2727 = vpack.c.bf16 %v2724, %v2723
    %v2728 = vpack.c.bf16 %v2726, %v2725
    %v2731 = vunpack.c.l.b16 %v2727
    %v2732 = vunpack.c.h.b16 %v2727
    %v2733 = vunpack.c.l.b16 %v2728
    %v2734 = vunpack.c.h.b16 %v2728
    %v2735 = vpack.c.b16 %v2731, %v2731
    %v2736 = vpack.c.b16 %v2732, %v2732
    %v2737 = vpack.c.b16 %v2733, %v2733
    %v2738 = vpack.c.b16 %v2734, %v2734
    %2743 = vst [vmem:[%s11] sm:$0xf] %v2735
    %2744 = vst [vmem:[%s11 + $0x4] sm:$0xf] %v2736
    %2745 = vst [vmem:[%s11 + $0x8] sm:$0xf] %v2737
    %2746 = vst [vmem:[%s11 + $0xc] sm:$0xf] %v2738
    %v2747 = vadd.f32 %v2723, %v2724
    %v2748 = vadd.f32 %v2747, %v2725
    %v2749 = vadd.f32 %v2748, %v2726
    %v2750 = vrot.slane %v2749, 4
    %v2751 = vadd.f32 %v2749, %v2750
    %v2752 = vrot.slane %v2751, 2
    %v2753 = vadd.f32 %v2751, %v2752
    %v2754 = vrot.slane %v2753, 1
    %v2755 = vadd.f32 %v2753, %v2754
    %2756 = vst [vmem:[%s12] sm:$0x1] %v2755
    %v2757 = vmul.f32 %v2723, %v2723
    %v2758 = vmul.f32 %v2724, %v2724
    %v2759 = vmul.f32 %v2725, %v2725
    %v2760 = vmul.f32 %v2726, %v2726
    %v2761 = vadd.f32 %v2757, %v2758
    %v2762 = vadd.f32 %v2761, %v2759
    %v2763 = vadd.f32 %v2762, %v2760
    %v2764 = vrot.slane %v2763, 4
    %v2765 = vadd.f32 %v2763, %v2764
    %v2766 = vrot.slane %v2765, 2
    %v2767 = vadd.f32 %v2765, %v2766
    %v2768 = vrot.slane %v2767, 1
    %v2769 = vadd.f32 %v2767, %v2768
    %2770 = vst [vmem:[%s12 + $0x1] sm:$0x1] %v2769
    // Predicated region
    $region74: #{graph_encoder.9} parent=1 // pred_check
      _
    $region75: #{graph_encoder.9} parent=1 // pred_check_branch
      %2772 = sbr.rel (0) target = $region77
    $region76: #{graph_encoder.9} parent=1 // pred_region
      _
    $region77: #{graph_encoder.9} parent=1 // pred_fallthru
      _
    // Predicated region
    $region78: #{graph_encoder.9} parent=1 // pred_check
      _
    $region79: #{graph_encoder.9} parent=1 // pred_check_branch
      %2774 = sbr.rel (0) target = $region81
    $region80: #{graph_encoder.9} parent=1 // pred_region
      _
    $region81: #{graph_encoder.9} parent=1 // pred_fallthru
      _
    // Predicated region
    $region82: #{graph_encoder.9} parent=1 // pred_check
      _
    $region83: #{graph_encoder.9} parent=1 // pred_check_branch
      %2776 = sbr.rel (0) target = $region85
    $region84: #{graph_encoder.9} parent=1 // pred_region
      _
    $region85: #{graph_encoder.9} parent=1 // pred_fallthru
      _
    // Predicated region
    $region86: #{graph_encoder.9} parent=1 // pred_check
      _
    $region87: #{graph_encoder.9} parent=1 // pred_check_branch
      %2778 = sbr.rel (0) target = $region89
    $region88: #{graph_encoder.9} parent=1 // pred_region
      _
    $region89: #{graph_encoder.9} parent=1 // pred_fallthru
      _
    %2779 = vsyncpa [#allocation3], 1
    %2780 = vsyncpa [#allocation5], 1
    %2781 = vsyncpa [#allocation8], 1
    %2782 = vsyncpa [#allocation11], 1

// kernel: graph_encoder.12
$region0: #{graph_encoder.12}
  #allocation0 [shape = 'u32[]', space=smem, size = 0x4, offset = 0x4, fixed_abs, tag = 'smem constant byte address 0x4 - core index']
  #allocation1 [shape = 'u32[144,128]{1,0:T(1,128)}', space=vmem, size = 0x12000, scoped, tag = 'internal scratch']
  %s0 = inlined_call_operand.vmem [shape: bf16[32,128], index: 0, kind: input, shape index: {}]
  %s1 = inlined_call_operand.vmem [shape: f32[1,128], index: 1, kind: input, shape index: {}]
  %s2 = inlined_call_operand.vmem [shape: f32[1,128], index: 2, kind: input, shape index: {}]
  %s3 = inlined_call_operand.vmem [shape: bf16[128,512], index: 3, kind: input, shape index: {}]
  %s4 = inlined_call_operand.vmem [shape: f32[1,512], index: 4, kind: input, shape index: {}]
  %s5 = inlined_call_operand.vmem [shape: bf16[512,128], index: 5, kind: input, shape index: {}]
  %s6 = inlined_call_operand.vmem [shape: f32[1,128], index: 6, kind: input, shape index: {}]
  %s7 = inlined_call_operand.vmem [shape: bf16[32,128], index: 7, kind: output, shape index: {0}]
  %s8 = inlined_call_operand.vmem [shape: f32[1,2,128], index: 8, kind: output, shape index: {1}]
  %9 = xla_tuple %s7, %s8
  %s10 = sld [smem:[#allocation0]]
  $region46: #{graph_encoder.12} parent=0
    _
  %s12 = ssub.s32 1, %s10
  %s13 = scalar_select 0, %s12, %s10
  // Predicated region
  $region2: #{graph_encoder.12} parent=0 // pred_check
    _
  $region3: #{graph_encoder.12} parent=0 // pred_check_branch
    %15 = sbr.rel (0) target = $region5
  $region4: #{graph_encoder.12} parent=0 // pred_region
    _
  $region5: #{graph_encoder.12} parent=0 // pred_fallthru
    _
  // Predicated region
  $region6: #{graph_encoder.12} parent=0 // pred_check
    _
  $region7: #{graph_encoder.12} parent=0 // pred_check_branch
    %17 = sbr.rel (0) target = $region9
  $region8: #{graph_encoder.12} parent=0 // pred_region
    _
  $region9: #{graph_encoder.12} parent=0 // pred_fallthru
    _
  // Predicated region
  $region10: #{graph_encoder.12} parent=0 // pred_check
    _
  $region11: #{graph_encoder.12} parent=0 // pred_check_branch
    %19 = sbr.rel (0) target = $region13
  $region12: #{graph_encoder.12} parent=0 // pred_region
    _
  $region13: #{graph_encoder.12} parent=0 // pred_fallthru
    _
  // Predicated region
  $region14: #{graph_encoder.12} parent=0 // pred_check
    _
  $region15: #{graph_encoder.12} parent=0 // pred_check_branch
    %21 = sbr.rel (0) target = $region17
  $region16: #{graph_encoder.12} parent=0 // pred_region
    _
  $region17: #{graph_encoder.12} parent=0 // pred_fallthru
    _
  // Predicated region
  $region18: #{graph_encoder.12} parent=0 // pred_check
    _
  $region19: #{graph_encoder.12} parent=0 // pred_check_branch
    %23 = sbr.rel (0) target = $region21
  $region20: #{graph_encoder.12} parent=0 // pred_region
    _
  $region21: #{graph_encoder.12} parent=0 // pred_fallthru
    _
  // Predicated region
  $region22: #{graph_encoder.12} parent=0 // pred_check
    _
  $region23: #{graph_encoder.12} parent=0 // pred_check_branch
    %25 = sbr.rel (0) target = $region25
  $region24: #{graph_encoder.12} parent=0 // pred_region
    _
  $region25: #{graph_encoder.12} parent=0 // pred_fallthru
    _
  // Predicated region
  $region26: #{graph_encoder.12} parent=0 // pred_check
    _
  $region27: #{graph_encoder.12} parent=0 // pred_check_branch
    %27 = sbr.rel (0) target = $region29
  $region28: #{graph_encoder.12} parent=0 // pred_region
    _
  $region29: #{graph_encoder.12} parent=0 // pred_fallthru
    _
  %v29 = vld [vmem:[%s0] sm:$0xf]
  %v30 = vld [vmem:[%s0 + $0x4] sm:$0xf]
  %v31 = vld [vmem:[%s0 + $0x8] sm:$0xf]
  %v32 = vld [vmem:[%s0 + $0xc] sm:$0xf]
  %v33 = vunpack.c.l.bf16 %v29
  %v34 = vunpack.c.l.bf16 %v30
  %v35 = vunpack.c.l.bf16 %v31
  %v36 = vunpack.c.l.bf16 %v32
  %v37 = vld [vmem:[%s1] sm:$0x1]
  %v39 = vlaneseq
  %v40 = vshrl.u32 %v39, 7
  %v41 = vsub.s32 0, %v40
  %v42 = vrot.slane %v37, %v41
  %v44 = vmul.f32 %v33, %v42
  %v45 = vmul.f32 %v34, %v42
  %v46 = vmul.f32 %v35, %v42
  %v47 = vmul.f32 %v36, %v42
  %v48 = vld [vmem:[%s2] sm:$0x1]
  %v50 = vlaneseq
  %v51 = vshrl.u32 %v50, 7
  %v52 = vsub.s32 0, %v51
  %v53 = vrot.slane %v48, %v52
  %v55 = vadd.f32 %v44, %v53
  %v56 = vadd.f32 %v45, %v53
  %v57 = vadd.f32 %v46, %v53
  %v58 = vadd.f32 %v47, %v53
  %v59 = vpack.c.bf16 %v56, %v55
  %v60 = vpack.c.bf16 %v58, %v57
  %v61 = vld [vmem:[%s3] sm:$0xff]
  %v62 = vld [vmem:[%s3 + $0x8] sm:$0xff]
  %v63 = vld [vmem:[%s3 + $0x10] sm:$0xff]
  %v64 = vld [vmem:[%s3 + $0x18] sm:$0xff]
  %v65 = vld [vmem:[%s3 + $0x20] sm:$0xff]
  %v66 = vld [vmem:[%s3 + $0x28] sm:$0xff]
  %v67 = vld [vmem:[%s3 + $0x30] sm:$0xff]
  %v68 = vld [vmem:[%s3 + $0x38] sm:$0xff]
  %v69 = vld [vmem:[%s3 + $0x40] sm:$0xff]
  %v70 = vld [vmem:[%s3 + $0x48] sm:$0xff]
  %v71 = vld [vmem:[%s3 + $0x50] sm:$0xff]
  %v72 = vld [vmem:[%s3 + $0x58] sm:$0xff]
  %v73 = vld [vmem:[%s3 + $0x60] sm:$0xff]
  %v74 = vld [vmem:[%s3 + $0x68] sm:$0xff]
  %v75 = vld [vmem:[%s3 + $0x70] sm:$0xff]
  %v76 = vld [vmem:[%s3 + $0x78] sm:$0xff]
  %v77 = vld [vmem:[%s3 + $0x80] sm:$0xff]
  %v78 = vld [vmem:[%s3 + $0x88] sm:$0xff]
  %v79 = vld [vmem:[%s3 + $0x90] sm:$0xff]
  %v80 = vld [vmem:[%s3 + $0x98] sm:$0xff]
  %v81 = vld [vmem:[%s3 + $0xa0] sm:$0xff]
  %v82 = vld [vmem:[%s3 + $0xa8] sm:$0xff]
  %v83 = vld [vmem:[%s3 + $0xb0] sm:$0xff]
  %v84 = vld [vmem:[%s3 + $0xb8] sm:$0xff]
  %v85 = vld [vmem:[%s3 + $0xc0] sm:$0xff]
  %v86 = vld [vmem:[%s3 + $0xc8] sm:$0xff]
  %v87 = vld [vmem:[%s3 + $0xd0] sm:$0xff]
  %v88 = vld [vmem:[%s3 + $0xd8] sm:$0xff]
  %v89 = vld [vmem:[%s3 + $0xe0] sm:$0xff]
  %v90 = vld [vmem:[%s3 + $0xe8] sm:$0xff]
  %v91 = vld [vmem:[%s3 + $0xf0] sm:$0xff]
  %v92 = vld [vmem:[%s3 + $0xf8] sm:$0xff]
  %v93 = vld [vmem:[%s4] sm:$0xf]
  %v95 = vlaneseq
  %v96 = vshrl.u32 %v95, 7
  %v97 = vsub.s32 0, %v96
  %v98 = vrot.slane %v93, %v97
  %v99 = vlaneseq
  %v100 = vshrl.u32 %v99, 7
  %v101 = vsub.s32 1, %v100
  %v102 = vrot.slane %v93, %v101
  %v103 = vlaneseq
  %v104 = vshrl.u32 %v103, 7
  %v105 = vsub.s32 2, %v104
  %v106 = vrot.slane %v93, %v105
  %v107 = vlaneseq
  %v108 = vshrl.u32 %v107, 7
  %v109 = vsub.s32 3, %v108
  %v110 = vrot.slane %v93, %v109
  %v147 = vunpack.c.l.b16 %v61
  %v148 = vunpack.c.h.b16 %v61
  %v149 = vunpack.c.l.b16 %v62
  %v150 = vunpack.c.h.b16 %v62
  %v151 = vunpack.c.l.b16 %v63
  %v152 = vunpack.c.h.b16 %v63
  %v153 = vunpack.c.l.b16 %v64
  %v154 = vunpack.c.h.b16 %v64
  %v155 = vunpack.c.l.b16 %v65
  %v156 = vunpack.c.h.b16 %v65
  %v157 = vunpack.c.l.b16 %v66
  %v158 = vunpack.c.h.b16 %v66
  %v159 = vunpack.c.l.b16 %v67
  %v160 = vunpack.c.h.b16 %v67
  %v161 = vunpack.c.l.b16 %v68
  %v162 = vunpack.c.h.b16 %v68
  %v163 = vunpack.c.l.b16 %v69
  %v164 = vunpack.c.h.b16 %v69
  %v165 = vunpack.c.l.b16 %v70
  %v166 = vunpack.c.h.b16 %v70
  %v167 = vunpack.c.l.b16 %v71
  %v168 = vunpack.c.h.b16 %v71
  %v169 = vunpack.c.l.b16 %v72
  %v170 = vunpack.c.h.b16 %v72
  %v171 = vunpack.c.l.b16 %v73
  %v172 = vunpack.c.h.b16 %v73
  %v173 = vunpack.c.l.b16 %v74
  %v174 = vunpack.c.h.b16 %v74
  %v175 = vunpack.c.l.b16 %v75
  %v176 = vunpack.c.h.b16 %v75
  %v177 = vunpack.c.l.b16 %v76
  %v178 = vunpack.c.h.b16 %v76
  %v179 = vunpack.c.l.b16 %v77
  %v180 = vunpack.c.h.b16 %v77
  %v181 = vunpack.c.l.b16 %v78
  %v182 = vunpack.c.h.b16 %v78
  %v183 = vunpack.c.l.b16 %v79
  %v184 = vunpack.c.h.b16 %v79
  %v185 = vunpack.c.l.b16 %v80
  %v186 = vunpack.c.h.b16 %v80
  %v187 = vunpack.c.l.b16 %v81
  %v188 = vunpack.c.h.b16 %v81
  %v189 = vunpack.c.l.b16 %v82
  %v190 = vunpack.c.h.b16 %v82
  %v191 = vunpack.c.l.b16 %v83
  %v192 = vunpack.c.h.b16 %v83
  %v193 = vunpack.c.l.b16 %v84
  %v194 = vunpack.c.h.b16 %v84
  %v195 = vunpack.c.l.b16 %v85
  %v196 = vunpack.c.h.b16 %v85
  %v197 = vunpack.c.l.b16 %v86
  %v198 = vunpack.c.h.b16 %v86
  %v199 = vunpack.c.l.b16 %v87
  %v200 = vunpack.c.h.b16 %v87
  %v201 = vunpack.c.l.b16 %v88
  %v202 = vunpack.c.h.b16 %v88
  %v203 = vunpack.c.l.b16 %v89
  %v204 = vunpack.c.h.b16 %v89
  %v205 = vunpack.c.l.b16 %v90
  %v206 = vunpack.c.h.b16 %v90
  %v207 = vunpack.c.l.b16 %v91
  %v208 = vunpack.c.h.b16 %v91
  %v209 = vunpack.c.l.b16 %v92
  %v210 = vunpack.c.h.b16 %v92
  %v211 = vpack.c.b16 %v151, %v147
  %v212 = vpack.c.b16 %v152, %v148
  %v213 = vpack.c.b16 %v153, %v149
  %v214 = vpack.c.b16 %v154, %v150
  %v215 = vpack.c.b16 %v159, %v155
  %v216 = vpack.c.b16 %v160, %v156
  %v217 = vpack.c.b16 %v161, %v157
  %v218 = vpack.c.b16 %v162, %v158
  %v219 = vpack.c.b16 %v167, %v163
  %v220 = vpack.c.b16 %v168, %v164
  %v221 = vpack.c.b16 %v169, %v165
  %v222 = vpack.c.b16 %v170, %v166
  %v223 = vpack.c.b16 %v175, %v171
  %v224 = vpack.c.b16 %v176, %v172
  %v225 = vpack.c.b16 %v177, %v173
  %v226 = vpack.c.b16 %v178, %v174
  %v227 = vpack.c.b16 %v183, %v179
  %v228 = vpack.c.b16 %v184, %v180
  %v229 = vpack.c.b16 %v185, %v181
  %v230 = vpack.c.b16 %v186, %v182
  %v231 = vpack.c.b16 %v191, %v187
  %v232 = vpack.c.b16 %v192, %v188
  %v233 = vpack.c.b16 %v193, %v189
  %v234 = vpack.c.b16 %v194, %v190
  %v235 = vpack.c.b16 %v199, %v195
  %v236 = vpack.c.b16 %v200, %v196
  %v237 = vpack.c.b16 %v201, %v197
  %v238 = vpack.c.b16 %v202, %v198
  %v239 = vpack.c.b16 %v207, %v203
  %v240 = vpack.c.b16 %v208, %v204
  %v241 = vpack.c.b16 %v209, %v205
  %v242 = vpack.c.b16 %v210, %v206
  %275 = vmatprep.subr.bf16.mxu0 %v240
  %276 = vmatpush1.bf16.msra.mxu0 %v239
  %277 = vmatprep.subr.bf16.mxu0 %v236
  %278 = vmatpush1.bf16.msra.mxu0 %v235
  %279 = vmatprep.subr.bf16.mxu0 %v232
  %280 = vmatpush1.bf16.msra.mxu0 %v231
  %281 = vmatprep.subr.bf16.mxu0 %v228
  %282 = vmatpush1.bf16.msra.mxu0 %v227
  %283 = vmatprep.subr.bf16.mxu0 %v224
  %284 = vmatpush1.bf16.msra.mxu0 %v223
  %285 = vmatprep.subr.bf16.mxu0 %v220
  %286 = vmatpush1.bf16.msra.mxu0 %v219
  %287 = vmatprep.subr.bf16.mxu0 %v216
  %288 = vmatpush1.bf16.msra.mxu0 %v215
  %289 = vmatprep.subr.bf16.mxu0 %v212
  %290 = vmatpush1.bf16.msra.mxu0 %v211
  %291 = vmatprep.subr.bf16.mxu0 0
  %292 = vmatpush2.bf16.msra.mxu0 0
  %293 = vmatprep.subr.bf16.mxu0 0
  %294 = vmatpush2.bf16.msra.mxu0 0
  %295 = vmatprep.subr.bf16.mxu0 0
  %296 = vmatpush2.bf16.msra.mxu0 0
  %297 = vmatprep.subr.bf16.mxu0 0
  %298 = vmatpush2.bf16.msra.mxu0 0
  %299 = vmatprep.subr.bf16.mxu0 0
  %300 = vmatpush2.bf16.msra.mxu0 0
  %301 = vmatprep.subr.bf16.mxu0 0
  %302 = vmatpush2.bf16.msra.mxu0 0
  %303 = vmatprep.subr.bf16.mxu0 0
  %304 = vmatpush2.bf16.msra.mxu0 0
  %305 = vmatprep.subr.bf16.mxu0 0
  %306 = vmatpush2.bf16.msra.mxu0 0
  %307 = vmatprep.mubr.bf16.mxu0 0
  %308 = vmatmul.mubr.bf16.gmra.mxu0 %v59
  %v309 = vpop.f32.mrf.mxu0
  %v310 = vadd.f32 %v98, %v309
  %v311 = vpop.f32.mrf.mxu0
  %v312 = vadd.f32 %v102, %v311
  %v313 = vpop.f32.mrf.mxu0
  %v314 = vadd.f32 %v98, %v313
  %v315 = vpop.f32.mrf.mxu0
  %v316 = vadd.f32 %v102, %v315
  %317 = vmatprep.mubr.bf16.mxu0 0
  %318 = vmatmul.mubr.bf16.gmra.mxu0 %v60
  %v319 = vpop.f32.mrf.mxu0
  %v320 = vadd.f32 %v98, %v319
  %v321 = vpop.f32.mrf.mxu0
  %v322 = vadd.f32 %v102, %v321
  %v323 = vpop.f32.mrf.mxu0
  %v324 = vadd.f32 %v98, %v323
  %v325 = vpop.f32.mrf.mxu0
  %v326 = vadd.f32 %v102, %v325
  %327 = vdwg.mxu0
  %328 = vmatprep.subr.bf16.mxu0 %v242
  %329 = vmatpush1.bf16.msra.mxu0 %v241
  %330 = vmatprep.subr.bf16.mxu0 %v238
  %331 = vmatpush1.bf16.msra.mxu0 %v237
  %332 = vmatprep.subr.bf16.mxu0 %v234
  %333 = vmatpush1.bf16.msra.mxu0 %v233
  %334 = vmatprep.subr.bf16.mxu0 %v230
  %335 = vmatpush1.bf16.msra.mxu0 %v229
  %336 = vmatprep.subr.bf16.mxu0 %v226
  %337 = vmatpush1.bf16.msra.mxu0 %v225
  %338 = vmatprep.subr.bf16.mxu0 %v222
  %339 = vmatpush1.bf16.msra.mxu0 %v221
  %340 = vmatprep.subr.bf16.mxu0 %v218
  %341 = vmatpush1.bf16.msra.mxu0 %v217
  %342 = vmatprep.subr.bf16.mxu0 %v214
  %343 = vmatpush1.bf16.msra.mxu0 %v213
  %344 = vmatprep.subr.bf16.mxu0 0
  %345 = vmatpush2.bf16.msra.mxu0 0
  %346 = vmatprep.subr.bf16.mxu0 0
  %347 = vmatpush2.bf16.msra.mxu0 0
  %348 = vmatprep.subr.bf16.mxu0 0
  %349 = vmatpush2.bf16.msra.mxu0 0
  %350 = vmatprep.subr.bf16.mxu0 0
  %351 = vmatpush2.bf16.msra.mxu0 0
  %352 = vmatprep.subr.bf16.mxu0 0
  %353 = vmatpush2.bf16.msra.mxu0 0
  %354 = vmatprep.subr.bf16.mxu0 0
  %355 = vmatpush2.bf16.msra.mxu0 0
  %356 = vmatprep.subr.bf16.mxu0 0
  %357 = vmatpush2.bf16.msra.mxu0 0
  %358 = vmatprep.subr.bf16.mxu0 0
  %359 = vmatpush2.bf16.msra.mxu0 0
  %360 = vmatprep.mubr.bf16.mxu0 0
  %361 = vmatmul.mubr.bf16.gmra.mxu0 %v59
  %v362 = vpop.f32.mrf.mxu0
  %v363 = vadd.f32 %v106, %v362
  %v364 = vpop.f32.mrf.mxu0
  %v365 = vadd.f32 %v110, %v364
  %v366 = vpop.f32.mrf.mxu0
  %v367 = vadd.f32 %v106, %v366
  %v368 = vpop.f32.mrf.mxu0
  %v369 = vadd.f32 %v110, %v368
  %370 = vmatprep.mubr.bf16.mxu0 0
  %371 = vmatmul.mubr.bf16.gmra.mxu0 %v60
  %v372 = vpop.f32.mrf.mxu0
  %v373 = vadd.f32 %v106, %v372
  %v374 = vpop.f32.mrf.mxu0
  %v375 = vadd.f32 %v110, %v374
  %v376 = vpop.f32.mrf.mxu0
  %v377 = vadd.f32 %v106, %v376
  %v378 = vpop.f32.mrf.mxu0
  %v379 = vadd.f32 %v110, %v378
  %380 = vdwg.mxu0
  %v381 = vmax.f32 %v310, 0.0
  %v382 = vmax.f32 %v312, 0.0
  %v383 = vmax.f32 %v363, 0.0
  %v384 = vmax.f32 %v365, 0.0
  %v385 = vmax.f32 %v314, 0.0
  %v386 = vmax.f32 %v316, 0.0
  %v387 = vmax.f32 %v367, 0.0
  %v388 = vmax.f32 %v369, 0.0
  %v389 = vmax.f32 %v320, 0.0
  %v390 = vmax.f32 %v322, 0.0
  %v391 = vmax.f32 %v373, 0.0
  %v392 = vmax.f32 %v375, 0.0
  %v393 = vmax.f32 %v324, 0.0
  %v394 = vmax.f32 %v326, 0.0
  %v395 = vmax.f32 %v377, 0.0
  %v396 = vmax.f32 %v379, 0.0
  %v397 = vpack.c.bf16 %v385, %v381
  %v398 = vpack.c.bf16 %v386, %v382
  %v399 = vpack.c.bf16 %v387, %v383
  %v400 = vpack.c.bf16 %v388, %v384
  %v401 = vpack.c.bf16 %v393, %v389
  %v402 = vpack.c.bf16 %v394, %v390
  %v403 = vpack.c.bf16 %v395, %v391
  %v404 = vpack.c.bf16 %v396, %v392
  %v405 = vld [vmem:[%s5] sm:$0xf]
  %v406 = vld [vmem:[%s5 + $0x4] sm:$0xf]
  %v407 = vld [vmem:[%s5 + $0x8] sm:$0xf]
  %v408 = vld [vmem:[%s5 + $0xc] sm:$0xf]
  %v409 = vld [vmem:[%s5 + $0x10] sm:$0xf]
  %v410 = vld [vmem:[%s5 + $0x14] sm:$0xf]
  %v411 = vld [vmem:[%s5 + $0x18] sm:$0xf]
  %v412 = vld [vmem:[%s5 + $0x1c] sm:$0xf]
  %v413 = vld [vmem:[%s5 + $0x20] sm:$0xf]
  %v414 = vld [vmem:[%s5 + $0x24] sm:$0xf]
  %v415 = vld [vmem:[%s5 + $0x28] sm:$0xf]
  %v416 = vld [vmem:[%s5 + $0x2c] sm:$0xf]
  %v417 = vld [vmem:[%s5 + $0x30] sm:$0xf]
  %v418 = vld [vmem:[%s5 + $0x34] sm:$0xf]
  %v419 = vld [vmem:[%s5 + $0x38] sm:$0xf]
  %v420 = vld [vmem:[%s5 + $0x3c] sm:$0xf]
  %v421 = vld [vmem:[%s5 + $0x40] sm:$0xf]
  %v422 = vld [vmem:[%s5 + $0x44] sm:$0xf]
  %v423 = vld [vmem:[%s5 + $0x48] sm:$0xf]
  %v424 = vld [vmem:[%s5 + $0x4c] sm:$0xf]
  %v425 = vld [vmem:[%s5 + $0x50] sm:$0xf]
  %v426 = vld [vmem:[%s5 + $0x54] sm:$0xf]
  %v427 = vld [vmem:[%s5 + $0x58] sm:$0xf]
  %v428 = vld [vmem:[%s5 + $0x5c] sm:$0xf]
  %v429 = vld [vmem:[%s5 + $0x60] sm:$0xf]
  %v430 = vld [vmem:[%s5 + $0x64] sm:$0xf]
  %v431 = vld [vmem:[%s5 + $0x68] sm:$0xf]
  %v432 = vld [vmem:[%s5 + $0x6c] sm:$0xf]
  %v433 = vld [vmem:[%s5 + $0x70] sm:$0xf]
  %v434 = vld [vmem:[%s5 + $0x74] sm:$0xf]
  %v435 = vld [vmem:[%s5 + $0x78] sm:$0xf]
  %v436 = vld [vmem:[%s5 + $0x7c] sm:$0xf]
  %v437 = vld [vmem:[%s5 + $0x80] sm:$0xf]
  %v438 = vld [vmem:[%s5 + $0x84] sm:$0xf]
  %v439 = vld [vmem:[%s5 + $0x88] sm:$0xf]
  %v440 = vld [vmem:[%s5 + $0x8c] sm:$0xf]
  %v441 = vld [vmem:[%s5 + $0x90] sm:$0xf]
  %v442 = vld [vmem:[%s5 + $0x94] sm:$0xf]
  %v443 = vld [vmem:[%s5 + $0x98] sm:$0xf]
  %v444 = vld [vmem:[%s5 + $0x9c] sm:$0xf]
  %v445 = vld [vmem:[%s5 + $0xa0] sm:$0xf]
  %v446 = vld [vmem:[%s5 + $0xa4] sm:$0xf]
  %v447 = vld [vmem:[%s5 + $0xa8] sm:$0xf]
  %v448 = vld [vmem:[%s5 + $0xac] sm:$0xf]
  %v449 = vld [vmem:[%s5 + $0xb0] sm:$0xf]
  %v450 = vld [vmem:[%s5 + $0xb4] sm:$0xf]
  %v451 = vld [vmem:[%s5 + $0xb8] sm:$0xf]
  %v452 = vld [vmem:[%s5 + $0xbc] sm:$0xf]
  %v453 = vld [vmem:[%s5 + $0xc0] sm:$0xf]
  %v454 = vld [vmem:[%s5 + $0xc4] sm:$0xf]
  %v455 = vld [vmem:[%s5 + $0xc8] sm:$0xf]
  %v456 = vld [vmem:[%s5 + $0xcc] sm:$0xf]
  %v457 = vld [vmem:[%s5 + $0xd0] sm:$0xf]
  %v458 = vld [vmem:[%s5 + $0xd4] sm:$0xf]
  %v459 = vld [vmem:[%s5 + $0xd8] sm:$0xf]
  %v460 = vld [vmem:[%s5 + $0xdc] sm:$0xf]
  %v461 = vld [vmem:[%s5 + $0xe0] sm:$0xf]
  %v462 = vld [vmem:[%s5 + $0xe4] sm:$0xf]
  %v463 = vld [vmem:[%s5 + $0xe8] sm:$0xf]
  %v464 = vld [vmem:[%s5 + $0xec] sm:$0xf]
  %v465 = vld [vmem:[%s5 + $0xf0] sm:$0xf]
  %v466 = vld [vmem:[%s5 + $0xf4] sm:$0xf]
  %v467 = vld [vmem:[%s5 + $0xf8] sm:$0xf]
  %v468 = vld [vmem:[%s5 + $0xfc] sm:$0xf]
  %v469 = vld [vmem:[%s6] sm:$0x1]
  %v471 = vlaneseq
  %v472 = vshrl.u32 %v471, 7
  %v473 = vsub.s32 0, %v472
  %v474 = vrot.slane %v469, %v473
  %v540 = vunpack.c.l.b16 %v405
  %v541 = vunpack.c.l.b16 %v406
  %v542 = vunpack.c.l.b16 %v407
  %v543 = vunpack.c.l.b16 %v408
  %v544 = vunpack.c.l.b16 %v409
  %v545 = vunpack.c.l.b16 %v410
  %v546 = vunpack.c.l.b16 %v411
  %v547 = vunpack.c.l.b16 %v412
  %v548 = vunpack.c.l.b16 %v413
  %v549 = vunpack.c.l.b16 %v414
  %v550 = vunpack.c.l.b16 %v415
  %v551 = vunpack.c.l.b16 %v416
  %v552 = vunpack.c.l.b16 %v417
  %v553 = vunpack.c.l.b16 %v418
  %v554 = vunpack.c.l.b16 %v419
  %v555 = vunpack.c.l.b16 %v420
  %v556 = vunpack.c.l.b16 %v421
  %v557 = vunpack.c.l.b16 %v422
  %v558 = vunpack.c.l.b16 %v423
  %v559 = vunpack.c.l.b16 %v424
  %v560 = vunpack.c.l.b16 %v425
  %v561 = vunpack.c.l.b16 %v426
  %v562 = vunpack.c.l.b16 %v427
  %v563 = vunpack.c.l.b16 %v428
  %v564 = vunpack.c.l.b16 %v429
  %v565 = vunpack.c.l.b16 %v430
  %v566 = vunpack.c.l.b16 %v431
  %v567 = vunpack.c.l.b16 %v432
  %v568 = vunpack.c.l.b16 %v433
  %v569 = vunpack.c.l.b16 %v434
  %v570 = vunpack.c.l.b16 %v435
  %v571 = vunpack.c.l.b16 %v436
  %v572 = vunpack.c.l.b16 %v437
  %v573 = vunpack.c.l.b16 %v438
  %v574 = vunpack.c.l.b16 %v439
  %v575 = vunpack.c.l.b16 %v440
  %v576 = vunpack.c.l.b16 %v441
  %v577 = vunpack.c.l.b16 %v442
  %v578 = vunpack.c.l.b16 %v443
  %v579 = vunpack.c.l.b16 %v444
  %v580 = vunpack.c.l.b16 %v445
  %v581 = vunpack.c.l.b16 %v446
  %v582 = vunpack.c.l.b16 %v447
  %v583 = vunpack.c.l.b16 %v448
  %v584 = vunpack.c.l.b16 %v449
  %v585 = vunpack.c.l.b16 %v450
  %v586 = vunpack.c.l.b16 %v451
  %v587 = vunpack.c.l.b16 %v452
  %v588 = vunpack.c.l.b16 %v453
  %v589 = vunpack.c.l.b16 %v454
  %v590 = vunpack.c.l.b16 %v455
  %v591 = vunpack.c.l.b16 %v456
  %v592 = vunpack.c.l.b16 %v457
  %v593 = vunpack.c.l.b16 %v458
  %v594 = vunpack.c.l.b16 %v459
  %v595 = vunpack.c.l.b16 %v460
  %v596 = vunpack.c.l.b16 %v461
  %v597 = vunpack.c.l.b16 %v462
  %v598 = vunpack.c.l.b16 %v463
  %v599 = vunpack.c.l.b16 %v464
  %v600 = vunpack.c.l.b16 %v465
  %v601 = vunpack.c.l.b16 %v466
  %v602 = vunpack.c.l.b16 %v467
  %v603 = vunpack.c.l.b16 %v468
  %v604 = vpack.c.b16 %v541, %v540
  %v605 = vpack.c.b16 %v543, %v542
  %v606 = vpack.c.b16 %v545, %v544
  %v607 = vpack.c.b16 %v547, %v546
  %v608 = vpack.c.b16 %v549, %v548
  %v609 = vpack.c.b16 %v551, %v550
  %v610 = vpack.c.b16 %v553, %v552
  %v611 = vpack.c.b16 %v555, %v554
  %v612 = vpack.c.b16 %v557, %v556
  %v613 = vpack.c.b16 %v559, %v558
  %v614 = vpack.c.b16 %v561, %v560
  %v615 = vpack.c.b16 %v563, %v562
  %v616 = vpack.c.b16 %v565, %v564
  %v617 = vpack.c.b16 %v567, %v566
  %v618 = vpack.c.b16 %v569, %v568
  %v619 = vpack.c.b16 %v571, %v570
  %v620 = vpack.c.b16 %v573, %v572
  %v621 = vpack.c.b16 %v575, %v574
  %v622 = vpack.c.b16 %v577, %v576
  %v623 = vpack.c.b16 %v579, %v578
  %v624 = vpack.c.b16 %v581, %v580
  %v625 = vpack.c.b16 %v583, %v582
  %v626 = vpack.c.b16 %v585, %v584
  %v627 = vpack.c.b16 %v587, %v586
  %v628 = vpack.c.b16 %v589, %v588
  %v629 = vpack.c.b16 %v591, %v590
  %v630 = vpack.c.b16 %v593, %v592
  %v631 = vpack.c.b16 %v595, %v594
  %v632 = vpack.c.b16 %v597, %v596
  %v633 = vpack.c.b16 %v599, %v598
  %v634 = vpack.c.b16 %v601, %v600
  %v635 = vpack.c.b16 %v603, %v602
  %668 = vmatprep.subr.bf16.mxu0 0
  %669 = vmatpush1.bf16.msra.mxu0 %v611
  %670 = vmatprep.subr.bf16.mxu0 0
  %671 = vmatpush1.bf16.msra.mxu0 %v610
  %672 = vmatprep.subr.bf16.mxu0 0
  %673 = vmatpush1.bf16.msra.mxu0 %v609
  %674 = vmatprep.subr.bf16.mxu0 0
  %675 = vmatpush1.bf16.msra.mxu0 %v608
  %676 = vmatprep.subr.bf16.mxu0 0
  %677 = vmatpush1.bf16.msra.mxu0 %v607
  %678 = vmatprep.subr.bf16.mxu0 0
  %679 = vmatpush1.bf16.msra.mxu0 %v606
  %680 = vmatprep.subr.bf16.mxu0 0
  %681 = vmatpush1.bf16.msra.mxu0 %v605
  %682 = vmatprep.subr.bf16.mxu0 0
  %683 = vmatpush1.bf16.msra.mxu0 %v604
  %684 = vmatprep.subr.bf16.mxu0 0
  %685 = vmatpush2.bf16.msra.mxu0 %v619
  %686 = vmatprep.subr.bf16.mxu0 0
  %687 = vmatpush2.bf16.msra.mxu0 %v618
  %688 = vmatprep.subr.bf16.mxu0 0
  %689 = vmatpush2.bf16.msra.mxu0 %v617
  %690 = vmatprep.subr.bf16.mxu0 0
  %691 = vmatpush2.bf16.msra.mxu0 %v616
  %692 = vmatprep.subr.bf16.mxu0 0
  %693 = vmatpush2.bf16.msra.mxu0 %v615
  %694 = vmatprep.subr.bf16.mxu0 0
  %695 = vmatpush2.bf16.msra.mxu0 %v614
  %696 = vmatprep.subr.bf16.mxu0 0
  %697 = vmatpush2.bf16.msra.mxu0 %v613
  %698 = vmatprep.subr.bf16.mxu0 0
  %699 = vmatpush2.bf16.msra.mxu0 %v612
  %700 = vmatprep.mubr.bf16.mxu0 %v398
  %701 = vmatmul.mubr.bf16.gmra.mxu0 %v397
  %v702 = vpop.f32.mrf.mxu0
  %v703 = vadd.f32 %v474, %v702
  %v704 = vpop.f32.mrf.mxu0
  %v705 = vpop.f32.mrf.mxu0
  %v706 = vadd.f32 %v474, %v705
  %v707 = vpop.f32.mrf.mxu0
  %708 = vmatprep.mubr.bf16.mxu0 %v402
  %709 = vmatmul.mubr.bf16.gmra.mxu0 %v401
  %v710 = vpop.f32.mrf.mxu0
  %v711 = vadd.f32 %v474, %v710
  %v712 = vpop.f32.mrf.mxu0
  %v713 = vpop.f32.mrf.mxu0
  %v714 = vadd.f32 %v474, %v713
  %v715 = vpop.f32.mrf.mxu0
  %716 = vdwg.mxu0
  %717 = vmatprep.subr.bf16.mxu0 0
  %718 = vmatpush1.bf16.msra.mxu0 %v627
  %719 = vmatprep.subr.bf16.mxu0 0
  %720 = vmatpush1.bf16.msra.mxu0 %v626
  %721 = vmatprep.subr.bf16.mxu0 0
  %722 = vmatpush1.bf16.msra.mxu0 %v625
  %723 = vmatprep.subr.bf16.mxu0 0
  %724 = vmatpush1.bf16.msra.mxu0 %v624
  %725 = vmatprep.subr.bf16.mxu0 0
  %726 = vmatpush1.bf16.msra.mxu0 %v623
  %727 = vmatprep.subr.bf16.mxu0 0
  %728 = vmatpush1.bf16.msra.mxu0 %v622
  %729 = vmatprep.subr.bf16.mxu0 0
  %730 = vmatpush1.bf16.msra.mxu0 %v621
  %731 = vmatprep.subr.bf16.mxu0 0
  %732 = vmatpush1.bf16.msra.mxu0 %v620
  %733 = vmatprep.subr.bf16.mxu0 0
  %734 = vmatpush2.bf16.msra.mxu0 %v635
  %735 = vmatprep.subr.bf16.mxu0 0
  %736 = vmatpush2.bf16.msra.mxu0 %v634
  %737 = vmatprep.subr.bf16.mxu0 0
  %738 = vmatpush2.bf16.msra.mxu0 %v633
  %739 = vmatprep.subr.bf16.mxu0 0
  %740 = vmatpush2.bf16.msra.mxu0 %v632
  %741 = vmatprep.subr.bf16.mxu0 0
  %742 = vmatpush2.bf16.msra.mxu0 %v631
  %743 = vmatprep.subr.bf16.mxu0 0
  %744 = vmatpush2.bf16.msra.mxu0 %v630
  %745 = vmatprep.subr.bf16.mxu0 0
  %746 = vmatpush2.bf16.msra.mxu0 %v629
  %747 = vmatprep.subr.bf16.mxu0 0
  %748 = vmatpush2.bf16.msra.mxu0 %v628
  %749 = vmatprep.mubr.bf16.mxu0 %v400
  %750 = vmatmul.mubr.bf16.gmra.mxu0 %v399
  %v751 = vpop.f32.mrf.mxu0
  %v752 = vadd.f32 %v703, %v751
  %v753 = vpop.f32.mrf.mxu0
  %v754 = vpop.f32.mrf.mxu0
  %v755 = vadd.f32 %v706, %v754
  %v756 = vpop.f32.mrf.mxu0
  %757 = vmatprep.mubr.bf16.mxu0 %v404
  %758 = vmatmul.mubr.bf16.gmra.mxu0 %v403
  %v759 = vpop.f32.mrf.mxu0
  %v760 = vadd.f32 %v711, %v759
  %v761 = vpop.f32.mrf.mxu0
  %v762 = vpop.f32.mrf.mxu0
  %v763 = vadd.f32 %v714, %v762
  %v764 = vpop.f32.mrf.mxu0
  %765 = vdwg.mxu0
  %v766 = vadd.f32 %v55, %v752
  %v767 = vadd.f32 %v56, %v755
  %v768 = vadd.f32 %v57, %v760
  %v769 = vadd.f32 %v58, %v763
  %v770 = vpack.c.bf16 %v767, %v766
  %v771 = vpack.c.bf16 %v769, %v768
  %v774 = vunpack.c.l.b16 %v770
  %v775 = vunpack.c.h.b16 %v770
  %v776 = vunpack.c.l.b16 %v771
  %v777 = vunpack.c.h.b16 %v771
  %v778 = vpack.c.b16 %v774, %v774
  %v779 = vpack.c.b16 %v775, %v775
  %v780 = vpack.c.b16 %v776, %v776
  %v781 = vpack.c.b16 %v777, %v777
  %786 = vst [vmem:[%s7] sm:$0xf] %v778
  %787 = vst [vmem:[%s7 + $0x4] sm:$0xf] %v779
  %788 = vst [vmem:[%s7 + $0x8] sm:$0xf] %v780
  %789 = vst [vmem:[%s7 + $0xc] sm:$0xf] %v781
  %s790 = smul.u32 0, 32
  %v791 = vlaneseq
  %v792 = vshrl.u32 %v791, 7
  %v793 = vadd.s32 %v792, 8
  %v794 = vadd.s32 %v792, 16
  %v795 = vadd.s32 %v792, 24
  %v796 = vstv %s790
  %v797 = vadd.s32 %v796, %v792
  %v798 = vadd.s32 %v796, %v793
  %v799 = vadd.s32 %v796, %v794
  %v800 = vadd.s32 %v796, %v795
  %vm801 = vcmp.lt.s32.totalorder %v797, 32
  %vm802 = vcmp.lt.s32.totalorder %v798, 32
  %vm803 = vcmp.lt.s32.totalorder %v799, 32
  %vm804 = vcmp.lt.s32.totalorder %v800, 32
  %v805 = vsel %vm801, %v766, 0.0
  %v806 = vsel %vm802, %v767, 0.0
  %v807 = vsel %vm803, %v768, 0.0
  %v808 = vsel %vm804, %v769, 0.0
  %v809 = vadd.f32 %v805, %v806
  %v810 = vadd.f32 %v809, %v807
  %v811 = vadd.f32 %v810, %v808
  %v812 = vrot.slane %v811, 4
  %v813 = vadd.f32 %v811, %v812
  %v814 = vrot.slane %v813, 2
  %v815 = vadd.f32 %v813, %v814
  %v816 = vrot.slane %v815, 1
  %v817 = vadd.f32 %v815, %v816
  %818 = vst [vmem:[%s8] sm:$0x1] %v817
  %v819 = vmul.f32 %v805, %v805
  %v820 = vmul.f32 %v806, %v806
  %v821 = vmul.f32 %v807, %v807
  %v822 = vmul.f32 %v808, %v808
  %v823 = vadd.f32 %v819, %v820
  %v824 = vadd.f32 %v823, %v821
  %v825 = vadd.f32 %v824, %v822
  %v826 = vrot.slane %v825, 4
  %v827 = vadd.f32 %v825, %v826
  %v828 = vrot.slane %v827, 2
  %v829 = vadd.f32 %v827, %v828
  %v830 = vrot.slane %v829, 1
  %v831 = vadd.f32 %v829, %v830
  %832 = vst [vmem:[%s8 + $0x1] sm:$0x1] %v831
  // Predicated region
  $region30: #{graph_encoder.12} parent=0 // pred_check
    _
  $region31: #{graph_encoder.12} parent=0 // pred_check_branch
    %834 = sbr.rel (0) target = $region33
  $region32: #{graph_encoder.12} parent=0 // pred_region
    _
  $region33: #{graph_encoder.12} parent=0 // pred_fallthru
    _
  // Predicated region
  $region34: #{graph_encoder.12} parent=0 // pred_check
    _
  $region35: #{graph_encoder.12} parent=0 // pred_check_branch
    %836 = sbr.rel (0) target = $region37
  $region36: #{graph_encoder.12} parent=0 // pred_region
    _
  $region37: #{graph_encoder.12} parent=0 // pred_fallthru
    _
  // Predicated region
  $region38: #{graph_encoder.12} parent=0 // pred_check
    _
  $region39: #{graph_encoder.12} parent=0 // pred_check_branch
    %838 = sbr.rel (0) target = $region41
  $region40: #{graph_encoder.12} parent=0 // pred_region
    _
  $region41: #{graph_encoder.12} parent=0 // pred_fallthru
    _
  // Predicated region
  $region42: #{graph_encoder.12} parent=0 // pred_check
    _
  $region43: #{graph_encoder.12} parent=0 // pred_check_branch
    %840 = sbr.rel (0) target = $region45
  $region44: #{graph_encoder.12} parent=0 // pred_region
    _
  $region45: #{graph_encoder.12} parent=0 // pred_fallthru
    _

// kernel: graph_encoder.15
$region0: #{graph_encoder.15}
  #allocation0 [shape = 'u32[]', space=smem, size = 0x4, offset = 0x4, fixed_abs, tag = 'smem constant byte address 0x4 - core index']
  #allocation1 [shape = 'u32[144,128]{1,0:T(1,128)}', space=vmem, size = 0x12000, scoped, tag = 'internal scratch']
  %s0 = inlined_call_operand.vmem [shape: bf16[32,128], index: 0, kind: input, shape index: {}]
  %s1 = inlined_call_operand.vmem [shape: f32[1,128], index: 1, kind: input, shape index: {}]
  %s2 = inlined_call_operand.vmem [shape: f32[1,128], index: 2, kind: input, shape index: {}]
  %s3 = inlined_call_operand.hbm [shape: f32[32,128], index: 3, kind: output, shape index: {}]
  %s4 = sld [smem:[#allocation0]]
  $region22: #{graph_encoder.15} parent=0
    _
  %s6 = ssub.s32 1, %s4
  %s7 = scalar_select 0, %s6, %s4
  $region1: #{graph_encoder.15} parent=0
    #allocation2 [shape = 'u8[16384]{0}', space=vmem, size = 0x4000, scoped, tag = 'output window, operand 0, single buffered']
    #allocation3 [shape = 's32[1]{0}', space=sflag, size = 0x4, scoped, tag = 'scoped memory for graph_encoder.15']
    %8 = vsyncpa [#allocation3], 0
    // Predicated region
    $region2: #{graph_encoder.15} parent=1 // pred_check
      _
    $region3: #{graph_encoder.15} parent=1 // pred_check_branch
      %10 = sbr.rel (0) target = $region5
    $region4: #{graph_encoder.15} parent=1 // pred_region
      _
    $region5: #{graph_encoder.15} parent=1 // pred_fallthru
      _
    // Predicated region
    $region6: #{graph_encoder.15} parent=1 // pred_check
      _
    $region7: #{graph_encoder.15} parent=1 // pred_check_branch
      %12 = sbr.rel (0) target = $region9
    $region8: #{graph_encoder.15} parent=1 // pred_region
      _
    $region9: #{graph_encoder.15} parent=1 // pred_fallthru
      _
    // Predicated region
    $region10: #{graph_encoder.15} parent=1 // pred_check
      _
    $region11: #{graph_encoder.15} parent=1 // pred_check_branch
      %14 = sbr.rel (0) target = $region13
    $region12: #{graph_encoder.15} parent=1 // pred_region
      _
    $region13: #{graph_encoder.15} parent=1 // pred_fallthru
      _
    %v15 = vld [vmem:[%s0] sm:$0xf]
    %v16 = vld [vmem:[%s0 + $0x4] sm:$0xf]
    %v17 = vld [vmem:[%s0 + $0x8] sm:$0xf]
    %v18 = vld [vmem:[%s0 + $0xc] sm:$0xf]
    %v19 = vunpack.c.l.bf16 %v15
    %v20 = vunpack.c.l.bf16 %v16
    %v21 = vunpack.c.l.bf16 %v17
    %v22 = vunpack.c.l.bf16 %v18
    %v23 = vld [vmem:[%s1] sm:$0x1]
    %v25 = vlaneseq
    %v26 = vshrl.u32 %v25, 7
    %v27 = vsub.s32 0, %v26
    %v28 = vrot.slane %v23, %v27
    %v30 = vmul.f32 %v19, %v28
    %v31 = vmul.f32 %v20, %v28
    %v32 = vmul.f32 %v21, %v28
    %v33 = vmul.f32 %v22, %v28
    %v34 = vld [vmem:[%s2] sm:$0x1]
    %v36 = vlaneseq
    %v37 = vshrl.u32 %v36, 7
    %v38 = vsub.s32 0, %v37
    %v39 = vrot.slane %v34, %v38
    %v41 = vadd.f32 %v30, %v39
    %v42 = vadd.f32 %v31, %v39
    %v43 = vadd.f32 %v32, %v39
    %v44 = vadd.f32 %v33, %v39
    %45 = vst [vmem:[#allocation2] sm:$0xff] %v41
    %46 = vst [vmem:[#allocation2 + $0x8] sm:$0xff] %v42
    %47 = vst [vmem:[#allocation2 + $0x10] sm:$0xff] %v43
    %48 = vst [vmem:[#allocation2 + $0x18] sm:$0xff] %v44
    // Predicated region
    $region14: #{graph_encoder.15} parent=1 // pred_check
      _
    $region15: #{graph_encoder.15} parent=1 // pred_check_branch
      %50 = sbr.rel (0) target = $region17
    $region16: #{graph_encoder.15} parent=1 // pred_region
      %s52 = ssub.s32 512, 512
      %53 = vsyncadd [#allocation3], %s52
      %s54 = sshll.u32 [#allocation2], 4
      %s55 = int_to_ptr.vmem [resolvable:$true] %s54
      %60 = dma.vmem_to_hbm [thread:$0]  %s55, 512, %s3, [#allocation3], 128, 128, 8
    $region17: #{graph_encoder.15} parent=1 // pred_fallthru
      _
    // Predicated region
    $region18: #{graph_encoder.15} parent=1 // pred_check
      _
    $region19: #{graph_encoder.15} parent=1 // pred_check_branch
      %62 = sbr.rel (0) target = $region21
    $region20: #{graph_encoder.15} parent=1 // pred_region
      %63 = dma.done [#allocation3], 512
    $region21: #{graph_encoder.15} parent=1 // pred_fallthru
      _
    %64 = vsyncpa [#allocation3], 1

// kernel: graph_encoder.11
$region0: #{graph_encoder.11}
  #allocation0 [shape = 'u32[]', space=smem, size = 0x4, offset = 0x4, fixed_abs, tag = 'smem constant byte address 0x4 - core index']
  #allocation1 [shape = 'u32[144,128]{1,0:T(1,128)}', space=vmem, size = 0x12000, scoped, tag = 'internal scratch']
  %s0 = inlined_call_operand.vmem [shape: bf16[2,16,128], index: 0, kind: input, shape index: {}]
  %s1 = inlined_call_operand.vmem [shape: f32[1,128], index: 1, kind: input, shape index: {}]
  %s2 = inlined_call_operand.vmem [shape: f32[1,128], index: 2, kind: input, shape index: {}]
  %s3 = inlined_call_operand.vmem [shape: bf16[128,128], index: 3, kind: input, shape index: {}]
  %s4 = inlined_call_operand.vmem [shape: bf16[128,128], index: 4, kind: input, shape index: {}]
  %s5 = inlined_call_operand.vmem [shape: bf16[128,128], index: 5, kind: input, shape index: {}]
  %s6 = inlined_call_operand.vmem [shape: f32[1,128], index: 6, kind: input, shape index: {}]
  %s7 = inlined_call_operand.vmem [shape: f32[1,128], index: 7, kind: input, shape index: {}]
  %s8 = inlined_call_operand.vmem [shape: f32[1,128], index: 8, kind: input, shape index: {}]
  %s9 = inlined_call_operand.vmem [shape: bf16[128,128], index: 9, kind: input, shape index: {}]
  %s10 = inlined_call_operand.vmem [shape: f32[1,128], index: 10, kind: input, shape index: {}]
  %s11 = inlined_call_operand.vmem [shape: bf16[2,16,128], index: 11, kind: output, shape index: {0}]
  %s12 = inlined_call_operand.vmem [shape: f32[1,2,128], index: 12, kind: output, shape index: {1}]
  %13 = xla_tuple %s11, %s12
  %s14 = sld [smem:[#allocation0]]
  $region62: #{graph_encoder.11} parent=0
    _
  %s16 = ssub.s32 1, %s14
  %s17 = scalar_select 0, %s16, %s14
  // Predicated region
  $region2: #{graph_encoder.11} parent=0 // pred_check
    _
  $region3: #{graph_encoder.11} parent=0 // pred_check_branch
    %19 = sbr.rel (0) target = $region5
  $region4: #{graph_encoder.11} parent=0 // pred_region
    _
  $region5: #{graph_encoder.11} parent=0 // pred_fallthru
    _
  // Predicated region
  $region6: #{graph_encoder.11} parent=0 // pred_check
    _
  $region7: #{graph_encoder.11} parent=0 // pred_check_branch
    %21 = sbr.rel (0) target = $region9
  $region8: #{graph_encoder.11} parent=0 // pred_region
    _
  $region9: #{graph_encoder.11} parent=0 // pred_fallthru
    _
  // Predicated region
  $region10: #{graph_encoder.11} parent=0 // pred_check
    _
  $region11: #{graph_encoder.11} parent=0 // pred_check_branch
    %23 = sbr.rel (0) target = $region13
  $region12: #{graph_encoder.11} parent=0 // pred_region
    _
  $region13: #{graph_encoder.11} parent=0 // pred_fallthru
    _
  // Predicated region
  $region14: #{graph_encoder.11} parent=0 // pred_check
    _
  $region15: #{graph_encoder.11} parent=0 // pred_check_branch
    %25 = sbr.rel (0) target = $region17
  $region16: #{graph_encoder.11} parent=0 // pred_region
    _
  $region17: #{graph_encoder.11} parent=0 // pred_fallthru
    _
  // Predicated region
  $region18: #{graph_encoder.11} parent=0 // pred_check
    _
  $region19: #{graph_encoder.11} parent=0 // pred_check_branch
    %27 = sbr.rel (0) target = $region21
  $region20: #{graph_encoder.11} parent=0 // pred_region
    _
  $region21: #{graph_encoder.11} parent=0 // pred_fallthru
    _
  // Predicated region
  $region22: #{graph_encoder.11} parent=0 // pred_check
    _
  $region23: #{graph_encoder.11} parent=0 // pred_check_branch
    %29 = sbr.rel (0) target = $region25
  $region24: #{graph_encoder.11} parent=0 // pred_region
    _
  $region25: #{graph_encoder.11} parent=0 // pred_fallthru
    _
  // Predicated region
  $region26: #{graph_encoder.11} parent=0 // pred_check
    _
  $region27: #{graph_encoder.11} parent=0 // pred_check_branch
    %31 = sbr.rel (0) target = $region29
  $region28: #{graph_encoder.11} parent=0 // pred_region
    _
  $region29: #{graph_encoder.11} parent=0 // pred_fallthru
    _
  // Predicated region
  $region30: #{graph_encoder.11} parent=0 // pred_check
    _
  $region31: #{graph_encoder.11} parent=0 // pred_check_branch
    %33 = sbr.rel (0) target = $region33
  $region32: #{graph_encoder.11} parent=0 // pred_region
    _
  $region33: #{graph_encoder.11} parent=0 // pred_fallthru
    _
  // Predicated region
  $region34: #{graph_encoder.11} parent=0 // pred_check
    _
  $region35: #{graph_encoder.11} parent=0 // pred_check_branch
    %35 = sbr.rel (0) target = $region37
  $region36: #{graph_encoder.11} parent=0 // pred_region
    _
  $region37: #{graph_encoder.11} parent=0 // pred_fallthru
    _
  // Predicated region
  $region38: #{graph_encoder.11} parent=0 // pred_check
    _
  $region39: #{graph_encoder.11} parent=0 // pred_check_branch
    %37 = sbr.rel (0) target = $region41
  $region40: #{graph_encoder.11} parent=0 // pred_region
    _
  $region41: #{graph_encoder.11} parent=0 // pred_fallthru
    _
  // Predicated region
  $region42: #{graph_encoder.11} parent=0 // pred_check
    _
  $region43: #{graph_encoder.11} parent=0 // pred_check_branch
    %39 = sbr.rel (0) target = $region45
  $region44: #{graph_encoder.11} parent=0 // pred_region
    _
  $region45: #{graph_encoder.11} parent=0 // pred_fallthru
    _
  %v41 = vld [vmem:[%s0] sm:$0xf]
  %v42 = vld [vmem:[%s0 + $0x4] sm:$0xf]
  %v43 = vld [vmem:[%s0 + $0x8] sm:$0xf]
  %v44 = vld [vmem:[%s0 + $0xc] sm:$0xf]
  %v45 = vunpack.c.l.bf16 %v41
  %v46 = vunpack.c.l.bf16 %v42
  %v47 = vunpack.c.l.bf16 %v43
  %v48 = vunpack.c.l.bf16 %v44
  %v49 = vld [vmem:[%s1] sm:$0x1]
  %v51 = vlaneseq
  %v52 = vshrl.u32 %v51, 7
  %v53 = vsub.s32 0, %v52
  %v54 = vrot.slane %v49, %v53
  %v56 = vmul.f32 %v45, %v54
  %v57 = vmul.f32 %v46, %v54
  %v58 = vmul.f32 %v47, %v54
  %v59 = vmul.f32 %v48, %v54
  %v60 = vld [vmem:[%s2] sm:$0x1]
  %v62 = vlaneseq
  %v63 = vshrl.u32 %v62, 7
  %v64 = vsub.s32 0, %v63
  %v65 = vrot.slane %v60, %v64
  %v67 = vadd.f32 %v56, %v65
  %v68 = vadd.f32 %v57, %v65
  %v69 = vadd.f32 %v58, %v65
  %v70 = vadd.f32 %v59, %v65
  %v71 = vpack.c.bf16 %v68, %v67
  %v72 = vpack.c.bf16 %v70, %v69
  %v73 = vld [vmem:[%s3] sm:$0xf]
  %v74 = vld [vmem:[%s3 + $0x4] sm:$0xf]
  %v75 = vld [vmem:[%s3 + $0x8] sm:$0xf]
  %v76 = vld [vmem:[%s3 + $0xc] sm:$0xf]
  %v77 = vld [vmem:[%s3 + $0x10] sm:$0xf]
  %v78 = vld [vmem:[%s3 + $0x14] sm:$0xf]
  %v79 = vld [vmem:[%s3 + $0x18] sm:$0xf]
  %v80 = vld [vmem:[%s3 + $0x1c] sm:$0xf]
  %v81 = vld [vmem:[%s3 + $0x20] sm:$0xf]
  %v82 = vld [vmem:[%s3 + $0x24] sm:$0xf]
  %v83 = vld [vmem:[%s3 + $0x28] sm:$0xf]
  %v84 = vld [vmem:[%s3 + $0x2c] sm:$0xf]
  %v85 = vld [vmem:[%s3 + $0x30] sm:$0xf]
  %v86 = vld [vmem:[%s3 + $0x34] sm:$0xf]
  %v87 = vld [vmem:[%s3 + $0x38] sm:$0xf]
  %v88 = vld [vmem:[%s3 + $0x3c] sm:$0xf]
  %v89 = vld [vmem:[%s6] sm:$0x1]
  %v91 = vlaneseq
  %v92 = vshrl.u32 %v91, 7
  %v93 = vsub.s32 0, %v92
  %v94 = vrot.slane %v89, %v93
  %v112 = vunpack.c.l.b16 %v73
  %v113 = vunpack.c.l.b16 %v74
  %v114 = vunpack.c.l.b16 %v75
  %v115 = vunpack.c.l.b16 %v76
  %v116 = vunpack.c.l.b16 %v77
  %v117 = vunpack.c.l.b16 %v78
  %v118 = vunpack.c.l.b16 %v79
  %v119 = vunpack.c.l.b16 %v80
  %v120 = vunpack.c.l.b16 %v81
  %v121 = vunpack.c.l.b16 %v82
  %v122 = vunpack.c.l.b16 %v83
  %v123 = vunpack.c.l.b16 %v84
  %v124 = vunpack.c.l.b16 %v85
  %v125 = vunpack.c.l.b16 %v86
  %v126 = vunpack.c.l.b16 %v87
  %v127 = vunpack.c.l.b16 %v88
  %v128 = vpack.c.b16 %v113, %v112
  %v129 = vpack.c.b16 %v115, %v114
  %v130 = vpack.c.b16 %v117, %v116
  %v131 = vpack.c.b16 %v119, %v118
  %v132 = vpack.c.b16 %v121, %v120
  %v133 = vpack.c.b16 %v123, %v122
  %v134 = vpack.c.b16 %v125, %v124
  %v135 = vpack.c.b16 %v127, %v126
  %144 = vmatprep.subr.bf16.mxu0 0
  %145 = vmatpush1.bf16.msra.mxu0 %v135
  %146 = vmatprep.subr.bf16.mxu0 0
  %147 = vmatpush1.bf16.msra.mxu0 %v134
  %148 = vmatprep.subr.bf16.mxu0 0
  %149 = vmatpush1.bf16.msra.mxu0 %v133
  %150 = vmatprep.subr.bf16.mxu0 0
  %151 = vmatpush1.bf16.msra.mxu0 %v132
  %152 = vmatprep.subr.bf16.mxu0 0
  %153 = vmatpush1.bf16.msra.mxu0 %v131
  %154 = vmatprep.subr.bf16.mxu0 0
  %155 = vmatpush1.bf16.msra.mxu0 %v130
  %156 = vmatprep.subr.bf16.mxu0 0
  %157 = vmatpush1.bf16.msra.mxu0 %v129
  %158 = vmatprep.subr.bf16.mxu0 0
  %159 = vmatpush1.bf16.msra.mxu0 %v128
  %160 = vmatprep.subr.bf16.mxu0 0
  %161 = vmatpush2.bf16.msra.mxu0 0
  %162 = vmatprep.subr.bf16.mxu0 0
  %163 = vmatpush2.bf16.msra.mxu0 0
  %164 = vmatprep.subr.bf16.mxu0 0
  %165 = vmatpush2.bf16.msra.mxu0 0
  %166 = vmatprep.subr.bf16.mxu0 0
  %167 = vmatpush2.bf16.msra.mxu0 0
  %168 = vmatprep.subr.bf16.mxu0 0
  %169 = vmatpush2.bf16.msra.mxu0 0
  %170 = vmatprep.subr.bf16.mxu0 0
  %171 = vmatpush2.bf16.msra.mxu0 0
  %172 = vmatprep.subr.bf16.mxu0 0
  %173 = vmatpush2.bf16.msra.mxu0 0
  %174 = vmatprep.subr.bf16.mxu0 0
  %175 = vmatpush2.bf16.msra.mxu0 0
  %176 = vmatprep.mubr.bf16.mxu0 0
  %177 = vmatmul.mubr.bf16.gmra.mxu0 %v71
  %v178 = vpop.f32.mrf.mxu0
  %v179 = vadd.f32 %v94, %v178
  %v180 = vpop.f32.mrf.mxu0
  %v181 = vpop.f32.mrf.mxu0
  %v182 = vadd.f32 %v94, %v181
  %v183 = vpop.f32.mrf.mxu0
  %184 = vmatprep.mubr.bf16.mxu0 0
  %185 = vmatmul.mubr.bf16.gmra.mxu0 %v72
  %v186 = vpop.f32.mrf.mxu0
  %v187 = vadd.f32 %v94, %v186
  %v188 = vpop.f32.mrf.mxu0
  %v189 = vpop.f32.mrf.mxu0
  %v190 = vadd.f32 %v94, %v189
  %v191 = vpop.f32.mrf.mxu0
  %192 = vdwg.mxu0
  %v193 = vld [vmem:[%s4] sm:$0xf]
  %v194 = vld [vmem:[%s4 + $0x4] sm:$0xf]
  %v195 = vld [vmem:[%s4 + $0x8] sm:$0xf]
  %v196 = vld [vmem:[%s4 + $0xc] sm:$0xf]
  %v197 = vld [vmem:[%s4 + $0x10] sm:$0xf]
  %v198 = vld [vmem:[%s4 + $0x14] sm:$0xf]
  %v199 = vld [vmem:[%s4 + $0x18] sm:$0xf]
  %v200 = vld [vmem:[%s4 + $0x1c] sm:$0xf]
  %v201 = vld [vmem:[%s4 + $0x20] sm:$0xf]
  %v202 = vld [vmem:[%s4 + $0x24] sm:$0xf]
  %v203 = vld [vmem:[%s4 + $0x28] sm:$0xf]
  %v204 = vld [vmem:[%s4 + $0x2c] sm:$0xf]
  %v205 = vld [vmem:[%s4 + $0x30] sm:$0xf]
  %v206 = vld [vmem:[%s4 + $0x34] sm:$0xf]
  %v207 = vld [vmem:[%s4 + $0x38] sm:$0xf]
  %v208 = vld [vmem:[%s4 + $0x3c] sm:$0xf]
  %v209 = vld [vmem:[%s7] sm:$0x1]
  %v211 = vlaneseq
  %v212 = vshrl.u32 %v211, 7
  %v213 = vsub.s32 0, %v212
  %v214 = vrot.slane %v209, %v213
  %v232 = vunpack.c.l.b16 %v193
  %v233 = vunpack.c.l.b16 %v194
  %v234 = vunpack.c.l.b16 %v195
  %v235 = vunpack.c.l.b16 %v196
  %v236 = vunpack.c.l.b16 %v197
  %v237 = vunpack.c.l.b16 %v198
  %v238 = vunpack.c.l.b16 %v199
  %v239 = vunpack.c.l.b16 %v200
  %v240 = vunpack.c.l.b16 %v201
  %v241 = vunpack.c.l.b16 %v202
  %v242 = vunpack.c.l.b16 %v203
  %v243 = vunpack.c.l.b16 %v204
  %v244 = vunpack.c.l.b16 %v205
  %v245 = vunpack.c.l.b16 %v206
  %v246 = vunpack.c.l.b16 %v207
  %v247 = vunpack.c.l.b16 %v208
  %v248 = vpack.c.b16 %v233, %v232
  %v249 = vpack.c.b16 %v235, %v234
  %v250 = vpack.c.b16 %v237, %v236
  %v251 = vpack.c.b16 %v239, %v238
  %v252 = vpack.c.b16 %v241, %v240
  %v253 = vpack.c.b16 %v243, %v242
  %v254 = vpack.c.b16 %v245, %v244
  %v255 = vpack.c.b16 %v247, %v246
  %264 = vmatprep.subr.bf16.mxu0 0
  %265 = vmatpush1.bf16.msra.mxu0 %v255
  %266 = vmatprep.subr.bf16.mxu0 0
  %267 = vmatpush1.bf16.msra.mxu0 %v254
  %268 = vmatprep.subr.bf16.mxu0 0
  %269 = vmatpush1.bf16.msra.mxu0 %v253
  %270 = vmatprep.subr.bf16.mxu0 0
  %271 = vmatpush1.bf16.msra.mxu0 %v252
  %272 = vmatprep.subr.bf16.mxu0 0
  %273 = vmatpush1.bf16.msra.mxu0 %v251
  %274 = vmatprep.subr.bf16.mxu0 0
  %275 = vmatpush1.bf16.msra.mxu0 %v250
  %276 = vmatprep.subr.bf16.mxu0 0
  %277 = vmatpush1.bf16.msra.mxu0 %v249
  %278 = vmatprep.subr.bf16.mxu0 0
  %279 = vmatpush1.bf16.msra.mxu0 %v248
  %280 = vmatprep.subr.bf16.mxu0 0
  %281 = vmatpush2.bf16.msra.mxu0 0
  %282 = vmatprep.subr.bf16.mxu0 0
  %283 = vmatpush2.bf16.msra.mxu0 0
  %284 = vmatprep.subr.bf16.mxu0 0
  %285 = vmatpush2.bf16.msra.mxu0 0
  %286 = vmatprep.subr.bf16.mxu0 0
  %287 = vmatpush2.bf16.msra.mxu0 0
  %288 = vmatprep.subr.bf16.mxu0 0
  %289 = vmatpush2.bf16.msra.mxu0 0
  %290 = vmatprep.subr.bf16.mxu0 0
  %291 = vmatpush2.bf16.msra.mxu0 0
  %292 = vmatprep.subr.bf16.mxu0 0
  %293 = vmatpush2.bf16.msra.mxu0 0
  %294 = vmatprep.subr.bf16.mxu0 0
  %295 = vmatpush2.bf16.msra.mxu0 0
  %296 = vmatprep.mubr.bf16.mxu0 0
  %297 = vmatmul.mubr.bf16.gmra.mxu0 %v71
  %v298 = vpop.f32.mrf.mxu0
  %v299 = vadd.f32 %v214, %v298
  %v300 = vpop.f32.mrf.mxu0
  %v301 = vpop.f32.mrf.mxu0
  %v302 = vadd.f32 %v214, %v301
  %v303 = vpop.f32.mrf.mxu0
  %304 = vmatprep.mubr.bf16.mxu0 0
  %305 = vmatmul.mubr.bf16.gmra.mxu0 %v72
  %v306 = vpop.f32.mrf.mxu0
  %v307 = vadd.f32 %v214, %v306
  %v308 = vpop.f32.mrf.mxu0
  %v309 = vpop.f32.mrf.mxu0
  %v310 = vadd.f32 %v214, %v309
  %v311 = vpop.f32.mrf.mxu0
  %312 = vdwg.mxu0
  %v313 = vld [vmem:[%s5] sm:$0xf]
  %v314 = vld [vmem:[%s5 + $0x4] sm:$0xf]
  %v315 = vld [vmem:[%s5 + $0x8] sm:$0xf]
  %v316 = vld [vmem:[%s5 + $0xc] sm:$0xf]
  %v317 = vld [vmem:[%s5 + $0x10] sm:$0xf]
  %v318 = vld [vmem:[%s5 + $0x14] sm:$0xf]
  %v319 = vld [vmem:[%s5 + $0x18] sm:$0xf]
  %v320 = vld [vmem:[%s5 + $0x1c] sm:$0xf]
  %v321 = vld [vmem:[%s5 + $0x20] sm:$0xf]
  %v322 = vld [vmem:[%s5 + $0x24] sm:$0xf]
  %v323 = vld [vmem:[%s5 + $0x28] sm:$0xf]
  %v324 = vld [vmem:[%s5 + $0x2c] sm:$0xf]
  %v325 = vld [vmem:[%s5 + $0x30] sm:$0xf]
  %v326 = vld [vmem:[%s5 + $0x34] sm:$0xf]
  %v327 = vld [vmem:[%s5 + $0x38] sm:$0xf]
  %v328 = vld [vmem:[%s5 + $0x3c] sm:$0xf]
  %v329 = vld [vmem:[%s8] sm:$0x1]
  %v331 = vlaneseq
  %v332 = vshrl.u32 %v331, 7
  %v333 = vsub.s32 0, %v332
  %v334 = vrot.slane %v329, %v333
  %v352 = vunpack.c.l.b16 %v313
  %v353 = vunpack.c.l.b16 %v314
  %v354 = vunpack.c.l.b16 %v315
  %v355 = vunpack.c.l.b16 %v316
  %v356 = vunpack.c.l.b16 %v317
  %v357 = vunpack.c.l.b16 %v318
  %v358 = vunpack.c.l.b16 %v319
  %v359 = vunpack.c.l.b16 %v320
  %v360 = vunpack.c.l.b16 %v321
  %v361 = vunpack.c.l.b16 %v322
  %v362 = vunpack.c.l.b16 %v323
  %v363 = vunpack.c.l.b16 %v324
  %v364 = vunpack.c.l.b16 %v325
  %v365 = vunpack.c.l.b16 %v326
  %v366 = vunpack.c.l.b16 %v327
  %v367 = vunpack.c.l.b16 %v328
  %v368 = vpack.c.b16 %v353, %v352
  %v369 = vpack.c.b16 %v355, %v354
  %v370 = vpack.c.b16 %v357, %v356
  %v371 = vpack.c.b16 %v359, %v358
  %v372 = vpack.c.b16 %v361, %v360
  %v373 = vpack.c.b16 %v363, %v362
  %v374 = vpack.c.b16 %v365, %v364
  %v375 = vpack.c.b16 %v367, %v366
  %384 = vmatprep.subr.bf16.mxu0 0
  %385 = vmatpush1.bf16.msra.mxu0 %v375
  %386 = vmatprep.subr.bf16.mxu0 0
  %387 = vmatpush1.bf16.msra.mxu0 %v374
  %388 = vmatprep.subr.bf16.mxu0 0
  %389 = vmatpush1.bf16.msra.mxu0 %v373
  %390 = vmatprep.subr.bf16.mxu0 0
  %391 = vmatpush1.bf16.msra.mxu0 %v372
  %392 = vmatprep.subr.bf16.mxu0 0
  %393 = vmatpush1.bf16.msra.mxu0 %v371
  %394 = vmatprep.subr.bf16.mxu0 0
  %395 = vmatpush1.bf16.msra.mxu0 %v370
  %396 = vmatprep.subr.bf16.mxu0 0
  %397 = vmatpush1.bf16.msra.mxu0 %v369
  %398 = vmatprep.subr.bf16.mxu0 0
  %399 = vmatpush1.bf16.msra.mxu0 %v368
  %400 = vmatprep.subr.bf16.mxu0 0
  %401 = vmatpush2.bf16.msra.mxu0 0
  %402 = vmatprep.subr.bf16.mxu0 0
  %403 = vmatpush2.bf16.msra.mxu0 0
  %404 = vmatprep.subr.bf16.mxu0 0
  %405 = vmatpush2.bf16.msra.mxu0 0
  %406 = vmatprep.subr.bf16.mxu0 0
  %407 = vmatpush2.bf16.msra.mxu0 0
  %408 = vmatprep.subr.bf16.mxu0 0
  %409 = vmatpush2.bf16.msra.mxu0 0
  %410 = vmatprep.subr.bf16.mxu0 0
  %411 = vmatpush2.bf16.msra.mxu0 0
  %412 = vmatprep.subr.bf16.mxu0 0
  %413 = vmatpush2.bf16.msra.mxu0 0
  %414 = vmatprep.subr.bf16.mxu0 0
  %415 = vmatpush2.bf16.msra.mxu0 0
  %416 = vmatprep.mubr.bf16.mxu0 0
  %417 = vmatmul.mubr.bf16.gmra.mxu0 %v71
  %v418 = vpop.f32.mrf.mxu0
  %v419 = vadd.f32 %v334, %v418
  %v420 = vpop.f32.mrf.mxu0
  %v421 = vpop.f32.mrf.mxu0
  %v422 = vadd.f32 %v334, %v421
  %v423 = vpop.f32.mrf.mxu0
  %424 = vmatprep.mubr.bf16.mxu0 0
  %425 = vmatmul.mubr.bf16.gmra.mxu0 %v72
  %v426 = vpop.f32.mrf.mxu0
  %v427 = vadd.f32 %v334, %v426
  %v428 = vpop.f32.mrf.mxu0
  %v429 = vpop.f32.mrf.mxu0
  %v430 = vadd.f32 %v334, %v429
  %v431 = vpop.f32.mrf.mxu0
  %432 = vdwg.mxu0
  %v433 = vpack.c.bf16 %v182, %v179
  %v434 = vpack.c.bf16 %v190, %v187
  %v435 = vpack.c.bf16 %v302, %v299
  %v436 = vpack.c.bf16 %v310, %v307
  %v437 = vpack.c.bf16 %v422, %v419
  %v438 = vpack.c.bf16 %v430, %v427
  %vm439 = vcmask 130048
  %v441 = vsel %vm439, %v433, 0
  %v444 = vsel %vm439, %v435, 0
  %446 = vmatprep.subr.bf16.mxu0 0
  %447 = vmatpush1.bf16.xpose.msra.mxu0 0
  %448 = vmatprep.subr.bf16.mxu0 0
  %449 = vmatpush1.bf16.xpose.msra.mxu0 0
  %450 = vmatprep.subr.bf16.mxu0 0
  %451 = vmatpush1.bf16.xpose.msra.mxu0 0
  %452 = vmatprep.subr.bf16.mxu0 0
  %453 = vmatpush1.bf16.xpose.msra.mxu0 0
  %454 = vmatprep.subr.bf16.mxu0 0
  %455 = vmatpush1.bf16.xpose.msra.mxu0 0
  %456 = vmatprep.subr.bf16.mxu0 0
  %457 = vmatpush1.bf16.xpose.msra.mxu0 0
  %458 = vmatprep.subr.bf16.mxu0 0
  %459 = vmatpush1.bf16.xpose.msra.mxu0 0
  %460 = vmatprep.subr.bf16.mxu0 0
  %461 = vmatpush1.bf16.xpose.msra.mxu0 %v444
  %462 = vmatprep.subr.bf16.mxu0 0
  %463 = vmatpush2.bf16.xpose.msra.mxu0 0
  %464 = vmatprep.subr.bf16.mxu0 0
  %465 = vmatpush2.bf16.xpose.msra.mxu0 0
  %466 = vmatprep.subr.bf16.mxu0 0
  %467 = vmatpush2.bf16.xpose.msra.mxu0 0
  %468 = vmatprep.subr.bf16.mxu0 0
  %469 = vmatpush2.bf16.xpose.msra.mxu0 0
  %470 = vmatprep.subr.bf16.mxu0 0
  %471 = vmatpush2.bf16.xpose.msra.mxu0 0
  %472 = vmatprep.subr.bf16.mxu0 0
  %473 = vmatpush2.bf16.xpose.msra.mxu0 0
  %474 = vmatprep.subr.bf16.mxu0 0
  %475 = vmatpush2.bf16.xpose.msra.mxu0 0
  %476 = vmatprep.subr.bf16.mxu0 0
  %477 = vmatpush2.bf16.xpose.msra.mxu0 0
  %478 = vmatprep.mubr.bf16.mxu0 0
  %479 = vmatmul.mubr.bf16.gmra.mxu0 %v441
  %v480 = vpop.f32.mrf.mxu0
  %v481 = vadd.f32 0.0, %v480
  %v482 = vpop.f32.mrf.mxu0
  %v483 = vpop.f32.mrf.mxu0
  %v484 = vadd.f32 0.0, %v483
  %v485 = vpop.f32.mrf.mxu0
  %486 = vdwg.mxu0
  %v488 = vsel %vm439, %v434, 0
  %v491 = vsel %vm439, %v436, 0
  %493 = vmatprep.subr.bf16.mxu0 0
  %494 = vmatpush1.bf16.xpose.msra.mxu0 0
  %495 = vmatprep.subr.bf16.mxu0 0
  %496 = vmatpush1.bf16.xpose.msra.mxu0 0
  %497 = vmatprep.subr.bf16.mxu0 0
  %498 = vmatpush1.bf16.xpose.msra.mxu0 0
  %499 = vmatprep.subr.bf16.mxu0 0
  %500 = vmatpush1.bf16.xpose.msra.mxu0 0
  %501 = vmatprep.subr.bf16.mxu0 0
  %502 = vmatpush1.bf16.xpose.msra.mxu0 0
  %503 = vmatprep.subr.bf16.mxu0 0
  %504 = vmatpush1.bf16.xpose.msra.mxu0 0
  %505 = vmatprep.subr.bf16.mxu0 0
  %506 = vmatpush1.bf16.xpose.msra.mxu0 0
  %507 = vmatprep.subr.bf16.mxu0 0
  %508 = vmatpush1.bf16.xpose.msra.mxu0 %v491
  %509 = vmatprep.subr.bf16.mxu0 0
  %510 = vmatpush2.bf16.xpose.msra.mxu0 0
  %511 = vmatprep.subr.bf16.mxu0 0
  %512 = vmatpush2.bf16.xpose.msra.mxu0 0
  %513 = vmatprep.subr.bf16.mxu0 0
  %514 = vmatpush2.bf16.xpose.msra.mxu0 0
  %515 = vmatprep.subr.bf16.mxu0 0
  %516 = vmatpush2.bf16.xpose.msra.mxu0 0
  %517 = vmatprep.subr.bf16.mxu0 0
  %518 = vmatpush2.bf16.xpose.msra.mxu0 0
  %519 = vmatprep.subr.bf16.mxu0 0
  %520 = vmatpush2.bf16.xpose.msra.mxu0 0
  %521 = vmatprep.subr.bf16.mxu0 0
  %522 = vmatpush2.bf16.xpose.msra.mxu0 0
  %523 = vmatprep.subr.bf16.mxu0 0
  %524 = vmatpush2.bf16.xpose.msra.mxu0 0
  %525 = vmatprep.mubr.bf16.mxu0 0
  %526 = vmatmul.mubr.bf16.gmra.mxu0 %v488
  %v527 = vpop.f32.mrf.mxu0
  %v528 = vadd.f32 0.0, %v527
  %v529 = vpop.f32.mrf.mxu0
  %v530 = vpop.f32.mrf.mxu0
  %v531 = vadd.f32 0.0, %v530
  %v532 = vpop.f32.mrf.mxu0
  %533 = vdwg.mxu0
  %v534 = vsel %vm439, %v481, -inf
  %535 = vmax.xlane.f32.xlu0 %v534
  %v536 = vpop.xlane.xlu0 %535
  %v537 = vsel %vm439, %v484, -inf
  %538 = vmax.xlane.f32.xlu0 %v537
  %v539 = vpop.xlane.xlu0 %538
  %v540 = vsel %vm439, %v528, -inf
  %541 = vmax.xlane.f32.xlu0 %v540
  %v542 = vpop.xlane.xlu0 %541
  %v543 = vsel %vm439, %v531, -inf
  %544 = vmax.xlane.f32.xlu0 %v543
  %v545 = vpop.xlane.xlu0 %544
  %v546 = vsub.f32 %v481, %v536
  %v547 = vsub.f32 %v484, %v539
  %v548 = vsub.f32 %v528, %v542
  %v549 = vsub.f32 %v531, %v545
  %v550 = vmul.f32 %v546, 1.442695
  %v551 = vpow.pop %v550
  %v552 = vmul.f32 %v547, 1.442695
  %v553 = vpow.pop %v552
  %v554 = vmul.f32 %v548, 1.442695
  %v555 = vpow.pop %v554
  %v556 = vmul.f32 %v549, 1.442695
  %v557 = vpow.pop %v556
  %v558 = vsel %vm439, %v551, 0.0
  %559 = vadd.xlane.f32.xlu0 %v558
  %v560 = vpop.xlane.xlu0 %559
  %v561 = vsel %vm439, %v553, 0.0
  %562 = vadd.xlane.f32.xlu0 %v561
  %v563 = vpop.xlane.xlu0 %562
  %v564 = vsel %vm439, %v555, 0.0
  %565 = vadd.xlane.f32.xlu0 %v564
  %v566 = vpop.xlane.xlu0 %565
  %v567 = vsel %vm439, %v557, 0.0
  %568 = vadd.xlane.f32.xlu0 %v567
  %v569 = vpop.xlane.xlu0 %568
  %v570 = vrcp.pop %v560
  %v571 = vrcp.pop %v563
  %v572 = vrcp.pop %v566
  %v573 = vrcp.pop %v569
  %v574 = vmul.f32 %v551, %v570
  %v575 = vmul.f32 %v553, %v571
  %v576 = vmul.f32 %v555, %v572
  %v577 = vmul.f32 %v557, %v573
  %v578 = vpack.c.bf16 %v575, %v574
  %v579 = vpack.c.bf16 %v577, %v576
  %v581 = vsel %vm439, %v578, 0
  %583 = vmatprep.subr.bf16.mxu0 0
  %584 = vmatpush1.bf16.msra.mxu0 0
  %585 = vmatprep.subr.bf16.mxu0 0
  %586 = vmatpush1.bf16.msra.mxu0 0
  %587 = vmatprep.subr.bf16.mxu0 0
  %588 = vmatpush1.bf16.msra.mxu0 0
  %589 = vmatprep.subr.bf16.mxu0 0
  %590 = vmatpush1.bf16.msra.mxu0 0
  %591 = vmatprep.subr.bf16.mxu0 0
  %592 = vmatpush1.bf16.msra.mxu0 0
  %593 = vmatprep.subr.bf16.mxu0 0
  %594 = vmatpush1.bf16.msra.mxu0 0
  %595 = vmatprep.subr.bf16.mxu0 0
  %596 = vmatpush1.bf16.msra.mxu0 0
  %597 = vmatprep.subr.bf16.mxu0 0
  %598 = vmatpush1.bf16.msra.mxu0 %v437
  %599 = vmatprep.subr.bf16.mxu0 0
  %600 = vmatpush2.bf16.msra.mxu0 0
  %601 = vmatprep.subr.bf16.mxu0 0
  %602 = vmatpush2.bf16.msra.mxu0 0
  %603 = vmatprep.subr.bf16.mxu0 0
  %604 = vmatpush2.bf16.msra.mxu0 0
  %605 = vmatprep.subr.bf16.mxu0 0
  %606 = vmatpush2.bf16.msra.mxu0 0
  %607 = vmatprep.subr.bf16.mxu0 0
  %608 = vmatpush2.bf16.msra.mxu0 0
  %609 = vmatprep.subr.bf16.mxu0 0
  %610 = vmatpush2.bf16.msra.mxu0 0
  %611 = vmatprep.subr.bf16.mxu0 0
  %612 = vmatpush2.bf16.msra.mxu0 0
  %613 = vmatprep.subr.bf16.mxu0 0
  %614 = vmatpush2.bf16.msra.mxu0 0
  %615 = vmatprep.mubr.bf16.mxu0 0
  %616 = vmatmul.mubr.bf16.gmra.mxu0 %v581
  %v617 = vpop.f32.mrf.mxu0
  %v618 = vadd.f32 0.0, %v617
  %v619 = vpop.f32.mrf.mxu0
  %v620 = vpop.f32.mrf.mxu0
  %v621 = vadd.f32 0.0, %v620
  %v622 = vpop.f32.mrf.mxu0
  %623 = vdwg.mxu0
  %v625 = vsel %vm439, %v579, 0
  %627 = vmatprep.subr.bf16.mxu0 0
  %628 = vmatpush1.bf16.msra.mxu0 0
  %629 = vmatprep.subr.bf16.mxu0 0
  %630 = vmatpush1.bf16.msra.mxu0 0
  %631 = vmatprep.subr.bf16.mxu0 0
  %632 = vmatpush1.bf16.msra.mxu0 0
  %633 = vmatprep.subr.bf16.mxu0 0
  %634 = vmatpush1.bf16.msra.mxu0 0
  %635 = vmatprep.subr.bf16.mxu0 0
  %636 = vmatpush1.bf16.msra.mxu0 0
  %637 = vmatprep.subr.bf16.mxu0 0
  %638 = vmatpush1.bf16.msra.mxu0 0
  %639 = vmatprep.subr.bf16.mxu0 0
  %640 = vmatpush1.bf16.msra.mxu0 0
  %641 = vmatprep.subr.bf16.mxu0 0
  %642 = vmatpush1.bf16.msra.mxu0 %v438
  %643 = vmatprep.subr.bf16.mxu0 0
  %644 = vmatpush2.bf16.msra.mxu0 0
  %645 = vmatprep.subr.bf16.mxu0 0
  %646 = vmatpush2.bf16.msra.mxu0 0
  %647 = vmatprep.subr.bf16.mxu0 0
  %648 = vmatpush2.bf16.msra.mxu0 0
  %649 = vmatprep.subr.bf16.mxu0 0
  %650 = vmatpush2.bf16.msra.mxu0 0
  %651 = vmatprep.subr.bf16.mxu0 0
  %652 = vmatpush2.bf16.msra.mxu0 0
  %653 = vmatprep.subr.bf16.mxu0 0
  %654 = vmatpush2.bf16.msra.mxu0 0
  %655 = vmatprep.subr.bf16.mxu0 0
  %656 = vmatpush2.bf16.msra.mxu0 0
  %657 = vmatprep.subr.bf16.mxu0 0
  %658 = vmatpush2.bf16.msra.mxu0 0
  %659 = vmatprep.mubr.bf16.mxu0 0
  %660 = vmatmul.mubr.bf16.gmra.mxu0 %v625
  %v661 = vpop.f32.mrf.mxu0
  %v662 = vadd.f32 0.0, %v661
  %v663 = vpop.f32.mrf.mxu0
  %v664 = vpop.f32.mrf.mxu0
  %v665 = vadd.f32 0.0, %v664
  %v666 = vpop.f32.mrf.mxu0
  %667 = vdwg.mxu0
  %669 = vrot.lane.b32.xlu0 %v433, 112
  %v670 = vpop.permute.xlu0 %669
  %672 = vrot.lane.b32.xlu0 %v435, 112
  %v673 = vpop.permute.xlu0 %672
  %v675 = vsel %vm439, %v670, 0
  %v678 = vsel %vm439, %v673, 0
  %680 = vmatprep.subr.bf16.mxu0 0
  %681 = vmatpush1.bf16.xpose.msra.mxu0 0
  %682 = vmatprep.subr.bf16.mxu0 0
  %683 = vmatpush1.bf16.xpose.msra.mxu0 0
  %684 = vmatprep.subr.bf16.mxu0 0
  %685 = vmatpush1.bf16.xpose.msra.mxu0 0
  %686 = vmatprep.subr.bf16.mxu0 0
  %687 = vmatpush1.bf16.xpose.msra.mxu0 0
  %688 = vmatprep.subr.bf16.mxu0 0
  %689 = vmatpush1.bf16.xpose.msra.mxu0 0
  %690 = vmatprep.subr.bf16.mxu0 0
  %691 = vmatpush1.bf16.xpose.msra.mxu0 0
  %692 = vmatprep.subr.bf16.mxu0 0
  %693 = vmatpush1.bf16.xpose.msra.mxu0 0
  %694 = vmatprep.subr.bf16.mxu0 0
  %695 = vmatpush1.bf16.xpose.msra.mxu0 %v678
  %696 = vmatprep.subr.bf16.mxu0 0
  %697 = vmatpush2.bf16.xpose.msra.mxu0 0
  %698 = vmatprep.subr.bf16.mxu0 0
  %699 = vmatpush2.bf16.xpose.msra.mxu0 0
  %700 = vmatprep.subr.bf16.mxu0 0
  %701 = vmatpush2.bf16.xpose.msra.mxu0 0
  %702 = vmatprep.subr.bf16.mxu0 0
  %703 = vmatpush2.bf16.xpose.msra.mxu0 0
  %704 = vmatprep.subr.bf16.mxu0 0
  %705 = vmatpush2.bf16.xpose.msra.mxu0 0
  %706 = vmatprep.subr.bf16.mxu0 0
  %707 = vmatpush2.bf16.xpose.msra.mxu0 0
  %708 = vmatprep.subr.bf16.mxu0 0
  %709 = vmatpush2.bf16.xpose.msra.mxu0 0
  %710 = vmatprep.subr.bf16.mxu0 0
  %711 = vmatpush2.bf16.xpose.msra.mxu0 0
  %712 = vmatprep.mubr.bf16.mxu0 0
  %713 = vmatmul.mubr.bf16.gmra.mxu0 %v675
  %v714 = vpop.f32.mrf.mxu0
  %v715 = vadd.f32 0.0, %v714
  %v716 = vpop.f32.mrf.mxu0
  %v717 = vpop.f32.mrf.mxu0
  %v718 = vadd.f32 0.0, %v717
  %v719 = vpop.f32.mrf.mxu0
  %720 = vdwg.mxu0
  %722 = vrot.lane.b32.xlu0 %v434, 112
  %v723 = vpop.permute.xlu0 %722
  %725 = vrot.lane.b32.xlu0 %v436, 112
  %v726 = vpop.permute.xlu0 %725
  %v728 = vsel %vm439, %v723, 0
  %v731 = vsel %vm439, %v726, 0
  %733 = vmatprep.subr.bf16.mxu0 0
  %734 = vmatpush1.bf16.xpose.msra.mxu0 0
  %735 = vmatprep.subr.bf16.mxu0 0
  %736 = vmatpush1.bf16.xpose.msra.mxu0 0
  %737 = vmatprep.subr.bf16.mxu0 0
  %738 = vmatpush1.bf16.xpose.msra.mxu0 0
  %739 = vmatprep.subr.bf16.mxu0 0
  %740 = vmatpush1.bf16.xpose.msra.mxu0 0
  %741 = vmatprep.subr.bf16.mxu0 0
  %742 = vmatpush1.bf16.xpose.msra.mxu0 0
  %743 = vmatprep.subr.bf16.mxu0 0
  %744 = vmatpush1.bf16.xpose.msra.mxu0 0
  %745 = vmatprep.subr.bf16.mxu0 0
  %746 = vmatpush1.bf16.xpose.msra.mxu0 0
  %747 = vmatprep.subr.bf16.mxu0 0
  %748 = vmatpush1.bf16.xpose.msra.mxu0 %v731
  %749 = vmatprep.subr.bf16.mxu0 0
  %750 = vmatpush2.bf16.xpose.msra.mxu0 0
  %751 = vmatprep.subr.bf16.mxu0 0
  %752 = vmatpush2.bf16.xpose.msra.mxu0 0
  %753 = vmatprep.subr.bf16.mxu0 0
  %754 = vmatpush2.bf16.xpose.msra.mxu0 0
  %755 = vmatprep.subr.bf16.mxu0 0
  %756 = vmatpush2.bf16.xpose.msra.mxu0 0
  %757 = vmatprep.subr.bf16.mxu0 0
  %758 = vmatpush2.bf16.xpose.msra.mxu0 0
  %759 = vmatprep.subr.bf16.mxu0 0
  %760 = vmatpush2.bf16.xpose.msra.mxu0 0
  %761 = vmatprep.subr.bf16.mxu0 0
  %762 = vmatpush2.bf16.xpose.msra.mxu0 0
  %763 = vmatprep.subr.bf16.mxu0 0
  %764 = vmatpush2.bf16.xpose.msra.mxu0 0
  %765 = vmatprep.mubr.bf16.mxu0 0
  %766 = vmatmul.mubr.bf16.gmra.mxu0 %v728
  %v767 = vpop.f32.mrf.mxu0
  %v768 = vadd.f32 0.0, %v767
  %v769 = vpop.f32.mrf.mxu0
  %v770 = vpop.f32.mrf.mxu0
  %v771 = vadd.f32 0.0, %v770
  %v772 = vpop.f32.mrf.mxu0
  %773 = vdwg.mxu0
  %v774 = vsel %vm439, %v715, -inf
  %775 = vmax.xlane.f32.xlu0 %v774
  %v776 = vpop.xlane.xlu0 %775
  %v777 = vsel %vm439, %v718, -inf
  %778 = vmax.xlane.f32.xlu0 %v777
  %v779 = vpop.xlane.xlu0 %778
  %v780 = vsel %vm439, %v768, -inf
  %781 = vmax.xlane.f32.xlu0 %v780
  %v782 = vpop.xlane.xlu0 %781
  %v783 = vsel %vm439, %v771, -inf
  %784 = vmax.xlane.f32.xlu0 %v783
  %v785 = vpop.xlane.xlu0 %784
  %v786 = vsub.f32 %v715, %v776
  %v787 = vsub.f32 %v718, %v779
  %v788 = vsub.f32 %v768, %v782
  %v789 = vsub.f32 %v771, %v785
  %v790 = vmul.f32 %v786, 1.442695
  %v791 = vpow.pop %v790
  %v792 = vmul.f32 %v787, 1.442695
  %v793 = vpow.pop %v792
  %v794 = vmul.f32 %v788, 1.442695
  %v795 = vpow.pop %v794
  %v796 = vmul.f32 %v789, 1.442695
  %v797 = vpow.pop %v796
  %v798 = vsel %vm439, %v791, 0.0
  %799 = vadd.xlane.f32.xlu0 %v798
  %v800 = vpop.xlane.xlu0 %799
  %v801 = vsel %vm439, %v793, 0.0
  %802 = vadd.xlane.f32.xlu0 %v801
  %v803 = vpop.xlane.xlu0 %802
  %v804 = vsel %vm439, %v795, 0.0
  %805 = vadd.xlane.f32.xlu0 %v804
  %v806 = vpop.xlane.xlu0 %805
  %v807 = vsel %vm439, %v797, 0.0
  %808 = vadd.xlane.f32.xlu0 %v807
  %v809 = vpop.xlane.xlu0 %808
  %v810 = vrcp.pop %v800
  %v811 = vrcp.pop %v803
  %v812 = vrcp.pop %v806
  %v813 = vrcp.pop %v809
  %v814 = vmul.f32 %v791, %v810
  %v815 = vmul.f32 %v793, %v811
  %v816 = vmul.f32 %v795, %v812
  %v817 = vmul.f32 %v797, %v813
  %v818 = vpack.c.bf16 %v815, %v814
  %v819 = vpack.c.bf16 %v817, %v816
  %821 = vrot.lane.b32.xlu0 %v437, 112
  %v822 = vpop.permute.xlu0 %821
  %v825 = vsel %vm439, %v818, 0
  %827 = vmatprep.subr.bf16.mxu0 0
  %828 = vmatpush1.bf16.msra.mxu0 0
  %829 = vmatprep.subr.bf16.mxu0 0
  %830 = vmatpush1.bf16.msra.mxu0 0
  %831 = vmatprep.subr.bf16.mxu0 0
  %832 = vmatpush1.bf16.msra.mxu0 0
  %833 = vmatprep.subr.bf16.mxu0 0
  %834 = vmatpush1.bf16.msra.mxu0 0
  %835 = vmatprep.subr.bf16.mxu0 0
  %836 = vmatpush1.bf16.msra.mxu0 0
  %837 = vmatprep.subr.bf16.mxu0 0
  %838 = vmatpush1.bf16.msra.mxu0 0
  %839 = vmatprep.subr.bf16.mxu0 0
  %840 = vmatpush1.bf16.msra.mxu0 0
  %841 = vmatprep.subr.bf16.mxu0 0
  %842 = vmatpush1.bf16.msra.mxu0 %v822
  %843 = vmatprep.subr.bf16.mxu0 0
  %844 = vmatpush2.bf16.msra.mxu0 0
  %845 = vmatprep.subr.bf16.mxu0 0
  %846 = vmatpush2.bf16.msra.mxu0 0
  %847 = vmatprep.subr.bf16.mxu0 0
  %848 = vmatpush2.bf16.msra.mxu0 0
  %849 = vmatprep.subr.bf16.mxu0 0
  %850 = vmatpush2.bf16.msra.mxu0 0
  %851 = vmatprep.subr.bf16.mxu0 0
  %852 = vmatpush2.bf16.msra.mxu0 0
  %853 = vmatprep.subr.bf16.mxu0 0
  %854 = vmatpush2.bf16.msra.mxu0 0
  %855 = vmatprep.subr.bf16.mxu0 0
  %856 = vmatpush2.bf16.msra.mxu0 0
  %857 = vmatprep.subr.bf16.mxu0 0
  %858 = vmatpush2.bf16.msra.mxu0 0
  %859 = vmatprep.mubr.bf16.mxu0 0
  %860 = vmatmul.mubr.bf16.gmra.mxu0 %v825
  %v861 = vpop.f32.mrf.mxu0
  %v862 = vadd.f32 0.0, %v861
  %v863 = vpop.f32.mrf.mxu0
  %v864 = vpop.f32.mrf.mxu0
  %v865 = vadd.f32 0.0, %v864
  %v866 = vpop.f32.mrf.mxu0
  %867 = vdwg.mxu0
  %869 = vrot.lane.b32.xlu0 %v438, 112
  %v870 = vpop.permute.xlu0 %869
  %v873 = vsel %vm439, %v819, 0
  %875 = vmatprep.subr.bf16.mxu0 0
  %876 = vmatpush1.bf16.msra.mxu0 0
  %877 = vmatprep.subr.bf16.mxu0 0
  %878 = vmatpush1.bf16.msra.mxu0 0
  %879 = vmatprep.subr.bf16.mxu0 0
  %880 = vmatpush1.bf16.msra.mxu0 0
  %881 = vmatprep.subr.bf16.mxu0 0
  %882 = vmatpush1.bf16.msra.mxu0 0
  %883 = vmatprep.subr.bf16.mxu0 0
  %884 = vmatpush1.bf16.msra.mxu0 0
  %885 = vmatprep.subr.bf16.mxu0 0
  %886 = vmatpush1.bf16.msra.mxu0 0
  %887 = vmatprep.subr.bf16.mxu0 0
  %888 = vmatpush1.bf16.msra.mxu0 0
  %889 = vmatprep.subr.bf16.mxu0 0
  %890 = vmatpush1.bf16.msra.mxu0 %v870
  %891 = vmatprep.subr.bf16.mxu0 0
  %892 = vmatpush2.bf16.msra.mxu0 0
  %893 = vmatprep.subr.bf16.mxu0 0
  %894 = vmatpush2.bf16.msra.mxu0 0
  %895 = vmatprep.subr.bf16.mxu0 0
  %896 = vmatpush2.bf16.msra.mxu0 0
  %897 = vmatprep.subr.bf16.mxu0 0
  %898 = vmatpush2.bf16.msra.mxu0 0
  %899 = vmatprep.subr.bf16.mxu0 0
  %900 = vmatpush2.bf16.msra.mxu0 0
  %901 = vmatprep.subr.bf16.mxu0 0
  %902 = vmatpush2.bf16.msra.mxu0 0
  %903 = vmatprep.subr.bf16.mxu0 0
  %904 = vmatpush2.bf16.msra.mxu0 0
  %905 = vmatprep.subr.bf16.mxu0 0
  %906 = vmatpush2.bf16.msra.mxu0 0
  %907 = vmatprep.mubr.bf16.mxu0 0
  %908 = vmatmul.mubr.bf16.gmra.mxu0 %v873
  %v909 = vpop.f32.mrf.mxu0
  %v910 = vadd.f32 0.0, %v909
  %v911 = vpop.f32.mrf.mxu0
  %v912 = vpop.f32.mrf.mxu0
  %v913 = vadd.f32 0.0, %v912
  %v914 = vpop.f32.mrf.mxu0
  %915 = vdwg.mxu0
  %916 = vrot.lane.b32.xlu0 %v433, 96
  %v917 = vpop.permute.xlu0 %916
  %918 = vrot.lane.b32.xlu0 %v435, 96
  %v919 = vpop.permute.xlu0 %918
  %v921 = vsel %vm439, %v917, 0
  %v924 = vsel %vm439, %v919, 0
  %926 = vmatprep.subr.bf16.mxu0 0
  %927 = vmatpush1.bf16.xpose.msra.mxu0 0
  %928 = vmatprep.subr.bf16.mxu0 0
  %929 = vmatpush1.bf16.xpose.msra.mxu0 0
  %930 = vmatprep.subr.bf16.mxu0 0
  %931 = vmatpush1.bf16.xpose.msra.mxu0 0
  %932 = vmatprep.subr.bf16.mxu0 0
  %933 = vmatpush1.bf16.xpose.msra.mxu0 0
  %934 = vmatprep.subr.bf16.mxu0 0
  %935 = vmatpush1.bf16.xpose.msra.mxu0 0
  %936 = vmatprep.subr.bf16.mxu0 0
  %937 = vmatpush1.bf16.xpose.msra.mxu0 0
  %938 = vmatprep.subr.bf16.mxu0 0
  %939 = vmatpush1.bf16.xpose.msra.mxu0 0
  %940 = vmatprep.subr.bf16.mxu0 0
  %941 = vmatpush1.bf16.xpose.msra.mxu0 %v924
  %942 = vmatprep.subr.bf16.mxu0 0
  %943 = vmatpush2.bf16.xpose.msra.mxu0 0
  %944 = vmatprep.subr.bf16.mxu0 0
  %945 = vmatpush2.bf16.xpose.msra.mxu0 0
  %946 = vmatprep.subr.bf16.mxu0 0
  %947 = vmatpush2.bf16.xpose.msra.mxu0 0
  %948 = vmatprep.subr.bf16.mxu0 0
  %949 = vmatpush2.bf16.xpose.msra.mxu0 0
  %950 = vmatprep.subr.bf16.mxu0 0
  %951 = vmatpush2.bf16.xpose.msra.mxu0 0
  %952 = vmatprep.subr.bf16.mxu0 0
  %953 = vmatpush2.bf16.xpose.msra.mxu0 0
  %954 = vmatprep.subr.bf16.mxu0 0
  %955 = vmatpush2.bf16.xpose.msra.mxu0 0
  %956 = vmatprep.subr.bf16.mxu0 0
  %957 = vmatpush2.bf16.xpose.msra.mxu0 0
  %958 = vmatprep.mubr.bf16.mxu0 0
  %959 = vmatmul.mubr.bf16.gmra.mxu0 %v921
  %v960 = vpop.f32.mrf.mxu0
  %v961 = vadd.f32 0.0, %v960
  %v962 = vpop.f32.mrf.mxu0
  %v963 = vpop.f32.mrf.mxu0
  %v964 = vadd.f32 0.0, %v963
  %v965 = vpop.f32.mrf.mxu0
  %966 = vdwg.mxu0
  %967 = vrot.lane.b32.xlu0 %v434, 96
  %v968 = vpop.permute.xlu0 %967
  %969 = vrot.lane.b32.xlu0 %v436, 96
  %v970 = vpop.permute.xlu0 %969
  %v972 = vsel %vm439, %v968, 0
  %v975 = vsel %vm439, %v970, 0
  %977 = vmatprep.subr.bf16.mxu0 0
  %978 = vmatpush1.bf16.xpose.msra.mxu0 0
  %979 = vmatprep.subr.bf16.mxu0 0
  %980 = vmatpush1.bf16.xpose.msra.mxu0 0
  %981 = vmatprep.subr.bf16.mxu0 0
  %982 = vmatpush1.bf16.xpose.msra.mxu0 0
  %983 = vmatprep.subr.bf16.mxu0 0
  %984 = vmatpush1.bf16.xpose.msra.mxu0 0
  %985 = vmatprep.subr.bf16.mxu0 0
  %986 = vmatpush1.bf16.xpose.msra.mxu0 0
  %987 = vmatprep.subr.bf16.mxu0 0
  %988 = vmatpush1.bf16.xpose.msra.mxu0 0
  %989 = vmatprep.subr.bf16.mxu0 0
  %990 = vmatpush1.bf16.xpose.msra.mxu0 0
  %991 = vmatprep.subr.bf16.mxu0 0
  %992 = vmatpush1.bf16.xpose.msra.mxu0 %v975
  %993 = vmatprep.subr.bf16.mxu0 0
  %994 = vmatpush2.bf16.xpose.msra.mxu0 0
  %995 = vmatprep.subr.bf16.mxu0 0
  %996 = vmatpush2.bf16.xpose.msra.mxu0 0
  %997 = vmatprep.subr.bf16.mxu0 0
  %998 = vmatpush2.bf16.xpose.msra.mxu0 0
  %999 = vmatprep.subr.bf16.mxu0 0
  %1000 = vmatpush2.bf16.xpose.msra.mxu0 0
  %1001 = vmatprep.subr.bf16.mxu0 0
  %1002 = vmatpush2.bf16.xpose.msra.mxu0 0
  %1003 = vmatprep.subr.bf16.mxu0 0
  %1004 = vmatpush2.bf16.xpose.msra.mxu0 0
  %1005 = vmatprep.subr.bf16.mxu0 0
  %1006 = vmatpush2.bf16.xpose.msra.mxu0 0
  %1007 = vmatprep.subr.bf16.mxu0 0
  %1008 = vmatpush2.bf16.xpose.msra.mxu0 0
  %1009 = vmatprep.mubr.bf16.mxu0 0
  %1010 = vmatmul.mubr.bf16.gmra.mxu0 %v972
  %v1011 = vpop.f32.mrf.mxu0
  %v1012 = vadd.f32 0.0, %v1011
  %v1013 = vpop.f32.mrf.mxu0
  %v1014 = vpop.f32.mrf.mxu0
  %v1015 = vadd.f32 0.0, %v1014
  %v1016 = vpop.f32.mrf.mxu0
  %1017 = vdwg.mxu0
  %v1018 = vsel %vm439, %v961, -inf
  %1019 = vmax.xlane.f32.xlu0 %v1018
  %v1020 = vpop.xlane.xlu0 %1019
  %v1021 = vsel %vm439, %v964, -inf
  %1022 = vmax.xlane.f32.xlu0 %v1021
  %v1023 = vpop.xlane.xlu0 %1022
  %v1024 = vsel %vm439, %v1012, -inf
  %1025 = vmax.xlane.f32.xlu0 %v1024
  %v1026 = vpop.xlane.xlu0 %1025
  %v1027 = vsel %vm439, %v1015, -inf
  %1028 = vmax.xlane.f32.xlu0 %v1027
  %v1029 = vpop.xlane.xlu0 %1028
  %v1030 = vsub.f32 %v961, %v1020
  %v1031 = vsub.f32 %v964, %v1023
  %v1032 = vsub.f32 %v1012, %v1026
  %v1033 = vsub.f32 %v1015, %v1029
  %v1034 = vmul.f32 %v1030, 1.442695
  %v1035 = vpow.pop %v1034
  %v1036 = vmul.f32 %v1031, 1.442695
  %v1037 = vpow.pop %v1036
  %v1038 = vmul.f32 %v1032, 1.442695
  %v1039 = vpow.pop %v1038
  %v1040 = vmul.f32 %v1033, 1.442695
  %v1041 = vpow.pop %v1040
  %v1042 = vsel %vm439, %v1035, 0.0
  %1043 = vadd.xlane.f32.xlu0 %v1042
  %v1044 = vpop.xlane.xlu0 %1043
  %v1045 = vsel %vm439, %v1037, 0.0
  %1046 = vadd.xlane.f32.xlu0 %v1045
  %v1047 = vpop.xlane.xlu0 %1046
  %v1048 = vsel %vm439, %v1039, 0.0
  %1049 = vadd.xlane.f32.xlu0 %v1048
  %v1050 = vpop.xlane.xlu0 %1049
  %v1051 = vsel %vm439, %v1041, 0.0
  %1052 = vadd.xlane.f32.xlu0 %v1051
  %v1053 = vpop.xlane.xlu0 %1052
  %v1054 = vrcp.pop %v1044
  %v1055 = vrcp.pop %v1047
  %v1056 = vrcp.pop %v1050
  %v1057 = vrcp.pop %v1053
  %v1058 = vmul.f32 %v1035, %v1054
  %v1059 = vmul.f32 %v1037, %v1055
  %v1060 = vmul.f32 %v1039, %v1056
  %v1061 = vmul.f32 %v1041, %v1057
  %v1062 = vpack.c.bf16 %v1059, %v1058
  %v1063 = vpack.c.bf16 %v1061, %v1060
  %1064 = vrot.lane.b32.xlu0 %v437, 96
  %v1065 = vpop.permute.xlu0 %1064
  %v1068 = vsel %vm439, %v1062, 0
  %1070 = vmatprep.subr.bf16.mxu0 0
  %1071 = vmatpush1.bf16.msra.mxu0 0
  %1072 = vmatprep.subr.bf16.mxu0 0
  %1073 = vmatpush1.bf16.msra.mxu0 0
  %1074 = vmatprep.subr.bf16.mxu0 0
  %1075 = vmatpush1.bf16.msra.mxu0 0
  %1076 = vmatprep.subr.bf16.mxu0 0
  %1077 = vmatpush1.bf16.msra.mxu0 0
  %1078 = vmatprep.subr.bf16.mxu0 0
  %1079 = vmatpush1.bf16.msra.mxu0 0
  %1080 = vmatprep.subr.bf16.mxu0 0
  %1081 = vmatpush1.bf16.msra.mxu0 0
  %1082 = vmatprep.subr.bf16.mxu0 0
  %1083 = vmatpush1.bf16.msra.mxu0 0
  %1084 = vmatprep.subr.bf16.mxu0 0
  %1085 = vmatpush1.bf16.msra.mxu0 %v1065
  %1086 = vmatprep.subr.bf16.mxu0 0
  %1087 = vmatpush2.bf16.msra.mxu0 0
  %1088 = vmatprep.subr.bf16.mxu0 0
  %1089 = vmatpush2.bf16.msra.mxu0 0
  %1090 = vmatprep.subr.bf16.mxu0 0
  %1091 = vmatpush2.bf16.msra.mxu0 0
  %1092 = vmatprep.subr.bf16.mxu0 0
  %1093 = vmatpush2.bf16.msra.mxu0 0
  %1094 = vmatprep.subr.bf16.mxu0 0
  %1095 = vmatpush2.bf16.msra.mxu0 0
  %1096 = vmatprep.subr.bf16.mxu0 0
  %1097 = vmatpush2.bf16.msra.mxu0 0
  %1098 = vmatprep.subr.bf16.mxu0 0
  %1099 = vmatpush2.bf16.msra.mxu0 0
  %1100 = vmatprep.subr.bf16.mxu0 0
  %1101 = vmatpush2.bf16.msra.mxu0 0
  %1102 = vmatprep.mubr.bf16.mxu0 0
  %1103 = vmatmul.mubr.bf16.gmra.mxu0 %v1068
  %v1104 = vpop.f32.mrf.mxu0
  %v1105 = vadd.f32 0.0, %v1104
  %v1106 = vpop.f32.mrf.mxu0
  %v1107 = vpop.f32.mrf.mxu0
  %v1108 = vadd.f32 0.0, %v1107
  %v1109 = vpop.f32.mrf.mxu0
  %1110 = vdwg.mxu0
  %1111 = vrot.lane.b32.xlu0 %v438, 96
  %v1112 = vpop.permute.xlu0 %1111
  %v1115 = vsel %vm439, %v1063, 0
  %1117 = vmatprep.subr.bf16.mxu0 0
  %1118 = vmatpush1.bf16.msra.mxu0 0
  %1119 = vmatprep.subr.bf16.mxu0 0
  %1120 = vmatpush1.bf16.msra.mxu0 0
  %1121 = vmatprep.subr.bf16.mxu0 0
  %1122 = vmatpush1.bf16.msra.mxu0 0
  %1123 = vmatprep.subr.bf16.mxu0 0
  %1124 = vmatpush1.bf16.msra.mxu0 0
  %1125 = vmatprep.subr.bf16.mxu0 0
  %1126 = vmatpush1.bf16.msra.mxu0 0
  %1127 = vmatprep.subr.bf16.mxu0 0
  %1128 = vmatpush1.bf16.msra.mxu0 0
  %1129 = vmatprep.subr.bf16.mxu0 0
  %1130 = vmatpush1.bf16.msra.mxu0 0
  %1131 = vmatprep.subr.bf16.mxu0 0
  %1132 = vmatpush1.bf16.msra.mxu0 %v1112
  %1133 = vmatprep.subr.bf16.mxu0 0
  %1134 = vmatpush2.bf16.msra.mxu0 0
  %1135 = vmatprep.subr.bf16.mxu0 0
  %1136 = vmatpush2.bf16.msra.mxu0 0
  %1137 = vmatprep.subr.bf16.mxu0 0
  %1138 = vmatpush2.bf16.msra.mxu0 0
  %1139 = vmatprep.subr.bf16.mxu0 0
  %1140 = vmatpush2.bf16.msra.mxu0 0
  %1141 = vmatprep.subr.bf16.mxu0 0
  %1142 = vmatpush2.bf16.msra.mxu0 0
  %1143 = vmatprep.subr.bf16.mxu0 0
  %1144 = vmatpush2.bf16.msra.mxu0 0
  %1145 = vmatprep.subr.bf16.mxu0 0
  %1146 = vmatpush2.bf16.msra.mxu0 0
  %1147 = vmatprep.subr.bf16.mxu0 0
  %1148 = vmatpush2.bf16.msra.mxu0 0
  %1149 = vmatprep.mubr.bf16.mxu0 0
  %1150 = vmatmul.mubr.bf16.gmra.mxu0 %v1115
  %v1151 = vpop.f32.mrf.mxu0
  %v1152 = vadd.f32 0.0, %v1151
  %v1153 = vpop.f32.mrf.mxu0
  %v1154 = vpop.f32.mrf.mxu0
  %v1155 = vadd.f32 0.0, %v1154
  %v1156 = vpop.f32.mrf.mxu0
  %1157 = vdwg.mxu0
  %1158 = vrot.lane.b32.xlu0 %v433, 80
  %v1159 = vpop.permute.xlu0 %1158
  %1160 = vrot.lane.b32.xlu0 %v435, 80
  %v1161 = vpop.permute.xlu0 %1160
  %v1163 = vsel %vm439, %v1159, 0
  %v1166 = vsel %vm439, %v1161, 0
  %1168 = vmatprep.subr.bf16.mxu0 0
  %1169 = vmatpush1.bf16.xpose.msra.mxu0 0
  %1170 = vmatprep.subr.bf16.mxu0 0
  %1171 = vmatpush1.bf16.xpose.msra.mxu0 0
  %1172 = vmatprep.subr.bf16.mxu0 0
  %1173 = vmatpush1.bf16.xpose.msra.mxu0 0
  %1174 = vmatprep.subr.bf16.mxu0 0
  %1175 = vmatpush1.bf16.xpose.msra.mxu0 0
  %1176 = vmatprep.subr.bf16.mxu0 0
  %1177 = vmatpush1.bf16.xpose.msra.mxu0 0
  %1178 = vmatprep.subr.bf16.mxu0 0
  %1179 = vmatpush1.bf16.xpose.msra.mxu0 0
  %1180 = vmatprep.subr.bf16.mxu0 0
  %1181 = vmatpush1.bf16.xpose.msra.mxu0 0
  %1182 = vmatprep.subr.bf16.mxu0 0
  %1183 = vmatpush1.bf16.xpose.msra.mxu0 %v1166
  %1184 = vmatprep.subr.bf16.mxu0 0
  %1185 = vmatpush2.bf16.xpose.msra.mxu0 0
  %1186 = vmatprep.subr.bf16.mxu0 0
  %1187 = vmatpush2.bf16.xpose.msra.mxu0 0
  %1188 = vmatprep.subr.bf16.mxu0 0
  %1189 = vmatpush2.bf16.xpose.msra.mxu0 0
  %1190 = vmatprep.subr.bf16.mxu0 0
  %1191 = vmatpush2.bf16.xpose.msra.mxu0 0
  %1192 = vmatprep.subr.bf16.mxu0 0
  %1193 = vmatpush2.bf16.xpose.msra.mxu0 0
  %1194 = vmatprep.subr.bf16.mxu0 0
  %1195 = vmatpush2.bf16.xpose.msra.mxu0 0
  %1196 = vmatprep.subr.bf16.mxu0 0
  %1197 = vmatpush2.bf16.xpose.msra.mxu0 0
  %1198 = vmatprep.subr.bf16.mxu0 0
  %1199 = vmatpush2.bf16.xpose.msra.mxu0 0
  %1200 = vmatprep.mubr.bf16.mxu0 0
  %1201 = vmatmul.mubr.bf16.gmra.mxu0 %v1163
  %v1202 = vpop.f32.mrf.mxu0
  %v1203 = vadd.f32 0.0, %v1202
  %v1204 = vpop.f32.mrf.mxu0
  %v1205 = vpop.f32.mrf.mxu0
  %v1206 = vadd.f32 0.0, %v1205
  %v1207 = vpop.f32.mrf.mxu0
  %1208 = vdwg.mxu0
  %1209 = vrot.lane.b32.xlu0 %v434, 80
  %v1210 = vpop.permute.xlu0 %1209
  %1211 = vrot.lane.b32.xlu0 %v436, 80
  %v1212 = vpop.permute.xlu0 %1211
  %v1214 = vsel %vm439, %v1210, 0
  %v1217 = vsel %vm439, %v1212, 0
  %1219 = vmatprep.subr.bf16.mxu0 0
  %1220 = vmatpush1.bf16.xpose.msra.mxu0 0
  %1221 = vmatprep.subr.bf16.mxu0 0
  %1222 = vmatpush1.bf16.xpose.msra.mxu0 0
  %1223 = vmatprep.subr.bf16.mxu0 0
  %1224 = vmatpush1.bf16.xpose.msra.mxu0 0
  %1225 = vmatprep.subr.bf16.mxu0 0
  %1226 = vmatpush1.bf16.xpose.msra.mxu0 0
  %1227 = vmatprep.subr.bf16.mxu0 0
  %1228 = vmatpush1.bf16.xpose.msra.mxu0 0
  %1229 = vmatprep.subr.bf16.mxu0 0
  %1230 = vmatpush1.bf16.xpose.msra.mxu0 0
  %1231 = vmatprep.subr.bf16.mxu0 0
  %1232 = vmatpush1.bf16.xpose.msra.mxu0 0
  %1233 = vmatprep.subr.bf16.mxu0 0
  %1234 = vmatpush1.bf16.xpose.msra.mxu0 %v1217
  %1235 = vmatprep.subr.bf16.mxu0 0
  %1236 = vmatpush2.bf16.xpose.msra.mxu0 0
  %1237 = vmatprep.subr.bf16.mxu0 0
  %1238 = vmatpush2.bf16.xpose.msra.mxu0 0
  %1239 = vmatprep.subr.bf16.mxu0 0
  %1240 = vmatpush2.bf16.xpose.msra.mxu0 0
  %1241 = vmatprep.subr.bf16.mxu0 0
  %1242 = vmatpush2.bf16.xpose.msra.mxu0 0
  %1243 = vmatprep.subr.bf16.mxu0 0
  %1244 = vmatpush2.bf16.xpose.msra.mxu0 0
  %1245 = vmatprep.subr.bf16.mxu0 0
  %1246 = vmatpush2.bf16.xpose.msra.mxu0 0
  %1247 = vmatprep.subr.bf16.mxu0 0
  %1248 = vmatpush2.bf16.xpose.msra.mxu0 0
  %1249 = vmatprep.subr.bf16.mxu0 0
  %1250 = vmatpush2.bf16.xpose.msra.mxu0 0
  %1251 = vmatprep.mubr.bf16.mxu0 0
  %1252 = vmatmul.mubr.bf16.gmra.mxu0 %v1214
  %v1253 = vpop.f32.mrf.mxu0
  %v1254 = vadd.f32 0.0, %v1253
  %v1255 = vpop.f32.mrf.mxu0
  %v1256 = vpop.f32.mrf.mxu0
  %v1257 = vadd.f32 0.0, %v1256
  %v1258 = vpop.f32.mrf.mxu0
  %1259 = vdwg.mxu0
  %v1260 = vsel %vm439, %v1203, -inf
  %1261 = vmax.xlane.f32.xlu0 %v1260
  %v1262 = vpop.xlane.xlu0 %1261
  %v1263 = vsel %vm439, %v1206, -inf
  %1264 = vmax.xlane.f32.xlu0 %v1263
  %v1265 = vpop.xlane.xlu0 %1264
  %v1266 = vsel %vm439, %v1254, -inf
  %1267 = vmax.xlane.f32.xlu0 %v1266
  %v1268 = vpop.xlane.xlu0 %1267
  %v1269 = vsel %vm439, %v1257, -inf
  %1270 = vmax.xlane.f32.xlu0 %v1269
  %v1271 = vpop.xlane.xlu0 %1270
  %v1272 = vsub.f32 %v1203, %v1262
  %v1273 = vsub.f32 %v1206, %v1265
  %v1274 = vsub.f32 %v1254, %v1268
  %v1275 = vsub.f32 %v1257, %v1271
  %v1276 = vmul.f32 %v1272, 1.442695
  %v1277 = vpow.pop %v1276
  %v1278 = vmul.f32 %v1273, 1.442695
  %v1279 = vpow.pop %v1278
  %v1280 = vmul.f32 %v1274, 1.442695
  %v1281 = vpow.pop %v1280
  %v1282 = vmul.f32 %v1275, 1.442695
  %v1283 = vpow.pop %v1282
  %v1284 = vsel %vm439, %v1277, 0.0
  %1285 = vadd.xlane.f32.xlu0 %v1284
  %v1286 = vpop.xlane.xlu0 %1285
  %v1287 = vsel %vm439, %v1279, 0.0
  %1288 = vadd.xlane.f32.xlu0 %v1287
  %v1289 = vpop.xlane.xlu0 %1288
  %v1290 = vsel %vm439, %v1281, 0.0
  %1291 = vadd.xlane.f32.xlu0 %v1290
  %v1292 = vpop.xlane.xlu0 %1291
  %v1293 = vsel %vm439, %v1283, 0.0
  %1294 = vadd.xlane.f32.xlu0 %v1293
  %v1295 = vpop.xlane.xlu0 %1294
  %v1296 = vrcp.pop %v1286
  %v1297 = vrcp.pop %v1289
  %v1298 = vrcp.pop %v1292
  %v1299 = vrcp.pop %v1295
  %v1300 = vmul.f32 %v1277, %v1296
  %v1301 = vmul.f32 %v1279, %v1297
  %v1302 = vmul.f32 %v1281, %v1298
  %v1303 = vmul.f32 %v1283, %v1299
  %v1304 = vpack.c.bf16 %v1301, %v1300
  %v1305 = vpack.c.bf16 %v1303, %v1302
  %1306 = vrot.lane.b32.xlu0 %v437, 80
  %v1307 = vpop.permute.xlu0 %1306
  %v1310 = vsel %vm439, %v1304, 0
  %1312 = vmatprep.subr.bf16.mxu0 0
  %1313 = vmatpush1.bf16.msra.mxu0 0
  %1314 = vmatprep.subr.bf16.mxu0 0
  %1315 = vmatpush1.bf16.msra.mxu0 0
  %1316 = vmatprep.subr.bf16.mxu0 0
  %1317 = vmatpush1.bf16.msra.mxu0 0
  %1318 = vmatprep.subr.bf16.mxu0 0
  %1319 = vmatpush1.bf16.msra.mxu0 0
  %1320 = vmatprep.subr.bf16.mxu0 0
  %1321 = vmatpush1.bf16.msra.mxu0 0
  %1322 = vmatprep.subr.bf16.mxu0 0
  %1323 = vmatpush1.bf16.msra.mxu0 0
  %1324 = vmatprep.subr.bf16.mxu0 0
  %1325 = vmatpush1.bf16.msra.mxu0 0
  %1326 = vmatprep.subr.bf16.mxu0 0
  %1327 = vmatpush1.bf16.msra.mxu0 %v1307
  %1328 = vmatprep.subr.bf16.mxu0 0
  %1329 = vmatpush2.bf16.msra.mxu0 0
  %1330 = vmatprep.subr.bf16.mxu0 0
  %1331 = vmatpush2.bf16.msra.mxu0 0
  %1332 = vmatprep.subr.bf16.mxu0 0
  %1333 = vmatpush2.bf16.msra.mxu0 0
  %1334 = vmatprep.subr.bf16.mxu0 0
  %1335 = vmatpush2.bf16.msra.mxu0 0
  %1336 = vmatprep.subr.bf16.mxu0 0
  %1337 = vmatpush2.bf16.msra.mxu0 0
  %1338 = vmatprep.subr.bf16.mxu0 0
  %1339 = vmatpush2.bf16.msra.mxu0 0
  %1340 = vmatprep.subr.bf16.mxu0 0
  %1341 = vmatpush2.bf16.msra.mxu0 0
  %1342 = vmatprep.subr.bf16.mxu0 0
  %1343 = vmatpush2.bf16.msra.mxu0 0
  %1344 = vmatprep.mubr.bf16.mxu0 0
  %1345 = vmatmul.mubr.bf16.gmra.mxu0 %v1310
  %v1346 = vpop.f32.mrf.mxu0
  %v1347 = vadd.f32 0.0, %v1346
  %v1348 = vpop.f32.mrf.mxu0
  %v1349 = vpop.f32.mrf.mxu0
  %v1350 = vadd.f32 0.0, %v1349
  %v1351 = vpop.f32.mrf.mxu0
  %1352 = vdwg.mxu0
  %1353 = vrot.lane.b32.xlu0 %v438, 80
  %v1354 = vpop.permute.xlu0 %1353
  %v1357 = vsel %vm439, %v1305, 0
  %1359 = vmatprep.subr.bf16.mxu0 0
  %1360 = vmatpush1.bf16.msra.mxu0 0
  %1361 = vmatprep.subr.bf16.mxu0 0
  %1362 = vmatpush1.bf16.msra.mxu0 0
  %1363 = vmatprep.subr.bf16.mxu0 0
  %1364 = vmatpush1.bf16.msra.mxu0 0
  %1365 = vmatprep.subr.bf16.mxu0 0
  %1366 = vmatpush1.bf16.msra.mxu0 0
  %1367 = vmatprep.subr.bf16.mxu0 0
  %1368 = vmatpush1.bf16.msra.mxu0 0
  %1369 = vmatprep.subr.bf16.mxu0 0
  %1370 = vmatpush1.bf16.msra.mxu0 0
  %1371 = vmatprep.subr.bf16.mxu0 0
  %1372 = vmatpush1.bf16.msra.mxu0 0
  %1373 = vmatprep.subr.bf16.mxu0 0
  %1374 = vmatpush1.bf16.msra.mxu0 %v1354
  %1375 = vmatprep.subr.bf16.mxu0 0
  %1376 = vmatpush2.bf16.msra.mxu0 0
  %1377 = vmatprep.subr.bf16.mxu0 0
  %1378 = vmatpush2.bf16.msra.mxu0 0
  %1379 = vmatprep.subr.bf16.mxu0 0
  %1380 = vmatpush2.bf16.msra.mxu0 0
  %1381 = vmatprep.subr.bf16.mxu0 0
  %1382 = vmatpush2.bf16.msra.mxu0 0
  %1383 = vmatprep.subr.bf16.mxu0 0
  %1384 = vmatpush2.bf16.msra.mxu0 0
  %1385 = vmatprep.subr.bf16.mxu0 0
  %1386 = vmatpush2.bf16.msra.mxu0 0
  %1387 = vmatprep.subr.bf16.mxu0 0
  %1388 = vmatpush2.bf16.msra.mxu0 0
  %1389 = vmatprep.subr.bf16.mxu0 0
  %1390 = vmatpush2.bf16.msra.mxu0 0
  %1391 = vmatprep.mubr.bf16.mxu0 0
  %1392 = vmatmul.mubr.bf16.gmra.mxu0 %v1357
  %v1393 = vpop.f32.mrf.mxu0
  %v1394 = vadd.f32 0.0, %v1393
  %v1395 = vpop.f32.mrf.mxu0
  %v1396 = vpop.f32.mrf.mxu0
  %v1397 = vadd.f32 0.0, %v1396
  %v1398 = vpop.f32.mrf.mxu0
  %1399 = vdwg.mxu0
  %1400 = vrot.lane.b32.xlu0 %v433, 64
  %v1401 = vpop.permute.xlu0 %1400
  %1402 = vrot.lane.b32.xlu0 %v435, 64
  %v1403 = vpop.permute.xlu0 %1402
  %v1405 = vsel %vm439, %v1401, 0
  %v1408 = vsel %vm439, %v1403, 0
  %1410 = vmatprep.subr.bf16.mxu0 0
  %1411 = vmatpush1.bf16.xpose.msra.mxu0 0
  %1412 = vmatprep.subr.bf16.mxu0 0
  %1413 = vmatpush1.bf16.xpose.msra.mxu0 0
  %1414 = vmatprep.subr.bf16.mxu0 0
  %1415 = vmatpush1.bf16.xpose.msra.mxu0 0
  %1416 = vmatprep.subr.bf16.mxu0 0
  %1417 = vmatpush1.bf16.xpose.msra.mxu0 0
  %1418 = vmatprep.subr.bf16.mxu0 0
  %1419 = vmatpush1.bf16.xpose.msra.mxu0 0
  %1420 = vmatprep.subr.bf16.mxu0 0
  %1421 = vmatpush1.bf16.xpose.msra.mxu0 0
  %1422 = vmatprep.subr.bf16.mxu0 0
  %1423 = vmatpush1.bf16.xpose.msra.mxu0 0
  %1424 = vmatprep.subr.bf16.mxu0 0
  %1425 = vmatpush1.bf16.xpose.msra.mxu0 %v1408
  %1426 = vmatprep.subr.bf16.mxu0 0
  %1427 = vmatpush2.bf16.xpose.msra.mxu0 0
  %1428 = vmatprep.subr.bf16.mxu0 0
  %1429 = vmatpush2.bf16.xpose.msra.mxu0 0
  %1430 = vmatprep.subr.bf16.mxu0 0
  %1431 = vmatpush2.bf16.xpose.msra.mxu0 0
  %1432 = vmatprep.subr.bf16.mxu0 0
  %1433 = vmatpush2.bf16.xpose.msra.mxu0 0
  %1434 = vmatprep.subr.bf16.mxu0 0
  %1435 = vmatpush2.bf16.xpose.msra.mxu0 0
  %1436 = vmatprep.subr.bf16.mxu0 0
  %1437 = vmatpush2.bf16.xpose.msra.mxu0 0
  %1438 = vmatprep.subr.bf16.mxu0 0
  %1439 = vmatpush2.bf16.xpose.msra.mxu0 0
  %1440 = vmatprep.subr.bf16.mxu0 0
  %1441 = vmatpush2.bf16.xpose.msra.mxu0 0
  %1442 = vmatprep.mubr.bf16.mxu0 0
  %1443 = vmatmul.mubr.bf16.gmra.mxu0 %v1405
  %v1444 = vpop.f32.mrf.mxu0
  %v1445 = vadd.f32 0.0, %v1444
  %v1446 = vpop.f32.mrf.mxu0
  %v1447 = vpop.f32.mrf.mxu0
  %v1448 = vadd.f32 0.0, %v1447
  %v1449 = vpop.f32.mrf.mxu0
  %1450 = vdwg.mxu0
  %1451 = vrot.lane.b32.xlu0 %v434, 64
  %v1452 = vpop.permute.xlu0 %1451
  %1453 = vrot.lane.b32.xlu0 %v436, 64
  %v1454 = vpop.permute.xlu0 %1453
  %v1456 = vsel %vm439, %v1452, 0
  %v1459 = vsel %vm439, %v1454, 0
  %1461 = vmatprep.subr.bf16.mxu0 0
  %1462 = vmatpush1.bf16.xpose.msra.mxu0 0
  %1463 = vmatprep.subr.bf16.mxu0 0
  %1464 = vmatpush1.bf16.xpose.msra.mxu0 0
  %1465 = vmatprep.subr.bf16.mxu0 0
  %1466 = vmatpush1.bf16.xpose.msra.mxu0 0
  %1467 = vmatprep.subr.bf16.mxu0 0
  %1468 = vmatpush1.bf16.xpose.msra.mxu0 0
  %1469 = vmatprep.subr.bf16.mxu0 0
  %1470 = vmatpush1.bf16.xpose.msra.mxu0 0
  %1471 = vmatprep.subr.bf16.mxu0 0
  %1472 = vmatpush1.bf16.xpose.msra.mxu0 0
  %1473 = vmatprep.subr.bf16.mxu0 0
  %1474 = vmatpush1.bf16.xpose.msra.mxu0 0
  %1475 = vmatprep.subr.bf16.mxu0 0
  %1476 = vmatpush1.bf16.xpose.msra.mxu0 %v1459
  %1477 = vmatprep.subr.bf16.mxu0 0
  %1478 = vmatpush2.bf16.xpose.msra.mxu0 0
  %1479 = vmatprep.subr.bf16.mxu0 0
  %1480 = vmatpush2.bf16.xpose.msra.mxu0 0
  %1481 = vmatprep.subr.bf16.mxu0 0
  %1482 = vmatpush2.bf16.xpose.msra.mxu0 0
  %1483 = vmatprep.subr.bf16.mxu0 0
  %1484 = vmatpush2.bf16.xpose.msra.mxu0 0
  %1485 = vmatprep.subr.bf16.mxu0 0
  %1486 = vmatpush2.bf16.xpose.msra.mxu0 0
  %1487 = vmatprep.subr.bf16.mxu0 0
  %1488 = vmatpush2.bf16.xpose.msra.mxu0 0
  %1489 = vmatprep.subr.bf16.mxu0 0
  %1490 = vmatpush2.bf16.xpose.msra.mxu0 0
  %1491 = vmatprep.subr.bf16.mxu0 0
  %1492 = vmatpush2.bf16.xpose.msra.mxu0 0
  %1493 = vmatprep.mubr.bf16.mxu0 0
  %1494 = vmatmul.mubr.bf16.gmra.mxu0 %v1456
  %v1495 = vpop.f32.mrf.mxu0
  %v1496 = vadd.f32 0.0, %v1495
  %v1497 = vpop.f32.mrf.mxu0
  %v1498 = vpop.f32.mrf.mxu0
  %v1499 = vadd.f32 0.0, %v1498
  %v1500 = vpop.f32.mrf.mxu0
  %1501 = vdwg.mxu0
  %v1502 = vsel %vm439, %v1445, -inf
  %1503 = vmax.xlane.f32.xlu0 %v1502
  %v1504 = vpop.xlane.xlu0 %1503
  %v1505 = vsel %vm439, %v1448, -inf
  %1506 = vmax.xlane.f32.xlu0 %v1505
  %v1507 = vpop.xlane.xlu0 %1506
  %v1508 = vsel %vm439, %v1496, -inf
  %1509 = vmax.xlane.f32.xlu0 %v1508
  %v1510 = vpop.xlane.xlu0 %1509
  %v1511 = vsel %vm439, %v1499, -inf
  %1512 = vmax.xlane.f32.xlu0 %v1511
  %v1513 = vpop.xlane.xlu0 %1512
  %v1514 = vsub.f32 %v1445, %v1504
  %v1515 = vsub.f32 %v1448, %v1507
  %v1516 = vsub.f32 %v1496, %v1510
  %v1517 = vsub.f32 %v1499, %v1513
  %v1518 = vmul.f32 %v1514, 1.442695
  %v1519 = vpow.pop %v1518
  %v1520 = vmul.f32 %v1515, 1.442695
  %v1521 = vpow.pop %v1520
  %v1522 = vmul.f32 %v1516, 1.442695
  %v1523 = vpow.pop %v1522
  %v1524 = vmul.f32 %v1517, 1.442695
  %v1525 = vpow.pop %v1524
  %v1526 = vsel %vm439, %v1519, 0.0
  %1527 = vadd.xlane.f32.xlu0 %v1526
  %v1528 = vpop.xlane.xlu0 %1527
  %v1529 = vsel %vm439, %v1521, 0.0
  %1530 = vadd.xlane.f32.xlu0 %v1529
  %v1531 = vpop.xlane.xlu0 %1530
  %v1532 = vsel %vm439, %v1523, 0.0
  %1533 = vadd.xlane.f32.xlu0 %v1532
  %v1534 = vpop.xlane.xlu0 %1533
  %v1535 = vsel %vm439, %v1525, 0.0
  %1536 = vadd.xlane.f32.xlu0 %v1535
  %v1537 = vpop.xlane.xlu0 %1536
  %v1538 = vrcp.pop %v1528
  %v1539 = vrcp.pop %v1531
  %v1540 = vrcp.pop %v1534
  %v1541 = vrcp.pop %v1537
  %v1542 = vmul.f32 %v1519, %v1538
  %v1543 = vmul.f32 %v1521, %v1539
  %v1544 = vmul.f32 %v1523, %v1540
  %v1545 = vmul.f32 %v1525, %v1541
  %v1546 = vpack.c.bf16 %v1543, %v1542
  %v1547 = vpack.c.bf16 %v1545, %v1544
  %1548 = vrot.lane.b32.xlu0 %v437, 64
  %v1549 = vpop.permute.xlu0 %1548
  %v1552 = vsel %vm439, %v1546, 0
  %1554 = vmatprep.subr.bf16.mxu0 0
  %1555 = vmatpush1.bf16.msra.mxu0 0
  %1556 = vmatprep.subr.bf16.mxu0 0
  %1557 = vmatpush1.bf16.msra.mxu0 0
  %1558 = vmatprep.subr.bf16.mxu0 0
  %1559 = vmatpush1.bf16.msra.mxu0 0
  %1560 = vmatprep.subr.bf16.mxu0 0
  %1561 = vmatpush1.bf16.msra.mxu0 0
  %1562 = vmatprep.subr.bf16.mxu0 0
  %1563 = vmatpush1.bf16.msra.mxu0 0
  %1564 = vmatprep.subr.bf16.mxu0 0
  %1565 = vmatpush1.bf16.msra.mxu0 0
  %1566 = vmatprep.subr.bf16.mxu0 0
  %1567 = vmatpush1.bf16.msra.mxu0 0
  %1568 = vmatprep.subr.bf16.mxu0 0
  %1569 = vmatpush1.bf16.msra.mxu0 %v1549
  %1570 = vmatprep.subr.bf16.mxu0 0
  %1571 = vmatpush2.bf16.msra.mxu0 0
  %1572 = vmatprep.subr.bf16.mxu0 0
  %1573 = vmatpush2.bf16.msra.mxu0 0
  %1574 = vmatprep.subr.bf16.mxu0 0
  %1575 = vmatpush2.bf16.msra.mxu0 0
  %1576 = vmatprep.subr.bf16.mxu0 0
  %1577 = vmatpush2.bf16.msra.mxu0 0
  %1578 = vmatprep.subr.bf16.mxu0 0
  %1579 = vmatpush2.bf16.msra.mxu0 0
  %1580 = vmatprep.subr.bf16.mxu0 0
  %1581 = vmatpush2.bf16.msra.mxu0 0
  %1582 = vmatprep.subr.bf16.mxu0 0
  %1583 = vmatpush2.bf16.msra.mxu0 0
  %1584 = vmatprep.subr.bf16.mxu0 0
  %1585 = vmatpush2.bf16.msra.mxu0 0
  %1586 = vmatprep.mubr.bf16.mxu0 0
  %1587 = vmatmul.mubr.bf16.gmra.mxu0 %v1552
  %v1588 = vpop.f32.mrf.mxu0
  %v1589 = vadd.f32 0.0, %v1588
  %v1590 = vpop.f32.mrf.mxu0
  %v1591 = vpop.f32.mrf.mxu0
  %v1592 = vadd.f32 0.0, %v1591
  %v1593 = vpop.f32.mrf.mxu0
  %1594 = vdwg.mxu0
  %1595 = vrot.lane.b32.xlu0 %v438, 64
  %v1596 = vpop.permute.xlu0 %1595
  %v1599 = vsel %vm439, %v1547, 0
  %1601 = vmatprep.subr.bf16.mxu0 0
  %1602 = vmatpush1.bf16.msra.mxu0 0
  %1603 = vmatprep.subr.bf16.mxu0 0
  %1604 = vmatpush1.bf16.msra.mxu0 0
  %1605 = vmatprep.subr.bf16.mxu0 0
  %1606 = vmatpush1.bf16.msra.mxu0 0
  %1607 = vmatprep.subr.bf16.mxu0 0
  %1608 = vmatpush1.bf16.msra.mxu0 0
  %1609 = vmatprep.subr.bf16.mxu0 0
  %1610 = vmatpush1.bf16.msra.mxu0 0
  %1611 = vmatprep.subr.bf16.mxu0 0
  %1612 = vmatpush1.bf16.msra.mxu0 0
  %1613 = vmatprep.subr.bf16.mxu0 0
  %1614 = vmatpush1.bf16.msra.mxu0 0
  %1615 = vmatprep.subr.bf16.mxu0 0
  %1616 = vmatpush1.bf16.msra.mxu0 %v1596
  %1617 = vmatprep.subr.bf16.mxu0 0
  %1618 = vmatpush2.bf16.msra.mxu0 0
  %1619 = vmatprep.subr.bf16.mxu0 0
  %1620 = vmatpush2.bf16.msra.mxu0 0
  %1621 = vmatprep.subr.bf16.mxu0 0
  %1622 = vmatpush2.bf16.msra.mxu0 0
  %1623 = vmatprep.subr.bf16.mxu0 0
  %1624 = vmatpush2.bf16.msra.mxu0 0
  %1625 = vmatprep.subr.bf16.mxu0 0
  %1626 = vmatpush2.bf16.msra.mxu0 0
  %1627 = vmatprep.subr.bf16.mxu0 0
  %1628 = vmatpush2.bf16.msra.mxu0 0
  %1629 = vmatprep.subr.bf16.mxu0 0
  %1630 = vmatpush2.bf16.msra.mxu0 0
  %1631 = vmatprep.subr.bf16.mxu0 0
  %1632 = vmatpush2.bf16.msra.mxu0 0
  %1633 = vmatprep.mubr.bf16.mxu0 0
  %1634 = vmatmul.mubr.bf16.gmra.mxu0 %v1599
  %v1635 = vpop.f32.mrf.mxu0
  %v1636 = vadd.f32 0.0, %v1635
  %v1637 = vpop.f32.mrf.mxu0
  %v1638 = vpop.f32.mrf.mxu0
  %v1639 = vadd.f32 0.0, %v1638
  %v1640 = vpop.f32.mrf.mxu0
  %1641 = vdwg.mxu0
  %1642 = vrot.lane.b32.xlu0 %v433, 48
  %v1643 = vpop.permute.xlu0 %1642
  %1644 = vrot.lane.b32.xlu0 %v435, 48
  %v1645 = vpop.permute.xlu0 %1644
  %v1647 = vsel %vm439, %v1643, 0
  %v1650 = vsel %vm439, %v1645, 0
  %1652 = vmatprep.subr.bf16.mxu0 0
  %1653 = vmatpush1.bf16.xpose.msra.mxu0 0
  %1654 = vmatprep.subr.bf16.mxu0 0
  %1655 = vmatpush1.bf16.xpose.msra.mxu0 0
  %1656 = vmatprep.subr.bf16.mxu0 0
  %1657 = vmatpush1.bf16.xpose.msra.mxu0 0
  %1658 = vmatprep.subr.bf16.mxu0 0
  %1659 = vmatpush1.bf16.xpose.msra.mxu0 0
  %1660 = vmatprep.subr.bf16.mxu0 0
  %1661 = vmatpush1.bf16.xpose.msra.mxu0 0
  %1662 = vmatprep.subr.bf16.mxu0 0
  %1663 = vmatpush1.bf16.xpose.msra.mxu0 0
  %1664 = vmatprep.subr.bf16.mxu0 0
  %1665 = vmatpush1.bf16.xpose.msra.mxu0 0
  %1666 = vmatprep.subr.bf16.mxu0 0
  %1667 = vmatpush1.bf16.xpose.msra.mxu0 %v1650
  %1668 = vmatprep.subr.bf16.mxu0 0
  %1669 = vmatpush2.bf16.xpose.msra.mxu0 0
  %1670 = vmatprep.subr.bf16.mxu0 0
  %1671 = vmatpush2.bf16.xpose.msra.mxu0 0
  %1672 = vmatprep.subr.bf16.mxu0 0
  %1673 = vmatpush2.bf16.xpose.msra.mxu0 0
  %1674 = vmatprep.subr.bf16.mxu0 0
  %1675 = vmatpush2.bf16.xpose.msra.mxu0 0
  %1676 = vmatprep.subr.bf16.mxu0 0
  %1677 = vmatpush2.bf16.xpose.msra.mxu0 0
  %1678 = vmatprep.subr.bf16.mxu0 0
  %1679 = vmatpush2.bf16.xpose.msra.mxu0 0
  %1680 = vmatprep.subr.bf16.mxu0 0
  %1681 = vmatpush2.bf16.xpose.msra.mxu0 0
  %1682 = vmatprep.subr.bf16.mxu0 0
  %1683 = vmatpush2.bf16.xpose.msra.mxu0 0
  %1684 = vmatprep.mubr.bf16.mxu0 0
  %1685 = vmatmul.mubr.bf16.gmra.mxu0 %v1647
  %v1686 = vpop.f32.mrf.mxu0
  %v1687 = vadd.f32 0.0, %v1686
  %v1688 = vpop.f32.mrf.mxu0
  %v1689 = vpop.f32.mrf.mxu0
  %v1690 = vadd.f32 0.0, %v1689
  %v1691 = vpop.f32.mrf.mxu0
  %1692 = vdwg.mxu0
  %1693 = vrot.lane.b32.xlu0 %v434, 48
  %v1694 = vpop.permute.xlu0 %1693
  %1695 = vrot.lane.b32.xlu0 %v436, 48
  %v1696 = vpop.permute.xlu0 %1695
  %v1698 = vsel %vm439, %v1694, 0
  %v1701 = vsel %vm439, %v1696, 0
  %1703 = vmatprep.subr.bf16.mxu0 0
  %1704 = vmatpush1.bf16.xpose.msra.mxu0 0
  %1705 = vmatprep.subr.bf16.mxu0 0
  %1706 = vmatpush1.bf16.xpose.msra.mxu0 0
  %1707 = vmatprep.subr.bf16.mxu0 0
  %1708 = vmatpush1.bf16.xpose.msra.mxu0 0
  %1709 = vmatprep.subr.bf16.mxu0 0
  %1710 = vmatpush1.bf16.xpose.msra.mxu0 0
  %1711 = vmatprep.subr.bf16.mxu0 0
  %1712 = vmatpush1.bf16.xpose.msra.mxu0 0
  %1713 = vmatprep.subr.bf16.mxu0 0
  %1714 = vmatpush1.bf16.xpose.msra.mxu0 0
  %1715 = vmatprep.subr.bf16.mxu0 0
  %1716 = vmatpush1.bf16.xpose.msra.mxu0 0
  %1717 = vmatprep.subr.bf16.mxu0 0
  %1718 = vmatpush1.bf16.xpose.msra.mxu0 %v1701
  %1719 = vmatprep.subr.bf16.mxu0 0
  %1720 = vmatpush2.bf16.xpose.msra.mxu0 0
  %1721 = vmatprep.subr.bf16.mxu0 0
  %1722 = vmatpush2.bf16.xpose.msra.mxu0 0
  %1723 = vmatprep.subr.bf16.mxu0 0
  %1724 = vmatpush2.bf16.xpose.msra.mxu0 0
  %1725 = vmatprep.subr.bf16.mxu0 0
  %1726 = vmatpush2.bf16.xpose.msra.mxu0 0
  %1727 = vmatprep.subr.bf16.mxu0 0
  %1728 = vmatpush2.bf16.xpose.msra.mxu0 0
  %1729 = vmatprep.subr.bf16.mxu0 0
  %1730 = vmatpush2.bf16.xpose.msra.mxu0 0
  %1731 = vmatprep.subr.bf16.mxu0 0
  %1732 = vmatpush2.bf16.xpose.msra.mxu0 0
  %1733 = vmatprep.subr.bf16.mxu0 0
  %1734 = vmatpush2.bf16.xpose.msra.mxu0 0
  %1735 = vmatprep.mubr.bf16.mxu0 0
  %1736 = vmatmul.mubr.bf16.gmra.mxu0 %v1698
  %v1737 = vpop.f32.mrf.mxu0
  %v1738 = vadd.f32 0.0, %v1737
  %v1739 = vpop.f32.mrf.mxu0
  %v1740 = vpop.f32.mrf.mxu0
  %v1741 = vadd.f32 0.0, %v1740
  %v1742 = vpop.f32.mrf.mxu0
  %1743 = vdwg.mxu0
  %v1744 = vsel %vm439, %v1687, -inf
  %1745 = vmax.xlane.f32.xlu0 %v1744
  %v1746 = vpop.xlane.xlu0 %1745
  %v1747 = vsel %vm439, %v1690, -inf
  %1748 = vmax.xlane.f32.xlu0 %v1747
  %v1749 = vpop.xlane.xlu0 %1748
  %v1750 = vsel %vm439, %v1738, -inf
  %1751 = vmax.xlane.f32.xlu0 %v1750
  %v1752 = vpop.xlane.xlu0 %1751
  %v1753 = vsel %vm439, %v1741, -inf
  %1754 = vmax.xlane.f32.xlu0 %v1753
  %v1755 = vpop.xlane.xlu0 %1754
  %v1756 = vsub.f32 %v1687, %v1746
  %v1757 = vsub.f32 %v1690, %v1749
  %v1758 = vsub.f32 %v1738, %v1752
  %v1759 = vsub.f32 %v1741, %v1755
  %v1760 = vmul.f32 %v1756, 1.442695
  %v1761 = vpow.pop %v1760
  %v1762 = vmul.f32 %v1757, 1.442695
  %v1763 = vpow.pop %v1762
  %v1764 = vmul.f32 %v1758, 1.442695
  %v1765 = vpow.pop %v1764
  %v1766 = vmul.f32 %v1759, 1.442695
  %v1767 = vpow.pop %v1766
  %v1768 = vsel %vm439, %v1761, 0.0
  %1769 = vadd.xlane.f32.xlu0 %v1768
  %v1770 = vpop.xlane.xlu0 %1769
  %v1771 = vsel %vm439, %v1763, 0.0
  %1772 = vadd.xlane.f32.xlu0 %v1771
  %v1773 = vpop.xlane.xlu0 %1772
  %v1774 = vsel %vm439, %v1765, 0.0
  %1775 = vadd.xlane.f32.xlu0 %v1774
  %v1776 = vpop.xlane.xlu0 %1775
  %v1777 = vsel %vm439, %v1767, 0.0
  %1778 = vadd.xlane.f32.xlu0 %v1777
  %v1779 = vpop.xlane.xlu0 %1778
  %v1780 = vrcp.pop %v1770
  %v1781 = vrcp.pop %v1773
  %v1782 = vrcp.pop %v1776
  %v1783 = vrcp.pop %v1779
  %v1784 = vmul.f32 %v1761, %v1780
  %v1785 = vmul.f32 %v1763, %v1781
  %v1786 = vmul.f32 %v1765, %v1782
  %v1787 = vmul.f32 %v1767, %v1783
  %v1788 = vpack.c.bf16 %v1785, %v1784
  %v1789 = vpack.c.bf16 %v1787, %v1786
  %1790 = vrot.lane.b32.xlu0 %v437, 48
  %v1791 = vpop.permute.xlu0 %1790
  %v1794 = vsel %vm439, %v1788, 0
  %1796 = vmatprep.subr.bf16.mxu0 0
  %1797 = vmatpush1.bf16.msra.mxu0 0
  %1798 = vmatprep.subr.bf16.mxu0 0
  %1799 = vmatpush1.bf16.msra.mxu0 0
  %1800 = vmatprep.subr.bf16.mxu0 0
  %1801 = vmatpush1.bf16.msra.mxu0 0
  %1802 = vmatprep.subr.bf16.mxu0 0
  %1803 = vmatpush1.bf16.msra.mxu0 0
  %1804 = vmatprep.subr.bf16.mxu0 0
  %1805 = vmatpush1.bf16.msra.mxu0 0
  %1806 = vmatprep.subr.bf16.mxu0 0
  %1807 = vmatpush1.bf16.msra.mxu0 0
  %1808 = vmatprep.subr.bf16.mxu0 0
  %1809 = vmatpush1.bf16.msra.mxu0 0
  %1810 = vmatprep.subr.bf16.mxu0 0
  %1811 = vmatpush1.bf16.msra.mxu0 %v1791
  %1812 = vmatprep.subr.bf16.mxu0 0
  %1813 = vmatpush2.bf16.msra.mxu0 0
  %1814 = vmatprep.subr.bf16.mxu0 0
  %1815 = vmatpush2.bf16.msra.mxu0 0
  %1816 = vmatprep.subr.bf16.mxu0 0
  %1817 = vmatpush2.bf16.msra.mxu0 0
  %1818 = vmatprep.subr.bf16.mxu0 0
  %1819 = vmatpush2.bf16.msra.mxu0 0
  %1820 = vmatprep.subr.bf16.mxu0 0
  %1821 = vmatpush2.bf16.msra.mxu0 0
  %1822 = vmatprep.subr.bf16.mxu0 0
  %1823 = vmatpush2.bf16.msra.mxu0 0
  %1824 = vmatprep.subr.bf16.mxu0 0
  %1825 = vmatpush2.bf16.msra.mxu0 0
  %1826 = vmatprep.subr.bf16.mxu0 0
  %1827 = vmatpush2.bf16.msra.mxu0 0
  %1828 = vmatprep.mubr.bf16.mxu0 0
  %1829 = vmatmul.mubr.bf16.gmra.mxu0 %v1794
  %v1830 = vpop.f32.mrf.mxu0
  %v1831 = vadd.f32 0.0, %v1830
  %v1832 = vpop.f32.mrf.mxu0
  %v1833 = vpop.f32.mrf.mxu0
  %v1834 = vadd.f32 0.0, %v1833
  %v1835 = vpop.f32.mrf.mxu0
  %1836 = vdwg.mxu0
  %1837 = vrot.lane.b32.xlu0 %v438, 48
  %v1838 = vpop.permute.xlu0 %1837
  %v1841 = vsel %vm439, %v1789, 0
  %1843 = vmatprep.subr.bf16.mxu0 0
  %1844 = vmatpush1.bf16.msra.mxu0 0
  %1845 = vmatprep.subr.bf16.mxu0 0
  %1846 = vmatpush1.bf16.msra.mxu0 0
  %1847 = vmatprep.subr.bf16.mxu0 0
  %1848 = vmatpush1.bf16.msra.mxu0 0
  %1849 = vmatprep.subr.bf16.mxu0 0
  %1850 = vmatpush1.bf16.msra.mxu0 0
  %1851 = vmatprep.subr.bf16.mxu0 0
  %1852 = vmatpush1.bf16.msra.mxu0 0
  %1853 = vmatprep.subr.bf16.mxu0 0
  %1854 = vmatpush1.bf16.msra.mxu0 0
  %1855 = vmatprep.subr.bf16.mxu0 0
  %1856 = vmatpush1.bf16.msra.mxu0 0
  %1857 = vmatprep.subr.bf16.mxu0 0
  %1858 = vmatpush1.bf16.msra.mxu0 %v1838
  %1859 = vmatprep.subr.bf16.mxu0 0
  %1860 = vmatpush2.bf16.msra.mxu0 0
  %1861 = vmatprep.subr.bf16.mxu0 0
  %1862 = vmatpush2.bf16.msra.mxu0 0
  %1863 = vmatprep.subr.bf16.mxu0 0
  %1864 = vmatpush2.bf16.msra.mxu0 0
  %1865 = vmatprep.subr.bf16.mxu0 0
  %1866 = vmatpush2.bf16.msra.mxu0 0
  %1867 = vmatprep.subr.bf16.mxu0 0
  %1868 = vmatpush2.bf16.msra.mxu0 0
  %1869 = vmatprep.subr.bf16.mxu0 0
  %1870 = vmatpush2.bf16.msra.mxu0 0
  %1871 = vmatprep.subr.bf16.mxu0 0
  %1872 = vmatpush2.bf16.msra.mxu0 0
  %1873 = vmatprep.subr.bf16.mxu0 0
  %1874 = vmatpush2.bf16.msra.mxu0 0
  %1875 = vmatprep.mubr.bf16.mxu0 0
  %1876 = vmatmul.mubr.bf16.gmra.mxu0 %v1841
  %v1877 = vpop.f32.mrf.mxu0
  %v1878 = vadd.f32 0.0, %v1877
  %v1879 = vpop.f32.mrf.mxu0
  %v1880 = vpop.f32.mrf.mxu0
  %v1881 = vadd.f32 0.0, %v1880
  %v1882 = vpop.f32.mrf.mxu0
  %1883 = vdwg.mxu0
  %1884 = vrot.lane.b32.xlu0 %v433, 32
  %v1885 = vpop.permute.xlu0 %1884
  %1886 = vrot.lane.b32.xlu0 %v435, 32
  %v1887 = vpop.permute.xlu0 %1886
  %v1889 = vsel %vm439, %v1885, 0
  %v1892 = vsel %vm439, %v1887, 0
  %1894 = vmatprep.subr.bf16.mxu0 0
  %1895 = vmatpush1.bf16.xpose.msra.mxu0 0
  %1896 = vmatprep.subr.bf16.mxu0 0
  %1897 = vmatpush1.bf16.xpose.msra.mxu0 0
  %1898 = vmatprep.subr.bf16.mxu0 0
  %1899 = vmatpush1.bf16.xpose.msra.mxu0 0
  %1900 = vmatprep.subr.bf16.mxu0 0
  %1901 = vmatpush1.bf16.xpose.msra.mxu0 0
  %1902 = vmatprep.subr.bf16.mxu0 0
  %1903 = vmatpush1.bf16.xpose.msra.mxu0 0
  %1904 = vmatprep.subr.bf16.mxu0 0
  %1905 = vmatpush1.bf16.xpose.msra.mxu0 0
  %1906 = vmatprep.subr.bf16.mxu0 0
  %1907 = vmatpush1.bf16.xpose.msra.mxu0 0
  %1908 = vmatprep.subr.bf16.mxu0 0
  %1909 = vmatpush1.bf16.xpose.msra.mxu0 %v1892
  %1910 = vmatprep.subr.bf16.mxu0 0
  %1911 = vmatpush2.bf16.xpose.msra.mxu0 0
  %1912 = vmatprep.subr.bf16.mxu0 0
  %1913 = vmatpush2.bf16.xpose.msra.mxu0 0
  %1914 = vmatprep.subr.bf16.mxu0 0
  %1915 = vmatpush2.bf16.xpose.msra.mxu0 0
  %1916 = vmatprep.subr.bf16.mxu0 0
  %1917 = vmatpush2.bf16.xpose.msra.mxu0 0
  %1918 = vmatprep.subr.bf16.mxu0 0
  %1919 = vmatpush2.bf16.xpose.msra.mxu0 0
  %1920 = vmatprep.subr.bf16.mxu0 0
  %1921 = vmatpush2.bf16.xpose.msra.mxu0 0
  %1922 = vmatprep.subr.bf16.mxu0 0
  %1923 = vmatpush2.bf16.xpose.msra.mxu0 0
  %1924 = vmatprep.subr.bf16.mxu0 0
  %1925 = vmatpush2.bf16.xpose.msra.mxu0 0
  %1926 = vmatprep.mubr.bf16.mxu0 0
  %1927 = vmatmul.mubr.bf16.gmra.mxu0 %v1889
  %v1928 = vpop.f32.mrf.mxu0
  %v1929 = vadd.f32 0.0, %v1928
  %v1930 = vpop.f32.mrf.mxu0
  %v1931 = vpop.f32.mrf.mxu0
  %v1932 = vadd.f32 0.0, %v1931
  %v1933 = vpop.f32.mrf.mxu0
  %1934 = vdwg.mxu0
  %1935 = vrot.lane.b32.xlu0 %v434, 32
  %v1936 = vpop.permute.xlu0 %1935
  %1937 = vrot.lane.b32.xlu0 %v436, 32
  %v1938 = vpop.permute.xlu0 %1937
  %v1940 = vsel %vm439, %v1936, 0
  %v1943 = vsel %vm439, %v1938, 0
  %1945 = vmatprep.subr.bf16.mxu0 0
  %1946 = vmatpush1.bf16.xpose.msra.mxu0 0
  %1947 = vmatprep.subr.bf16.mxu0 0
  %1948 = vmatpush1.bf16.xpose.msra.mxu0 0
  %1949 = vmatprep.subr.bf16.mxu0 0
  %1950 = vmatpush1.bf16.xpose.msra.mxu0 0
  %1951 = vmatprep.subr.bf16.mxu0 0
  %1952 = vmatpush1.bf16.xpose.msra.mxu0 0
  %1953 = vmatprep.subr.bf16.mxu0 0
  %1954 = vmatpush1.bf16.xpose.msra.mxu0 0
  %1955 = vmatprep.subr.bf16.mxu0 0
  %1956 = vmatpush1.bf16.xpose.msra.mxu0 0
  %1957 = vmatprep.subr.bf16.mxu0 0
  %1958 = vmatpush1.bf16.xpose.msra.mxu0 0
  %1959 = vmatprep.subr.bf16.mxu0 0
  %1960 = vmatpush1.bf16.xpose.msra.mxu0 %v1943
  %1961 = vmatprep.subr.bf16.mxu0 0
  %1962 = vmatpush2.bf16.xpose.msra.mxu0 0
  %1963 = vmatprep.subr.bf16.mxu0 0
  %1964 = vmatpush2.bf16.xpose.msra.mxu0 0
  %1965 = vmatprep.subr.bf16.mxu0 0
  %1966 = vmatpush2.bf16.xpose.msra.mxu0 0
  %1967 = vmatprep.subr.bf16.mxu0 0
  %1968 = vmatpush2.bf16.xpose.msra.mxu0 0
  %1969 = vmatprep.subr.bf16.mxu0 0
  %1970 = vmatpush2.bf16.xpose.msra.mxu0 0
  %1971 = vmatprep.subr.bf16.mxu0 0
  %1972 = vmatpush2.bf16.xpose.msra.mxu0 0
  %1973 = vmatprep.subr.bf16.mxu0 0
  %1974 = vmatpush2.bf16.xpose.msra.mxu0 0
  %1975 = vmatprep.subr.bf16.mxu0 0
  %1976 = vmatpush2.bf16.xpose.msra.mxu0 0
  %1977 = vmatprep.mubr.bf16.mxu0 0
  %1978 = vmatmul.mubr.bf16.gmra.mxu0 %v1940
  %v1979 = vpop.f32.mrf.mxu0
  %v1980 = vadd.f32 0.0, %v1979
  %v1981 = vpop.f32.mrf.mxu0
  %v1982 = vpop.f32.mrf.mxu0
  %v1983 = vadd.f32 0.0, %v1982
  %v1984 = vpop.f32.mrf.mxu0
  %1985 = vdwg.mxu0
  %v1986 = vsel %vm439, %v1929, -inf
  %1987 = vmax.xlane.f32.xlu0 %v1986
  %v1988 = vpop.xlane.xlu0 %1987
  %v1989 = vsel %vm439, %v1932, -inf
  %1990 = vmax.xlane.f32.xlu0 %v1989
  %v1991 = vpop.xlane.xlu0 %1990
  %v1992 = vsel %vm439, %v1980, -inf
  %1993 = vmax.xlane.f32.xlu0 %v1992
  %v1994 = vpop.xlane.xlu0 %1993
  %v1995 = vsel %vm439, %v1983, -inf
  %1996 = vmax.xlane.f32.xlu0 %v1995
  %v1997 = vpop.xlane.xlu0 %1996
  %v1998 = vsub.f32 %v1929, %v1988
  %v1999 = vsub.f32 %v1932, %v1991
  %v2000 = vsub.f32 %v1980, %v1994
  %v2001 = vsub.f32 %v1983, %v1997
  %v2002 = vmul.f32 %v1998, 1.442695
  %v2003 = vpow.pop %v2002
  %v2004 = vmul.f32 %v1999, 1.442695
  %v2005 = vpow.pop %v2004
  %v2006 = vmul.f32 %v2000, 1.442695
  %v2007 = vpow.pop %v2006
  %v2008 = vmul.f32 %v2001, 1.442695
  %v2009 = vpow.pop %v2008
  %v2010 = vsel %vm439, %v2003, 0.0
  %2011 = vadd.xlane.f32.xlu0 %v2010
  %v2012 = vpop.xlane.xlu0 %2011
  %v2013 = vsel %vm439, %v2005, 0.0
  %2014 = vadd.xlane.f32.xlu0 %v2013
  %v2015 = vpop.xlane.xlu0 %2014
  %v2016 = vsel %vm439, %v2007, 0.0
  %2017 = vadd.xlane.f32.xlu0 %v2016
  %v2018 = vpop.xlane.xlu0 %2017
  %v2019 = vsel %vm439, %v2009, 0.0
  %2020 = vadd.xlane.f32.xlu0 %v2019
  %v2021 = vpop.xlane.xlu0 %2020
  %v2022 = vrcp.pop %v2012
  %v2023 = vrcp.pop %v2015
  %v2024 = vrcp.pop %v2018
  %v2025 = vrcp.pop %v2021
  %v2026 = vmul.f32 %v2003, %v2022
  %v2027 = vmul.f32 %v2005, %v2023
  %v2028 = vmul.f32 %v2007, %v2024
  %v2029 = vmul.f32 %v2009, %v2025
  %v2030 = vpack.c.bf16 %v2027, %v2026
  %v2031 = vpack.c.bf16 %v2029, %v2028
  %2032 = vrot.lane.b32.xlu0 %v437, 32
  %v2033 = vpop.permute.xlu0 %2032
  %v2036 = vsel %vm439, %v2030, 0
  %2038 = vmatprep.subr.bf16.mxu0 0
  %2039 = vmatpush1.bf16.msra.mxu0 0
  %2040 = vmatprep.subr.bf16.mxu0 0
  %2041 = vmatpush1.bf16.msra.mxu0 0
  %2042 = vmatprep.subr.bf16.mxu0 0
  %2043 = vmatpush1.bf16.msra.mxu0 0
  %2044 = vmatprep.subr.bf16.mxu0 0
  %2045 = vmatpush1.bf16.msra.mxu0 0
  %2046 = vmatprep.subr.bf16.mxu0 0
  %2047 = vmatpush1.bf16.msra.mxu0 0
  %2048 = vmatprep.subr.bf16.mxu0 0
  %2049 = vmatpush1.bf16.msra.mxu0 0
  %2050 = vmatprep.subr.bf16.mxu0 0
  %2051 = vmatpush1.bf16.msra.mxu0 0
  %2052 = vmatprep.subr.bf16.mxu0 0
  %2053 = vmatpush1.bf16.msra.mxu0 %v2033
  %2054 = vmatprep.subr.bf16.mxu0 0
  %2055 = vmatpush2.bf16.msra.mxu0 0
  %2056 = vmatprep.subr.bf16.mxu0 0
  %2057 = vmatpush2.bf16.msra.mxu0 0
  %2058 = vmatprep.subr.bf16.mxu0 0
  %2059 = vmatpush2.bf16.msra.mxu0 0
  %2060 = vmatprep.subr.bf16.mxu0 0
  %2061 = vmatpush2.bf16.msra.mxu0 0
  %2062 = vmatprep.subr.bf16.mxu0 0
  %2063 = vmatpush2.bf16.msra.mxu0 0
  %2064 = vmatprep.subr.bf16.mxu0 0
  %2065 = vmatpush2.bf16.msra.mxu0 0
  %2066 = vmatprep.subr.bf16.mxu0 0
  %2067 = vmatpush2.bf16.msra.mxu0 0
  %2068 = vmatprep.subr.bf16.mxu0 0
  %2069 = vmatpush2.bf16.msra.mxu0 0
  %2070 = vmatprep.mubr.bf16.mxu0 0
  %2071 = vmatmul.mubr.bf16.gmra.mxu0 %v2036
  %v2072 = vpop.f32.mrf.mxu0
  %v2073 = vadd.f32 0.0, %v2072
  %v2074 = vpop.f32.mrf.mxu0
  %v2075 = vpop.f32.mrf.mxu0
  %v2076 = vadd.f32 0.0, %v2075
  %v2077 = vpop.f32.mrf.mxu0
  %2078 = vdwg.mxu0
  %2079 = vrot.lane.b32.xlu0 %v438, 32
  %v2080 = vpop.permute.xlu0 %2079
  %v2083 = vsel %vm439, %v2031, 0
  %2085 = vmatprep.subr.bf16.mxu0 0
  %2086 = vmatpush1.bf16.msra.mxu0 0
  %2087 = vmatprep.subr.bf16.mxu0 0
  %2088 = vmatpush1.bf16.msra.mxu0 0
  %2089 = vmatprep.subr.bf16.mxu0 0
  %2090 = vmatpush1.bf16.msra.mxu0 0
  %2091 = vmatprep.subr.bf16.mxu0 0
  %2092 = vmatpush1.bf16.msra.mxu0 0
  %2093 = vmatprep.subr.bf16.mxu0 0
  %2094 = vmatpush1.bf16.msra.mxu0 0
  %2095 = vmatprep.subr.bf16.mxu0 0
  %2096 = vmatpush1.bf16.msra.mxu0 0
  %2097 = vmatprep.subr.bf16.mxu0 0
  %2098 = vmatpush1.bf16.msra.mxu0 0
  %2099 = vmatprep.subr.bf16.mxu0 0
  %2100 = vmatpush1.bf16.msra.mxu0 %v2080
  %2101 = vmatprep.subr.bf16.mxu0 0
  %2102 = vmatpush2.bf16.msra.mxu0 0
  %2103 = vmatprep.subr.bf16.mxu0 0
  %2104 = vmatpush2.bf16.msra.mxu0 0
  %2105 = vmatprep.subr.bf16.mxu0 0
  %2106 = vmatpush2.bf16.msra.mxu0 0
  %2107 = vmatprep.subr.bf16.mxu0 0
  %2108 = vmatpush2.bf16.msra.mxu0 0
  %2109 = vmatprep.subr.bf16.mxu0 0
  %2110 = vmatpush2.bf16.msra.mxu0 0
  %2111 = vmatprep.subr.bf16.mxu0 0
  %2112 = vmatpush2.bf16.msra.mxu0 0
  %2113 = vmatprep.subr.bf16.mxu0 0
  %2114 = vmatpush2.bf16.msra.mxu0 0
  %2115 = vmatprep.subr.bf16.mxu0 0
  %2116 = vmatpush2.bf16.msra.mxu0 0
  %2117 = vmatprep.mubr.bf16.mxu0 0
  %2118 = vmatmul.mubr.bf16.gmra.mxu0 %v2083
  %v2119 = vpop.f32.mrf.mxu0
  %v2120 = vadd.f32 0.0, %v2119
  %v2121 = vpop.f32.mrf.mxu0
  %v2122 = vpop.f32.mrf.mxu0
  %v2123 = vadd.f32 0.0, %v2122
  %v2124 = vpop.f32.mrf.mxu0
  %2125 = vdwg.mxu0
  %2126 = vrot.lane.b32.xlu0 %v433, 16
  %v2127 = vpop.permute.xlu0 %2126
  %2128 = vrot.lane.b32.xlu0 %v435, 16
  %v2129 = vpop.permute.xlu0 %2128
  %v2131 = vsel %vm439, %v2127, 0
  %v2134 = vsel %vm439, %v2129, 0
  %2136 = vmatprep.subr.bf16.mxu0 0
  %2137 = vmatpush1.bf16.xpose.msra.mxu0 0
  %2138 = vmatprep.subr.bf16.mxu0 0
  %2139 = vmatpush1.bf16.xpose.msra.mxu0 0
  %2140 = vmatprep.subr.bf16.mxu0 0
  %2141 = vmatpush1.bf16.xpose.msra.mxu0 0
  %2142 = vmatprep.subr.bf16.mxu0 0
  %2143 = vmatpush1.bf16.xpose.msra.mxu0 0
  %2144 = vmatprep.subr.bf16.mxu0 0
  %2145 = vmatpush1.bf16.xpose.msra.mxu0 0
  %2146 = vmatprep.subr.bf16.mxu0 0
  %2147 = vmatpush1.bf16.xpose.msra.mxu0 0
  %2148 = vmatprep.subr.bf16.mxu0 0
  %2149 = vmatpush1.bf16.xpose.msra.mxu0 0
  %2150 = vmatprep.subr.bf16.mxu0 0
  %2151 = vmatpush1.bf16.xpose.msra.mxu0 %v2134
  %2152 = vmatprep.subr.bf16.mxu0 0
  %2153 = vmatpush2.bf16.xpose.msra.mxu0 0
  %2154 = vmatprep.subr.bf16.mxu0 0
  %2155 = vmatpush2.bf16.xpose.msra.mxu0 0
  %2156 = vmatprep.subr.bf16.mxu0 0
  %2157 = vmatpush2.bf16.xpose.msra.mxu0 0
  %2158 = vmatprep.subr.bf16.mxu0 0
  %2159 = vmatpush2.bf16.xpose.msra.mxu0 0
  %2160 = vmatprep.subr.bf16.mxu0 0
  %2161 = vmatpush2.bf16.xpose.msra.mxu0 0
  %2162 = vmatprep.subr.bf16.mxu0 0
  %2163 = vmatpush2.bf16.xpose.msra.mxu0 0
  %2164 = vmatprep.subr.bf16.mxu0 0
  %2165 = vmatpush2.bf16.xpose.msra.mxu0 0
  %2166 = vmatprep.subr.bf16.mxu0 0
  %2167 = vmatpush2.bf16.xpose.msra.mxu0 0
  %2168 = vmatprep.mubr.bf16.mxu0 0
  %2169 = vmatmul.mubr.bf16.gmra.mxu0 %v2131
  %v2170 = vpop.f32.mrf.mxu0
  %v2171 = vadd.f32 0.0, %v2170
  %v2172 = vpop.f32.mrf.mxu0
  %v2173 = vpop.f32.mrf.mxu0
  %v2174 = vadd.f32 0.0, %v2173
  %v2175 = vpop.f32.mrf.mxu0
  %2176 = vdwg.mxu0
  %2177 = vrot.lane.b32.xlu0 %v434, 16
  %v2178 = vpop.permute.xlu0 %2177
  %2179 = vrot.lane.b32.xlu0 %v436, 16
  %v2180 = vpop.permute.xlu0 %2179
  %v2182 = vsel %vm439, %v2178, 0
  %v2185 = vsel %vm439, %v2180, 0
  %2187 = vmatprep.subr.bf16.mxu0 0
  %2188 = vmatpush1.bf16.xpose.msra.mxu0 0
  %2189 = vmatprep.subr.bf16.mxu0 0
  %2190 = vmatpush1.bf16.xpose.msra.mxu0 0
  %2191 = vmatprep.subr.bf16.mxu0 0
  %2192 = vmatpush1.bf16.xpose.msra.mxu0 0
  %2193 = vmatprep.subr.bf16.mxu0 0
  %2194 = vmatpush1.bf16.xpose.msra.mxu0 0
  %2195 = vmatprep.subr.bf16.mxu0 0
  %2196 = vmatpush1.bf16.xpose.msra.mxu0 0
  %2197 = vmatprep.subr.bf16.mxu0 0
  %2198 = vmatpush1.bf16.xpose.msra.mxu0 0
  %2199 = vmatprep.subr.bf16.mxu0 0
  %2200 = vmatpush1.bf16.xpose.msra.mxu0 0
  %2201 = vmatprep.subr.bf16.mxu0 0
  %2202 = vmatpush1.bf16.xpose.msra.mxu0 %v2185
  %2203 = vmatprep.subr.bf16.mxu0 0
  %2204 = vmatpush2.bf16.xpose.msra.mxu0 0
  %2205 = vmatprep.subr.bf16.mxu0 0
  %2206 = vmatpush2.bf16.xpose.msra.mxu0 0
  %2207 = vmatprep.subr.bf16.mxu0 0
  %2208 = vmatpush2.bf16.xpose.msra.mxu0 0
  %2209 = vmatprep.subr.bf16.mxu0 0
  %2210 = vmatpush2.bf16.xpose.msra.mxu0 0
  %2211 = vmatprep.subr.bf16.mxu0 0
  %2212 = vmatpush2.bf16.xpose.msra.mxu0 0
  %2213 = vmatprep.subr.bf16.mxu0 0
  %2214 = vmatpush2.bf16.xpose.msra.mxu0 0
  %2215 = vmatprep.subr.bf16.mxu0 0
  %2216 = vmatpush2.bf16.xpose.msra.mxu0 0
  %2217 = vmatprep.subr.bf16.mxu0 0
  %2218 = vmatpush2.bf16.xpose.msra.mxu0 0
  %2219 = vmatprep.mubr.bf16.mxu0 0
  %2220 = vmatmul.mubr.bf16.gmra.mxu0 %v2182
  %v2221 = vpop.f32.mrf.mxu0
  %v2222 = vadd.f32 0.0, %v2221
  %v2223 = vpop.f32.mrf.mxu0
  %v2224 = vpop.f32.mrf.mxu0
  %v2225 = vadd.f32 0.0, %v2224
  %v2226 = vpop.f32.mrf.mxu0
  %2227 = vdwg.mxu0
  %v2228 = vsel %vm439, %v2171, -inf
  %2229 = vmax.xlane.f32.xlu0 %v2228
  %v2230 = vpop.xlane.xlu0 %2229
  %v2231 = vsel %vm439, %v2174, -inf
  %2232 = vmax.xlane.f32.xlu0 %v2231
  %v2233 = vpop.xlane.xlu0 %2232
  %v2234 = vsel %vm439, %v2222, -inf
  %2235 = vmax.xlane.f32.xlu0 %v2234
  %v2236 = vpop.xlane.xlu0 %2235
  %v2237 = vsel %vm439, %v2225, -inf
  %2238 = vmax.xlane.f32.xlu0 %v2237
  %v2239 = vpop.xlane.xlu0 %2238
  %v2240 = vsub.f32 %v2171, %v2230
  %v2241 = vsub.f32 %v2174, %v2233
  %v2242 = vsub.f32 %v2222, %v2236
  %v2243 = vsub.f32 %v2225, %v2239
  %v2244 = vmul.f32 %v2240, 1.442695
  %v2245 = vpow.pop %v2244
  %v2246 = vmul.f32 %v2241, 1.442695
  %v2247 = vpow.pop %v2246
  %v2248 = vmul.f32 %v2242, 1.442695
  %v2249 = vpow.pop %v2248
  %v2250 = vmul.f32 %v2243, 1.442695
  %v2251 = vpow.pop %v2250
  %v2252 = vsel %vm439, %v2245, 0.0
  %2253 = vadd.xlane.f32.xlu0 %v2252
  %v2254 = vpop.xlane.xlu0 %2253
  %v2255 = vsel %vm439, %v2247, 0.0
  %2256 = vadd.xlane.f32.xlu0 %v2255
  %v2257 = vpop.xlane.xlu0 %2256
  %v2258 = vsel %vm439, %v2249, 0.0
  %2259 = vadd.xlane.f32.xlu0 %v2258
  %v2260 = vpop.xlane.xlu0 %2259
  %v2261 = vsel %vm439, %v2251, 0.0
  %2262 = vadd.xlane.f32.xlu0 %v2261
  %v2263 = vpop.xlane.xlu0 %2262
  %v2264 = vrcp.pop %v2254
  %v2265 = vrcp.pop %v2257
  %v2266 = vrcp.pop %v2260
  %v2267 = vrcp.pop %v2263
  %v2268 = vmul.f32 %v2245, %v2264
  %v2269 = vmul.f32 %v2247, %v2265
  %v2270 = vmul.f32 %v2249, %v2266
  %v2271 = vmul.f32 %v2251, %v2267
  %v2272 = vpack.c.bf16 %v2269, %v2268
  %v2273 = vpack.c.bf16 %v2271, %v2270
  %2274 = vrot.lane.b32.xlu0 %v437, 16
  %v2275 = vpop.permute.xlu0 %2274
  %v2278 = vsel %vm439, %v2272, 0
  %2280 = vmatprep.subr.bf16.mxu0 0
  %2281 = vmatpush1.bf16.msra.mxu0 0
  %2282 = vmatprep.subr.bf16.mxu0 0
  %2283 = vmatpush1.bf16.msra.mxu0 0
  %2284 = vmatprep.subr.bf16.mxu0 0
  %2285 = vmatpush1.bf16.msra.mxu0 0
  %2286 = vmatprep.subr.bf16.mxu0 0
  %2287 = vmatpush1.bf16.msra.mxu0 0
  %2288 = vmatprep.subr.bf16.mxu0 0
  %2289 = vmatpush1.bf16.msra.mxu0 0
  %2290 = vmatprep.subr.bf16.mxu0 0
  %2291 = vmatpush1.bf16.msra.mxu0 0
  %2292 = vmatprep.subr.bf16.mxu0 0
  %2293 = vmatpush1.bf16.msra.mxu0 0
  %2294 = vmatprep.subr.bf16.mxu0 0
  %2295 = vmatpush1.bf16.msra.mxu0 %v2275
  %2296 = vmatprep.subr.bf16.mxu0 0
  %2297 = vmatpush2.bf16.msra.mxu0 0
  %2298 = vmatprep.subr.bf16.mxu0 0
  %2299 = vmatpush2.bf16.msra.mxu0 0
  %2300 = vmatprep.subr.bf16.mxu0 0
  %2301 = vmatpush2.bf16.msra.mxu0 0
  %2302 = vmatprep.subr.bf16.mxu0 0
  %2303 = vmatpush2.bf16.msra.mxu0 0
  %2304 = vmatprep.subr.bf16.mxu0 0
  %2305 = vmatpush2.bf16.msra.mxu0 0
  %2306 = vmatprep.subr.bf16.mxu0 0
  %2307 = vmatpush2.bf16.msra.mxu0 0
  %2308 = vmatprep.subr.bf16.mxu0 0
  %2309 = vmatpush2.bf16.msra.mxu0 0
  %2310 = vmatprep.subr.bf16.mxu0 0
  %2311 = vmatpush2.bf16.msra.mxu0 0
  %2312 = vmatprep.mubr.bf16.mxu0 0
  %2313 = vmatmul.mubr.bf16.gmra.mxu0 %v2278
  %v2314 = vpop.f32.mrf.mxu0
  %v2315 = vadd.f32 0.0, %v2314
  %v2316 = vpop.f32.mrf.mxu0
  %v2317 = vpop.f32.mrf.mxu0
  %v2318 = vadd.f32 0.0, %v2317
  %v2319 = vpop.f32.mrf.mxu0
  %2320 = vdwg.mxu0
  %2321 = vrot.lane.b32.xlu0 %v438, 16
  %v2322 = vpop.permute.xlu0 %2321
  %v2325 = vsel %vm439, %v2273, 0
  %2327 = vmatprep.subr.bf16.mxu0 0
  %2328 = vmatpush1.bf16.msra.mxu0 0
  %2329 = vmatprep.subr.bf16.mxu0 0
  %2330 = vmatpush1.bf16.msra.mxu0 0
  %2331 = vmatprep.subr.bf16.mxu0 0
  %2332 = vmatpush1.bf16.msra.mxu0 0
  %2333 = vmatprep.subr.bf16.mxu0 0
  %2334 = vmatpush1.bf16.msra.mxu0 0
  %2335 = vmatprep.subr.bf16.mxu0 0
  %2336 = vmatpush1.bf16.msra.mxu0 0
  %2337 = vmatprep.subr.bf16.mxu0 0
  %2338 = vmatpush1.bf16.msra.mxu0 0
  %2339 = vmatprep.subr.bf16.mxu0 0
  %2340 = vmatpush1.bf16.msra.mxu0 0
  %2341 = vmatprep.subr.bf16.mxu0 0
  %2342 = vmatpush1.bf16.msra.mxu0 %v2322
  %2343 = vmatprep.subr.bf16.mxu0 0
  %2344 = vmatpush2.bf16.msra.mxu0 0
  %2345 = vmatprep.subr.bf16.mxu0 0
  %2346 = vmatpush2.bf16.msra.mxu0 0
  %2347 = vmatprep.subr.bf16.mxu0 0
  %2348 = vmatpush2.bf16.msra.mxu0 0
  %2349 = vmatprep.subr.bf16.mxu0 0
  %2350 = vmatpush2.bf16.msra.mxu0 0
  %2351 = vmatprep.subr.bf16.mxu0 0
  %2352 = vmatpush2.bf16.msra.mxu0 0
  %2353 = vmatprep.subr.bf16.mxu0 0
  %2354 = vmatpush2.bf16.msra.mxu0 0
  %2355 = vmatprep.subr.bf16.mxu0 0
  %2356 = vmatpush2.bf16.msra.mxu0 0
  %2357 = vmatprep.subr.bf16.mxu0 0
  %2358 = vmatpush2.bf16.msra.mxu0 0
  %2359 = vmatprep.mubr.bf16.mxu0 0
  %2360 = vmatmul.mubr.bf16.gmra.mxu0 %v2325
  %v2361 = vpop.f32.mrf.mxu0
  %v2362 = vadd.f32 0.0, %v2361
  %v2363 = vpop.f32.mrf.mxu0
  %v2364 = vpop.f32.mrf.mxu0
  %v2365 = vadd.f32 0.0, %v2364
  %v2366 = vpop.f32.mrf.mxu0
  %2367 = vdwg.mxu0
  %2372 = vrot.lane.b32.xlu0 %v862, 16
  %v2373 = vpop.permute.xlu0 %2372
  %2374 = vrot.lane.b32.xlu0 %v865, 16
  %v2375 = vpop.permute.xlu0 %2374
  %2376 = vrot.lane.b32.xlu0 %v910, 16
  %v2377 = vpop.permute.xlu0 %2376
  %2378 = vrot.lane.b32.xlu0 %v913, 16
  %v2379 = vpop.permute.xlu0 %2378
  %2388 = vrot.lane.b32.xlu0 %v1105, 32
  %v2389 = vpop.permute.xlu0 %2388
  %2390 = vrot.lane.b32.xlu0 %v1108, 32
  %v2391 = vpop.permute.xlu0 %2390
  %2392 = vrot.lane.b32.xlu0 %v1152, 32
  %v2393 = vpop.permute.xlu0 %2392
  %2394 = vrot.lane.b32.xlu0 %v1155, 32
  %v2395 = vpop.permute.xlu0 %2394
  %2404 = vrot.lane.b32.xlu0 %v1347, 48
  %v2405 = vpop.permute.xlu0 %2404
  %2406 = vrot.lane.b32.xlu0 %v1350, 48
  %v2407 = vpop.permute.xlu0 %2406
  %2408 = vrot.lane.b32.xlu0 %v1394, 48
  %v2409 = vpop.permute.xlu0 %2408
  %2410 = vrot.lane.b32.xlu0 %v1397, 48
  %v2411 = vpop.permute.xlu0 %2410
  %2420 = vrot.lane.b32.xlu0 %v1589, 64
  %v2421 = vpop.permute.xlu0 %2420
  %2422 = vrot.lane.b32.xlu0 %v1592, 64
  %v2423 = vpop.permute.xlu0 %2422
  %2424 = vrot.lane.b32.xlu0 %v1636, 64
  %v2425 = vpop.permute.xlu0 %2424
  %2426 = vrot.lane.b32.xlu0 %v1639, 64
  %v2427 = vpop.permute.xlu0 %2426
  %2436 = vrot.lane.b32.xlu0 %v1831, 80
  %v2437 = vpop.permute.xlu0 %2436
  %2438 = vrot.lane.b32.xlu0 %v1834, 80
  %v2439 = vpop.permute.xlu0 %2438
  %2440 = vrot.lane.b32.xlu0 %v1878, 80
  %v2441 = vpop.permute.xlu0 %2440
  %2442 = vrot.lane.b32.xlu0 %v1881, 80
  %v2443 = vpop.permute.xlu0 %2442
  %2452 = vrot.lane.b32.xlu0 %v2073, 96
  %v2453 = vpop.permute.xlu0 %2452
  %2454 = vrot.lane.b32.xlu0 %v2076, 96
  %v2455 = vpop.permute.xlu0 %2454
  %2456 = vrot.lane.b32.xlu0 %v2120, 96
  %v2457 = vpop.permute.xlu0 %2456
  %2458 = vrot.lane.b32.xlu0 %v2123, 96
  %v2459 = vpop.permute.xlu0 %2458
  %2468 = vrot.lane.b32.xlu0 %v2315, 112
  %v2469 = vpop.permute.xlu0 %2468
  %2470 = vrot.lane.b32.xlu0 %v2318, 112
  %v2471 = vpop.permute.xlu0 %2470
  %2472 = vrot.lane.b32.xlu0 %v2362, 112
  %v2473 = vpop.permute.xlu0 %2472
  %2474 = vrot.lane.b32.xlu0 %v2365, 112
  %v2475 = vpop.permute.xlu0 %2474
  %v2480 = vsel %vm439, %v618, %v2373
  %v2481 = vsel %vm439, %v621, %v2375
  %v2482 = vsel %vm439, %v662, %v2377
  %v2483 = vsel %vm439, %v665, %v2379
  %vm2484 = vcmask 261120
  %v2485 = vsel %vm2484, %v2480, %v2389
  %v2486 = vsel %vm2484, %v2481, %v2391
  %v2487 = vsel %vm2484, %v2482, %v2393
  %v2488 = vsel %vm2484, %v2483, %v2395
  %vm2489 = vcmask 392192
  %v2490 = vsel %vm2489, %v2485, %v2405
  %v2491 = vsel %vm2489, %v2486, %v2407
  %v2492 = vsel %vm2489, %v2487, %v2409
  %v2493 = vsel %vm2489, %v2488, %v2411
  %vm2494 = vcmask 523264
  %v2495 = vsel %vm2494, %v2490, %v2421
  %v2496 = vsel %vm2494, %v2491, %v2423
  %v2497 = vsel %vm2494, %v2492, %v2425
  %v2498 = vsel %vm2494, %v2493, %v2427
  %vm2499 = vcmask 654336
  %v2500 = vsel %vm2499, %v2495, %v2437
  %v2501 = vsel %vm2499, %v2496, %v2439
  %v2502 = vsel %vm2499, %v2497, %v2441
  %v2503 = vsel %vm2499, %v2498, %v2443
  %vm2504 = vcmask 785408
  %v2505 = vsel %vm2504, %v2500, %v2453
  %v2506 = vsel %vm2504, %v2501, %v2455
  %v2507 = vsel %vm2504, %v2502, %v2457
  %v2508 = vsel %vm2504, %v2503, %v2459
  %vm2509 = vcmask 916480
  %v2510 = vsel %vm2509, %v2505, %v2469
  %v2511 = vsel %vm2509, %v2506, %v2471
  %v2512 = vsel %vm2509, %v2507, %v2473
  %v2513 = vsel %vm2509, %v2508, %v2475
  %v2514 = vpack.c.bf16 %v2511, %v2510
  %v2515 = vpack.c.bf16 %v2513, %v2512
  %v2516 = vld [vmem:[%s9] sm:$0xf]
  %v2517 = vld [vmem:[%s9 + $0x4] sm:$0xf]
  %v2518 = vld [vmem:[%s9 + $0x8] sm:$0xf]
  %v2519 = vld [vmem:[%s9 + $0xc] sm:$0xf]
  %v2520 = vld [vmem:[%s9 + $0x10] sm:$0xf]
  %v2521 = vld [vmem:[%s9 + $0x14] sm:$0xf]
  %v2522 = vld [vmem:[%s9 + $0x18] sm:$0xf]
  %v2523 = vld [vmem:[%s9 + $0x1c] sm:$0xf]
  %v2524 = vld [vmem:[%s9 + $0x20] sm:$0xf]
  %v2525 = vld [vmem:[%s9 + $0x24] sm:$0xf]
  %v2526 = vld [vmem:[%s9 + $0x28] sm:$0xf]
  %v2527 = vld [vmem:[%s9 + $0x2c] sm:$0xf]
  %v2528 = vld [vmem:[%s9 + $0x30] sm:$0xf]
  %v2529 = vld [vmem:[%s9 + $0x34] sm:$0xf]
  %v2530 = vld [vmem:[%s9 + $0x38] sm:$0xf]
  %v2531 = vld [vmem:[%s9 + $0x3c] sm:$0xf]
  %v2532 = vld [vmem:[%s10] sm:$0x1]
  %v2534 = vlaneseq
  %v2535 = vshrl.u32 %v2534, 7
  %v2536 = vsub.s32 0, %v2535
  %v2537 = vrot.slane %v2532, %v2536
  %v2555 = vunpack.c.l.b16 %v2516
  %v2556 = vunpack.c.l.b16 %v2517
  %v2557 = vunpack.c.l.b16 %v2518
  %v2558 = vunpack.c.l.b16 %v2519
  %v2559 = vunpack.c.l.b16 %v2520
  %v2560 = vunpack.c.l.b16 %v2521
  %v2561 = vunpack.c.l.b16 %v2522
  %v2562 = vunpack.c.l.b16 %v2523
  %v2563 = vunpack.c.l.b16 %v2524
  %v2564 = vunpack.c.l.b16 %v2525
  %v2565 = vunpack.c.l.b16 %v2526
  %v2566 = vunpack.c.l.b16 %v2527
  %v2567 = vunpack.c.l.b16 %v2528
  %v2568 = vunpack.c.l.b16 %v2529
  %v2569 = vunpack.c.l.b16 %v2530
  %v2570 = vunpack.c.l.b16 %v2531
  %v2571 = vpack.c.b16 %v2556, %v2555
  %v2572 = vpack.c.b16 %v2558, %v2557
  %v2573 = vpack.c.b16 %v2560, %v2559
  %v2574 = vpack.c.b16 %v2562, %v2561
  %v2575 = vpack.c.b16 %v2564, %v2563
  %v2576 = vpack.c.b16 %v2566, %v2565
  %v2577 = vpack.c.b16 %v2568, %v2567
  %v2578 = vpack.c.b16 %v2570, %v2569
  %2587 = vmatprep.subr.bf16.mxu0 0
  %2588 = vmatpush1.bf16.msra.mxu0 %v2578
  %2589 = vmatprep.subr.bf16.mxu0 0
  %2590 = vmatpush1.bf16.msra.mxu0 %v2577
  %2591 = vmatprep.subr.bf16.mxu0 0
  %2592 = vmatpush1.bf16.msra.mxu0 %v2576
  %2593 = vmatprep.subr.bf16.mxu0 0
  %2594 = vmatpush1.bf16.msra.mxu0 %v2575
  %2595 = vmatprep.subr.bf16.mxu0 0
  %2596 = vmatpush1.bf16.msra.mxu0 %v2574
  %2597 = vmatprep.subr.bf16.mxu0 0
  %2598 = vmatpush1.bf16.msra.mxu0 %v2573
  %2599 = vmatprep.subr.bf16.mxu0 0
  %2600 = vmatpush1.bf16.msra.mxu0 %v2572
  %2601 = vmatprep.subr.bf16.mxu0 0
  %2602 = vmatpush1.bf16.msra.mxu0 %v2571
  %2603 = vmatprep.subr.bf16.mxu0 0
  %2604 = vmatpush2.bf16.msra.mxu0 0
  %2605 = vmatprep.subr.bf16.mxu0 0
  %2606 = vmatpush2.bf16.msra.mxu0 0
  %2607 = vmatprep.subr.bf16.mxu0 0
  %2608 = vmatpush2.bf16.msra.mxu0 0
  %2609 = vmatprep.subr.bf16.mxu0 0
  %2610 = vmatpush2.bf16.msra.mxu0 0
  %2611 = vmatprep.subr.bf16.mxu0 0
  %2612 = vmatpush2.bf16.msra.mxu0 0
  %2613 = vmatprep.subr.bf16.mxu0 0
  %2614 = vmatpush2.bf16.msra.mxu0 0
  %2615 = vmatprep.subr.bf16.mxu0 0
  %2616 = vmatpush2.bf16.msra.mxu0 0
  %2617 = vmatprep.subr.bf16.mxu0 0
  %2618 = vmatpush2.bf16.msra.mxu0 0
  %2619 = vmatprep.mubr.bf16.mxu0 0
  %2620 = vmatmul.mubr.bf16.gmra.mxu0 %v2514
  %v2621 = vpop.f32.mrf.mxu0
  %v2622 = vadd.f32 %v2537, %v2621
  %v2623 = vpop.f32.mrf.mxu0
  %v2624 = vpop.f32.mrf.mxu0
  %v2625 = vadd.f32 %v2537, %v2624
  %v2626 = vpop.f32.mrf.mxu0
  %2627 = vmatprep.mubr.bf16.mxu0 0
  %2628 = vmatmul.mubr.bf16.gmra.mxu0 %v2515
  %v2629 = vpop.f32.mrf.mxu0
  %v2630 = vadd.f32 %v2537, %v2629
  %v2631 = vpop.f32.mrf.mxu0
  %v2632 = vpop.f32.mrf.mxu0
  %v2633 = vadd.f32 %v2537, %v2632
  %v2634 = vpop.f32.mrf.mxu0
  %2635 = vdwg.mxu0
  %v2636 = vadd.f32 %v67, %v2622
  %v2637 = vadd.f32 %v68, %v2625
  %v2638 = vadd.f32 %v69, %v2630
  %v2639 = vadd.f32 %v70, %v2633
  %v2640 = vpack.c.bf16 %v2637, %v2636
  %v2641 = vpack.c.bf16 %v2639, %v2638
  %v2644 = vunpack.c.l.b16 %v2640
  %v2645 = vunpack.c.h.b16 %v2640
  %v2646 = vunpack.c.l.b16 %v2641
  %v2647 = vunpack.c.h.b16 %v2641
  %v2648 = vpack.c.b16 %v2644, %v2644
  %v2649 = vpack.c.b16 %v2645, %v2645
  %v2650 = vpack.c.b16 %v2646, %v2646
  %v2651 = vpack.c.b16 %v2647, %v2647
  %2656 = vst [vmem:[%s11] sm:$0xf] %v2648
  %2657 = vst [vmem:[%s11 + $0x4] sm:$0xf] %v2649
  %2658 = vst [vmem:[%s11 + $0x8] sm:$0xf] %v2650
  %2659 = vst [vmem:[%s11 + $0xc] sm:$0xf] %v2651
  %v2660 = vadd.f32 %v2636, %v2637
  %v2661 = vadd.f32 %v2660, %v2638
  %v2662 = vadd.f32 %v2661, %v2639
  %v2663 = vrot.slane %v2662, 4
  %v2664 = vadd.f32 %v2662, %v2663
  %v2665 = vrot.slane %v2664, 2
  %v2666 = vadd.f32 %v2664, %v2665
  %v2667 = vrot.slane %v2666, 1
  %v2668 = vadd.f32 %v2666, %v2667
  %2669 = vst [vmem:[%s12] sm:$0x1] %v2668
  %v2670 = vmul.f32 %v2636, %v2636
  %v2671 = vmul.f32 %v2637, %v2637
  %v2672 = vmul.f32 %v2638, %v2638
  %v2673 = vmul.f32 %v2639, %v2639
  %v2674 = vadd.f32 %v2670, %v2671
  %v2675 = vadd.f32 %v2674, %v2672
  %v2676 = vadd.f32 %v2675, %v2673
  %v2677 = vrot.slane %v2676, 4
  %v2678 = vadd.f32 %v2676, %v2677
  %v2679 = vrot.slane %v2678, 2
  %v2680 = vadd.f32 %v2678, %v2679
  %v2681 = vrot.slane %v2680, 1
  %v2682 = vadd.f32 %v2680, %v2681
  %2683 = vst [vmem:[%s12 + $0x1] sm:$0x1] %v2682
  // Predicated region
  $region46: #{graph_encoder.11} parent=0 // pred_check
    _
  $region47: #{graph_encoder.11} parent=0 // pred_check_branch
    %2685 = sbr.rel (0) target = $region49
  $region48: #{graph_encoder.11} parent=0 // pred_region
    _
  $region49: #{graph_encoder.11} parent=0 // pred_fallthru
    _
  // Predicated region
  $region50: #{graph_encoder.11} parent=0 // pred_check
    _
  $region51: #{graph_encoder.11} parent=0 // pred_check_branch
    %2687 = sbr.rel (0) target = $region53
  $region52: #{graph_encoder.11} parent=0 // pred_region
    _
  $region53: #{graph_encoder.11} parent=0 // pred_fallthru
    _
  // Predicated region
  $region54: #{graph_encoder.11} parent=0 // pred_check
    _
  $region55: #{graph_encoder.11} parent=0 // pred_check_branch
    %2689 = sbr.rel (0) target = $region57
  $region56: #{graph_encoder.11} parent=0 // pred_region
    _
  $region57: #{graph_encoder.11} parent=0 // pred_fallthru
    _
  // Predicated region
  $region58: #{graph_encoder.11} parent=0 // pred_check
    _
  $region59: #{graph_encoder.11} parent=0 // pred_check_branch
    %2691 = sbr.rel (0) target = $region61
  $region60: #{graph_encoder.11} parent=0 // pred_region
    _
  $region61: #{graph_encoder.11} parent=0 // pred_fallthru
    _

</llo_original>
